<compile_context>
chip_gen: v7x
topology: tpu7x:2x2x1
jax: 0.10.0
libtpu: 0.0.40
codegen_flags: <defaults>
</compile_context>

<pallas_src>
import jax
import jax.numpy as jnp
import numpy as np
from jax.experimental import pallas as pl
from jax.experimental.pallas import tpu as pltpu

# ----- config (get_config) -----
H = 128          # hidden size
K = 100          # fc1 out
A_F = 500        # appearance feature size
M_F = 2          # motion feature size
I_F = 49         # interaction feature size
T = 6            # timeStep

# padded (lane/sublane aligned) sizes
K_P = 128
A_FP = 512
M_FP = 128
I_FP = 128
OUT_P = 128      # final fc output padded to a full lane tile (wrapper slices [:, :2])


def target_lstm_kernel(
    # appearance branch
    a_x, a_tg, a_tfcw, a_tfcb, a_wih, a_b, a_whh, a_fc1w, a_fc1b,
    # motion branch
    m_x, m_tg, m_tfcw, m_tfcb, m_wih, m_b, m_whh, m_fc1w, m_fc1b,
    # interaction branch
    i_x, i_tg, i_tfcw, i_tfcb, i_wih, i_b, i_whh, i_fc1w, i_fc1b,
    # top LSTM: small params in VMEM, big weights in HBM (manual DMA)
    t_b, fc_b, t_wih_hbm, t_whh_hbm, fc_w_hbm,
    # output
    out_ref,
    # scratch
    gx_a, gx_m, gx_i, gx_t, hb_a, hb_m, hb_i,
    t_wih_v, t_whh_v, fc_w_v, dma_sem,
):
    B = a_tg.shape[0]
    bf16 = jnp.bfloat16

    # -- 1. kick off DMA of the top-LSTM weights (used last); hidden behind branch compute --
    cp_wih = pltpu.make_async_copy(t_wih_hbm, t_wih_v, dma_sem.at[0])
    cp_whh = pltpu.make_async_copy(t_whh_hbm, t_whh_v, dma_sem.at[1])
    cp_fcw = pltpu.make_async_copy(fc_w_hbm, fc_w_v, dma_sem.at[2])
    cp_wih.start()
    cp_whh.start()
    cp_fcw.start()

    # -- 2. hoisted, time-parallel projections (bf16 MXU operands, f32 accumulation) --
    def hoist(x_ref, tg_ref, tfcw_ref, tfcb_ref, wih_ref, b_ref, gx_ref):
        # one input projection for all timesteps, bias (b_ih + b_hh) folded in, staged in VMEM
        gx_ref[...] = jnp.dot(x_ref[...].astype(bf16), wih_ref[...],
                              preferred_element_type=jnp.float32) + b_ref[...]
        # target_fc
        return jnp.dot(tg_ref[...].astype(bf16), tfcw_ref[...],
                       preferred_element_type=jnp.float32) + tfcb_ref[...]

    t_out_a = hoist(a_x, a_tg, a_tfcw, a_tfcb, a_wih, a_b, gx_a)
    t_out_m = hoist(m_x, m_tg, m_tfcw, m_tfcb, m_wih, m_b, gx_m)
    t_out_i = hoist(i_x, i_tg, i_tfcw, i_tfcb, i_wih, i_b, gx_i)

    # -- 3. serial recurrences: only h @ W_hh + gate nonlinearities on the chain --
    def lstm_step(t, h, c, gx_ref, whh_ref):
        gates = gx_ref[pl.ds(t * B, B), :] + jnp.dot(
            h.astype(bf16), whh_ref[...], preferred_element_type=jnp.float32)
        i_g = jax.nn.sigmoid(gates[:, 0 * H:1 * H])
        f_g = jax.nn.sigmoid(gates[:, 1 * H:2 * H])
        g_g = jnp.tanh(gates[:, 2 * H:3 * H])
        o_g = jax.nn.sigmoid(gates[:, 3 * H:4 * H])
        c = f_g * c + i_g * g_g
        h = o_g * jnp.tanh(c)
        return h, c

    zero = jnp.zeros((B, H), jnp.float32)
    h_a, c_a = zero, zero
    h_m, c_m = zero, zero
    h_i, c_i = zero, zero
    for t in range(T):  # static unroll; the 3 independent branch chains interleave per step
        h_a, c_a = lstm_step(t, h_a, c_a, gx_a, a_whh)
        h_m, c_m = lstm_step(t, h_m, c_m, gx_m, m_whh)
        h_i, c_i = lstm_step(t, h_i, c_i, gx_i, i_whh)
        hb_a[pl.ds(t * B, B), :] = h_a
        hb_m[pl.ds(t * B, B), :] = h_m
        hb_i[pl.ds(t * B, B), :] = h_i

    # -- 4. fc1 over all timesteps at once: one K=2H=256-deep matmul per branch --
    def fc1_relu(h_buf, t_out, fc1w_ref, fc1b_ref):
        fused = jnp.concatenate(
            [h_buf[...], jnp.concatenate([t_out] * T, axis=0)], axis=1).astype(bf16)
        y = jnp.dot(fused, fc1w_ref[...],
                    preferred_element_type=jnp.float32) + fc1b_ref[...]
        return jnp.maximum(y, 0.0)                                   # (T*B, K_P) f32

    relu_a = fc1_relu(hb_a, t_out_a, a_fc1w, a_fc1b)
    relu_m = fc1_relu(hb_m, t_out_m, m_fc1w, m_fc1b)
    relu_i = fc1_relu(hb_i, t_out_i, i_fc1w, i_fc1b)

    # -- 5. top LSTM: one K=3*K_P=384-deep input projection (cat == fused weight), recurrence, fc --
    top_in = jnp.concatenate([relu_a, relu_m, relu_i], axis=1).astype(bf16)   # (T*B, 384)
    cp_wih.wait()
    cp_whh.wait()
    cp_fcw.wait()
    gx_t[...] = jnp.dot(top_in, t_wih_v[...],
                        preferred_element_type=jnp.float32) + t_b[...]

    h_top, c_top = zero, zero
    for t in range(T):
        h_top, c_top = lstm_step(t, h_top, c_top, gx_t, t_whh_v)

    out_ref[...] = jnp.dot(h_top.astype(bf16), fc_w_v[...],
                           preferred_element_type=jnp.float32) + fc_b[...]


# ----------------- parameter construction (deterministic, PyTorch-style uniform init) -----------------

def _uniform(key, shape, bound):
    return jax.random.uniform(key, shape, jnp.float32, -bound, bound)


def make_branch_params(key, f_in):
    ks = jax.random.split(key, 8)
    b_tfc = 1.0 / np.sqrt(f_in)
    b_lstm = 1.0 / np.sqrt(H)
    b_fc1 = 1.0 / np.sqrt(2 * H)
    return dict(
        tfc_w=_uniform(ks[0], (f_in, H), b_tfc),
        tfc_b=_uniform(ks[1], (1, H), b_tfc),
        w_ih=_uniform(ks[2], (f_in, 4 * H), b_lstm),
        w_hh=_uniform(ks[3], (H, 4 * H), b_lstm),
        b=_uniform(ks[4], (1, 4 * H), b_lstm) + _uniform(ks[5], (1, 4 * H), b_lstm),
        fc1_w=_uniform(ks[6], (2 * H, K), b_fc1),   # rows 0:H <- h_t, rows H:2H <- target_out
        fc1_b=_uniform(ks[7], (1, K), b_fc1),
    )


def make_top_params(key):
    ks = jax.random.split(key, 6)
    b_lstm = 1.0 / np.sqrt(H)
    b_fc = 1.0 / np.sqrt(H)
    return dict(
        w_ih=_uniform(ks[0], (3 * K, 4 * H), b_lstm),
        whh=_uniform(ks[1], (H, 4 * H), b_lstm),
        b=_uniform(ks[2], (1, 4 * H), b_lstm) + _uniform(ks[3], (1, 4 * H), b_lstm),
        fc_w=_uniform(ks[4], (H, 2), b_fc),
        fc_b=_uniform(ks[5], (1, 2), b_fc),
    )


# ----------------- padding helpers (zero padding; math-exact) -----------------

def _pad_last(a, n):
    pad = n - a.shape[-1]
    if pad == 0:
        return a
    return jnp.pad(a, [(0, 0)] * (a.ndim - 1) + [(0, pad)])


def _pad_rows(a, n):
    pad = n - a.shape[0]
    if pad == 0:
        return a
    return jnp.pad(a, [(0, pad)] + [(0, 0)] * (a.ndim - 1))


def _prep_branch(x, targ, p, f_pad):
    """Flatten track input time-major to (T*B, f_pad), pad weights, cast weights to bf16."""
    B = x.shape[0]
    x_flat = jnp.transpose(x, (1, 0, 2)).reshape(T * B, x.shape[-1])   # time-major rows
    return dict(
        x=_pad_last(x_flat, f_pad),
        targ=_pad_last(targ, f_pad),
        tfc_w=_pad_rows(p["tfc_w"], f_pad).astype(jnp.bfloat16),
        tfc_b=p["tfc_b"],
        w_ih=_pad_rows(p["w_ih"], f_pad).astype(jnp.bfloat16),
        b=p["b"],
        w_hh=p["w_hh"].astype(jnp.bfloat16),
        fc1_w=_pad_last(p["fc1_w"], K_P).astype(jnp.bfloat16),
        fc1_b=_pad_last(p["fc1_b"], K_P),
    )


# ----------------- wrapper -----------------

def target_lstm_forward(inputs, p_app, p_mot, p_int, p_top):
    B = inputs["app_x"].shape[0]

    app = _prep_branch(inputs["app_x"], inputs["app_t"], p_app, A_FP)
    mot = _prep_branch(inputs["mot_x"], inputs["mot_t"], p_mot, M_FP)
    itr = _prep_branch(inputs["int_x"], inputs["int_t"], p_int, I_FP)

    def branch_args(b):
        return [b["x"], b["targ"], b["tfc_w"], b["tfc_b"], b["w_ih"], b["b"],
                b["w_hh"], b["fc1_w"], b["fc1_b"]]

    # top-LSTM input weight: row-stack the three K-blocks, each zero-padded to K_P rows, so one
    # (3*K_P, 4H) matmul replaces three K=100 matmuls (padded rows align with the zero-padded
    # lanes of the branch relu outputs -> math exact).
    t_wih = jnp.concatenate(
        [_pad_rows(p_top["w_ih"][j * K:(j + 1) * K], K_P) for j in range(3)],
        axis=0).astype(jnp.bfloat16)
    t_whh = p_top["whh"].astype(jnp.bfloat16)
    fc_w = _pad_last(p_top["fc_w"], OUT_P).astype(jnp.bfloat16)
    fc_b = _pad_last(p_top["fc_b"], OUT_P)

    args = (branch_args(app) + branch_args(mot) + branch_args(itr)
            + [p_top["b"], fc_b, t_wih, t_whh, fc_w])
    n_vmem = len(args) - 3   # last 3 (top wih / whh / fc_w) stay in HBM, DMA'd inside the kernel

    out = pl.pallas_call(
        target_lstm_kernel,
        out_shape=jax.ShapeDtypeStruct((B, OUT_P), jnp.float32),
        in_specs=([pl.BlockSpec(memory_space=pltpu.MemorySpace.VMEM)] * n_vmem
                  + [pl.BlockSpec(memory_space=pl.ANY)] * 3),
        out_specs=pl.BlockSpec(memory_space=pltpu.MemorySpace.VMEM),
        scratch_shapes=[
            pltpu.VMEM((T * B, 4 * H), jnp.float32),      # gx_a
            pltpu.VMEM((T * B, 4 * H), jnp.float32),      # gx_m
            pltpu.VMEM((T * B, 4 * H), jnp.float32),      # gx_i
            pltpu.VMEM((T * B, 4 * H), jnp.float32),      # gx_top
            pltpu.VMEM((T * B, H), jnp.float32),          # hb_a
            pltpu.VMEM((T * B, H), jnp.float32),          # hb_m
            pltpu.VMEM((T * B, H), jnp.float32),          # hb_i
            pltpu.VMEM((3 * K_P, 4 * H), jnp.bfloat16),   # top W_ih VMEM copy
            pltpu.VMEM((H, 4 * H), jnp.bfloat16),         # top W_hh VMEM copy
            pltpu.VMEM((H, OUT_P), jnp.bfloat16),         # final fc_w VMEM copy
            pltpu.SemaphoreType.DMA((3,)),
        ],
    )(*args)
    return out[:, :2]


# ----------------- pure-JAX reference (same math, f32 HIGHEST precision, no Pallas) -----------------

def _ref_cell(gx, h, c, whh, b):
    gates = gx + jnp.dot(h, whh, precision=jax.lax.Precision.HIGHEST) + b
    i = jax.nn.sigmoid(gates[:, 0 * H:1 * H])
    f = jax.nn.sigmoid(gates[:, 1 * H:2 * H])
    g = jnp.tanh(gates[:, 2 * H:3 * H])
    o = jax.nn.sigmoid(gates[:, 3 * H:4 * H])
    c = f * c + i * g
    return o * jnp.tanh(c), c


def reference_forward(inputs, p_app, p_mot, p_int, p_top):
    hp = jax.lax.Precision.HIGHEST

    def branch(x, targ, p):
        target_out = jnp.dot(targ, p["tfc_w"], precision=hp) + p["tfc_b"]
        B = x.shape[0]
        h = jnp.zeros((B, H), jnp.float32)
        c = jnp.zeros((B, H), jnp.float32)
        outs = []
        for t in range(T):
            gx = jnp.dot(x[:, t, :], p["w_ih"], precision=hp)
            h, c = _ref_cell(gx, h, c, p["w_hh"], p["b"])
            combined = jnp.concatenate([h, target_out], axis=1)
            outs.append(jnp.maximum(
                jnp.dot(combined, p["fc1_w"], precision=hp) + p["fc1_b"], 0.0))
        return outs

    app = branch(inputs["app_x"], inputs["app_t"], p_app)
    mot = branch(inputs["mot_x"], inputs["mot_t"], p_mot)
    inter = branch(inputs["int_x"], inputs["int_t"], p_int)

    B = inputs["app_x"].shape[0]
    h = jnp.zeros((B, H), jnp.float32)
    c = jnp.zeros((B, H), jnp.float32)
    for t in range(T):
        comb = jnp.concatenate([app[t], mot[t], inter[t]], axis=1)
        gx = jnp.dot(comb, p_top["w_ih"], precision=hp)
        h, c = _ref_cell(gx, h, c, p_top["whh"], p_top["b"])
    return jnp.dot(h, p_top["fc_w"], precision=hp) + p_top["fc_b"]


if __name__ == "__main__":
    B = 2
    root = jax.random.PRNGKey(0)
    k_in, k_app, k_mot, k_int, k_top = jax.random.split(root, 5)

    ki = jax.random.split(k_in, 6)
    inputs = {
        "app_x": jax.random.normal(ki[0], (B, T, A_F), jnp.float32),
        "app_t": jax.random.normal(ki[1], (B, A_F), jnp.float32),
        "mot_x": jax.random.normal(ki[2], (B, T, M_F), jnp.float32),
        "mot_t": jax.random.normal(ki[3], (B, M_F), jnp.float32),
        "int_x": jax.random.normal(ki[4], (B, T, I_F), jnp.float32),
        "int_t": jax.random.normal(ki[5], (B, I_F), jnp.float32),
    }

    p_app = make_branch_params(k_app, A_F)
    p_mot = make_branch_params(k_mot, M_F)
    p_int = make_branch_params(k_int, I_F)
    p_top = make_top_params(k_top)

    out = target_lstm_forward(inputs, p_app, p_mot, p_int, p_top)
    out = jax.block_until_ready(out)

    ref = jax.block_until_ready(reference_forward(inputs, p_app, p_mot, p_int, p_top))
    assert out.shape == (B, 2) and bool(jnp.all(jnp.isfinite(out)))
    # bf16 MXU operands (f32 accumulation / state) vs. an f32 HIGHEST-precision reference across
    # two 6-step recurrences -> tolerance widened to 2e-2.
    np.testing.assert_allclose(np.asarray(out), np.asarray(ref), rtol=2e-2, atol=2e-2)

    print("KERNEL_OK")
</pallas_src>

<mosaic_0001>
module attributes {stable_mosaic.version = 11 : i64} {
  func.func @target_lstm_kernel(%arg0: memref<12x512xf32, #tpu.memory_space<vmem>>, %arg1: memref<2x512xf32, #tpu.memory_space<vmem>>, %arg2: memref<512x128xbf16, #tpu.memory_space<vmem>>, %arg3: memref<1x128xf32, #tpu.memory_space<vmem>>, %arg4: memref<512x512xbf16, #tpu.memory_space<vmem>>, %arg5: memref<1x512xf32, #tpu.memory_space<vmem>>, %arg6: memref<128x512xbf16, #tpu.memory_space<vmem>>, %arg7: memref<256x128xbf16, #tpu.memory_space<vmem>>, %arg8: memref<1x128xf32, #tpu.memory_space<vmem>>, %arg9: memref<12x128xf32, #tpu.memory_space<vmem>>, %arg10: memref<2x128xf32, #tpu.memory_space<vmem>>, %arg11: memref<128x128xbf16, #tpu.memory_space<vmem>>, %arg12: memref<1x128xf32, #tpu.memory_space<vmem>>, %arg13: memref<128x512xbf16, #tpu.memory_space<vmem>>, %arg14: memref<1x512xf32, #tpu.memory_space<vmem>>, %arg15: memref<128x512xbf16, #tpu.memory_space<vmem>>, %arg16: memref<256x128xbf16, #tpu.memory_space<vmem>>, %arg17: memref<1x128xf32, #tpu.memory_space<vmem>>, %arg18: memref<12x128xf32, #tpu.memory_space<vmem>>, %arg19: memref<2x128xf32, #tpu.memory_space<vmem>>, %arg20: memref<128x128xbf16, #tpu.memory_space<vmem>>, %arg21: memref<1x128xf32, #tpu.memory_space<vmem>>, %arg22: memref<128x512xbf16, #tpu.memory_space<vmem>>, %arg23: memref<1x512xf32, #tpu.memory_space<vmem>>, %arg24: memref<128x512xbf16, #tpu.memory_space<vmem>>, %arg25: memref<256x128xbf16, #tpu.memory_space<vmem>>, %arg26: memref<1x128xf32, #tpu.memory_space<vmem>>, %arg27: memref<1x512xf32, #tpu.memory_space<vmem>>, %arg28: memref<1x128xf32, #tpu.memory_space<vmem>>, %arg29: memref<384x512xbf16, #tpu.memory_space<any>>, %arg30: memref<128x512xbf16, #tpu.memory_space<any>>, %arg31: memref<128x128xbf16, #tpu.memory_space<any>>, %arg32: memref<2x128xf32, #tpu.memory_space<vmem>>, %arg33: memref<12x512xf32, #tpu.memory_space<vmem>>, %arg34: memref<12x512xf32, #tpu.memory_space<vmem>>, %arg35: memref<12x512xf32, #tpu.memory_space<vmem>>, %arg36: memref<12x512xf32, #tpu.memory_space<vmem>>, %arg37: memref<12x128xf32, #tpu.memory_space<vmem>>, %arg38: memref<12x128xf32, #tpu.memory_space<vmem>>, %arg39: memref<12x128xf32, #tpu.memory_space<vmem>>, %arg40: memref<384x512xbf16, #tpu.memory_space<vmem>>, %arg41: memref<128x512xbf16, #tpu.memory_space<vmem>>, %arg42: memref<128x128xbf16, #tpu.memory_space<vmem>>, %arg43: memref<3x!tpu.dma_semaphore, #tpu.memory_space<semaphore_mem>>) attributes {dimension_semantics = [], scalar_prefetch = 0 : i64, scratch_operands = 11 : i64, tpu.core_type = #tpu.core_type<tc>} {
    %c0_i32 = arith.constant 0 : i32
    %0 = tpu.memref_slice %arg43[%c0_i32] : memref<3x!tpu.dma_semaphore, #tpu.memory_space<semaphore_mem>> -> memref<1x!tpu.dma_semaphore, #tpu.memory_space<semaphore_mem>>
    %1 = tpu.memref_squeeze %0 : memref<1x!tpu.dma_semaphore, #tpu.memory_space<semaphore_mem>> -> memref<!tpu.dma_semaphore, #tpu.memory_space<semaphore_mem>>
    tpu.enqueue_dma source(%arg29 : memref<384x512xbf16, #tpu.memory_space<any>>) target(%arg40 : memref<384x512xbf16, #tpu.memory_space<vmem>>) target_semaphore(%1 : memref<!tpu.dma_semaphore, #tpu.memory_space<semaphore_mem>>)
    %c1_i32 = arith.constant 1 : i32
    %2 = tpu.memref_slice %arg43[%c1_i32] : memref<3x!tpu.dma_semaphore, #tpu.memory_space<semaphore_mem>> -> memref<1x!tpu.dma_semaphore, #tpu.memory_space<semaphore_mem>>
    %3 = tpu.memref_squeeze %2 : memref<1x!tpu.dma_semaphore, #tpu.memory_space<semaphore_mem>> -> memref<!tpu.dma_semaphore, #tpu.memory_space<semaphore_mem>>
    tpu.enqueue_dma source(%arg30 : memref<128x512xbf16, #tpu.memory_space<any>>) target(%arg41 : memref<128x512xbf16, #tpu.memory_space<vmem>>) target_semaphore(%3 : memref<!tpu.dma_semaphore, #tpu.memory_space<semaphore_mem>>)
    %c2_i32 = arith.constant 2 : i32
    %4 = tpu.memref_slice %arg43[%c2_i32] : memref<3x!tpu.dma_semaphore, #tpu.memory_space<semaphore_mem>> -> memref<1x!tpu.dma_semaphore, #tpu.memory_space<semaphore_mem>>
    %5 = tpu.memref_squeeze %4 : memref<1x!tpu.dma_semaphore, #tpu.memory_space<semaphore_mem>> -> memref<!tpu.dma_semaphore, #tpu.memory_space<semaphore_mem>>
    tpu.enqueue_dma source(%arg31 : memref<128x128xbf16, #tpu.memory_space<any>>) target(%arg42 : memref<128x128xbf16, #tpu.memory_space<vmem>>) target_semaphore(%5 : memref<!tpu.dma_semaphore, #tpu.memory_space<semaphore_mem>>)
    %c0 = arith.constant 0 : index
    %c0_0 = arith.constant 0 : index
    %6 = vector.load %arg0[%c0, %c0_0] : memref<12x512xf32, #tpu.memory_space<vmem>>, vector<12x512xf32>
    %7 = arith.truncf %6 : vector<12x512xf32> to vector<12x512xbf16>
    %c0_1 = arith.constant 0 : index
    %c0_2 = arith.constant 0 : index
    %8 = vector.load %arg4[%c0_1, %c0_2] : memref<512x512xbf16, #tpu.memory_space<vmem>>, vector<512x512xbf16>
    %cst = arith.constant dense<0.000000e+00> : vector<12x512xf32>
    %9 = tpu.matmul %7, %8, %cst {dimension_numbers = #tpu.dot_dimension_numbers<[1], [0], [0], [1], [0, 0, 1, 1], [], []>} : vector<12x512xbf16>, vector<512x512xbf16>, vector<12x512xf32> -> vector<12x512xf32>
    %c0_3 = arith.constant 0 : index
    %c0_4 = arith.constant 0 : index
    %10 = vector.load %arg5[%c0_3, %c0_4] : memref<1x512xf32, #tpu.memory_space<vmem>>, vector<1x512xf32>
    %11 = vector.broadcast %10 : vector<1x512xf32> to vector<12x512xf32>
    %12 = arith.addf %9, %11 : vector<12x512xf32>
    %c0_5 = arith.constant 0 : index
    %c0_6 = arith.constant 0 : index
    %13 = vector.load %arg33[%c0_5, %c0_6] : memref<12x512xf32, #tpu.memory_space<vmem>>, vector<12x512xf32>
    tpu.vector_store %arg33[%c0_5, %c0_6], %12 {strides = array<i32>} : memref<12x512xf32, #tpu.memory_space<vmem>>, vector<12x512xf32>,
    %c0_7 = arith.constant 0 : index
    %c0_8 = arith.constant 0 : index
    %14 = vector.load %arg1[%c0_7, %c0_8] : memref<2x512xf32, #tpu.memory_space<vmem>>, vector<2x512xf32>
    %15 = arith.truncf %14 : vector<2x512xf32> to vector<2x512xbf16>
    %c0_9 = arith.constant 0 : index
    %c0_10 = arith.constant 0 : index
    %16 = vector.load %arg2[%c0_9, %c0_10] : memref<512x128xbf16, #tpu.memory_space<vmem>>, vector<512x128xbf16>
    %cst_11 = arith.constant dense<0.000000e+00> : vector<2x128xf32>
    %17 = tpu.matmul %15, %16, %cst_11 {dimension_numbers = #tpu.dot_dimension_numbers<[1], [0], [0], [1], [0, 0, 1, 1], [], []>} : vector<2x512xbf16>, vector<512x128xbf16>, vector<2x128xf32> -> vector<2x128xf32>
    %c0_12 = arith.constant 0 : index
    %c0_13 = arith.constant 0 : index
    %18 = vector.load %arg3[%c0_12, %c0_13] : memref<1x128xf32, #tpu.memory_space<vmem>>, vector<1x128xf32>
    %19 = vector.broadcast %18 : vector<1x128xf32> to vector<2x128xf32>
    %20 = arith.addf %17, %19 : vector<2x128xf32>
    %c0_14 = arith.constant 0 : index
    %c0_15 = arith.constant 0 : index
    %21 = vector.load %arg9[%c0_14, %c0_15] : memref<12x128xf32, #tpu.memory_space<vmem>>, vector<12x128xf32>
    %22 = arith.truncf %21 : vector<12x128xf32> to vector<12x128xbf16>
    %c0_16 = arith.constant 0 : index
    %c0_17 = arith.constant 0 : index
    %23 = vector.load %arg13[%c0_16, %c0_17] : memref<128x512xbf16, #tpu.memory_space<vmem>>, vector<128x512xbf16>
    %cst_18 = arith.constant dense<0.000000e+00> : vector<12x512xf32>
    %24 = tpu.matmul %22, %23, %cst_18 {dimension_numbers = #tpu.dot_dimension_numbers<[1], [0], [0], [1], [0, 0, 1, 1], [], []>} : vector<12x128xbf16>, vector<128x512xbf16>, vector<12x512xf32> -> vector<12x512xf32>
    %c0_19 = arith.constant 0 : index
    %c0_20 = arith.constant 0 : index
    %25 = vector.load %arg14[%c0_19, %c0_20] : memref<1x512xf32, #tpu.memory_space<vmem>>, vector<1x512xf32>
    %26 = vector.broadcast %25 : vector<1x512xf32> to vector<12x512xf32>
    %27 = arith.addf %24, %26 : vector<12x512xf32>
    %c0_21 = arith.constant 0 : index
    %c0_22 = arith.constant 0 : index
    %28 = vector.load %arg34[%c0_21, %c0_22] : memref<12x512xf32, #tpu.memory_space<vmem>>, vector<12x512xf32>
    tpu.vector_store %arg34[%c0_21, %c0_22], %27 {strides = array<i32>} : memref<12x512xf32, #tpu.memory_space<vmem>>, vector<12x512xf32>,
    %c0_23 = arith.constant 0 : index
    %c0_24 = arith.constant 0 : index
    %29 = vector.load %arg10[%c0_23, %c0_24] : memref<2x128xf32, #tpu.memory_space<vmem>>, vector<2x128xf32>
    %30 = arith.truncf %29 : vector<2x128xf32> to vector<2x128xbf16>
    %c0_25 = arith.constant 0 : index
    %c0_26 = arith.constant 0 : index
    %31 = vector.load %arg11[%c0_25, %c0_26] : memref<128x128xbf16, #tpu.memory_space<vmem>>, vector<128x128xbf16>
    %cst_27 = arith.constant dense<0.000000e+00> : vector<2x128xf32>
    %32 = tpu.matmul %30, %31, %cst_27 {dimension_numbers = #tpu.dot_dimension_numbers<[1], [0], [0], [1], [0, 0, 1, 1], [], []>} : vector<2x128xbf16>, vector<128x128xbf16>, vector<2x128xf32> -> vector<2x128xf32>
    %c0_28 = arith.constant 0 : index
    %c0_29 = arith.constant 0 : index
    %33 = vector.load %arg12[%c0_28, %c0_29] : memref<1x128xf32, #tpu.memory_space<vmem>>, vector<1x128xf32>
    %34 = vector.broadcast %33 : vector<1x128xf32> to vector<2x128xf32>
    %35 = arith.addf %32, %34 : vector<2x128xf32>
    %c0_30 = arith.constant 0 : index
    %c0_31 = arith.constant 0 : index
    %36 = vector.load %arg18[%c0_30, %c0_31] : memref<12x128xf32, #tpu.memory_space<vmem>>, vector<12x128xf32>
    %37 = arith.truncf %36 : vector<12x128xf32> to vector<12x128xbf16>
    %c0_32 = arith.constant 0 : index
    %c0_33 = arith.constant 0 : index
    %38 = vector.load %arg22[%c0_32, %c0_33] : memref<128x512xbf16, #tpu.memory_space<vmem>>, vector<128x512xbf16>
    %cst_34 = arith.constant dense<0.000000e+00> : vector<12x512xf32>
    %39 = tpu.matmul %37, %38, %cst_34 {dimension_numbers = #tpu.dot_dimension_numbers<[1], [0], [0], [1], [0, 0, 1, 1], [], []>} : vector<12x128xbf16>, vector<128x512xbf16>, vector<12x512xf32> -> vector<12x512xf32>
    %c0_35 = arith.constant 0 : index
    %c0_36 = arith.constant 0 : index
    %40 = vector.load %arg23[%c0_35, %c0_36] : memref<1x512xf32, #tpu.memory_space<vmem>>, vector<1x512xf32>
    %41 = vector.broadcast %40 : vector<1x512xf32> to vector<12x512xf32>
    %42 = arith.addf %39, %41 : vector<12x512xf32>
    %c0_37 = arith.constant 0 : index
    %c0_38 = arith.constant 0 : index
    %43 = vector.load %arg35[%c0_37, %c0_38] : memref<12x512xf32, #tpu.memory_space<vmem>>, vector<12x512xf32>
    tpu.vector_store %arg35[%c0_37, %c0_38], %42 {strides = array<i32>} : memref<12x512xf32, #tpu.memory_space<vmem>>, vector<12x512xf32>,
    %c0_39 = arith.constant 0 : index
    %c0_40 = arith.constant 0 : index
    %44 = vector.load %arg19[%c0_39, %c0_40] : memref<2x128xf32, #tpu.memory_space<vmem>>, vector<2x128xf32>
    %45 = arith.truncf %44 : vector<2x128xf32> to vector<2x128xbf16>
    %c0_41 = arith.constant 0 : index
    %c0_42 = arith.constant 0 : index
    %46 = vector.load %arg20[%c0_41, %c0_42] : memref<128x128xbf16, #tpu.memory_space<vmem>>, vector<128x128xbf16>
    %cst_43 = arith.constant dense<0.000000e+00> : vector<2x128xf32>
    %47 = tpu.matmul %45, %46, %cst_43 {dimension_numbers = #tpu.dot_dimension_numbers<[1], [0], [0], [1], [0, 0, 1, 1], [], []>} : vector<2x128xbf16>, vector<128x128xbf16>, vector<2x128xf32> -> vector<2x128xf32>
    %c0_44 = arith.constant 0 : index
    %c0_45 = arith.constant 0 : index
    %48 = vector.load %arg21[%c0_44, %c0_45] : memref<1x128xf32, #tpu.memory_space<vmem>>, vector<1x128xf32>
    %49 = vector.broadcast %48 : vector<1x128xf32> to vector<2x128xf32>
    %50 = arith.addf %47, %49 : vector<2x128xf32>
    %cst_46 = arith.constant 0.000000e+00 : f32
    %51 = vector.broadcast %cst_46 : f32 to vector<2x128xf32>
    %c0_47 = arith.constant 0 : index
    %c0_48 = arith.constant 0 : index
    %52 = vector.load %arg33[%c0_47, %c0_48] : memref<12x512xf32, #tpu.memory_space<vmem>>, vector<2x512xf32>
    %53 = arith.truncf %51 : vector<2x128xf32> to vector<2x128xbf16>
    %c0_49 = arith.constant 0 : index
    %c0_50 = arith.constant 0 : index
    %54 = vector.load %arg6[%c0_49, %c0_50] : memref<128x512xbf16, #tpu.memory_space<vmem>>, vector<128x512xbf16>
    %cst_51 = arith.constant dense<0.000000e+00> : vector<2x512xf32>
    %55 = tpu.matmul %53, %54, %cst_51 {dimension_numbers = #tpu.dot_dimension_numbers<[1], [0], [0], [1], [0, 0, 1, 1], [], []>} : vector<2x128xbf16>, vector<128x512xbf16>, vector<2x512xf32> -> vector<2x512xf32>
    %56 = arith.addf %52, %55 : vector<2x512xf32>
    %57 = vector.extract_strided_slice %56 {offsets = [0, 0], sizes = [2, 128], strides = [1, 1]} : vector<2x512xf32> to vector<2x128xf32>
    %58 = arith.negf %57 : vector<2x128xf32>
    %59 = math.exp %58 : vector<2x128xf32>
    %cst_52 = arith.constant 1.000000e+00 : f32
    %60 = vector.broadcast %cst_52 : f32 to vector<2x128xf32>
    %61 = arith.addf %60, %59 : vector<2x128xf32>
    %62 = arith.divf %60, %61 : vector<2x128xf32>
    %63 = vector.extract_strided_slice %56 {offsets = [0, 128], sizes = [2, 128], strides = [1, 1]} : vector<2x512xf32> to vector<2x128xf32>
    %64 = arith.negf %63 : vector<2x128xf32>
    %65 = math.exp %64 : vector<2x128xf32>
    %cst_53 = arith.constant 1.000000e+00 : f32
    %66 = vector.broadcast %cst_53 : f32 to vector<2x128xf32>
    %67 = arith.addf %66, %65 : vector<2x128xf32>
    %68 = arith.divf %66, %67 : vector<2x128xf32>
    %69 = vector.extract_strided_slice %56 {offsets = [0, 256], sizes = [2, 128], strides = [1, 1]} : vector<2x512xf32> to vector<2x128xf32>
    %70 = math.tanh %69 : vector<2x128xf32>
    %71 = vector.extract_strided_slice %56 {offsets = [0, 384], sizes = [2, 128], strides = [1, 1]} : vector<2x512xf32> to vector<2x128xf32>
    %72 = arith.negf %71 : vector<2x128xf32>
    %73 = math.exp %72 : vector<2x128xf32>
    %cst_54 = arith.constant 1.000000e+00 : f32
    %74 = vector.broadcast %cst_54 : f32 to vector<2x128xf32>
    %75 = arith.addf %74, %73 : vector<2x128xf32>
    %76 = arith.divf %74, %75 : vector<2x128xf32>
    %77 = arith.mulf %68, %51 : vector<2x128xf32>
    %78 = arith.mulf %62, %70 : vector<2x128xf32>
    %79 = arith.addf %77, %78 : vector<2x128xf32>
    %80 = math.tanh %79 : vector<2x128xf32>
    %81 = arith.mulf %76, %80 : vector<2x128xf32>
    %c0_55 = arith.constant 0 : index
    %c0_56 = arith.constant 0 : index
    %82 = vector.load %arg34[%c0_55, %c0_56] : memref<12x512xf32, #tpu.memory_space<vmem>>, vector<2x512xf32>
    %83 = arith.truncf %51 : vector<2x128xf32> to vector<2x128xbf16>
    %c0_57 = arith.constant 0 : index
    %c0_58 = arith.constant 0 : index
    %84 = vector.load %arg15[%c0_57, %c0_58] : memref<128x512xbf16, #tpu.memory_space<vmem>>, vector<128x512xbf16>
    %cst_59 = arith.constant dense<0.000000e+00> : vector<2x512xf32>
    %85 = tpu.matmul %83, %84, %cst_59 {dimension_numbers = #tpu.dot_dimension_numbers<[1], [0], [0], [1], [0, 0, 1, 1], [], []>} : vector<2x128xbf16>, vector<128x512xbf16>, vector<2x512xf32> -> vector<2x512xf32>
    %86 = arith.addf %82, %85 : vector<2x512xf32>
    %87 = vector.extract_strided_slice %86 {offsets = [0, 0], sizes = [2, 128], strides = [1, 1]} : vector<2x512xf32> to vector<2x128xf32>
    %88 = arith.negf %87 : vector<2x128xf32>
    %89 = math.exp %88 : vector<2x128xf32>
    %cst_60 = arith.constant 1.000000e+00 : f32
    %90 = vector.broadcast %cst_60 : f32 to vector<2x128xf32>
    %91 = arith.addf %90, %89 : vector<2x128xf32>
    %92 = arith.divf %90, %91 : vector<2x128xf32>
    %93 = vector.extract_strided_slice %86 {offsets = [0, 128], sizes = [2, 128], strides = [1, 1]} : vector<2x512xf32> to vector<2x128xf32>
    %94 = arith.negf %93 : vector<2x128xf32>
    %95 = math.exp %94 : vector<2x128xf32>
    %cst_61 = arith.constant 1.000000e+00 : f32
    %96 = vector.broadcast %cst_61 : f32 to vector<2x128xf32>
    %97 = arith.addf %96, %95 : vector<2x128xf32>
    %98 = arith.divf %96, %97 : vector<2x128xf32>
    %99 = vector.extract_strided_slice %86 {offsets = [0, 256], sizes = [2, 128], strides = [1, 1]} : vector<2x512xf32> to vector<2x128xf32>
    %100 = math.tanh %99 : vector<2x128xf32>
    %101 = vector.extract_strided_slice %86 {offsets = [0, 384], sizes = [2, 128], strides = [1, 1]} : vector<2x512xf32> to vector<2x128xf32>
    %102 = arith.negf %101 : vector<2x128xf32>
    %103 = math.exp %102 : vector<2x128xf32>
    %cst_62 = arith.constant 1.000000e+00 : f32
    %104 = vector.broadcast %cst_62 : f32 to vector<2x128xf32>
    %105 = arith.addf %104, %103 : vector<2x128xf32>
    %106 = arith.divf %104, %105 : vector<2x128xf32>
    %107 = arith.mulf %98, %51 : vector<2x128xf32>
    %108 = arith.mulf %92, %100 : vector<2x128xf32>
    %109 = arith.addf %107, %108 : vector<2x128xf32>
    %110 = math.tanh %109 : vector<2x128xf32>
    %111 = arith.mulf %106, %110 : vector<2x128xf32>
    %c0_63 = arith.constant 0 : index
    %c0_64 = arith.constant 0 : index
    %112 = vector.load %arg35[%c0_63, %c0_64] : memref<12x512xf32, #tpu.memory_space<vmem>>, vector<2x512xf32>
    %113 = arith.truncf %51 : vector<2x128xf32> to vector<2x128xbf16>
    %c0_65 = arith.constant 0 : index
    %c0_66 = arith.constant 0 : index
    %114 = vector.load %arg24[%c0_65, %c0_66] : memref<128x512xbf16, #tpu.memory_space<vmem>>, vector<128x512xbf16>
    %cst_67 = arith.constant dense<0.000000e+00> : vector<2x512xf32>
    %115 = tpu.matmul %113, %114, %cst_67 {dimension_numbers = #tpu.dot_dimension_numbers<[1], [0], [0], [1], [0, 0, 1, 1], [], []>} : vector<2x128xbf16>, vector<128x512xbf16>, vector<2x512xf32> -> vector<2x512xf32>
    %116 = arith.addf %112, %115 : vector<2x512xf32>
    %117 = vector.extract_strided_slice %116 {offsets = [0, 0], sizes = [2, 128], strides = [1, 1]} : vector<2x512xf32> to vector<2x128xf32>
    %118 = arith.negf %117 : vector<2x128xf32>
    %119 = math.exp %118 : vector<2x128xf32>
    %cst_68 = arith.constant 1.000000e+00 : f32
    %120 = vector.broadcast %cst_68 : f32 to vector<2x128xf32>
    %121 = arith.addf %120, %119 : vector<2x128xf32>
    %122 = arith.divf %120, %121 : vector<2x128xf32>
    %123 = vector.extract_strided_slice %116 {offsets = [0, 128], sizes = [2, 128], strides = [1, 1]} : vector<2x512xf32> to vector<2x128xf32>
    %124 = arith.negf %123 : vector<2x128xf32>
    %125 = math.exp %124 : vector<2x128xf32>
    %cst_69 = arith.constant 1.000000e+00 : f32
    %126 = vector.broadcast %cst_69 : f32 to vector<2x128xf32>
    %127 = arith.addf %126, %125 : vector<2x128xf32>
    %128 = arith.divf %126, %127 : vector<2x128xf32>
    %129 = vector.extract_strided_slice %116 {offsets = [0, 256], sizes = [2, 128], strides = [1, 1]} : vector<2x512xf32> to vector<2x128xf32>
    %130 = math.tanh %129 : vector<2x128xf32>
    %131 = vector.extract_strided_slice %116 {offsets = [0, 384], sizes = [2, 128], strides = [1, 1]} : vector<2x512xf32> to vector<2x128xf32>
    %132 = arith.negf %131 : vector<2x128xf32>
    %133 = math.exp %132 : vector<2x128xf32>
    %cst_70 = arith.constant 1.000000e+00 : f32
    %134 = vector.broadcast %cst_70 : f32 to vector<2x128xf32>
    %135 = arith.addf %134, %133 : vector<2x128xf32>
    %136 = arith.divf %134, %135 : vector<2x128xf32>
    %137 = arith.mulf %128, %51 : vector<2x128xf32>
    %138 = arith.mulf %122, %130 : vector<2x128xf32>
    %139 = arith.addf %137, %138 : vector<2x128xf32>
    %140 = math.tanh %139 : vector<2x128xf32>
    %141 = arith.mulf %136, %140 : vector<2x128xf32>
    %c0_71 = arith.constant 0 : index
    %c0_72 = arith.constant 0 : index
    %142 = vector.load %arg37[%c0_71, %c0_72] : memref<12x128xf32, #tpu.memory_space<vmem>>, vector<2x128xf32>
    tpu.vector_store %arg37[%c0_71, %c0_72], %81 {strides = array<i32>} : memref<12x128xf32, #tpu.memory_space<vmem>>, vector<2x128xf32>,
    %c0_73 = arith.constant 0 : index
    %c0_74 = arith.constant 0 : index
    %143 = vector.load %arg38[%c0_73, %c0_74] : memref<12x128xf32, #tpu.memory_space<vmem>>, vector<2x128xf32>
    tpu.vector_store %arg38[%c0_73, %c0_74], %111 {strides = array<i32>} : memref<12x128xf32, #tpu.memory_space<vmem>>, vector<2x128xf32>,
    %c0_75 = arith.constant 0 : index
    %c0_76 = arith.constant 0 : index
    %144 = vector.load %arg39[%c0_75, %c0_76] : memref<12x128xf32, #tpu.memory_space<vmem>>, vector<2x128xf32>
    tpu.vector_store %arg39[%c0_75, %c0_76], %141 {strides = array<i32>} : memref<12x128xf32, #tpu.memory_space<vmem>>, vector<2x128xf32>,
    %c2 = arith.constant 2 : index
    %c0_77 = arith.constant 0 : index
    %145 = vector.load %arg33[%c2, %c0_77] : memref<12x512xf32, #tpu.memory_space<vmem>>, vector<2x512xf32>
    %146 = arith.truncf %81 : vector<2x128xf32> to vector<2x128xbf16>
    %c0_78 = arith.constant 0 : index
    %c0_79 = arith.constant 0 : index
    %147 = vector.load %arg6[%c0_78, %c0_79] : memref<128x512xbf16, #tpu.memory_space<vmem>>, vector<128x512xbf16>
    %cst_80 = arith.constant dense<0.000000e+00> : vector<2x512xf32>
    %148 = tpu.matmul %146, %147, %cst_80 {dimension_numbers = #tpu.dot_dimension_numbers<[1], [0], [0], [1], [0, 0, 1, 1], [], []>} : vector<2x128xbf16>, vector<128x512xbf16>, vector<2x512xf32> -> vector<2x512xf32>
    %149 = arith.addf %145, %148 : vector<2x512xf32>
    %150 = vector.extract_strided_slice %149 {offsets = [0, 0], sizes = [2, 128], strides = [1, 1]} : vector<2x512xf32> to vector<2x128xf32>
    %151 = arith.negf %150 : vector<2x128xf32>
    %152 = math.exp %151 : vector<2x128xf32>
    %cst_81 = arith.constant 1.000000e+00 : f32
    %153 = vector.broadcast %cst_81 : f32 to vector<2x128xf32>
    %154 = arith.addf %153, %152 : vector<2x128xf32>
    %155 = arith.divf %153, %154 : vector<2x128xf32>
    %156 = vector.extract_strided_slice %149 {offsets = [0, 128], sizes = [2, 128], strides = [1, 1]} : vector<2x512xf32> to vector<2x128xf32>
    %157 = arith.negf %156 : vector<2x128xf32>
    %158 = math.exp %157 : vector<2x128xf32>
    %cst_82 = arith.constant 1.000000e+00 : f32
    %159 = vector.broadcast %cst_82 : f32 to vector<2x128xf32>
    %160 = arith.addf %159, %158 : vector<2x128xf32>
    %161 = arith.divf %159, %160 : vector<2x128xf32>
    %162 = vector.extract_strided_slice %149 {offsets = [0, 256], sizes = [2, 128], strides = [1, 1]} : vector<2x512xf32> to vector<2x128xf32>
    %163 = math.tanh %162 : vector<2x128xf32>
    %164 = vector.extract_strided_slice %149 {offsets = [0, 384], sizes = [2, 128], strides = [1, 1]} : vector<2x512xf32> to vector<2x128xf32>
    %165 = arith.negf %164 : vector<2x128xf32>
    %166 = math.exp %165 : vector<2x128xf32>
    %cst_83 = arith.constant 1.000000e+00 : f32
    %167 = vector.broadcast %cst_83 : f32 to vector<2x128xf32>
    %168 = arith.addf %167, %166 : vector<2x128xf32>
    %169 = arith.divf %167, %168 : vector<2x128xf32>
    %170 = arith.mulf %161, %79 : vector<2x128xf32>
    %171 = arith.mulf %155, %163 : vector<2x128xf32>
    %172 = arith.addf %170, %171 : vector<2x128xf32>
    %173 = math.tanh %172 : vector<2x128xf32>
    %174 = arith.mulf %169, %173 : vector<2x128xf32>
    %c2_84 = arith.constant 2 : index
    %c0_85 = arith.constant 0 : index
    %175 = vector.load %arg34[%c2_84, %c0_85] : memref<12x512xf32, #tpu.memory_space<vmem>>, vector<2x512xf32>
    %176 = arith.truncf %111 : vector<2x128xf32> to vector<2x128xbf16>
    %c0_86 = arith.constant 0 : index
    %c0_87 = arith.constant 0 : index
    %177 = vector.load %arg15[%c0_86, %c0_87] : memref<128x512xbf16, #tpu.memory_space<vmem>>, vector<128x512xbf16>
    %cst_88 = arith.constant dense<0.000000e+00> : vector<2x512xf32>
    %178 = tpu.matmul %176, %177, %cst_88 {dimension_numbers = #tpu.dot_dimension_numbers<[1], [0], [0], [1], [0, 0, 1, 1], [], []>} : vector<2x128xbf16>, vector<128x512xbf16>, vector<2x512xf32> -> vector<2x512xf32>
    %179 = arith.addf %175, %178 : vector<2x512xf32>
    %180 = vector.extract_strided_slice %179 {offsets = [0, 0], sizes = [2, 128], strides = [1, 1]} : vector<2x512xf32> to vector<2x128xf32>
    %181 = arith.negf %180 : vector<2x128xf32>
    %182 = math.exp %181 : vector<2x128xf32>
    %cst_89 = arith.constant 1.000000e+00 : f32
    %183 = vector.broadcast %cst_89 : f32 to vector<2x128xf32>
    %184 = arith.addf %183, %182 : vector<2x128xf32>
    %185 = arith.divf %183, %184 : vector<2x128xf32>
    %186 = vector.extract_strided_slice %179 {offsets = [0, 128], sizes = [2, 128], strides = [1, 1]} : vector<2x512xf32> to vector<2x128xf32>
    %187 = arith.negf %186 : vector<2x128xf32>
    %188 = math.exp %187 : vector<2x128xf32>
    %cst_90 = arith.constant 1.000000e+00 : f32
    %189 = vector.broadcast %cst_90 : f32 to vector<2x128xf32>
    %190 = arith.addf %189, %188 : vector<2x128xf32>
    %191 = arith.divf %189, %190 : vector<2x128xf32>
    %192 = vector.extract_strided_slice %179 {offsets = [0, 256], sizes = [2, 128], strides = [1, 1]} : vector<2x512xf32> to vector<2x128xf32>
    %193 = math.tanh %192 : vector<2x128xf32>
    %194 = vector.extract_strided_slice %179 {offsets = [0, 384], sizes = [2, 128], strides = [1, 1]} : vector<2x512xf32> to vector<2x128xf32>
    %195 = arith.negf %194 : vector<2x128xf32>
    %196 = math.exp %195 : vector<2x128xf32>
    %cst_91 = arith.constant 1.000000e+00 : f32
    %197 = vector.broadcast %cst_91 : f32 to vector<2x128xf32>
    %198 = arith.addf %197, %196 : vector<2x128xf32>
    %199 = arith.divf %197, %198 : vector<2x128xf32>
    %200 = arith.mulf %191, %109 : vector<2x128xf32>
    %201 = arith.mulf %185, %193 : vector<2x128xf32>
    %202 = arith.addf %200, %201 : vector<2x128xf32>
    %203 = math.tanh %202 : vector<2x128xf32>
    %204 = arith.mulf %199, %203 : vector<2x128xf32>
    %c2_92 = arith.constant 2 : index
    %c0_93 = arith.constant 0 : index
    %205 = vector.load %arg35[%c2_92, %c0_93] : memref<12x512xf32, #tpu.memory_space<vmem>>, vector<2x512xf32>
    %206 = arith.truncf %141 : vector<2x128xf32> to vector<2x128xbf16>
    %c0_94 = arith.constant 0 : index
    %c0_95 = arith.constant 0 : index
    %207 = vector.load %arg24[%c0_94, %c0_95] : memref<128x512xbf16, #tpu.memory_space<vmem>>, vector<128x512xbf16>
    %cst_96 = arith.constant dense<0.000000e+00> : vector<2x512xf32>
    %208 = tpu.matmul %206, %207, %cst_96 {dimension_numbers = #tpu.dot_dimension_numbers<[1], [0], [0], [1], [0, 0, 1, 1], [], []>} : vector<2x128xbf16>, vector<128x512xbf16>, vector<2x512xf32> -> vector<2x512xf32>
    %209 = arith.addf %205, %208 : vector<2x512xf32>
    %210 = vector.extract_strided_slice %209 {offsets = [0, 0], sizes = [2, 128], strides = [1, 1]} : vector<2x512xf32> to vector<2x128xf32>
    %211 = arith.negf %210 : vector<2x128xf32>
    %212 = math.exp %211 : vector<2x128xf32>
    %cst_97 = arith.constant 1.000000e+00 : f32
    %213 = vector.broadcast %cst_97 : f32 to vector<2x128xf32>
    %214 = arith.addf %213, %212 : vector<2x128xf32>
    %215 = arith.divf %213, %214 : vector<2x128xf32>
    %216 = vector.extract_strided_slice %209 {offsets = [0, 128], sizes = [2, 128], strides = [1, 1]} : vector<2x512xf32> to vector<2x128xf32>
    %217 = arith.negf %216 : vector<2x128xf32>
    %218 = math.exp %217 : vector<2x128xf32>
    %cst_98 = arith.constant 1.000000e+00 : f32
    %219 = vector.broadcast %cst_98 : f32 to vector<2x128xf32>
    %220 = arith.addf %219, %218 : vector<2x128xf32>
    %221 = arith.divf %219, %220 : vector<2x128xf32>
    %222 = vector.extract_strided_slice %209 {offsets = [0, 256], sizes = [2, 128], strides = [1, 1]} : vector<2x512xf32> to vector<2x128xf32>
    %223 = math.tanh %222 : vector<2x128xf32>
    %224 = vector.extract_strided_slice %209 {offsets = [0, 384], sizes = [2, 128], strides = [1, 1]} : vector<2x512xf32> to vector<2x128xf32>
    %225 = arith.negf %224 : vector<2x128xf32>
    %226 = math.exp %225 : vector<2x128xf32>
    %cst_99 = arith.constant 1.000000e+00 : f32
    %227 = vector.broadcast %cst_99 : f32 to vector<2x128xf32>
    %228 = arith.addf %227, %226 : vector<2x128xf32>
    %229 = arith.divf %227, %228 : vector<2x128xf32>
    %230 = arith.mulf %221, %139 : vector<2x128xf32>
    %231 = arith.mulf %215, %223 : vector<2x128xf32>
    %232 = arith.addf %230, %231 : vector<2x128xf32>
    %233 = math.tanh %232 : vector<2x128xf32>
    %234 = arith.mulf %229, %233 : vector<2x128xf32>
    %c2_100 = arith.constant 2 : index
    %c0_101 = arith.constant 0 : index
    %235 = vector.load %arg37[%c2_100, %c0_101] : memref<12x128xf32, #tpu.memory_space<vmem>>, vector<2x128xf32>
    tpu.vector_store %arg37[%c2_100, %c0_101], %174 {strides = array<i32>} : memref<12x128xf32, #tpu.memory_space<vmem>>, vector<2x128xf32>,
    %c2_102 = arith.constant 2 : index
    %c0_103 = arith.constant 0 : index
    %236 = vector.load %arg38[%c2_102, %c0_103] : memref<12x128xf32, #tpu.memory_space<vmem>>, vector<2x128xf32>
    tpu.vector_store %arg38[%c2_102, %c0_103], %204 {strides = array<i32>} : memref<12x128xf32, #tpu.memory_space<vmem>>, vector<2x128xf32>,
    %c2_104 = arith.constant 2 : index
    %c0_105 = arith.constant 0 : index
    %237 = vector.load %arg39[%c2_104, %c0_105] : memref<12x128xf32, #tpu.memory_space<vmem>>, vector<2x128xf32>
    tpu.vector_store %arg39[%c2_104, %c0_105], %234 {strides = array<i32>} : memref<12x128xf32, #tpu.memory_space<vmem>>, vector<2x128xf32>,
    %c4 = arith.constant 4 : index
    %c0_106 = arith.constant 0 : index
    %238 = vector.load %arg33[%c4, %c0_106] : memref<12x512xf32, #tpu.memory_space<vmem>>, vector<2x512xf32>
    %239 = arith.truncf %174 : vector<2x128xf32> to vector<2x128xbf16>
    %c0_107 = arith.constant 0 : index
    %c0_108 = arith.constant 0 : index
    %240 = vector.load %arg6[%c0_107, %c0_108] : memref<128x512xbf16, #tpu.memory_space<vmem>>, vector<128x512xbf16>
    %cst_109 = arith.constant dense<0.000000e+00> : vector<2x512xf32>
    %241 = tpu.matmul %239, %240, %cst_109 {dimension_numbers = #tpu.dot_dimension_numbers<[1], [0], [0], [1], [0, 0, 1, 1], [], []>} : vector<2x128xbf16>, vector<128x512xbf16>, vector<2x512xf32> -> vector<2x512xf32>
    %242 = arith.addf %238, %241 : vector<2x512xf32>
    %243 = vector.extract_strided_slice %242 {offsets = [0, 0], sizes = [2, 128], strides = [1, 1]} : vector<2x512xf32> to vector<2x128xf32>
    %244 = arith.negf %243 : vector<2x128xf32>
    %245 = math.exp %244 : vector<2x128xf32>
    %cst_110 = arith.constant 1.000000e+00 : f32
    %246 = vector.broadcast %cst_110 : f32 to vector<2x128xf32>
    %247 = arith.addf %246, %245 : vector<2x128xf32>
    %248 = arith.divf %246, %247 : vector<2x128xf32>
    %249 = vector.extract_strided_slice %242 {offsets = [0, 128], sizes = [2, 128], strides = [1, 1]} : vector<2x512xf32> to vector<2x128xf32>
    %250 = arith.negf %249 : vector<2x128xf32>
    %251 = math.exp %250 : vector<2x128xf32>
    %cst_111 = arith.constant 1.000000e+00 : f32
    %252 = vector.broadcast %cst_111 : f32 to vector<2x128xf32>
    %253 = arith.addf %252, %251 : vector<2x128xf32>
    %254 = arith.divf %252, %253 : vector<2x128xf32>
    %255 = vector.extract_strided_slice %242 {offsets = [0, 256], sizes = [2, 128], strides = [1, 1]} : vector<2x512xf32> to vector<2x128xf32>
    %256 = math.tanh %255 : vector<2x128xf32>
    %257 = vector.extract_strided_slice %242 {offsets = [0, 384], sizes = [2, 128], strides = [1, 1]} : vector<2x512xf32> to vector<2x128xf32>
    %258 = arith.negf %257 : vector<2x128xf32>
    %259 = math.exp %258 : vector<2x128xf32>
    %cst_112 = arith.constant 1.000000e+00 : f32
    %260 = vector.broadcast %cst_112 : f32 to vector<2x128xf32>
    %261 = arith.addf %260, %259 : vector<2x128xf32>
    %262 = arith.divf %260, %261 : vector<2x128xf32>
    %263 = arith.mulf %254, %172 : vector<2x128xf32>
    %264 = arith.mulf %248, %256 : vector<2x128xf32>
    %265 = arith.addf %263, %264 : vector<2x128xf32>
    %266 = math.tanh %265 : vector<2x128xf32>
    %267 = arith.mulf %262, %266 : vector<2x128xf32>
    %c4_113 = arith.constant 4 : index
    %c0_114 = arith.constant 0 : index
    %268 = vector.load %arg34[%c4_113, %c0_114] : memref<12x512xf32, #tpu.memory_space<vmem>>, vector<2x512xf32>
    %269 = arith.truncf %204 : vector<2x128xf32> to vector<2x128xbf16>
    %c0_115 = arith.constant 0 : index
    %c0_116 = arith.constant 0 : index
    %270 = vector.load %arg15[%c0_115, %c0_116] : memref<128x512xbf16, #tpu.memory_space<vmem>>, vector<128x512xbf16>
    %cst_117 = arith.constant dense<0.000000e+00> : vector<2x512xf32>
    %271 = tpu.matmul %269, %270, %cst_117 {dimension_numbers = #tpu.dot_dimension_numbers<[1], [0], [0], [1], [0, 0, 1, 1], [], []>} : vector<2x128xbf16>, vector<128x512xbf16>, vector<2x512xf32> -> vector<2x512xf32>
    %272 = arith.addf %268, %271 : vector<2x512xf32>
    %273 = vector.extract_strided_slice %272 {offsets = [0, 0], sizes = [2, 128], strides = [1, 1]} : vector<2x512xf32> to vector<2x128xf32>
    %274 = arith.negf %273 : vector<2x128xf32>
    %275 = math.exp %274 : vector<2x128xf32>
    %cst_118 = arith.constant 1.000000e+00 : f32
    %276 = vector.broadcast %cst_118 : f32 to vector<2x128xf32>
    %277 = arith.addf %276, %275 : vector<2x128xf32>
    %278 = arith.divf %276, %277 : vector<2x128xf32>
    %279 = vector.extract_strided_slice %272 {offsets = [0, 128], sizes = [2, 128], strides = [1, 1]} : vector<2x512xf32> to vector<2x128xf32>
    %280 = arith.negf %279 : vector<2x128xf32>
    %281 = math.exp %280 : vector<2x128xf32>
    %cst_119 = arith.constant 1.000000e+00 : f32
    %282 = vector.broadcast %cst_119 : f32 to vector<2x128xf32>
    %283 = arith.addf %282, %281 : vector<2x128xf32>
    %284 = arith.divf %282, %283 : vector<2x128xf32>
    %285 = vector.extract_strided_slice %272 {offsets = [0, 256], sizes = [2, 128], strides = [1, 1]} : vector<2x512xf32> to vector<2x128xf32>
    %286 = math.tanh %285 : vector<2x128xf32>
    %287 = vector.extract_strided_slice %272 {offsets = [0, 384], sizes = [2, 128], strides = [1, 1]} : vector<2x512xf32> to vector<2x128xf32>
    %288 = arith.negf %287 : vector<2x128xf32>
    %289 = math.exp %288 : vector<2x128xf32>
    %cst_120 = arith.constant 1.000000e+00 : f32
    %290 = vector.broadcast %cst_120 : f32 to vector<2x128xf32>
    %291 = arith.addf %290, %289 : vector<2x128xf32>
    %292 = arith.divf %290, %291 : vector<2x128xf32>
    %293 = arith.mulf %284, %202 : vector<2x128xf32>
    %294 = arith.mulf %278, %286 : vector<2x128xf32>
    %295 = arith.addf %293, %294 : vector<2x128xf32>
    %296 = math.tanh %295 : vector<2x128xf32>
    %297 = arith.mulf %292, %296 : vector<2x128xf32>
    %c4_121 = arith.constant 4 : index
    %c0_122 = arith.constant 0 : index
    %298 = vector.load %arg35[%c4_121, %c0_122] : memref<12x512xf32, #tpu.memory_space<vmem>>, vector<2x512xf32>
    %299 = arith.truncf %234 : vector<2x128xf32> to vector<2x128xbf16>
    %c0_123 = arith.constant 0 : index
    %c0_124 = arith.constant 0 : index
    %300 = vector.load %arg24[%c0_123, %c0_124] : memref<128x512xbf16, #tpu.memory_space<vmem>>, vector<128x512xbf16>
    %cst_125 = arith.constant dense<0.000000e+00> : vector<2x512xf32>
    %301 = tpu.matmul %299, %300, %cst_125 {dimension_numbers = #tpu.dot_dimension_numbers<[1], [0], [0], [1], [0, 0, 1, 1], [], []>} : vector<2x128xbf16>, vector<128x512xbf16>, vector<2x512xf32> -> vector<2x512xf32>
    %302 = arith.addf %298, %301 : vector<2x512xf32>
    %303 = vector.extract_strided_slice %302 {offsets = [0, 0], sizes = [2, 128], strides = [1, 1]} : vector<2x512xf32> to vector<2x128xf32>
    %304 = arith.negf %303 : vector<2x128xf32>
    %305 = math.exp %304 : vector<2x128xf32>
    %cst_126 = arith.constant 1.000000e+00 : f32
    %306 = vector.broadcast %cst_126 : f32 to vector<2x128xf32>
    %307 = arith.addf %306, %305 : vector<2x128xf32>
    %308 = arith.divf %306, %307 : vector<2x128xf32>
    %309 = vector.extract_strided_slice %302 {offsets = [0, 128], sizes = [2, 128], strides = [1, 1]} : vector<2x512xf32> to vector<2x128xf32>
    %310 = arith.negf %309 : vector<2x128xf32>
    %311 = math.exp %310 : vector<2x128xf32>
    %cst_127 = arith.constant 1.000000e+00 : f32
    %312 = vector.broadcast %cst_127 : f32 to vector<2x128xf32>
    %313 = arith.addf %312, %311 : vector<2x128xf32>
    %314 = arith.divf %312, %313 : vector<2x128xf32>
    %315 = vector.extract_strided_slice %302 {offsets = [0, 256], sizes = [2, 128], strides = [1, 1]} : vector<2x512xf32> to vector<2x128xf32>
    %316 = math.tanh %315 : vector<2x128xf32>
    %317 = vector.extract_strided_slice %302 {offsets = [0, 384], sizes = [2, 128], strides = [1, 1]} : vector<2x512xf32> to vector<2x128xf32>
    %318 = arith.negf %317 : vector<2x128xf32>
    %319 = math.exp %318 : vector<2x128xf32>
    %cst_128 = arith.constant 1.000000e+00 : f32
    %320 = vector.broadcast %cst_128 : f32 to vector<2x128xf32>
    %321 = arith.addf %320, %319 : vector<2x128xf32>
    %322 = arith.divf %320, %321 : vector<2x128xf32>
    %323 = arith.mulf %314, %232 : vector<2x128xf32>
    %324 = arith.mulf %308, %316 : vector<2x128xf32>
    %325 = arith.addf %323, %324 : vector<2x128xf32>
    %326 = math.tanh %325 : vector<2x128xf32>
    %327 = arith.mulf %322, %326 : vector<2x128xf32>
    %c4_129 = arith.constant 4 : index
    %c0_130 = arith.constant 0 : index
    %328 = vector.load %arg37[%c4_129, %c0_130] : memref<12x128xf32, #tpu.memory_space<vmem>>, vector<2x128xf32>
    tpu.vector_store %arg37[%c4_129, %c0_130], %267 {strides = array<i32>} : memref<12x128xf32, #tpu.memory_space<vmem>>, vector<2x128xf32>,
    %c4_131 = arith.constant 4 : index
    %c0_132 = arith.constant 0 : index
    %329 = vector.load %arg38[%c4_131, %c0_132] : memref<12x128xf32, #tpu.memory_space<vmem>>, vector<2x128xf32>
    tpu.vector_store %arg38[%c4_131, %c0_132], %297 {strides = array<i32>} : memref<12x128xf32, #tpu.memory_space<vmem>>, vector<2x128xf32>,
    %c4_133 = arith.constant 4 : index
    %c0_134 = arith.constant 0 : index
    %330 = vector.load %arg39[%c4_133, %c0_134] : memref<12x128xf32, #tpu.memory_space<vmem>>, vector<2x128xf32>
    tpu.vector_store %arg39[%c4_133, %c0_134], %327 {strides = array<i32>} : memref<12x128xf32, #tpu.memory_space<vmem>>, vector<2x128xf32>,
    %c6 = arith.constant 6 : index
    %c0_135 = arith.constant 0 : index
    %331 = vector.load %arg33[%c6, %c0_135] : memref<12x512xf32, #tpu.memory_space<vmem>>, vector<2x512xf32>
    %332 = arith.truncf %267 : vector<2x128xf32> to vector<2x128xbf16>
    %c0_136 = arith.constant 0 : index
    %c0_137 = arith.constant 0 : index
    %333 = vector.load %arg6[%c0_136, %c0_137] : memref<128x512xbf16, #tpu.memory_space<vmem>>, vector<128x512xbf16>
    %cst_138 = arith.constant dense<0.000000e+00> : vector<2x512xf32>
    %334 = tpu.matmul %332, %333, %cst_138 {dimension_numbers = #tpu.dot_dimension_numbers<[1], [0], [0], [1], [0, 0, 1, 1], [], []>} : vector<2x128xbf16>, vector<128x512xbf16>, vector<2x512xf32> -> vector<2x512xf32>
    %335 = arith.addf %331, %334 : vector<2x512xf32>
    %336 = vector.extract_strided_slice %335 {offsets = [0, 0], sizes = [2, 128], strides = [1, 1]} : vector<2x512xf32> to vector<2x128xf32>
    %337 = arith.negf %336 : vector<2x128xf32>
    %338 = math.exp %337 : vector<2x128xf32>
    %cst_139 = arith.constant 1.000000e+00 : f32
    %339 = vector.broadcast %cst_139 : f32 to vector<2x128xf32>
    %340 = arith.addf %339, %338 : vector<2x128xf32>
    %341 = arith.divf %339, %340 : vector<2x128xf32>
    %342 = vector.extract_strided_slice %335 {offsets = [0, 128], sizes = [2, 128], strides = [1, 1]} : vector<2x512xf32> to vector<2x128xf32>
    %343 = arith.negf %342 : vector<2x128xf32>
    %344 = math.exp %343 : vector<2x128xf32>
    %cst_140 = arith.constant 1.000000e+00 : f32
    %345 = vector.broadcast %cst_140 : f32 to vector<2x128xf32>
    %346 = arith.addf %345, %344 : vector<2x128xf32>
    %347 = arith.divf %345, %346 : vector<2x128xf32>
    %348 = vector.extract_strided_slice %335 {offsets = [0, 256], sizes = [2, 128], strides = [1, 1]} : vector<2x512xf32> to vector<2x128xf32>
    %349 = math.tanh %348 : vector<2x128xf32>
    %350 = vector.extract_strided_slice %335 {offsets = [0, 384], sizes = [2, 128], strides = [1, 1]} : vector<2x512xf32> to vector<2x128xf32>
    %351 = arith.negf %350 : vector<2x128xf32>
    %352 = math.exp %351 : vector<2x128xf32>
    %cst_141 = arith.constant 1.000000e+00 : f32
    %353 = vector.broadcast %cst_141 : f32 to vector<2x128xf32>
    %354 = arith.addf %353, %352 : vector<2x128xf32>
    %355 = arith.divf %353, %354 : vector<2x128xf32>
    %356 = arith.mulf %347, %265 : vector<2x128xf32>
    %357 = arith.mulf %341, %349 : vector<2x128xf32>
    %358 = arith.addf %356, %357 : vector<2x128xf32>
    %359 = math.tanh %358 : vector<2x128xf32>
    %360 = arith.mulf %355, %359 : vector<2x128xf32>
    %c6_142 = arith.constant 6 : index
    %c0_143 = arith.constant 0 : index
    %361 = vector.load %arg34[%c6_142, %c0_143] : memref<12x512xf32, #tpu.memory_space<vmem>>, vector<2x512xf32>
    %362 = arith.truncf %297 : vector<2x128xf32> to vector<2x128xbf16>
    %c0_144 = arith.constant 0 : index
    %c0_145 = arith.constant 0 : index
    %363 = vector.load %arg15[%c0_144, %c0_145] : memref<128x512xbf16, #tpu.memory_space<vmem>>, vector<128x512xbf16>
    %cst_146 = arith.constant dense<0.000000e+00> : vector<2x512xf32>
    %364 = tpu.matmul %362, %363, %cst_146 {dimension_numbers = #tpu.dot_dimension_numbers<[1], [0], [0], [1], [0, 0, 1, 1], [], []>} : vector<2x128xbf16>, vector<128x512xbf16>, vector<2x512xf32> -> vector<2x512xf32>
    %365 = arith.addf %361, %364 : vector<2x512xf32>
    %366 = vector.extract_strided_slice %365 {offsets = [0, 0], sizes = [2, 128], strides = [1, 1]} : vector<2x512xf32> to vector<2x128xf32>
    %367 = arith.negf %366 : vector<2x128xf32>
    %368 = math.exp %367 : vector<2x128xf32>
    %cst_147 = arith.constant 1.000000e+00 : f32
    %369 = vector.broadcast %cst_147 : f32 to vector<2x128xf32>
    %370 = arith.addf %369, %368 : vector<2x128xf32>
    %371 = arith.divf %369, %370 : vector<2x128xf32>
    %372 = vector.extract_strided_slice %365 {offsets = [0, 128], sizes = [2, 128], strides = [1, 1]} : vector<2x512xf32> to vector<2x128xf32>
    %373 = arith.negf %372 : vector<2x128xf32>
    %374 = math.exp %373 : vector<2x128xf32>
    %cst_148 = arith.constant 1.000000e+00 : f32
    %375 = vector.broadcast %cst_148 : f32 to vector<2x128xf32>
    %376 = arith.addf %375, %374 : vector<2x128xf32>
    %377 = arith.divf %375, %376 : vector<2x128xf32>
    %378 = vector.extract_strided_slice %365 {offsets = [0, 256], sizes = [2, 128], strides = [1, 1]} : vector<2x512xf32> to vector<2x128xf32>
    %379 = math.tanh %378 : vector<2x128xf32>
    %380 = vector.extract_strided_slice %365 {offsets = [0, 384], sizes = [2, 128], strides = [1, 1]} : vector<2x512xf32> to vector<2x128xf32>
    %381 = arith.negf %380 : vector<2x128xf32>
    %382 = math.exp %381 : vector<2x128xf32>
    %cst_149 = arith.constant 1.000000e+00 : f32
    %383 = vector.broadcast %cst_149 : f32 to vector<2x128xf32>
    %384 = arith.addf %383, %382 : vector<2x128xf32>
    %385 = arith.divf %383, %384 : vector<2x128xf32>
    %386 = arith.mulf %377, %295 : vector<2x128xf32>
    %387 = arith.mulf %371, %379 : vector<2x128xf32>
    %388 = arith.addf %386, %387 : vector<2x128xf32>
    %389 = math.tanh %388 : vector<2x128xf32>
    %390 = arith.mulf %385, %389 : vector<2x128xf32>
    %c6_150 = arith.constant 6 : index
    %c0_151 = arith.constant 0 : index
    %391 = vector.load %arg35[%c6_150, %c0_151] : memref<12x512xf32, #tpu.memory_space<vmem>>, vector<2x512xf32>
    %392 = arith.truncf %327 : vector<2x128xf32> to vector<2x128xbf16>
    %c0_152 = arith.constant 0 : index
    %c0_153 = arith.constant 0 : index
    %393 = vector.load %arg24[%c0_152, %c0_153] : memref<128x512xbf16, #tpu.memory_space<vmem>>, vector<128x512xbf16>
    %cst_154 = arith.constant dense<0.000000e+00> : vector<2x512xf32>
    %394 = tpu.matmul %392, %393, %cst_154 {dimension_numbers = #tpu.dot_dimension_numbers<[1], [0], [0], [1], [0, 0, 1, 1], [], []>} : vector<2x128xbf16>, vector<128x512xbf16>, vector<2x512xf32> -> vector<2x512xf32>
    %395 = arith.addf %391, %394 : vector<2x512xf32>
    %396 = vector.extract_strided_slice %395 {offsets = [0, 0], sizes = [2, 128], strides = [1, 1]} : vector<2x512xf32> to vector<2x128xf32>
    %397 = arith.negf %396 : vector<2x128xf32>
    %398 = math.exp %397 : vector<2x128xf32>
    %cst_155 = arith.constant 1.000000e+00 : f32
    %399 = vector.broadcast %cst_155 : f32 to vector<2x128xf32>
    %400 = arith.addf %399, %398 : vector<2x128xf32>
    %401 = arith.divf %399, %400 : vector<2x128xf32>
    %402 = vector.extract_strided_slice %395 {offsets = [0, 128], sizes = [2, 128], strides = [1, 1]} : vector<2x512xf32> to vector<2x128xf32>
    %403 = arith.negf %402 : vector<2x128xf32>
    %404 = math.exp %403 : vector<2x128xf32>
    %cst_156 = arith.constant 1.000000e+00 : f32
    %405 = vector.broadcast %cst_156 : f32 to vector<2x128xf32>
    %406 = arith.addf %405, %404 : vector<2x128xf32>
    %407 = arith.divf %405, %406 : vector<2x128xf32>
    %408 = vector.extract_strided_slice %395 {offsets = [0, 256], sizes = [2, 128], strides = [1, 1]} : vector<2x512xf32> to vector<2x128xf32>
    %409 = math.tanh %408 : vector<2x128xf32>
    %410 = vector.extract_strided_slice %395 {offsets = [0, 384], sizes = [2, 128], strides = [1, 1]} : vector<2x512xf32> to vector<2x128xf32>
    %411 = arith.negf %410 : vector<2x128xf32>
    %412 = math.exp %411 : vector<2x128xf32>
    %cst_157 = arith.constant 1.000000e+00 : f32
    %413 = vector.broadcast %cst_157 : f32 to vector<2x128xf32>
    %414 = arith.addf %413, %412 : vector<2x128xf32>
    %415 = arith.divf %413, %414 : vector<2x128xf32>
    %416 = arith.mulf %407, %325 : vector<2x128xf32>
    %417 = arith.mulf %401, %409 : vector<2x128xf32>
    %418 = arith.addf %416, %417 : vector<2x128xf32>
    %419 = math.tanh %418 : vector<2x128xf32>
    %420 = arith.mulf %415, %419 : vector<2x128xf32>
    %c6_158 = arith.constant 6 : index
    %c0_159 = arith.constant 0 : index
    %421 = vector.load %arg37[%c6_158, %c0_159] : memref<12x128xf32, #tpu.memory_space<vmem>>, vector<2x128xf32>
    tpu.vector_store %arg37[%c6_158, %c0_159], %360 {strides = array<i32>} : memref<12x128xf32, #tpu.memory_space<vmem>>, vector<2x128xf32>,
    %c6_160 = arith.constant 6 : index
    %c0_161 = arith.constant 0 : index
    %422 = vector.load %arg38[%c6_160, %c0_161] : memref<12x128xf32, #tpu.memory_space<vmem>>, vector<2x128xf32>
    tpu.vector_store %arg38[%c6_160, %c0_161], %390 {strides = array<i32>} : memref<12x128xf32, #tpu.memory_space<vmem>>, vector<2x128xf32>,
    %c6_162 = arith.constant 6 : index
    %c0_163 = arith.constant 0 : index
    %423 = vector.load %arg39[%c6_162, %c0_163] : memref<12x128xf32, #tpu.memory_space<vmem>>, vector<2x128xf32>
    tpu.vector_store %arg39[%c6_162, %c0_163], %420 {strides = array<i32>} : memref<12x128xf32, #tpu.memory_space<vmem>>, vector<2x128xf32>,
    %c8 = arith.constant 8 : index
    %c0_164 = arith.constant 0 : index
    %424 = vector.load %arg33[%c8, %c0_164] : memref<12x512xf32, #tpu.memory_space<vmem>>, vector<2x512xf32>
    %425 = arith.truncf %360 : vector<2x128xf32> to vector<2x128xbf16>
    %c0_165 = arith.constant 0 : index
    %c0_166 = arith.constant 0 : index
    %426 = vector.load %arg6[%c0_165, %c0_166] : memref<128x512xbf16, #tpu.memory_space<vmem>>, vector<128x512xbf16>
    %cst_167 = arith.constant dense<0.000000e+00> : vector<2x512xf32>
    %427 = tpu.matmul %425, %426, %cst_167 {dimension_numbers = #tpu.dot_dimension_numbers<[1], [0], [0], [1], [0, 0, 1, 1], [], []>} : vector<2x128xbf16>, vector<128x512xbf16>, vector<2x512xf32> -> vector<2x512xf32>
    %428 = arith.addf %424, %427 : vector<2x512xf32>
    %429 = vector.extract_strided_slice %428 {offsets = [0, 0], sizes = [2, 128], strides = [1, 1]} : vector<2x512xf32> to vector<2x128xf32>
    %430 = arith.negf %429 : vector<2x128xf32>
    %431 = math.exp %430 : vector<2x128xf32>
    %cst_168 = arith.constant 1.000000e+00 : f32
    %432 = vector.broadcast %cst_168 : f32 to vector<2x128xf32>
    %433 = arith.addf %432, %431 : vector<2x128xf32>
    %434 = arith.divf %432, %433 : vector<2x128xf32>
    %435 = vector.extract_strided_slice %428 {offsets = [0, 128], sizes = [2, 128], strides = [1, 1]} : vector<2x512xf32> to vector<2x128xf32>
    %436 = arith.negf %435 : vector<2x128xf32>
    %437 = math.exp %436 : vector<2x128xf32>
    %cst_169 = arith.constant 1.000000e+00 : f32
    %438 = vector.broadcast %cst_169 : f32 to vector<2x128xf32>
    %439 = arith.addf %438, %437 : vector<2x128xf32>
    %440 = arith.divf %438, %439 : vector<2x128xf32>
    %441 = vector.extract_strided_slice %428 {offsets = [0, 256], sizes = [2, 128], strides = [1, 1]} : vector<2x512xf32> to vector<2x128xf32>
    %442 = math.tanh %441 : vector<2x128xf32>
    %443 = vector.extract_strided_slice %428 {offsets = [0, 384], sizes = [2, 128], strides = [1, 1]} : vector<2x512xf32> to vector<2x128xf32>
    %444 = arith.negf %443 : vector<2x128xf32>
    %445 = math.exp %444 : vector<2x128xf32>
    %cst_170 = arith.constant 1.000000e+00 : f32
    %446 = vector.broadcast %cst_170 : f32 to vector<2x128xf32>
    %447 = arith.addf %446, %445 : vector<2x128xf32>
    %448 = arith.divf %446, %447 : vector<2x128xf32>
    %449 = arith.mulf %440, %358 : vector<2x128xf32>
    %450 = arith.mulf %434, %442 : vector<2x128xf32>
    %451 = arith.addf %449, %450 : vector<2x128xf32>
    %452 = math.tanh %451 : vector<2x128xf32>
    %453 = arith.mulf %448, %452 : vector<2x128xf32>
    %c8_171 = arith.constant 8 : index
    %c0_172 = arith.constant 0 : index
    %454 = vector.load %arg34[%c8_171, %c0_172] : memref<12x512xf32, #tpu.memory_space<vmem>>, vector<2x512xf32>
    %455 = arith.truncf %390 : vector<2x128xf32> to vector<2x128xbf16>
    %c0_173 = arith.constant 0 : index
    %c0_174 = arith.constant 0 : index
    %456 = vector.load %arg15[%c0_173, %c0_174] : memref<128x512xbf16, #tpu.memory_space<vmem>>, vector<128x512xbf16>
    %cst_175 = arith.constant dense<0.000000e+00> : vector<2x512xf32>
    %457 = tpu.matmul %455, %456, %cst_175 {dimension_numbers = #tpu.dot_dimension_numbers<[1], [0], [0], [1], [0, 0, 1, 1], [], []>} : vector<2x128xbf16>, vector<128x512xbf16>, vector<2x512xf32> -> vector<2x512xf32>
    %458 = arith.addf %454, %457 : vector<2x512xf32>
    %459 = vector.extract_strided_slice %458 {offsets = [0, 0], sizes = [2, 128], strides = [1, 1]} : vector<2x512xf32> to vector<2x128xf32>
    %460 = arith.negf %459 : vector<2x128xf32>
    %461 = math.exp %460 : vector<2x128xf32>
    %cst_176 = arith.constant 1.000000e+00 : f32
    %462 = vector.broadcast %cst_176 : f32 to vector<2x128xf32>
    %463 = arith.addf %462, %461 : vector<2x128xf32>
    %464 = arith.divf %462, %463 : vector<2x128xf32>
    %465 = vector.extract_strided_slice %458 {offsets = [0, 128], sizes = [2, 128], strides = [1, 1]} : vector<2x512xf32> to vector<2x128xf32>
    %466 = arith.negf %465 : vector<2x128xf32>
    %467 = math.exp %466 : vector<2x128xf32>
    %cst_177 = arith.constant 1.000000e+00 : f32
    %468 = vector.broadcast %cst_177 : f32 to vector<2x128xf32>
    %469 = arith.addf %468, %467 : vector<2x128xf32>
    %470 = arith.divf %468, %469 : vector<2x128xf32>
    %471 = vector.extract_strided_slice %458 {offsets = [0, 256], sizes = [2, 128], strides = [1, 1]} : vector<2x512xf32> to vector<2x128xf32>
    %472 = math.tanh %471 : vector<2x128xf32>
    %473 = vector.extract_strided_slice %458 {offsets = [0, 384], sizes = [2, 128], strides = [1, 1]} : vector<2x512xf32> to vector<2x128xf32>
    %474 = arith.negf %473 : vector<2x128xf32>
    %475 = math.exp %474 : vector<2x128xf32>
    %cst_178 = arith.constant 1.000000e+00 : f32
    %476 = vector.broadcast %cst_178 : f32 to vector<2x128xf32>
    %477 = arith.addf %476, %475 : vector<2x128xf32>
    %478 = arith.divf %476, %477 : vector<2x128xf32>
    %479 = arith.mulf %470, %388 : vector<2x128xf32>
    %480 = arith.mulf %464, %472 : vector<2x128xf32>
    %481 = arith.addf %479, %480 : vector<2x128xf32>
    %482 = math.tanh %481 : vector<2x128xf32>
    %483 = arith.mulf %478, %482 : vector<2x128xf32>
    %c8_179 = arith.constant 8 : index
    %c0_180 = arith.constant 0 : index
    %484 = vector.load %arg35[%c8_179, %c0_180] : memref<12x512xf32, #tpu.memory_space<vmem>>, vector<2x512xf32>
    %485 = arith.truncf %420 : vector<2x128xf32> to vector<2x128xbf16>
    %c0_181 = arith.constant 0 : index
    %c0_182 = arith.constant 0 : index
    %486 = vector.load %arg24[%c0_181, %c0_182] : memref<128x512xbf16, #tpu.memory_space<vmem>>, vector<128x512xbf16>
    %cst_183 = arith.constant dense<0.000000e+00> : vector<2x512xf32>
    %487 = tpu.matmul %485, %486, %cst_183 {dimension_numbers = #tpu.dot_dimension_numbers<[1], [0], [0], [1], [0, 0, 1, 1], [], []>} : vector<2x128xbf16>, vector<128x512xbf16>, vector<2x512xf32> -> vector<2x512xf32>
    %488 = arith.addf %484, %487 : vector<2x512xf32>
    %489 = vector.extract_strided_slice %488 {offsets = [0, 0], sizes = [2, 128], strides = [1, 1]} : vector<2x512xf32> to vector<2x128xf32>
    %490 = arith.negf %489 : vector<2x128xf32>
    %491 = math.exp %490 : vector<2x128xf32>
    %cst_184 = arith.constant 1.000000e+00 : f32
    %492 = vector.broadcast %cst_184 : f32 to vector<2x128xf32>
    %493 = arith.addf %492, %491 : vector<2x128xf32>
    %494 = arith.divf %492, %493 : vector<2x128xf32>
    %495 = vector.extract_strided_slice %488 {offsets = [0, 128], sizes = [2, 128], strides = [1, 1]} : vector<2x512xf32> to vector<2x128xf32>
    %496 = arith.negf %495 : vector<2x128xf32>
    %497 = math.exp %496 : vector<2x128xf32>
    %cst_185 = arith.constant 1.000000e+00 : f32
    %498 = vector.broadcast %cst_185 : f32 to vector<2x128xf32>
    %499 = arith.addf %498, %497 : vector<2x128xf32>
    %500 = arith.divf %498, %499 : vector<2x128xf32>
    %501 = vector.extract_strided_slice %488 {offsets = [0, 256], sizes = [2, 128], strides = [1, 1]} : vector<2x512xf32> to vector<2x128xf32>
    %502 = math.tanh %501 : vector<2x128xf32>
    %503 = vector.extract_strided_slice %488 {offsets = [0, 384], sizes = [2, 128], strides = [1, 1]} : vector<2x512xf32> to vector<2x128xf32>
    %504 = arith.negf %503 : vector<2x128xf32>
    %505 = math.exp %504 : vector<2x128xf32>
    %cst_186 = arith.constant 1.000000e+00 : f32
    %506 = vector.broadcast %cst_186 : f32 to vector<2x128xf32>
    %507 = arith.addf %506, %505 : vector<2x128xf32>
    %508 = arith.divf %506, %507 : vector<2x128xf32>
    %509 = arith.mulf %500, %418 : vector<2x128xf32>
    %510 = arith.mulf %494, %502 : vector<2x128xf32>
    %511 = arith.addf %509, %510 : vector<2x128xf32>
    %512 = math.tanh %511 : vector<2x128xf32>
    %513 = arith.mulf %508, %512 : vector<2x128xf32>
    %c8_187 = arith.constant 8 : index
    %c0_188 = arith.constant 0 : index
    %514 = vector.load %arg37[%c8_187, %c0_188] : memref<12x128xf32, #tpu.memory_space<vmem>>, vector<2x128xf32>
    tpu.vector_store %arg37[%c8_187, %c0_188], %453 {strides = array<i32>} : memref<12x128xf32, #tpu.memory_space<vmem>>, vector<2x128xf32>,
    %c8_189 = arith.constant 8 : index
    %c0_190 = arith.constant 0 : index
    %515 = vector.load %arg38[%c8_189, %c0_190] : memref<12x128xf32, #tpu.memory_space<vmem>>, vector<2x128xf32>
    tpu.vector_store %arg38[%c8_189, %c0_190], %483 {strides = array<i32>} : memref<12x128xf32, #tpu.memory_space<vmem>>, vector<2x128xf32>,
    %c8_191 = arith.constant 8 : index
    %c0_192 = arith.constant 0 : index
    %516 = vector.load %arg39[%c8_191, %c0_192] : memref<12x128xf32, #tpu.memory_space<vmem>>, vector<2x128xf32>
    tpu.vector_store %arg39[%c8_191, %c0_192], %513 {strides = array<i32>} : memref<12x128xf32, #tpu.memory_space<vmem>>, vector<2x128xf32>,
    %c10 = arith.constant 10 : index
    %c0_193 = arith.constant 0 : index
    %517 = vector.load %arg33[%c10, %c0_193] : memref<12x512xf32, #tpu.memory_space<vmem>>, vector<2x512xf32>
    %518 = arith.truncf %453 : vector<2x128xf32> to vector<2x128xbf16>
    %c0_194 = arith.constant 0 : index
    %c0_195 = arith.constant 0 : index
    %519 = vector.load %arg6[%c0_194, %c0_195] : memref<128x512xbf16, #tpu.memory_space<vmem>>, vector<128x512xbf16>
    %cst_196 = arith.constant dense<0.000000e+00> : vector<2x512xf32>
    %520 = tpu.matmul %518, %519, %cst_196 {dimension_numbers = #tpu.dot_dimension_numbers<[1], [0], [0], [1], [0, 0, 1, 1], [], []>} : vector<2x128xbf16>, vector<128x512xbf16>, vector<2x512xf32> -> vector<2x512xf32>
    %521 = arith.addf %517, %520 : vector<2x512xf32>
    %522 = vector.extract_strided_slice %521 {offsets = [0, 0], sizes = [2, 128], strides = [1, 1]} : vector<2x512xf32> to vector<2x128xf32>
    %523 = arith.negf %522 : vector<2x128xf32>
    %524 = math.exp %523 : vector<2x128xf32>
    %cst_197 = arith.constant 1.000000e+00 : f32
    %525 = vector.broadcast %cst_197 : f32 to vector<2x128xf32>
    %526 = arith.addf %525, %524 : vector<2x128xf32>
    %527 = arith.divf %525, %526 : vector<2x128xf32>
    %528 = vector.extract_strided_slice %521 {offsets = [0, 128], sizes = [2, 128], strides = [1, 1]} : vector<2x512xf32> to vector<2x128xf32>
    %529 = arith.negf %528 : vector<2x128xf32>
    %530 = math.exp %529 : vector<2x128xf32>
    %cst_198 = arith.constant 1.000000e+00 : f32
    %531 = vector.broadcast %cst_198 : f32 to vector<2x128xf32>
    %532 = arith.addf %531, %530 : vector<2x128xf32>
    %533 = arith.divf %531, %532 : vector<2x128xf32>
    %534 = vector.extract_strided_slice %521 {offsets = [0, 256], sizes = [2, 128], strides = [1, 1]} : vector<2x512xf32> to vector<2x128xf32>
    %535 = math.tanh %534 : vector<2x128xf32>
    %536 = vector.extract_strided_slice %521 {offsets = [0, 384], sizes = [2, 128], strides = [1, 1]} : vector<2x512xf32> to vector<2x128xf32>
    %537 = arith.negf %536 : vector<2x128xf32>
    %538 = math.exp %537 : vector<2x128xf32>
    %cst_199 = arith.constant 1.000000e+00 : f32
    %539 = vector.broadcast %cst_199 : f32 to vector<2x128xf32>
    %540 = arith.addf %539, %538 : vector<2x128xf32>
    %541 = arith.divf %539, %540 : vector<2x128xf32>
    %542 = arith.mulf %533, %451 : vector<2x128xf32>
    %543 = arith.mulf %527, %535 : vector<2x128xf32>
    %544 = arith.addf %542, %543 : vector<2x128xf32>
    %545 = math.tanh %544 : vector<2x128xf32>
    %546 = arith.mulf %541, %545 : vector<2x128xf32>
    %c10_200 = arith.constant 10 : index
    %c0_201 = arith.constant 0 : index
    %547 = vector.load %arg34[%c10_200, %c0_201] : memref<12x512xf32, #tpu.memory_space<vmem>>, vector<2x512xf32>
    %548 = arith.truncf %483 : vector<2x128xf32> to vector<2x128xbf16>
    %c0_202 = arith.constant 0 : index
    %c0_203 = arith.constant 0 : index
    %549 = vector.load %arg15[%c0_202, %c0_203] : memref<128x512xbf16, #tpu.memory_space<vmem>>, vector<128x512xbf16>
    %cst_204 = arith.constant dense<0.000000e+00> : vector<2x512xf32>
    %550 = tpu.matmul %548, %549, %cst_204 {dimension_numbers = #tpu.dot_dimension_numbers<[1], [0], [0], [1], [0, 0, 1, 1], [], []>} : vector<2x128xbf16>, vector<128x512xbf16>, vector<2x512xf32> -> vector<2x512xf32>
    %551 = arith.addf %547, %550 : vector<2x512xf32>
    %552 = vector.extract_strided_slice %551 {offsets = [0, 0], sizes = [2, 128], strides = [1, 1]} : vector<2x512xf32> to vector<2x128xf32>
    %553 = arith.negf %552 : vector<2x128xf32>
    %554 = math.exp %553 : vector<2x128xf32>
    %cst_205 = arith.constant 1.000000e+00 : f32
    %555 = vector.broadcast %cst_205 : f32 to vector<2x128xf32>
    %556 = arith.addf %555, %554 : vector<2x128xf32>
    %557 = arith.divf %555, %556 : vector<2x128xf32>
    %558 = vector.extract_strided_slice %551 {offsets = [0, 128], sizes = [2, 128], strides = [1, 1]} : vector<2x512xf32> to vector<2x128xf32>
    %559 = arith.negf %558 : vector<2x128xf32>
    %560 = math.exp %559 : vector<2x128xf32>
    %cst_206 = arith.constant 1.000000e+00 : f32
    %561 = vector.broadcast %cst_206 : f32 to vector<2x128xf32>
    %562 = arith.addf %561, %560 : vector<2x128xf32>
    %563 = arith.divf %561, %562 : vector<2x128xf32>
    %564 = vector.extract_strided_slice %551 {offsets = [0, 256], sizes = [2, 128], strides = [1, 1]} : vector<2x512xf32> to vector<2x128xf32>
    %565 = math.tanh %564 : vector<2x128xf32>
    %566 = vector.extract_strided_slice %551 {offsets = [0, 384], sizes = [2, 128], strides = [1, 1]} : vector<2x512xf32> to vector<2x128xf32>
    %567 = arith.negf %566 : vector<2x128xf32>
    %568 = math.exp %567 : vector<2x128xf32>
    %cst_207 = arith.constant 1.000000e+00 : f32
    %569 = vector.broadcast %cst_207 : f32 to vector<2x128xf32>
    %570 = arith.addf %569, %568 : vector<2x128xf32>
    %571 = arith.divf %569, %570 : vector<2x128xf32>
    %572 = arith.mulf %563, %481 : vector<2x128xf32>
    %573 = arith.mulf %557, %565 : vector<2x128xf32>
    %574 = arith.addf %572, %573 : vector<2x128xf32>
    %575 = math.tanh %574 : vector<2x128xf32>
    %576 = arith.mulf %571, %575 : vector<2x128xf32>
    %c10_208 = arith.constant 10 : index
    %c0_209 = arith.constant 0 : index
    %577 = vector.load %arg35[%c10_208, %c0_209] : memref<12x512xf32, #tpu.memory_space<vmem>>, vector<2x512xf32>
    %578 = arith.truncf %513 : vector<2x128xf32> to vector<2x128xbf16>
    %c0_210 = arith.constant 0 : index
    %c0_211 = arith.constant 0 : index
    %579 = vector.load %arg24[%c0_210, %c0_211] : memref<128x512xbf16, #tpu.memory_space<vmem>>, vector<128x512xbf16>
    %cst_212 = arith.constant dense<0.000000e+00> : vector<2x512xf32>
    %580 = tpu.matmul %578, %579, %cst_212 {dimension_numbers = #tpu.dot_dimension_numbers<[1], [0], [0], [1], [0, 0, 1, 1], [], []>} : vector<2x128xbf16>, vector<128x512xbf16>, vector<2x512xf32> -> vector<2x512xf32>
    %581 = arith.addf %577, %580 : vector<2x512xf32>
    %582 = vector.extract_strided_slice %581 {offsets = [0, 0], sizes = [2, 128], strides = [1, 1]} : vector<2x512xf32> to vector<2x128xf32>
    %583 = arith.negf %582 : vector<2x128xf32>
    %584 = math.exp %583 : vector<2x128xf32>
    %cst_213 = arith.constant 1.000000e+00 : f32
    %585 = vector.broadcast %cst_213 : f32 to vector<2x128xf32>
    %586 = arith.addf %585, %584 : vector<2x128xf32>
    %587 = arith.divf %585, %586 : vector<2x128xf32>
    %588 = vector.extract_strided_slice %581 {offsets = [0, 128], sizes = [2, 128], strides = [1, 1]} : vector<2x512xf32> to vector<2x128xf32>
    %589 = arith.negf %588 : vector<2x128xf32>
    %590 = math.exp %589 : vector<2x128xf32>
    %cst_214 = arith.constant 1.000000e+00 : f32
    %591 = vector.broadcast %cst_214 : f32 to vector<2x128xf32>
    %592 = arith.addf %591, %590 : vector<2x128xf32>
    %593 = arith.divf %591, %592 : vector<2x128xf32>
    %594 = vector.extract_strided_slice %581 {offsets = [0, 256], sizes = [2, 128], strides = [1, 1]} : vector<2x512xf32> to vector<2x128xf32>
    %595 = math.tanh %594 : vector<2x128xf32>
    %596 = vector.extract_strided_slice %581 {offsets = [0, 384], sizes = [2, 128], strides = [1, 1]} : vector<2x512xf32> to vector<2x128xf32>
    %597 = arith.negf %596 : vector<2x128xf32>
    %598 = math.exp %597 : vector<2x128xf32>
    %cst_215 = arith.constant 1.000000e+00 : f32
    %599 = vector.broadcast %cst_215 : f32 to vector<2x128xf32>
    %600 = arith.addf %599, %598 : vector<2x128xf32>
    %601 = arith.divf %599, %600 : vector<2x128xf32>
    %602 = arith.mulf %593, %511 : vector<2x128xf32>
    %603 = arith.mulf %587, %595 : vector<2x128xf32>
    %604 = arith.addf %602, %603 : vector<2x128xf32>
    %605 = math.tanh %604 : vector<2x128xf32>
    %606 = arith.mulf %601, %605 : vector<2x128xf32>
    %c10_216 = arith.constant 10 : index
    %c0_217 = arith.constant 0 : index
    %607 = vector.load %arg37[%c10_216, %c0_217] : memref<12x128xf32, #tpu.memory_space<vmem>>, vector<2x128xf32>
    tpu.vector_store %arg37[%c10_216, %c0_217], %546 {strides = array<i32>} : memref<12x128xf32, #tpu.memory_space<vmem>>, vector<2x128xf32>,
    %c10_218 = arith.constant 10 : index
    %c0_219 = arith.constant 0 : index
    %608 = vector.load %arg38[%c10_218, %c0_219] : memref<12x128xf32, #tpu.memory_space<vmem>>, vector<2x128xf32>
    tpu.vector_store %arg38[%c10_218, %c0_219], %576 {strides = array<i32>} : memref<12x128xf32, #tpu.memory_space<vmem>>, vector<2x128xf32>,
    %c10_220 = arith.constant 10 : index
    %c0_221 = arith.constant 0 : index
    %609 = vector.load %arg39[%c10_220, %c0_221] : memref<12x128xf32, #tpu.memory_space<vmem>>, vector<2x128xf32>
    tpu.vector_store %arg39[%c10_220, %c0_221], %606 {strides = array<i32>} : memref<12x128xf32, #tpu.memory_space<vmem>>, vector<2x128xf32>,
    %c0_222 = arith.constant 0 : index
    %c0_223 = arith.constant 0 : index
    %610 = vector.load %arg37[%c0_222, %c0_223] : memref<12x128xf32, #tpu.memory_space<vmem>>, vector<12x128xf32>
    %611 = tpu.concatenate %20, %20, %20, %20, %20, %20 in 0 : vector<2x128xf32>, vector<2x128xf32>, vector<2x128xf32>, vector<2x128xf32>, vector<2x128xf32>, vector<2x128xf32> -> vector<12x128xf32>
    %612 = tpu.concatenate %610, %611 in 1 : vector<12x128xf32>, vector<12x128xf32> -> vector<12x256xf32>
    %613 = arith.truncf %612 : vector<12x256xf32> to vector<12x256xbf16>
    %c0_224 = arith.constant 0 : index
    %c0_225 = arith.constant 0 : index
    %614 = vector.load %arg7[%c0_224, %c0_225] : memref<256x128xbf16, #tpu.memory_space<vmem>>, vector<256x128xbf16>
    %cst_226 = arith.constant dense<0.000000e+00> : vector<12x128xf32>
    %615 = tpu.matmul %613, %614, %cst_226 {dimension_numbers = #tpu.dot_dimension_numbers<[1], [0], [0], [1], [0, 0, 1, 1], [], []>} : vector<12x256xbf16>, vector<256x128xbf16>, vector<12x128xf32> -> vector<12x128xf32>
    %c0_227 = arith.constant 0 : index
    %c0_228 = arith.constant 0 : index
    %616 = vector.load %arg8[%c0_227, %c0_228] : memref<1x128xf32, #tpu.memory_space<vmem>>, vector<1x128xf32>
    %617 = vector.broadcast %616 : vector<1x128xf32> to vector<12x128xf32>
    %618 = arith.addf %615, %617 : vector<12x128xf32>
    %cst_229 = arith.constant 0.000000e+00 : f32
    %619 = vector.broadcast %cst_229 : f32 to vector<12x128xf32>
    %620 = arith.maximumf %618, %619 : vector<12x128xf32>
    %c0_230 = arith.constant 0 : index
    %c0_231 = arith.constant 0 : index
    %621 = vector.load %arg38[%c0_230, %c0_231] : memref<12x128xf32, #tpu.memory_space<vmem>>, vector<12x128xf32>
    %622 = tpu.concatenate %35, %35, %35, %35, %35, %35 in 0 : vector<2x128xf32>, vector<2x128xf32>, vector<2x128xf32>, vector<2x128xf32>, vector<2x128xf32>, vector<2x128xf32> -> vector<12x128xf32>
    %623 = tpu.concatenate %621, %622 in 1 : vector<12x128xf32>, vector<12x128xf32> -> vector<12x256xf32>
    %624 = arith.truncf %623 : vector<12x256xf32> to vector<12x256xbf16>
    %c0_232 = arith.constant 0 : index
    %c0_233 = arith.constant 0 : index
    %625 = vector.load %arg16[%c0_232, %c0_233] : memref<256x128xbf16, #tpu.memory_space<vmem>>, vector<256x128xbf16>
    %cst_234 = arith.constant dense<0.000000e+00> : vector<12x128xf32>
    %626 = tpu.matmul %624, %625, %cst_234 {dimension_numbers = #tpu.dot_dimension_numbers<[1], [0], [0], [1], [0, 0, 1, 1], [], []>} : vector<12x256xbf16>, vector<256x128xbf16>, vector<12x128xf32> -> vector<12x128xf32>
    %c0_235 = arith.constant 0 : index
    %c0_236 = arith.constant 0 : index
    %627 = vector.load %arg17[%c0_235, %c0_236] : memref<1x128xf32, #tpu.memory_space<vmem>>, vector<1x128xf32>
    %628 = vector.broadcast %627 : vector<1x128xf32> to vector<12x128xf32>
    %629 = arith.addf %626, %628 : vector<12x128xf32>
    %cst_237 = arith.constant 0.000000e+00 : f32
    %630 = vector.broadcast %cst_237 : f32 to vector<12x128xf32>
    %631 = arith.maximumf %629, %630 : vector<12x128xf32>
    %c0_238 = arith.constant 0 : index
    %c0_239 = arith.constant 0 : index
    %632 = vector.load %arg39[%c0_238, %c0_239] : memref<12x128xf32, #tpu.memory_space<vmem>>, vector<12x128xf32>
    %633 = tpu.concatenate %50, %50, %50, %50, %50, %50 in 0 : vector<2x128xf32>, vector<2x128xf32>, vector<2x128xf32>, vector<2x128xf32>, vector<2x128xf32>, vector<2x128xf32> -> vector<12x128xf32>
    %634 = tpu.concatenate %632, %633 in 1 : vector<12x128xf32>, vector<12x128xf32> -> vector<12x256xf32>
    %635 = arith.truncf %634 : vector<12x256xf32> to vector<12x256xbf16>
    %c0_240 = arith.constant 0 : index
    %c0_241 = arith.constant 0 : index
    %636 = vector.load %arg25[%c0_240, %c0_241] : memref<256x128xbf16, #tpu.memory_space<vmem>>, vector<256x128xbf16>
    %cst_242 = arith.constant dense<0.000000e+00> : vector<12x128xf32>
    %637 = tpu.matmul %635, %636, %cst_242 {dimension_numbers = #tpu.dot_dimension_numbers<[1], [0], [0], [1], [0, 0, 1, 1], [], []>} : vector<12x256xbf16>, vector<256x128xbf16>, vector<12x128xf32> -> vector<12x128xf32>
    %c0_243 = arith.constant 0 : index
    %c0_244 = arith.constant 0 : index
    %638 = vector.load %arg26[%c0_243, %c0_244] : memref<1x128xf32, #tpu.memory_space<vmem>>, vector<1x128xf32>
    %639 = vector.broadcast %638 : vector<1x128xf32> to vector<12x128xf32>
    %640 = arith.addf %637, %639 : vector<12x128xf32>
    %cst_245 = arith.constant 0.000000e+00 : f32
    %641 = vector.broadcast %cst_245 : f32 to vector<12x128xf32>
    %642 = arith.maximumf %640, %641 : vector<12x128xf32>
    %643 = tpu.concatenate %620, %631, %642 in 1 : vector<12x128xf32>, vector<12x128xf32>, vector<12x128xf32> -> vector<12x384xf32>
    %644 = arith.truncf %643 : vector<12x384xf32> to vector<12x384xbf16>
    %c0_i32_246 = arith.constant 0 : i32
    %645 = tpu.memref_slice %arg43[%c0_i32_246] : memref<3x!tpu.dma_semaphore, #tpu.memory_space<semaphore_mem>> -> memref<1x!tpu.dma_semaphore, #tpu.memory_space<semaphore_mem>>
    %646 = tpu.memref_squeeze %645 : memref<1x!tpu.dma_semaphore, #tpu.memory_space<semaphore_mem>> -> memref<!tpu.dma_semaphore, #tpu.memory_space<semaphore_mem>>
    tpu.wait_dma2 semaphore(%646 : memref<!tpu.dma_semaphore, #tpu.memory_space<semaphore_mem>>) src(%arg29 : memref<384x512xbf16, #tpu.memory_space<any>>) dst(%arg40 : memref<384x512xbf16, #tpu.memory_space<vmem>>)
    %c1_i32_247 = arith.constant 1 : i32
    %647 = tpu.memref_slice %arg43[%c1_i32_247] : memref<3x!tpu.dma_semaphore, #tpu.memory_space<semaphore_mem>> -> memref<1x!tpu.dma_semaphore, #tpu.memory_space<semaphore_mem>>
    %648 = tpu.memref_squeeze %647 : memref<1x!tpu.dma_semaphore, #tpu.memory_space<semaphore_mem>> -> memref<!tpu.dma_semaphore, #tpu.memory_space<semaphore_mem>>
    tpu.wait_dma2 semaphore(%648 : memref<!tpu.dma_semaphore, #tpu.memory_space<semaphore_mem>>) src(%arg30 : memref<128x512xbf16, #tpu.memory_space<any>>) dst(%arg41 : memref<128x512xbf16, #tpu.memory_space<vmem>>)
    %c2_i32_248 = arith.constant 2 : i32
    %649 = tpu.memref_slice %arg43[%c2_i32_248] : memref<3x!tpu.dma_semaphore, #tpu.memory_space<semaphore_mem>> -> memref<1x!tpu.dma_semaphore, #tpu.memory_space<semaphore_mem>>
    %650 = tpu.memref_squeeze %649 : memref<1x!tpu.dma_semaphore, #tpu.memory_space<semaphore_mem>> -> memref<!tpu.dma_semaphore, #tpu.memory_space<semaphore_mem>>
    tpu.wait_dma2 semaphore(%650 : memref<!tpu.dma_semaphore, #tpu.memory_space<semaphore_mem>>) src(%arg31 : memref<128x128xbf16, #tpu.memory_space<any>>) dst(%arg42 : memref<128x128xbf16, #tpu.memory_space<vmem>>)
    %c0_249 = arith.constant 0 : index
    %c0_250 = arith.constant 0 : index
    %651 = vector.load %arg40[%c0_249, %c0_250] : memref<384x512xbf16, #tpu.memory_space<vmem>>, vector<384x512xbf16>
    %cst_251 = arith.constant dense<0.000000e+00> : vector<12x512xf32>
    %652 = tpu.matmul %644, %651, %cst_251 {dimension_numbers = #tpu.dot_dimension_numbers<[1], [0], [0], [1], [0, 0, 1, 1], [], []>} : vector<12x384xbf16>, vector<384x512xbf16>, vector<12x512xf32> -> vector<12x512xf32>
    %c0_252 = arith.constant 0 : index
    %c0_253 = arith.constant 0 : index
    %653 = vector.load %arg27[%c0_252, %c0_253] : memref<1x512xf32, #tpu.memory_space<vmem>>, vector<1x512xf32>
    %654 = vector.broadcast %653 : vector<1x512xf32> to vector<12x512xf32>
    %655 = arith.addf %652, %654 : vector<12x512xf32>
    %c0_254 = arith.constant 0 : index
    %c0_255 = arith.constant 0 : index
    %656 = vector.load %arg36[%c0_254, %c0_255] : memref<12x512xf32, #tpu.memory_space<vmem>>, vector<12x512xf32>
    tpu.vector_store %arg36[%c0_254, %c0_255], %655 {strides = array<i32>} : memref<12x512xf32, #tpu.memory_space<vmem>>, vector<12x512xf32>,
    %c0_256 = arith.constant 0 : index
    %c0_257 = arith.constant 0 : index
    %657 = vector.load %arg36[%c0_256, %c0_257] : memref<12x512xf32, #tpu.memory_space<vmem>>, vector<2x512xf32>
    %658 = arith.truncf %51 : vector<2x128xf32> to vector<2x128xbf16>
    %c0_258 = arith.constant 0 : index
    %c0_259 = arith.constant 0 : index
    %659 = vector.load %arg41[%c0_258, %c0_259] : memref<128x512xbf16, #tpu.memory_space<vmem>>, vector<128x512xbf16>
    %cst_260 = arith.constant dense<0.000000e+00> : vector<2x512xf32>
    %660 = tpu.matmul %658, %659, %cst_260 {dimension_numbers = #tpu.dot_dimension_numbers<[1], [0], [0], [1], [0, 0, 1, 1], [], []>} : vector<2x128xbf16>, vector<128x512xbf16>, vector<2x512xf32> -> vector<2x512xf32>
    %661 = arith.addf %657, %660 : vector<2x512xf32>
    %662 = vector.extract_strided_slice %661 {offsets = [0, 0], sizes = [2, 128], strides = [1, 1]} : vector<2x512xf32> to vector<2x128xf32>
    %663 = arith.negf %662 : vector<2x128xf32>
    %664 = math.exp %663 : vector<2x128xf32>
    %cst_261 = arith.constant 1.000000e+00 : f32
    %665 = vector.broadcast %cst_261 : f32 to vector<2x128xf32>
    %666 = arith.addf %665, %664 : vector<2x128xf32>
    %667 = arith.divf %665, %666 : vector<2x128xf32>
    %668 = vector.extract_strided_slice %661 {offsets = [0, 128], sizes = [2, 128], strides = [1, 1]} : vector<2x512xf32> to vector<2x128xf32>
    %669 = arith.negf %668 : vector<2x128xf32>
    %670 = math.exp %669 : vector<2x128xf32>
    %cst_262 = arith.constant 1.000000e+00 : f32
    %671 = vector.broadcast %cst_262 : f32 to vector<2x128xf32>
    %672 = arith.addf %671, %670 : vector<2x128xf32>
    %673 = arith.divf %671, %672 : vector<2x128xf32>
    %674 = vector.extract_strided_slice %661 {offsets = [0, 256], sizes = [2, 128], strides = [1, 1]} : vector<2x512xf32> to vector<2x128xf32>
    %675 = math.tanh %674 : vector<2x128xf32>
    %676 = vector.extract_strided_slice %661 {offsets = [0, 384], sizes = [2, 128], strides = [1, 1]} : vector<2x512xf32> to vector<2x128xf32>
    %677 = arith.negf %676 : vector<2x128xf32>
    %678 = math.exp %677 : vector<2x128xf32>
    %cst_263 = arith.constant 1.000000e+00 : f32
    %679 = vector.broadcast %cst_263 : f32 to vector<2x128xf32>
    %680 = arith.addf %679, %678 : vector<2x128xf32>
    %681 = arith.divf %679, %680 : vector<2x128xf32>
    %682 = arith.mulf %673, %51 : vector<2x128xf32>
    %683 = arith.mulf %667, %675 : vector<2x128xf32>
    %684 = arith.addf %682, %683 : vector<2x128xf32>
    %685 = math.tanh %684 : vector<2x128xf32>
    %686 = arith.mulf %681, %685 : vector<2x128xf32>
    %c2_264 = arith.constant 2 : index
    %c0_265 = arith.constant 0 : index
    %687 = vector.load %arg36[%c2_264, %c0_265] : memref<12x512xf32, #tpu.memory_space<vmem>>, vector<2x512xf32>
    %688 = arith.truncf %686 : vector<2x128xf32> to vector<2x128xbf16>
    %c0_266 = arith.constant 0 : index
    %c0_267 = arith.constant 0 : index
    %689 = vector.load %arg41[%c0_266, %c0_267] : memref<128x512xbf16, #tpu.memory_space<vmem>>, vector<128x512xbf16>
    %cst_268 = arith.constant dense<0.000000e+00> : vector<2x512xf32>
    %690 = tpu.matmul %688, %689, %cst_268 {dimension_numbers = #tpu.dot_dimension_numbers<[1], [0], [0], [1], [0, 0, 1, 1], [], []>} : vector<2x128xbf16>, vector<128x512xbf16>, vector<2x512xf32> -> vector<2x512xf32>
    %691 = arith.addf %687, %690 : vector<2x512xf32>
    %692 = vector.extract_strided_slice %691 {offsets = [0, 0], sizes = [2, 128], strides = [1, 1]} : vector<2x512xf32> to vector<2x128xf32>
    %693 = arith.negf %692 : vector<2x128xf32>
    %694 = math.exp %693 : vector<2x128xf32>
    %cst_269 = arith.constant 1.000000e+00 : f32
    %695 = vector.broadcast %cst_269 : f32 to vector<2x128xf32>
    %696 = arith.addf %695, %694 : vector<2x128xf32>
    %697 = arith.divf %695, %696 : vector<2x128xf32>
    %698 = vector.extract_strided_slice %691 {offsets = [0, 128], sizes = [2, 128], strides = [1, 1]} : vector<2x512xf32> to vector<2x128xf32>
    %699 = arith.negf %698 : vector<2x128xf32>
    %700 = math.exp %699 : vector<2x128xf32>
    %cst_270 = arith.constant 1.000000e+00 : f32
    %701 = vector.broadcast %cst_270 : f32 to vector<2x128xf32>
    %702 = arith.addf %701, %700 : vector<2x128xf32>
    %703 = arith.divf %701, %702 : vector<2x128xf32>
    %704 = vector.extract_strided_slice %691 {offsets = [0, 256], sizes = [2, 128], strides = [1, 1]} : vector<2x512xf32> to vector<2x128xf32>
    %705 = math.tanh %704 : vector<2x128xf32>
    %706 = vector.extract_strided_slice %691 {offsets = [0, 384], sizes = [2, 128], strides = [1, 1]} : vector<2x512xf32> to vector<2x128xf32>
    %707 = arith.negf %706 : vector<2x128xf32>
    %708 = math.exp %707 : vector<2x128xf32>
    %cst_271 = arith.constant 1.000000e+00 : f32
    %709 = vector.broadcast %cst_271 : f32 to vector<2x128xf32>
    %710 = arith.addf %709, %708 : vector<2x128xf32>
    %711 = arith.divf %709, %710 : vector<2x128xf32>
    %712 = arith.mulf %703, %684 : vector<2x128xf32>
    %713 = arith.mulf %697, %705 : vector<2x128xf32>
    %714 = arith.addf %712, %713 : vector<2x128xf32>
    %715 = math.tanh %714 : vector<2x128xf32>
    %716 = arith.mulf %711, %715 : vector<2x128xf32>
    %c4_272 = arith.constant 4 : index
    %c0_273 = arith.constant 0 : index
    %717 = vector.load %arg36[%c4_272, %c0_273] : memref<12x512xf32, #tpu.memory_space<vmem>>, vector<2x512xf32>
    %718 = arith.truncf %716 : vector<2x128xf32> to vector<2x128xbf16>
    %c0_274 = arith.constant 0 : index
    %c0_275 = arith.constant 0 : index
    %719 = vector.load %arg41[%c0_274, %c0_275] : memref<128x512xbf16, #tpu.memory_space<vmem>>, vector<128x512xbf16>
    %cst_276 = arith.constant dense<0.000000e+00> : vector<2x512xf32>
    %720 = tpu.matmul %718, %719, %cst_276 {dimension_numbers = #tpu.dot_dimension_numbers<[1], [0], [0], [1], [0, 0, 1, 1], [], []>} : vector<2x128xbf16>, vector<128x512xbf16>, vector<2x512xf32> -> vector<2x512xf32>
    %721 = arith.addf %717, %720 : vector<2x512xf32>
    %722 = vector.extract_strided_slice %721 {offsets = [0, 0], sizes = [2, 128], strides = [1, 1]} : vector<2x512xf32> to vector<2x128xf32>
    %723 = arith.negf %722 : vector<2x128xf32>
    %724 = math.exp %723 : vector<2x128xf32>
    %cst_277 = arith.constant 1.000000e+00 : f32
    %725 = vector.broadcast %cst_277 : f32 to vector<2x128xf32>
    %726 = arith.addf %725, %724 : vector<2x128xf32>
    %727 = arith.divf %725, %726 : vector<2x128xf32>
    %728 = vector.extract_strided_slice %721 {offsets = [0, 128], sizes = [2, 128], strides = [1, 1]} : vector<2x512xf32> to vector<2x128xf32>
    %729 = arith.negf %728 : vector<2x128xf32>
    %730 = math.exp %729 : vector<2x128xf32>
    %cst_278 = arith.constant 1.000000e+00 : f32
    %731 = vector.broadcast %cst_278 : f32 to vector<2x128xf32>
    %732 = arith.addf %731, %730 : vector<2x128xf32>
    %733 = arith.divf %731, %732 : vector<2x128xf32>
    %734 = vector.extract_strided_slice %721 {offsets = [0, 256], sizes = [2, 128], strides = [1, 1]} : vector<2x512xf32> to vector<2x128xf32>
    %735 = math.tanh %734 : vector<2x128xf32>
    %736 = vector.extract_strided_slice %721 {offsets = [0, 384], sizes = [2, 128], strides = [1, 1]} : vector<2x512xf32> to vector<2x128xf32>
    %737 = arith.negf %736 : vector<2x128xf32>
    %738 = math.exp %737 : vector<2x128xf32>
    %cst_279 = arith.constant 1.000000e+00 : f32
    %739 = vector.broadcast %cst_279 : f32 to vector<2x128xf32>
    %740 = arith.addf %739, %738 : vector<2x128xf32>
    %741 = arith.divf %739, %740 : vector<2x128xf32>
    %742 = arith.mulf %733, %714 : vector<2x128xf32>
    %743 = arith.mulf %727, %735 : vector<2x128xf32>
    %744 = arith.addf %742, %743 : vector<2x128xf32>
    %745 = math.tanh %744 : vector<2x128xf32>
    %746 = arith.mulf %741, %745 : vector<2x128xf32>
    %c6_280 = arith.constant 6 : index
    %c0_281 = arith.constant 0 : index
    %747 = vector.load %arg36[%c6_280, %c0_281] : memref<12x512xf32, #tpu.memory_space<vmem>>, vector<2x512xf32>
    %748 = arith.truncf %746 : vector<2x128xf32> to vector<2x128xbf16>
    %c0_282 = arith.constant 0 : index
    %c0_283 = arith.constant 0 : index
    %749 = vector.load %arg41[%c0_282, %c0_283] : memref<128x512xbf16, #tpu.memory_space<vmem>>, vector<128x512xbf16>
    %cst_284 = arith.constant dense<0.000000e+00> : vector<2x512xf32>
    %750 = tpu.matmul %748, %749, %cst_284 {dimension_numbers = #tpu.dot_dimension_numbers<[1], [0], [0], [1], [0, 0, 1, 1], [], []>} : vector<2x128xbf16>, vector<128x512xbf16>, vector<2x512xf32> -> vector<2x512xf32>
    %751 = arith.addf %747, %750 : vector<2x512xf32>
    %752 = vector.extract_strided_slice %751 {offsets = [0, 0], sizes = [2, 128], strides = [1, 1]} : vector<2x512xf32> to vector<2x128xf32>
    %753 = arith.negf %752 : vector<2x128xf32>
    %754 = math.exp %753 : vector<2x128xf32>
    %cst_285 = arith.constant 1.000000e+00 : f32
    %755 = vector.broadcast %cst_285 : f32 to vector<2x128xf32>
    %756 = arith.addf %755, %754 : vector<2x128xf32>
    %757 = arith.divf %755, %756 : vector<2x128xf32>
    %758 = vector.extract_strided_slice %751 {offsets = [0, 128], sizes = [2, 128], strides = [1, 1]} : vector<2x512xf32> to vector<2x128xf32>
    %759 = arith.negf %758 : vector<2x128xf32>
    %760 = math.exp %759 : vector<2x128xf32>
    %cst_286 = arith.constant 1.000000e+00 : f32
    %761 = vector.broadcast %cst_286 : f32 to vector<2x128xf32>
    %762 = arith.addf %761, %760 : vector<2x128xf32>
    %763 = arith.divf %761, %762 : vector<2x128xf32>
    %764 = vector.extract_strided_slice %751 {offsets = [0, 256], sizes = [2, 128], strides = [1, 1]} : vector<2x512xf32> to vector<2x128xf32>
    %765 = math.tanh %764 : vector<2x128xf32>
    %766 = vector.extract_strided_slice %751 {offsets = [0, 384], sizes = [2, 128], strides = [1, 1]} : vector<2x512xf32> to vector<2x128xf32>
    %767 = arith.negf %766 : vector<2x128xf32>
    %768 = math.exp %767 : vector<2x128xf32>
    %cst_287 = arith.constant 1.000000e+00 : f32
    %769 = vector.broadcast %cst_287 : f32 to vector<2x128xf32>
    %770 = arith.addf %769, %768 : vector<2x128xf32>
    %771 = arith.divf %769, %770 : vector<2x128xf32>
    %772 = arith.mulf %763, %744 : vector<2x128xf32>
    %773 = arith.mulf %757, %765 : vector<2x128xf32>
    %774 = arith.addf %772, %773 : vector<2x128xf32>
    %775 = math.tanh %774 : vector<2x128xf32>
    %776 = arith.mulf %771, %775 : vector<2x128xf32>
    %c8_288 = arith.constant 8 : index
    %c0_289 = arith.constant 0 : index
    %777 = vector.load %arg36[%c8_288, %c0_289] : memref<12x512xf32, #tpu.memory_space<vmem>>, vector<2x512xf32>
    %778 = arith.truncf %776 : vector<2x128xf32> to vector<2x128xbf16>
    %c0_290 = arith.constant 0 : index
    %c0_291 = arith.constant 0 : index
    %779 = vector.load %arg41[%c0_290, %c0_291] : memref<128x512xbf16, #tpu.memory_space<vmem>>, vector<128x512xbf16>
    %cst_292 = arith.constant dense<0.000000e+00> : vector<2x512xf32>
    %780 = tpu.matmul %778, %779, %cst_292 {dimension_numbers = #tpu.dot_dimension_numbers<[1], [0], [0], [1], [0, 0, 1, 1], [], []>} : vector<2x128xbf16>, vector<128x512xbf16>, vector<2x512xf32> -> vector<2x512xf32>
    %781 = arith.addf %777, %780 : vector<2x512xf32>
    %782 = vector.extract_strided_slice %781 {offsets = [0, 0], sizes = [2, 128], strides = [1, 1]} : vector<2x512xf32> to vector<2x128xf32>
    %783 = arith.negf %782 : vector<2x128xf32>
    %784 = math.exp %783 : vector<2x128xf32>
    %cst_293 = arith.constant 1.000000e+00 : f32
    %785 = vector.broadcast %cst_293 : f32 to vector<2x128xf32>
    %786 = arith.addf %785, %784 : vector<2x128xf32>
    %787 = arith.divf %785, %786 : vector<2x128xf32>
    %788 = vector.extract_strided_slice %781 {offsets = [0, 128], sizes = [2, 128], strides = [1, 1]} : vector<2x512xf32> to vector<2x128xf32>
    %789 = arith.negf %788 : vector<2x128xf32>
    %790 = math.exp %789 : vector<2x128xf32>
    %cst_294 = arith.constant 1.000000e+00 : f32
    %791 = vector.broadcast %cst_294 : f32 to vector<2x128xf32>
    %792 = arith.addf %791, %790 : vector<2x128xf32>
    %793 = arith.divf %791, %792 : vector<2x128xf32>
    %794 = vector.extract_strided_slice %781 {offsets = [0, 256], sizes = [2, 128], strides = [1, 1]} : vector<2x512xf32> to vector<2x128xf32>
    %795 = math.tanh %794 : vector<2x128xf32>
    %796 = vector.extract_strided_slice %781 {offsets = [0, 384], sizes = [2, 128], strides = [1, 1]} : vector<2x512xf32> to vector<2x128xf32>
    %797 = arith.negf %796 : vector<2x128xf32>
    %798 = math.exp %797 : vector<2x128xf32>
    %cst_295 = arith.constant 1.000000e+00 : f32
    %799 = vector.broadcast %cst_295 : f32 to vector<2x128xf32>
    %800 = arith.addf %799, %798 : vector<2x128xf32>
    %801 = arith.divf %799, %800 : vector<2x128xf32>
    %802 = arith.mulf %793, %774 : vector<2x128xf32>
    %803 = arith.mulf %787, %795 : vector<2x128xf32>
    %804 = arith.addf %802, %803 : vector<2x128xf32>
    %805 = math.tanh %804 : vector<2x128xf32>
    %806 = arith.mulf %801, %805 : vector<2x128xf32>
    %c10_296 = arith.constant 10 : index
    %c0_297 = arith.constant 0 : index
    %807 = vector.load %arg36[%c10_296, %c0_297] : memref<12x512xf32, #tpu.memory_space<vmem>>, vector<2x512xf32>
    %808 = arith.truncf %806 : vector<2x128xf32> to vector<2x128xbf16>
    %c0_298 = arith.constant 0 : index
    %c0_299 = arith.constant 0 : index
    %809 = vector.load %arg41[%c0_298, %c0_299] : memref<128x512xbf16, #tpu.memory_space<vmem>>, vector<128x512xbf16>
    %cst_300 = arith.constant dense<0.000000e+00> : vector<2x512xf32>
    %810 = tpu.matmul %808, %809, %cst_300 {dimension_numbers = #tpu.dot_dimension_numbers<[1], [0], [0], [1], [0, 0, 1, 1], [], []>} : vector<2x128xbf16>, vector<128x512xbf16>, vector<2x512xf32> -> vector<2x512xf32>
    %811 = arith.addf %807, %810 : vector<2x512xf32>
    %812 = vector.extract_strided_slice %811 {offsets = [0, 0], sizes = [2, 128], strides = [1, 1]} : vector<2x512xf32> to vector<2x128xf32>
    %813 = arith.negf %812 : vector<2x128xf32>
    %814 = math.exp %813 : vector<2x128xf32>
    %cst_301 = arith.constant 1.000000e+00 : f32
    %815 = vector.broadcast %cst_301 : f32 to vector<2x128xf32>
    %816 = arith.addf %815, %814 : vector<2x128xf32>
    %817 = arith.divf %815, %816 : vector<2x128xf32>
    %818 = vector.extract_strided_slice %811 {offsets = [0, 128], sizes = [2, 128], strides = [1, 1]} : vector<2x512xf32> to vector<2x128xf32>
    %819 = arith.negf %818 : vector<2x128xf32>
    %820 = math.exp %819 : vector<2x128xf32>
    %cst_302 = arith.constant 1.000000e+00 : f32
    %821 = vector.broadcast %cst_302 : f32 to vector<2x128xf32>
    %822 = arith.addf %821, %820 : vector<2x128xf32>
    %823 = arith.divf %821, %822 : vector<2x128xf32>
    %824 = vector.extract_strided_slice %811 {offsets = [0, 256], sizes = [2, 128], strides = [1, 1]} : vector<2x512xf32> to vector<2x128xf32>
    %825 = math.tanh %824 : vector<2x128xf32>
    %826 = vector.extract_strided_slice %811 {offsets = [0, 384], sizes = [2, 128], strides = [1, 1]} : vector<2x512xf32> to vector<2x128xf32>
    %827 = arith.negf %826 : vector<2x128xf32>
    %828 = math.exp %827 : vector<2x128xf32>
    %cst_303 = arith.constant 1.000000e+00 : f32
    %829 = vector.broadcast %cst_303 : f32 to vector<2x128xf32>
    %830 = arith.addf %829, %828 : vector<2x128xf32>
    %831 = arith.divf %829, %830 : vector<2x128xf32>
    %832 = arith.mulf %823, %804 : vector<2x128xf32>
    %833 = arith.mulf %817, %825 : vector<2x128xf32>
    %834 = arith.addf %832, %833 : vector<2x128xf32>
    %835 = math.tanh %834 : vector<2x128xf32>
    %836 = arith.mulf %831, %835 : vector<2x128xf32>
    %837 = arith.truncf %836 : vector<2x128xf32> to vector<2x128xbf16>
    %c0_304 = arith.constant 0 : index
    %c0_305 = arith.constant 0 : index
    %838 = vector.load %arg42[%c0_304, %c0_305] : memref<128x128xbf16, #tpu.memory_space<vmem>>, vector<128x128xbf16>
    %cst_306 = arith.constant dense<0.000000e+00> : vector<2x128xf32>
    %839 = tpu.matmul %837, %838, %cst_306 {dimension_numbers = #tpu.dot_dimension_numbers<[1], [0], [0], [1], [0, 0, 1, 1], [], []>} : vector<2x128xbf16>, vector<128x128xbf16>, vector<2x128xf32> -> vector<2x128xf32>
    %c0_307 = arith.constant 0 : index
    %c0_308 = arith.constant 0 : index
    %840 = vector.load %arg28[%c0_307, %c0_308] : memref<1x128xf32, #tpu.memory_space<vmem>>, vector<1x128xf32>
    %841 = vector.broadcast %840 : vector<1x128xf32> to vector<2x128xf32>
    %842 = arith.addf %839, %841 : vector<2x128xf32>
    %c0_309 = arith.constant 0 : index
    %c0_310 = arith.constant 0 : index
    %843 = vector.load %arg32[%c0_309, %c0_310] : memref<2x128xf32, #tpu.memory_space<vmem>>, vector<2x128xf32>
    tpu.vector_store %arg32[%c0_309, %c0_310], %842 {strides = array<i32>} : memref<2x128xf32, #tpu.memory_space<vmem>>, vector<2x128xf32>,
    return
  }
}

</mosaic_0001>

<llo_original>
// kernel: tpu_custom_call.1
$region0: #{tpu_custom_call.1}
  #allocation0 [shape = 'u32[]', space=smem, size = 0x4, offset = 0x4, fixed_abs, tag = 'smem constant byte address 0x4 - core index']
  #allocation1 [shape = 'u32[144,128]{1,0:T(1,128)}', space=vmem, size = 0x12000, scoped, tag = 'internal scratch']
  #allocation2 [shape = 'f32[12,512]{1,0:T(8,128)}', space=vmem, size = 0x8000, scoped, tag = 'scratch operand']
  #allocation3 [shape = 'f32[12,512]{1,0:T(8,128)}', space=vmem, size = 0x8000, scoped, tag = 'scratch operand']
  #allocation4 [shape = 'f32[12,512]{1,0:T(8,128)}', space=vmem, size = 0x8000, scoped, tag = 'scratch operand']
  #allocation5 [shape = 'f32[12,512]{1,0:T(8,128)}', space=vmem, size = 0x8000, scoped, tag = 'scratch operand']
  #allocation6 [shape = 'f32[12,128]{1,0:T(8,128)}', space=vmem, size = 0x2000, scoped, tag = 'scratch operand']
  #allocation7 [shape = 'f32[12,128]{1,0:T(8,128)}', space=vmem, size = 0x2000, scoped, tag = 'scratch operand']
  #allocation8 [shape = 'f32[12,128]{1,0:T(8,128)}', space=vmem, size = 0x2000, scoped, tag = 'scratch operand']
  #allocation9 [shape = 'bf16[384,512]{1,0:T(16,128)(2,1)}', space=vmem, size = 0x60000, scoped, tag = 'scratch operand']
  #allocation10 [shape = 'bf16[128,512]{1,0:T(16,128)(2,1)}', space=vmem, size = 0x20000, scoped, tag = 'scratch operand']
  #allocation11 [shape = 'bf16[128,128]{1,0:T(16,128)(2,1)}', space=vmem, size = 0x8000, scoped, tag = 'scratch operand']
  #allocation12 [shape = 's32[3]{0}', space=sflag, size = 0xc, scoped, tag = 'scratch operand']
  #allocation46 [shape = 's32[]', space=sflag, size = 0x4, offset = 0, fixed_abs, tag = 'sflag constant byte address 0x0 - dummy sync flag']
  #allocation48 [shape = 's32[]', space=sflag, size = 0x4, offset = 0, fixed_abs, tag = 'sflag constant byte address 0x0 - dummy sync flag']
  #allocation50 [shape = 's32[]', space=sflag, size = 0x4, offset = 0, fixed_abs, tag = 'sflag constant byte address 0x0 - dummy sync flag']
  #allocation51 [shape = 's32[]', space=sflag, size = 0x4, offset = 0, fixed_abs, tag = 'sflag constant byte address 0x0 - dummy sync flag']
  #allocation52 [shape = 'u32[]', space=smem, size = 0x4, offset = 0x44, fixed_abs, tag = 'smem constant byte address 0x44 - assertion arg 0']
  #allocation53 [shape = 'u32[]', space=smem, size = 0x4, offset = 0x48, fixed_abs, tag = 'smem constant byte address 0x48 - assertion arg 1']
  %s0 = inlined_call_operand.smem [shape: u32[33], index: -1, kind: input, shape index: {}]
  %s1 = sld [smem:[%s0]]
  %s2 = scalar_lea.smem %s0, 1
  %s3 = sld [smem:[%s2]]
  %s4 = scalar_lea.smem %s0, 2
  %s5 = sld [smem:[%s4]]
  %s6 = scalar_lea.smem %s0, 3
  %s7 = sld [smem:[%s6]]
  %s8 = scalar_lea.smem %s0, 4
  %s9 = sld [smem:[%s8]]
  %s10 = scalar_lea.smem %s0, 5
  %s11 = sld [smem:[%s10]]
  %s12 = scalar_lea.smem %s0, 6
  %s13 = sld [smem:[%s12]]
  %s14 = scalar_lea.smem %s0, 7
  %s15 = sld [smem:[%s14]]
  %s16 = scalar_lea.smem %s0, 8
  %s17 = sld [smem:[%s16]]
  %s18 = scalar_lea.smem %s0, 9
  %s19 = sld [smem:[%s18]]
  %s20 = scalar_lea.smem %s0, 10
  %s21 = sld [smem:[%s20]]
  %s22 = scalar_lea.smem %s0, 11
  %s23 = sld [smem:[%s22]]
  %s24 = scalar_lea.smem %s0, 12
  %s25 = sld [smem:[%s24]]
  %s26 = scalar_lea.smem %s0, 13
  %s27 = sld [smem:[%s26]]
  %s28 = scalar_lea.smem %s0, 14
  %s29 = sld [smem:[%s28]]
  %s30 = scalar_lea.smem %s0, 15
  %s31 = sld [smem:[%s30]]
  %s32 = scalar_lea.smem %s0, 16
  %s33 = sld [smem:[%s32]]
  %s34 = scalar_lea.smem %s0, 17
  %s35 = sld [smem:[%s34]]
  %s36 = scalar_lea.smem %s0, 18
  %s37 = sld [smem:[%s36]]
  %s38 = scalar_lea.smem %s0, 19
  %s39 = sld [smem:[%s38]]
  %s40 = scalar_lea.smem %s0, 20
  %s41 = sld [smem:[%s40]]
  %s42 = scalar_lea.smem %s0, 21
  %s43 = sld [smem:[%s42]]
  %s44 = scalar_lea.smem %s0, 22
  %s45 = sld [smem:[%s44]]
  %s46 = scalar_lea.smem %s0, 23
  %s47 = sld [smem:[%s46]]
  %s48 = scalar_lea.smem %s0, 24
  %s49 = sld [smem:[%s48]]
  %s50 = scalar_lea.smem %s0, 25
  %s51 = sld [smem:[%s50]]
  %s52 = scalar_lea.smem %s0, 26
  %s53 = sld [smem:[%s52]]
  %s54 = scalar_lea.smem %s0, 27
  %s55 = sld [smem:[%s54]]
  %s56 = scalar_lea.smem %s0, 28
  %s57 = sld [smem:[%s56]]
  %s58 = scalar_lea.smem %s0, 29
  %s59 = sld [smem:[%s58]]
  %s60 = scalar_lea.smem %s0, 30
  %s61 = sld [smem:[%s60]]
  %s62 = scalar_lea.smem %s0, 31
  %s63 = sld [smem:[%s62]]
  %s64 = scalar_lea.smem %s0, 32
  %s65 = sld [smem:[%s64]]
  %s66 = sld [smem:[#allocation0]]
  $region210: #{tpu_custom_call.1} parent=0
    _
  %s68 = ssub.s32 1, %s66
  %s69 = scalar_select 0, %s68, %s66
  $region1: #{tpu_custom_call.1} parent=0
    #allocation13 [shape = 'u8[32768]{0}', space=vmem, size = 0x8000, scoped, tag = 'input window, operand 0, single buffered']
    #allocation14 [shape = 's32[1]{0}', space=sflag, size = 0x4, scoped, tag = 'scoped memory for tpu_custom_call.1']
    #allocation15 [shape = 's32[1]{0}', space=sflag, size = 0x4, scoped, tag = 'scoped memory for tpu_custom_call.1']
    #allocation16 [shape = 'u8[4096]{0}', space=vmem, size = 0x1000, scoped, tag = 'input window, operand 1, single buffered']
    #allocation17 [shape = 's32[1]{0}', space=sflag, size = 0x4, scoped, tag = 'scoped memory for tpu_custom_call.1']
    #allocation18 [shape = 'u8[131072]{0}', space=vmem, size = 0x20000, scoped, tag = 'input window, operand 2, single buffered']
    #allocation19 [shape = 'u8[524288]{0}', space=vmem, size = 0x80000, scoped, tag = 'input window, operand 4, single buffered']
    #allocation20 [shape = 's32[1]{0}', space=sflag, size = 0x4, scoped, tag = 'scoped memory for tpu_custom_call.1']
    #allocation21 [shape = 'u8[131072]{0}', space=vmem, size = 0x20000, scoped, tag = 'input window, operand 6, single buffered']
    #allocation22 [shape = 'u8[65536]{0}', space=vmem, size = 0x10000, scoped, tag = 'input window, operand 7, single buffered']
    #allocation23 [shape = 's32[1]{0}', space=sflag, size = 0x4, scoped, tag = 'scoped memory for tpu_custom_call.1']
    #allocation24 [shape = 'u8[512]{0}', space=vmem, size = 0x400, scoped, tag = 'input window, operand 8, single buffered']
    #allocation25 [shape = 'u8[8192]{0}', space=vmem, size = 0x2000, scoped, tag = 'input window, operand 9, single buffered']
    #allocation26 [shape = 's32[1]{0}', space=sflag, size = 0x4, scoped, tag = 'scoped memory for tpu_custom_call.1']
    #allocation27 [shape = 'u8[32768]{0}', space=vmem, size = 0x8000, scoped, tag = 'input window, operand 11, single buffered']
    #allocation28 [shape = 'u8[512]{0}', space=vmem, size = 0x400, scoped, tag = 'input window, operand 12, single buffered']
    #allocation29 [shape = 's32[1]{0}', space=sflag, size = 0x4, scoped, tag = 'scoped memory for tpu_custom_call.1']
    #allocation30 [shape = 'u8[131072]{0}', space=vmem, size = 0x20000, scoped, tag = 'input window, operand 13, single buffered']
    #allocation31 [shape = 'u8[131072]{0}', space=vmem, size = 0x20000, scoped, tag = 'input window, operand 15, single buffered']
    #allocation32 [shape = 's32[1]{0}', space=sflag, size = 0x4, scoped, tag = 'scoped memory for tpu_custom_call.1']
    #allocation33 [shape = 'u8[65536]{0}', space=vmem, size = 0x10000, scoped, tag = 'input window, operand 16, single buffered']
    #allocation34 [shape = 'u8[512]{0}', space=vmem, size = 0x400, scoped, tag = 'input window, operand 17, single buffered']
    #allocation35 [shape = 's32[1]{0}', space=sflag, size = 0x4, scoped, tag = 'scoped memory for tpu_custom_call.1']
    #allocation36 [shape = 'u8[8192]{0}', space=vmem, size = 0x2000, scoped, tag = 'input window, operand 18, single buffered']
    #allocation37 [shape = 'u8[1024]{0}', space=vmem, size = 0x400, scoped, tag = 'input window, operand 19, single buffered']
    #allocation38 [shape = 's32[1]{0}', space=sflag, size = 0x4, scoped, tag = 'scoped memory for tpu_custom_call.1']
    #allocation39 [shape = 'u8[512]{0}', space=vmem, size = 0x400, scoped, tag = 'input window, operand 21, single buffered']
    #allocation40 [shape = 'u8[131072]{0}', space=vmem, size = 0x20000, scoped, tag = 'input window, operand 22, single buffered']
    #allocation41 [shape = 's32[1]{0}', space=sflag, size = 0x4, scoped, tag = 'scoped memory for tpu_custom_call.1']
    #allocation42 [shape = 'u8[131072]{0}', space=vmem, size = 0x20000, scoped, tag = 'input window, operand 24, single buffered']
    #allocation43 [shape = 'u8[65536]{0}', space=vmem, size = 0x10000, scoped, tag = 'input window, operand 25, single buffered']
    #allocation44 [shape = 's32[1]{0}', space=sflag, size = 0x4, scoped, tag = 'scoped memory for tpu_custom_call.1']
    #allocation45 [shape = 'u8[1024]{0}', space=vmem, size = 0x400, scoped, tag = 'output window, operand 0, single buffered']
    #allocation47 [shape = 'u32[9]{0}', space=smem, size = 0x24, scoped, tag = 'DMA stride descriptor']
    #allocation49 [shape = 'u32[9]{0}', space=smem, size = 0x24, scoped, tag = 'DMA stride descriptor']
    %70 = vsyncpa [#allocation14], 0
    %71 = vsyncpa [#allocation17], 0
    %72 = vsyncpa [#allocation20], 0
    %73 = vsyncpa [#allocation23], 0
    %74 = vsyncpa [#allocation26], 0
    %75 = vsyncpa [#allocation29], 0
    %76 = vsyncpa [#allocation32], 0
    %77 = vsyncpa [#allocation35], 0
    %78 = vsyncpa [#allocation38], 0
    %79 = vsyncpa [#allocation41], 0
    %80 = vsyncpa [#allocation44], 0
    %81 = vsyncpa [#allocation15], 0
    // Predicated region
    $region2: #{tpu_custom_call.1} parent=1 // pred_check
      _
    $region3: #{tpu_custom_call.1} parent=1 // pred_check_branch
      %83 = sbr.rel (0) target = $region5
    $region4: #{tpu_custom_call.1} parent=1 // pred_region
      %s85 = ssub.s32 1024, 1024
      %86 = vsyncadd [#allocation14], %s85
      %s87 = sshll.u32 [#allocation13], 4
      %s88 = int_to_ptr.vmem [resolvable:$true] %s87
      %93 = dma.hbm_to_vmem [thread:$0]  %s1, 1024, %s88, [#allocation14], 512, 512, 32
    $region5: #{tpu_custom_call.1} parent=1 // pred_fallthru
      _
    // Predicated region
    $region6: #{tpu_custom_call.1} parent=1 // pred_check
      _
    $region7: #{tpu_custom_call.1} parent=1 // pred_check_branch
      %95 = sbr.rel (0) target = $region9
    $region8: #{tpu_custom_call.1} parent=1 // pred_region
      %s97 = ssub.s32 128, 128
      %98 = vsyncadd [#allocation17], %s97
      %s100 = sshll.u32 [#allocation16], 4
      %s101 = int_to_ptr.vmem [resolvable:$true] %s100
      %103 = dma.hbm_to_vmem [thread:$0]  %s3, 128, %s101, [#allocation17]
    $region9: #{tpu_custom_call.1} parent=1 // pred_fallthru
      _
    // Predicated region
    $region10: #{tpu_custom_call.1} parent=1 // pred_check
      _
    $region11: #{tpu_custom_call.1} parent=1 // pred_check_branch
      %105 = sbr.rel (0) target = $region13
    $region12: #{tpu_custom_call.1} parent=1 // pred_region
      %s107 = ssub.s32 4096, 4096
      %108 = vsyncadd [#allocation17], %s107
      %s109 = sshll.u32 [#allocation18], 4
      %s110 = int_to_ptr.vmem [resolvable:$true] %s109
      %115 = dma.hbm_to_vmem [thread:$0]  %s5, 4096, %s110, [#allocation17], 64, 64, 4
    $region13: #{tpu_custom_call.1} parent=1 // pred_fallthru
      _
    // Predicated region
    $region14: #{tpu_custom_call.1} parent=1 // pred_check
      _
    $region15: #{tpu_custom_call.1} parent=1 // pred_check_branch
      %117 = sbr.rel (0) target = $region17
    $region16: #{tpu_custom_call.1} parent=1 // pred_region
      _
    $region17: #{tpu_custom_call.1} parent=1 // pred_fallthru
      _
    // Predicated region
    $region18: #{tpu_custom_call.1} parent=1 // pred_check
      _
    $region19: #{tpu_custom_call.1} parent=1 // pred_check_branch
      %119 = sbr.rel (0) target = $region21
    $region20: #{tpu_custom_call.1} parent=1 // pred_region
      %s121 = ssub.s32 16384, 16384
      %122 = vsyncadd [#allocation20], %s121
      %s123 = sshll.u32 [#allocation19], 4
      %s124 = int_to_ptr.vmem [resolvable:$true] %s123
      %129 = dma.hbm_to_vmem [thread:$0]  %s9, 16384, %s124, [#allocation20], 256, 256, 16
    $region21: #{tpu_custom_call.1} parent=1 // pred_fallthru
      _
    // Predicated region
    $region22: #{tpu_custom_call.1} parent=1 // pred_check
      _
    $region23: #{tpu_custom_call.1} parent=1 // pred_check_branch
      %131 = sbr.rel (0) target = $region25
    $region24: #{tpu_custom_call.1} parent=1 // pred_region
      _
    $region25: #{tpu_custom_call.1} parent=1 // pred_fallthru
      _
    // Predicated region
    $region26: #{tpu_custom_call.1} parent=1 // pred_check
      _
    $region27: #{tpu_custom_call.1} parent=1 // pred_check_branch
      %133 = sbr.rel (0) target = $region29
    $region28: #{tpu_custom_call.1} parent=1 // pred_region
      %s135 = ssub.s32 4096, 4096
      %136 = vsyncadd [#allocation20], %s135
      %s137 = sshll.u32 [#allocation21], 4
      %s138 = int_to_ptr.vmem [resolvable:$true] %s137
      %143 = dma.hbm_to_vmem [thread:$0]  %s13, 4096, %s138, [#allocation20], 256, 256, 16
    $region29: #{tpu_custom_call.1} parent=1 // pred_fallthru
      _
    // Predicated region
    $region30: #{tpu_custom_call.1} parent=1 // pred_check
      _
    $region31: #{tpu_custom_call.1} parent=1 // pred_check_branch
      %145 = sbr.rel (0) target = $region33
    $region32: #{tpu_custom_call.1} parent=1 // pred_region
      %s147 = ssub.s32 2048, 2048
      %148 = vsyncadd [#allocation23], %s147
      %s149 = sshll.u32 [#allocation22], 4
      %s150 = int_to_ptr.vmem [resolvable:$true] %s149
      %155 = dma.hbm_to_vmem [thread:$0]  %s15, 2048, %s150, [#allocation23], 64, 64, 4
    $region33: #{tpu_custom_call.1} parent=1 // pred_fallthru
      _
    // Predicated region
    $region34: #{tpu_custom_call.1} parent=1 // pred_check
      _
    $region35: #{tpu_custom_call.1} parent=1 // pred_check_branch
      %157 = sbr.rel (0) target = $region37
    $region36: #{tpu_custom_call.1} parent=1 // pred_region
      %s159 = ssub.s32 16, 16
      %160 = vsyncadd [#allocation23], %s159
      %s162 = sshll.u32 [#allocation24], 4
      %s163 = int_to_ptr.vmem [resolvable:$true] %s162
      %165 = dma.hbm_to_vmem [thread:$0]  %s17, 16, %s163, [#allocation23]
    $region37: #{tpu_custom_call.1} parent=1 // pred_fallthru
      _
    // Predicated region
    $region38: #{tpu_custom_call.1} parent=1 // pred_check
      _
    $region39: #{tpu_custom_call.1} parent=1 // pred_check_branch
      %167 = sbr.rel (0) target = $region41
    $region40: #{tpu_custom_call.1} parent=1 // pred_region
      %s169 = ssub.s32 256, 256
      %170 = vsyncadd [#allocation26], %s169
      %s171 = sshll.u32 [#allocation25], 4
      %s172 = int_to_ptr.vmem [resolvable:$true] %s171
      %177 = dma.hbm_to_vmem [thread:$0]  %s19, 256, %s172, [#allocation26], 128, 128, 8
    $region41: #{tpu_custom_call.1} parent=1 // pred_fallthru
      _
    // Predicated region
    $region42: #{tpu_custom_call.1} parent=1 // pred_check
      _
    $region43: #{tpu_custom_call.1} parent=1 // pred_check_branch
      %179 = sbr.rel (0) target = $region45
    $region44: #{tpu_custom_call.1} parent=1 // pred_region
      _
    $region45: #{tpu_custom_call.1} parent=1 // pred_fallthru
      _
    // Predicated region
    $region46: #{tpu_custom_call.1} parent=1 // pred_check
      _
    $region47: #{tpu_custom_call.1} parent=1 // pred_check_branch
      %181 = sbr.rel (0) target = $region49
    $region48: #{tpu_custom_call.1} parent=1 // pred_region
      %s183 = ssub.s32 1024, 1024
      %184 = vsyncadd [#allocation26], %s183
      %s185 = sshll.u32 [#allocation27], 4
      %s186 = int_to_ptr.vmem [resolvable:$true] %s185
      %191 = dma.hbm_to_vmem [thread:$0]  %s23, 1024, %s186, [#allocation26], 64, 64, 4
    $region49: #{tpu_custom_call.1} parent=1 // pred_fallthru
      _
    // Predicated region
    $region50: #{tpu_custom_call.1} parent=1 // pred_check
      _
    $region51: #{tpu_custom_call.1} parent=1 // pred_check_branch
      %193 = sbr.rel (0) target = $region53
    $region52: #{tpu_custom_call.1} parent=1 // pred_region
      %s195 = ssub.s32 16, 16
      %196 = vsyncadd [#allocation29], %s195
      %s198 = sshll.u32 [#allocation28], 4
      %s199 = int_to_ptr.vmem [resolvable:$true] %s198
      %201 = dma.hbm_to_vmem [thread:$0]  %s25, 16, %s199, [#allocation29]
    $region53: #{tpu_custom_call.1} parent=1 // pred_fallthru
      _
    // Predicated region
    $region54: #{tpu_custom_call.1} parent=1 // pred_check
      _
    $region55: #{tpu_custom_call.1} parent=1 // pred_check_branch
      %203 = sbr.rel (0) target = $region57
    $region56: #{tpu_custom_call.1} parent=1 // pred_region
      %s205 = ssub.s32 4096, 4096
      %206 = vsyncadd [#allocation29], %s205
      %s207 = sshll.u32 [#allocation30], 4
      %s208 = int_to_ptr.vmem [resolvable:$true] %s207
      %213 = dma.hbm_to_vmem [thread:$0]  %s27, 4096, %s208, [#allocation29], 256, 256, 16
    $region57: #{tpu_custom_call.1} parent=1 // pred_fallthru
      _
    // Predicated region
    $region58: #{tpu_custom_call.1} parent=1 // pred_check
      _
    $region59: #{tpu_custom_call.1} parent=1 // pred_check_branch
      %215 = sbr.rel (0) target = $region61
    $region60: #{tpu_custom_call.1} parent=1 // pred_region
      _
    $region61: #{tpu_custom_call.1} parent=1 // pred_fallthru
      _
    // Predicated region
    $region62: #{tpu_custom_call.1} parent=1 // pred_check
      _
    $region63: #{tpu_custom_call.1} parent=1 // pred_check_branch
      %217 = sbr.rel (0) target = $region65
    $region64: #{tpu_custom_call.1} parent=1 // pred_region
      %s219 = ssub.s32 4096, 4096
      %220 = vsyncadd [#allocation32], %s219
      %s221 = sshll.u32 [#allocation31], 4
      %s222 = int_to_ptr.vmem [resolvable:$true] %s221
      %227 = dma.hbm_to_vmem [thread:$0]  %s31, 4096, %s222, [#allocation32], 256, 256, 16
    $region65: #{tpu_custom_call.1} parent=1 // pred_fallthru
      _
    // Predicated region
    $region66: #{tpu_custom_call.1} parent=1 // pred_check
      _
    $region67: #{tpu_custom_call.1} parent=1 // pred_check_branch
      %229 = sbr.rel (0) target = $region69
    $region68: #{tpu_custom_call.1} parent=1 // pred_region
      %s231 = ssub.s32 2048, 2048
      %232 = vsyncadd [#allocation32], %s231
      %s233 = sshll.u32 [#allocation33], 4
      %s234 = int_to_ptr.vmem [resolvable:$true] %s233
      %239 = dma.hbm_to_vmem [thread:$0]  %s33, 2048, %s234, [#allocation32], 64, 64, 4
    $region69: #{tpu_custom_call.1} parent=1 // pred_fallthru
      _
    // Predicated region
    $region70: #{tpu_custom_call.1} parent=1 // pred_check
      _
    $region71: #{tpu_custom_call.1} parent=1 // pred_check_branch
      %241 = sbr.rel (0) target = $region73
    $region72: #{tpu_custom_call.1} parent=1 // pred_region
      %s243 = ssub.s32 16, 16
      %244 = vsyncadd [#allocation35], %s243
      %s246 = sshll.u32 [#allocation34], 4
      %s247 = int_to_ptr.vmem [resolvable:$true] %s246
      %249 = dma.hbm_to_vmem [thread:$0]  %s35, 16, %s247, [#allocation35]
    $region73: #{tpu_custom_call.1} parent=1 // pred_fallthru
      _
    // Predicated region
    $region74: #{tpu_custom_call.1} parent=1 // pred_check
      _
    $region75: #{tpu_custom_call.1} parent=1 // pred_check_branch
      %251 = sbr.rel (0) target = $region77
    $region76: #{tpu_custom_call.1} parent=1 // pred_region
      %s253 = ssub.s32 256, 256
      %254 = vsyncadd [#allocation35], %s253
      %s255 = sshll.u32 [#allocation36], 4
      %s256 = int_to_ptr.vmem [resolvable:$true] %s255
      %261 = dma.hbm_to_vmem [thread:$0]  %s37, 256, %s256, [#allocation35], 128, 128, 8
    $region77: #{tpu_custom_call.1} parent=1 // pred_fallthru
      _
    // Predicated region
    $region78: #{tpu_custom_call.1} parent=1 // pred_check
      _
    $region79: #{tpu_custom_call.1} parent=1 // pred_check_branch
      %263 = sbr.rel (0) target = $region81
    $region80: #{tpu_custom_call.1} parent=1 // pred_region
      %s265 = ssub.s32 32, 32
      %266 = vsyncadd [#allocation38], %s265
      %s268 = sshll.u32 [#allocation37], 4
      %s269 = int_to_ptr.vmem [resolvable:$true] %s268
      %271 = dma.hbm_to_vmem [thread:$0]  %s39, 32, %s269, [#allocation38]
    $region81: #{tpu_custom_call.1} parent=1 // pred_fallthru
      _
    // Predicated region
    $region82: #{tpu_custom_call.1} parent=1 // pred_check
      _
    $region83: #{tpu_custom_call.1} parent=1 // pred_check_branch
      %273 = sbr.rel (0) target = $region85
    $region84: #{tpu_custom_call.1} parent=1 // pred_region
      _
    $region85: #{tpu_custom_call.1} parent=1 // pred_fallthru
      _
    // Predicated region
    $region86: #{tpu_custom_call.1} parent=1 // pred_check
      _
    $region87: #{tpu_custom_call.1} parent=1 // pred_check_branch
      %275 = sbr.rel (0) target = $region89
    $region88: #{tpu_custom_call.1} parent=1 // pred_region
      %s277 = ssub.s32 16, 16
      %278 = vsyncadd [#allocation38], %s277
      %s280 = sshll.u32 [#allocation39], 4
      %s281 = int_to_ptr.vmem [resolvable:$true] %s280
      %283 = dma.hbm_to_vmem [thread:$0]  %s43, 16, %s281, [#allocation38]
    $region89: #{tpu_custom_call.1} parent=1 // pred_fallthru
      _
    // Predicated region
    $region90: #{tpu_custom_call.1} parent=1 // pred_check
      _
    $region91: #{tpu_custom_call.1} parent=1 // pred_check_branch
      %285 = sbr.rel (0) target = $region93
    $region92: #{tpu_custom_call.1} parent=1 // pred_region
      %s287 = ssub.s32 4096, 4096
      %288 = vsyncadd [#allocation41], %s287
      %s289 = sshll.u32 [#allocation40], 4
      %s290 = int_to_ptr.vmem [resolvable:$true] %s289
      %295 = dma.hbm_to_vmem [thread:$0]  %s45, 4096, %s290, [#allocation41], 256, 256, 16
    $region93: #{tpu_custom_call.1} parent=1 // pred_fallthru
      _
    // Predicated region
    $region94: #{tpu_custom_call.1} parent=1 // pred_check
      _
    $region95: #{tpu_custom_call.1} parent=1 // pred_check_branch
      %297 = sbr.rel (0) target = $region97
    $region96: #{tpu_custom_call.1} parent=1 // pred_region
      _
    $region97: #{tpu_custom_call.1} parent=1 // pred_fallthru
      _
    // Predicated region
    $region98: #{tpu_custom_call.1} parent=1 // pred_check
      _
    $region99: #{tpu_custom_call.1} parent=1 // pred_check_branch
      %299 = sbr.rel (0) target = $region101
    $region100: #{tpu_custom_call.1} parent=1 // pred_region
      %s301 = ssub.s32 4096, 4096
      %302 = vsyncadd [#allocation41], %s301
      %s303 = sshll.u32 [#allocation42], 4
      %s304 = int_to_ptr.vmem [resolvable:$true] %s303
      %309 = dma.hbm_to_vmem [thread:$0]  %s49, 4096, %s304, [#allocation41], 256, 256, 16
    $region101: #{tpu_custom_call.1} parent=1 // pred_fallthru
      _
    // Predicated region
    $region102: #{tpu_custom_call.1} parent=1 // pred_check
      _
    $region103: #{tpu_custom_call.1} parent=1 // pred_check_branch
      %311 = sbr.rel (0) target = $region105
    $region104: #{tpu_custom_call.1} parent=1 // pred_region
      %s313 = ssub.s32 2048, 2048
      %314 = vsyncadd [#allocation44], %s313
      %s315 = sshll.u32 [#allocation43], 4
      %s316 = int_to_ptr.vmem [resolvable:$true] %s315
      %321 = dma.hbm_to_vmem [thread:$0]  %s51, 2048, %s316, [#allocation44], 64, 64, 4
    $region105: #{tpu_custom_call.1} parent=1 // pred_fallthru
      _
    // Predicated region
    $region106: #{tpu_custom_call.1} parent=1 // pred_check
      _
    $region107: #{tpu_custom_call.1} parent=1 // pred_check_branch
      %323 = sbr.rel (0) target = $region109
    $region108: #{tpu_custom_call.1} parent=1 // pred_region
      _
    $region109: #{tpu_custom_call.1} parent=1 // pred_fallthru
      _
    // Predicated region
    $region110: #{tpu_custom_call.1} parent=1 // pred_check
      _
    $region111: #{tpu_custom_call.1} parent=1 // pred_check_branch
      %325 = sbr.rel (0) target = $region113
    $region112: #{tpu_custom_call.1} parent=1 // pred_region
      _
    $region113: #{tpu_custom_call.1} parent=1 // pred_fallthru
      _
    // Predicated region
    $region114: #{tpu_custom_call.1} parent=1 // pred_check
      _
    $region115: #{tpu_custom_call.1} parent=1 // pred_check_branch
      %327 = sbr.rel (0) target = $region117
    $region116: #{tpu_custom_call.1} parent=1 // pred_region
      _
    $region117: #{tpu_custom_call.1} parent=1 // pred_fallthru
      _
    // Predicated region
    $region118: #{tpu_custom_call.1} parent=1 // pred_check
      _
    $region119: #{tpu_custom_call.1} parent=1 // pred_check_branch
      %329 = sbr.rel (0) target = $region121
    $region120: #{tpu_custom_call.1} parent=1 // pred_region
      %330 = dma.done [#allocation14], 1024
    $region121: #{tpu_custom_call.1} parent=1 // pred_fallthru
      _
    // Predicated region
    $region122: #{tpu_custom_call.1} parent=1 // pred_check
      _
    $region123: #{tpu_custom_call.1} parent=1 // pred_check_branch
      %332 = sbr.rel (0) target = $region125
    $region124: #{tpu_custom_call.1} parent=1 // pred_region
      %333 = dma.done [#allocation17], 128
    $region125: #{tpu_custom_call.1} parent=1 // pred_fallthru
      _
    // Predicated region
    $region126: #{tpu_custom_call.1} parent=1 // pred_check
      _
    $region127: #{tpu_custom_call.1} parent=1 // pred_check_branch
      %335 = sbr.rel (0) target = $region129
    $region128: #{tpu_custom_call.1} parent=1 // pred_region
      %336 = dma.done [#allocation17], 4096
    $region129: #{tpu_custom_call.1} parent=1 // pred_fallthru
      _
    // Predicated region
    $region130: #{tpu_custom_call.1} parent=1 // pred_check
      _
    $region131: #{tpu_custom_call.1} parent=1 // pred_check_branch
      %338 = sbr.rel (0) target = $region133
    $region132: #{tpu_custom_call.1} parent=1 // pred_region
      %339 = dma.done [#allocation20], 16384
    $region133: #{tpu_custom_call.1} parent=1 // pred_fallthru
      _
    // Predicated region
    $region134: #{tpu_custom_call.1} parent=1 // pred_check
      _
    $region135: #{tpu_custom_call.1} parent=1 // pred_check_branch
      %341 = sbr.rel (0) target = $region137
    $region136: #{tpu_custom_call.1} parent=1 // pred_region
      %342 = dma.done [#allocation20], 4096
    $region137: #{tpu_custom_call.1} parent=1 // pred_fallthru
      _
    // Predicated region
    $region138: #{tpu_custom_call.1} parent=1 // pred_check
      _
    $region139: #{tpu_custom_call.1} parent=1 // pred_check_branch
      %344 = sbr.rel (0) target = $region141
    $region140: #{tpu_custom_call.1} parent=1 // pred_region
      %345 = dma.done [#allocation23], 2048
    $region141: #{tpu_custom_call.1} parent=1 // pred_fallthru
      _
    // Predicated region
    $region142: #{tpu_custom_call.1} parent=1 // pred_check
      _
    $region143: #{tpu_custom_call.1} parent=1 // pred_check_branch
      %347 = sbr.rel (0) target = $region145
    $region144: #{tpu_custom_call.1} parent=1 // pred_region
      %348 = dma.done [#allocation23], 16
    $region145: #{tpu_custom_call.1} parent=1 // pred_fallthru
      _
    // Predicated region
    $region146: #{tpu_custom_call.1} parent=1 // pred_check
      _
    $region147: #{tpu_custom_call.1} parent=1 // pred_check_branch
      %350 = sbr.rel (0) target = $region149
    $region148: #{tpu_custom_call.1} parent=1 // pred_region
      %351 = dma.done [#allocation26], 256
    $region149: #{tpu_custom_call.1} parent=1 // pred_fallthru
      _
    // Predicated region
    $region150: #{tpu_custom_call.1} parent=1 // pred_check
      _
    $region151: #{tpu_custom_call.1} parent=1 // pred_check_branch
      %353 = sbr.rel (0) target = $region153
    $region152: #{tpu_custom_call.1} parent=1 // pred_region
      %354 = dma.done [#allocation26], 1024
    $region153: #{tpu_custom_call.1} parent=1 // pred_fallthru
      _
    // Predicated region
    $region154: #{tpu_custom_call.1} parent=1 // pred_check
      _
    $region155: #{tpu_custom_call.1} parent=1 // pred_check_branch
      %356 = sbr.rel (0) target = $region157
    $region156: #{tpu_custom_call.1} parent=1 // pred_region
      %357 = dma.done [#allocation29], 16
    $region157: #{tpu_custom_call.1} parent=1 // pred_fallthru
      _
    // Predicated region
    $region158: #{tpu_custom_call.1} parent=1 // pred_check
      _
    $region159: #{tpu_custom_call.1} parent=1 // pred_check_branch
      %359 = sbr.rel (0) target = $region161
    $region160: #{tpu_custom_call.1} parent=1 // pred_region
      %360 = dma.done [#allocation29], 4096
    $region161: #{tpu_custom_call.1} parent=1 // pred_fallthru
      _
    // Predicated region
    $region162: #{tpu_custom_call.1} parent=1 // pred_check
      _
    $region163: #{tpu_custom_call.1} parent=1 // pred_check_branch
      %362 = sbr.rel (0) target = $region165
    $region164: #{tpu_custom_call.1} parent=1 // pred_region
      %363 = dma.done [#allocation32], 4096
    $region165: #{tpu_custom_call.1} parent=1 // pred_fallthru
      _
    // Predicated region
    $region166: #{tpu_custom_call.1} parent=1 // pred_check
      _
    $region167: #{tpu_custom_call.1} parent=1 // pred_check_branch
      %365 = sbr.rel (0) target = $region169
    $region168: #{tpu_custom_call.1} parent=1 // pred_region
      %366 = dma.done [#allocation32], 2048
    $region169: #{tpu_custom_call.1} parent=1 // pred_fallthru
      _
    // Predicated region
    $region170: #{tpu_custom_call.1} parent=1 // pred_check
      _
    $region171: #{tpu_custom_call.1} parent=1 // pred_check_branch
      %368 = sbr.rel (0) target = $region173
    $region172: #{tpu_custom_call.1} parent=1 // pred_region
      %369 = dma.done [#allocation35], 16
    $region173: #{tpu_custom_call.1} parent=1 // pred_fallthru
      _
    // Predicated region
    $region174: #{tpu_custom_call.1} parent=1 // pred_check
      _
    $region175: #{tpu_custom_call.1} parent=1 // pred_check_branch
      %371 = sbr.rel (0) target = $region177
    $region176: #{tpu_custom_call.1} parent=1 // pred_region
      %372 = dma.done [#allocation35], 256
    $region177: #{tpu_custom_call.1} parent=1 // pred_fallthru
      _
    // Predicated region
    $region178: #{tpu_custom_call.1} parent=1 // pred_check
      _
    $region179: #{tpu_custom_call.1} parent=1 // pred_check_branch
      %374 = sbr.rel (0) target = $region181
    $region180: #{tpu_custom_call.1} parent=1 // pred_region
      %375 = dma.done [#allocation38], 32
    $region181: #{tpu_custom_call.1} parent=1 // pred_fallthru
      _
    // Predicated region
    $region182: #{tpu_custom_call.1} parent=1 // pred_check
      _
    $region183: #{tpu_custom_call.1} parent=1 // pred_check_branch
      %377 = sbr.rel (0) target = $region185
    $region184: #{tpu_custom_call.1} parent=1 // pred_region
      %378 = dma.done [#allocation38], 16
    $region185: #{tpu_custom_call.1} parent=1 // pred_fallthru
      _
    // Predicated region
    $region186: #{tpu_custom_call.1} parent=1 // pred_check
      _
    $region187: #{tpu_custom_call.1} parent=1 // pred_check_branch
      %380 = sbr.rel (0) target = $region189
    $region188: #{tpu_custom_call.1} parent=1 // pred_region
      %381 = dma.done [#allocation41], 4096
    $region189: #{tpu_custom_call.1} parent=1 // pred_fallthru
      _
    // Predicated region
    $region190: #{tpu_custom_call.1} parent=1 // pred_check
      _
    $region191: #{tpu_custom_call.1} parent=1 // pred_check_branch
      %383 = sbr.rel (0) target = $region193
    $region192: #{tpu_custom_call.1} parent=1 // pred_region
      %384 = dma.done [#allocation41], 4096
    $region193: #{tpu_custom_call.1} parent=1 // pred_fallthru
      _
    // Predicated region
    $region194: #{tpu_custom_call.1} parent=1 // pred_check
      _
    $region195: #{tpu_custom_call.1} parent=1 // pred_check_branch
      %386 = sbr.rel (0) target = $region197
    $region196: #{tpu_custom_call.1} parent=1 // pred_region
      %387 = dma.done [#allocation44], 2048
    $region197: #{tpu_custom_call.1} parent=1 // pred_fallthru
      _
    %s390 = sshll.u32 1, 14
    %s391 = sxor.u32 4294967295, %s390
    %s393 = sld [smem:[#allocation0]]
    %s394 = sadd.s32 2, %s393
    %s396 = sshll.u32 7, 26
    %s397 = sxor.u32 4294967295, %s396
    %s398 = sand.u32 0, %s397
    %s399 = sshll.u32 %s394, 26
    %s400 = sor.u32 %s398, %s399
    %s401 = sshll.u32 [#allocation9], 4
    %s402 = int_to_ptr.vmem [resolvable:$true] %s401
    %405 = sst [smem:[#allocation47]] 512
    %s406 = scalar_lea.smem [#allocation47], 1
    %407 = sst [smem:[%s406]] 512
    %s408 = scalar_lea.smem [#allocation47], 2
    %409 = sst [smem:[%s408]] 4
    %s410 = scalar_lea.smem [#allocation47], 3
    %411 = sst [smem:[%s410]] 64
    %s412 = scalar_lea.smem [#allocation47], 4
    %413 = sst [smem:[%s412]] 128
    %s414 = scalar_lea.smem [#allocation47], 5
    %415 = sst [smem:[%s414]] 2
    %s416 = scalar_lea.smem [#allocation47], 6
    %417 = sst [smem:[%s416]] 256
    %s418 = scalar_lea.smem [#allocation47], 7
    %419 = sst [smem:[%s418]] 64
    %s420 = scalar_lea.smem [#allocation47], 8
    %421 = sst [smem:[%s420]] 4
    %423 = dma.general %s59, 12288, %s402, [#allocation12], [#allocation46], [#allocation47], %s400, 0
    %s424 = scalar_lea.sflag [#allocation12], 1
    %s426 = sshll.u32 1, 14
    %s427 = sxor.u32 4294967295, %s426
    %s429 = sadd.s32 2, %s393
    %s431 = sshll.u32 7, 26
    %s432 = sxor.u32 4294967295, %s431
    %s433 = sand.u32 0, %s432
    %s434 = sshll.u32 %s429, 26
    %s435 = sor.u32 %s433, %s434
    %s436 = sshll.u32 [#allocation10], 4
    %s437 = int_to_ptr.vmem [resolvable:$true] %s436
    %440 = sst [smem:[#allocation49]] 512
    %s441 = scalar_lea.smem [#allocation49], 1
    %442 = sst [smem:[%s441]] 512
    %s443 = scalar_lea.smem [#allocation49], 2
    %444 = sst [smem:[%s443]] 4
    %s445 = scalar_lea.smem [#allocation49], 3
    %446 = sst [smem:[%s445]] 64
    %s447 = scalar_lea.smem [#allocation49], 4
    %448 = sst [smem:[%s447]] 128
    %s449 = scalar_lea.smem [#allocation49], 5
    %450 = sst [smem:[%s449]] 2
    %s451 = scalar_lea.smem [#allocation49], 6
    %452 = sst [smem:[%s451]] 256
    %s453 = scalar_lea.smem [#allocation49], 7
    %454 = sst [smem:[%s453]] 64
    %s455 = scalar_lea.smem [#allocation49], 8
    %456 = sst [smem:[%s455]] 4
    %458 = dma.general %s61, 4096, %s437, %s424, [#allocation48], [#allocation49], %s435, 0
    %s459 = scalar_lea.sflag [#allocation12], 2
    // Predicated region
    $region198: #{tpu_custom_call.1} parent=1 // pred_check
      _
    $region199: #{tpu_custom_call.1} parent=1 // pred_check_branch
      %461 = sbr.rel target = $region201
    $region200: #{tpu_custom_call.1} parent=1 // pred_region
      %462 = sst [smem:[#allocation52]] [#allocation51]
      %463 = sst [smem:[#allocation53]] [#allocation50]
    $region201: #{tpu_custom_call.1} parent=1 // pred_fallthru
      _
    %465 = shalt.err (0)
    %s467 = sshll.u32 [#allocation11], 4
    %s468 = int_to_ptr.vmem [resolvable:$true] %s467
    %470 = dma.hbm_to_vmem [thread:$0]  %s63, 1024, %s468, %s459
    %v471 = vld [vmem:[#allocation13] sm:$0xff]
    %v472 = vld [vmem:[#allocation13 + $0x8] sm:$0xff]
    %v473 = vld [vmem:[#allocation13 + $0x10] sm:$0xff]
    %v474 = vld [vmem:[#allocation13 + $0x18] sm:$0xff]
    %v475 = vld [vmem:[#allocation13 + $0x20] sm:$0xf]
    %v476 = vld [vmem:[#allocation13 + $0x28] sm:$0xf]
    %v477 = vld [vmem:[#allocation13 + $0x30] sm:$0xf]
    %v478 = vld [vmem:[#allocation13 + $0x38] sm:$0xf]
    %v479 = vpack.c.bf16 %v475, %v471
    %v480 = vpack.c.bf16 %v476, %v472
    %v481 = vpack.c.bf16 %v477, %v473
    %v482 = vpack.c.bf16 %v478, %v474
    %v483 = vld [vmem:[#allocation19] sm:$0xff]
    %v484 = vld [vmem:[#allocation19 + $0x8] sm:$0xff]
    %v485 = vld [vmem:[#allocation19 + $0x10] sm:$0xff]
    %v486 = vld [vmem:[#allocation19 + $0x18] sm:$0xff]
    %v487 = vld [vmem:[#allocation19 + $0x20] sm:$0xff]
    %v488 = vld [vmem:[#allocation19 + $0x28] sm:$0xff]
    %v489 = vld [vmem:[#allocation19 + $0x30] sm:$0xff]
    %v490 = vld [vmem:[#allocation19 + $0x38] sm:$0xff]
    %v491 = vld [vmem:[#allocation19 + $0x40] sm:$0xff]
    %v492 = vld [vmem:[#allocation19 + $0x48] sm:$0xff]
    %v493 = vld [vmem:[#allocation19 + $0x50] sm:$0xff]
    %v494 = vld [vmem:[#allocation19 + $0x58] sm:$0xff]
    %v495 = vld [vmem:[#allocation19 + $0x60] sm:$0xff]
    %v496 = vld [vmem:[#allocation19 + $0x68] sm:$0xff]
    %v497 = vld [vmem:[#allocation19 + $0x70] sm:$0xff]
    %v498 = vld [vmem:[#allocation19 + $0x78] sm:$0xff]
    %v499 = vld [vmem:[#allocation19 + $0x80] sm:$0xff]
    %v500 = vld [vmem:[#allocation19 + $0x88] sm:$0xff]
    %v501 = vld [vmem:[#allocation19 + $0x90] sm:$0xff]
    %v502 = vld [vmem:[#allocation19 + $0x98] sm:$0xff]
    %v503 = vld [vmem:[#allocation19 + $0xa0] sm:$0xff]
    %v504 = vld [vmem:[#allocation19 + $0xa8] sm:$0xff]
    %v505 = vld [vmem:[#allocation19 + $0xb0] sm:$0xff]
    %v506 = vld [vmem:[#allocation19 + $0xb8] sm:$0xff]
    %v507 = vld [vmem:[#allocation19 + $0xc0] sm:$0xff]
    %v508 = vld [vmem:[#allocation19 + $0xc8] sm:$0xff]
    %v509 = vld [vmem:[#allocation19 + $0xd0] sm:$0xff]
    %v510 = vld [vmem:[#allocation19 + $0xd8] sm:$0xff]
    %v511 = vld [vmem:[#allocation19 + $0xe0] sm:$0xff]
    %v512 = vld [vmem:[#allocation19 + $0xe8] sm:$0xff]
    %v513 = vld [vmem:[#allocation19 + $0xf0] sm:$0xff]
    %v514 = vld [vmem:[#allocation19 + $0xf8] sm:$0xff]
    %v515 = vld [vmem:[#allocation19 + $0x100] sm:$0xff]
    %v516 = vld [vmem:[#allocation19 + $0x108] sm:$0xff]
    %v517 = vld [vmem:[#allocation19 + $0x110] sm:$0xff]
    %v518 = vld [vmem:[#allocation19 + $0x118] sm:$0xff]
    %v519 = vld [vmem:[#allocation19 + $0x120] sm:$0xff]
    %v520 = vld [vmem:[#allocation19 + $0x128] sm:$0xff]
    %v521 = vld [vmem:[#allocation19 + $0x130] sm:$0xff]
    %v522 = vld [vmem:[#allocation19 + $0x138] sm:$0xff]
    %v523 = vld [vmem:[#allocation19 + $0x140] sm:$0xff]
    %v524 = vld [vmem:[#allocation19 + $0x148] sm:$0xff]
    %v525 = vld [vmem:[#allocation19 + $0x150] sm:$0xff]
    %v526 = vld [vmem:[#allocation19 + $0x158] sm:$0xff]
    %v527 = vld [vmem:[#allocation19 + $0x160] sm:$0xff]
    %v528 = vld [vmem:[#allocation19 + $0x168] sm:$0xff]
    %v529 = vld [vmem:[#allocation19 + $0x170] sm:$0xff]
    %v530 = vld [vmem:[#allocation19 + $0x178] sm:$0xff]
    %v531 = vld [vmem:[#allocation19 + $0x180] sm:$0xff]
    %v532 = vld [vmem:[#allocation19 + $0x188] sm:$0xff]
    %v533 = vld [vmem:[#allocation19 + $0x190] sm:$0xff]
    %v534 = vld [vmem:[#allocation19 + $0x198] sm:$0xff]
    %v535 = vld [vmem:[#allocation19 + $0x1a0] sm:$0xff]
    %v536 = vld [vmem:[#allocation19 + $0x1a8] sm:$0xff]
    %v537 = vld [vmem:[#allocation19 + $0x1b0] sm:$0xff]
    %v538 = vld [vmem:[#allocation19 + $0x1b8] sm:$0xff]
    %v539 = vld [vmem:[#allocation19 + $0x1c0] sm:$0xff]
    %v540 = vld [vmem:[#allocation19 + $0x1c8] sm:$0xff]
    %v541 = vld [vmem:[#allocation19 + $0x1d0] sm:$0xff]
    %v542 = vld [vmem:[#allocation19 + $0x1d8] sm:$0xff]
    %v543 = vld [vmem:[#allocation19 + $0x1e0] sm:$0xff]
    %v544 = vld [vmem:[#allocation19 + $0x1e8] sm:$0xff]
    %v545 = vld [vmem:[#allocation19 + $0x1f0] sm:$0xff]
    %v546 = vld [vmem:[#allocation19 + $0x1f8] sm:$0xff]
    %v547 = vld [vmem:[#allocation19 + $0x200] sm:$0xff]
    %v548 = vld [vmem:[#allocation19 + $0x208] sm:$0xff]
    %v549 = vld [vmem:[#allocation19 + $0x210] sm:$0xff]
    %v550 = vld [vmem:[#allocation19 + $0x218] sm:$0xff]
    %v551 = vld [vmem:[#allocation19 + $0x220] sm:$0xff]
    %v552 = vld [vmem:[#allocation19 + $0x228] sm:$0xff]
    %v553 = vld [vmem:[#allocation19 + $0x230] sm:$0xff]
    %v554 = vld [vmem:[#allocation19 + $0x238] sm:$0xff]
    %v555 = vld [vmem:[#allocation19 + $0x240] sm:$0xff]
    %v556 = vld [vmem:[#allocation19 + $0x248] sm:$0xff]
    %v557 = vld [vmem:[#allocation19 + $0x250] sm:$0xff]
    %v558 = vld [vmem:[#allocation19 + $0x258] sm:$0xff]
    %v559 = vld [vmem:[#allocation19 + $0x260] sm:$0xff]
    %v560 = vld [vmem:[#allocation19 + $0x268] sm:$0xff]
    %v561 = vld [vmem:[#allocation19 + $0x270] sm:$0xff]
    %v562 = vld [vmem:[#allocation19 + $0x278] sm:$0xff]
    %v563 = vld [vmem:[#allocation19 + $0x280] sm:$0xff]
    %v564 = vld [vmem:[#allocation19 + $0x288] sm:$0xff]
    %v565 = vld [vmem:[#allocation19 + $0x290] sm:$0xff]
    %v566 = vld [vmem:[#allocation19 + $0x298] sm:$0xff]
    %v567 = vld [vmem:[#allocation19 + $0x2a0] sm:$0xff]
    %v568 = vld [vmem:[#allocation19 + $0x2a8] sm:$0xff]
    %v569 = vld [vmem:[#allocation19 + $0x2b0] sm:$0xff]
    %v570 = vld [vmem:[#allocation19 + $0x2b8] sm:$0xff]
    %v571 = vld [vmem:[#allocation19 + $0x2c0] sm:$0xff]
    %v572 = vld [vmem:[#allocation19 + $0x2c8] sm:$0xff]
    %v573 = vld [vmem:[#allocation19 + $0x2d0] sm:$0xff]
    %v574 = vld [vmem:[#allocation19 + $0x2d8] sm:$0xff]
    %v575 = vld [vmem:[#allocation19 + $0x2e0] sm:$0xff]
    %v576 = vld [vmem:[#allocation19 + $0x2e8] sm:$0xff]
    %v577 = vld [vmem:[#allocation19 + $0x2f0] sm:$0xff]
    %v578 = vld [vmem:[#allocation19 + $0x2f8] sm:$0xff]
    %v579 = vld [vmem:[#allocation19 + $0x300] sm:$0xff]
    %v580 = vld [vmem:[#allocation19 + $0x308] sm:$0xff]
    %v581 = vld [vmem:[#allocation19 + $0x310] sm:$0xff]
    %v582 = vld [vmem:[#allocation19 + $0x318] sm:$0xff]
    %v583 = vld [vmem:[#allocation19 + $0x320] sm:$0xff]
    %v584 = vld [vmem:[#allocation19 + $0x328] sm:$0xff]
    %v585 = vld [vmem:[#allocation19 + $0x330] sm:$0xff]
    %v586 = vld [vmem:[#allocation19 + $0x338] sm:$0xff]
    %v587 = vld [vmem:[#allocation19 + $0x340] sm:$0xff]
    %v588 = vld [vmem:[#allocation19 + $0x348] sm:$0xff]
    %v589 = vld [vmem:[#allocation19 + $0x350] sm:$0xff]
    %v590 = vld [vmem:[#allocation19 + $0x358] sm:$0xff]
    %v591 = vld [vmem:[#allocation19 + $0x360] sm:$0xff]
    %v592 = vld [vmem:[#allocation19 + $0x368] sm:$0xff]
    %v593 = vld [vmem:[#allocation19 + $0x370] sm:$0xff]
    %v594 = vld [vmem:[#allocation19 + $0x378] sm:$0xff]
    %v595 = vld [vmem:[#allocation19 + $0x380] sm:$0xff]
    %v596 = vld [vmem:[#allocation19 + $0x388] sm:$0xff]
    %v597 = vld [vmem:[#allocation19 + $0x390] sm:$0xff]
    %v598 = vld [vmem:[#allocation19 + $0x398] sm:$0xff]
    %v599 = vld [vmem:[#allocation19 + $0x3a0] sm:$0xff]
    %v600 = vld [vmem:[#allocation19 + $0x3a8] sm:$0xff]
    %v601 = vld [vmem:[#allocation19 + $0x3b0] sm:$0xff]
    %v602 = vld [vmem:[#allocation19 + $0x3b8] sm:$0xff]
    %v603 = vld [vmem:[#allocation19 + $0x3c0] sm:$0xff]
    %v604 = vld [vmem:[#allocation19 + $0x3c8] sm:$0xff]
    %v605 = vld [vmem:[#allocation19 + $0x3d0] sm:$0xff]
    %v606 = vld [vmem:[#allocation19 + $0x3d8] sm:$0xff]
    %v607 = vld [vmem:[#allocation19 + $0x3e0] sm:$0xff]
    %v608 = vld [vmem:[#allocation19 + $0x3e8] sm:$0xff]
    %v609 = vld [vmem:[#allocation19 + $0x3f0] sm:$0xff]
    %v610 = vld [vmem:[#allocation19 + $0x3f8] sm:$0xff]
    %v611 = vld [vmem:[%s11] sm:$0xf]
    %v613 = vlaneseq
    %v614 = vshrl.u32 %v613, 7
    %v615 = vsub.s32 0, %v614
    %v616 = vrot.slane %v611, %v615
    %v617 = vlaneseq
    %v618 = vshrl.u32 %v617, 7
    %v619 = vsub.s32 1, %v618
    %v620 = vrot.slane %v611, %v619
    %v621 = vlaneseq
    %v622 = vshrl.u32 %v621, 7
    %v623 = vsub.s32 2, %v622
    %v624 = vrot.slane %v611, %v623
    %v625 = vlaneseq
    %v626 = vshrl.u32 %v625, 7
    %v627 = vsub.s32 3, %v626
    %v628 = vrot.slane %v611, %v627
    %v761 = vunpack.c.l.b16 %v483
    %v762 = vunpack.c.h.b16 %v483
    %v763 = vunpack.c.l.b16 %v484
    %v764 = vunpack.c.h.b16 %v484
    %v765 = vunpack.c.l.b16 %v485
    %v766 = vunpack.c.h.b16 %v485
    %v767 = vunpack.c.l.b16 %v486
    %v768 = vunpack.c.h.b16 %v486
    %v769 = vunpack.c.l.b16 %v487
    %v770 = vunpack.c.h.b16 %v487
    %v771 = vunpack.c.l.b16 %v488
    %v772 = vunpack.c.h.b16 %v488
    %v773 = vunpack.c.l.b16 %v489
    %v774 = vunpack.c.h.b16 %v489
    %v775 = vunpack.c.l.b16 %v490
    %v776 = vunpack.c.h.b16 %v490
    %v777 = vunpack.c.l.b16 %v491
    %v778 = vunpack.c.h.b16 %v491
    %v779 = vunpack.c.l.b16 %v492
    %v780 = vunpack.c.h.b16 %v492
    %v781 = vunpack.c.l.b16 %v493
    %v782 = vunpack.c.h.b16 %v493
    %v783 = vunpack.c.l.b16 %v494
    %v784 = vunpack.c.h.b16 %v494
    %v785 = vunpack.c.l.b16 %v495
    %v786 = vunpack.c.h.b16 %v495
    %v787 = vunpack.c.l.b16 %v496
    %v788 = vunpack.c.h.b16 %v496
    %v789 = vunpack.c.l.b16 %v497
    %v790 = vunpack.c.h.b16 %v497
    %v791 = vunpack.c.l.b16 %v498
    %v792 = vunpack.c.h.b16 %v498
    %v793 = vunpack.c.l.b16 %v499
    %v794 = vunpack.c.h.b16 %v499
    %v795 = vunpack.c.l.b16 %v500
    %v796 = vunpack.c.h.b16 %v500
    %v797 = vunpack.c.l.b16 %v501
    %v798 = vunpack.c.h.b16 %v501
    %v799 = vunpack.c.l.b16 %v502
    %v800 = vunpack.c.h.b16 %v502
    %v801 = vunpack.c.l.b16 %v503
    %v802 = vunpack.c.h.b16 %v503
    %v803 = vunpack.c.l.b16 %v504
    %v804 = vunpack.c.h.b16 %v504
    %v805 = vunpack.c.l.b16 %v505
    %v806 = vunpack.c.h.b16 %v505
    %v807 = vunpack.c.l.b16 %v506
    %v808 = vunpack.c.h.b16 %v506
    %v809 = vunpack.c.l.b16 %v507
    %v810 = vunpack.c.h.b16 %v507
    %v811 = vunpack.c.l.b16 %v508
    %v812 = vunpack.c.h.b16 %v508
    %v813 = vunpack.c.l.b16 %v509
    %v814 = vunpack.c.h.b16 %v509
    %v815 = vunpack.c.l.b16 %v510
    %v816 = vunpack.c.h.b16 %v510
    %v817 = vunpack.c.l.b16 %v511
    %v818 = vunpack.c.h.b16 %v511
    %v819 = vunpack.c.l.b16 %v512
    %v820 = vunpack.c.h.b16 %v512
    %v821 = vunpack.c.l.b16 %v513
    %v822 = vunpack.c.h.b16 %v513
    %v823 = vunpack.c.l.b16 %v514
    %v824 = vunpack.c.h.b16 %v514
    %v825 = vunpack.c.l.b16 %v515
    %v826 = vunpack.c.h.b16 %v515
    %v827 = vunpack.c.l.b16 %v516
    %v828 = vunpack.c.h.b16 %v516
    %v829 = vunpack.c.l.b16 %v517
    %v830 = vunpack.c.h.b16 %v517
    %v831 = vunpack.c.l.b16 %v518
    %v832 = vunpack.c.h.b16 %v518
    %v833 = vunpack.c.l.b16 %v519
    %v834 = vunpack.c.h.b16 %v519
    %v835 = vunpack.c.l.b16 %v520
    %v836 = vunpack.c.h.b16 %v520
    %v837 = vunpack.c.l.b16 %v521
    %v838 = vunpack.c.h.b16 %v521
    %v839 = vunpack.c.l.b16 %v522
    %v840 = vunpack.c.h.b16 %v522
    %v841 = vunpack.c.l.b16 %v523
    %v842 = vunpack.c.h.b16 %v523
    %v843 = vunpack.c.l.b16 %v524
    %v844 = vunpack.c.h.b16 %v524
    %v845 = vunpack.c.l.b16 %v525
    %v846 = vunpack.c.h.b16 %v525
    %v847 = vunpack.c.l.b16 %v526
    %v848 = vunpack.c.h.b16 %v526
    %v849 = vunpack.c.l.b16 %v527
    %v850 = vunpack.c.h.b16 %v527
    %v851 = vunpack.c.l.b16 %v528
    %v852 = vunpack.c.h.b16 %v528
    %v853 = vunpack.c.l.b16 %v529
    %v854 = vunpack.c.h.b16 %v529
    %v855 = vunpack.c.l.b16 %v530
    %v856 = vunpack.c.h.b16 %v530
    %v857 = vunpack.c.l.b16 %v531
    %v858 = vunpack.c.h.b16 %v531
    %v859 = vunpack.c.l.b16 %v532
    %v860 = vunpack.c.h.b16 %v532
    %v861 = vunpack.c.l.b16 %v533
    %v862 = vunpack.c.h.b16 %v533
    %v863 = vunpack.c.l.b16 %v534
    %v864 = vunpack.c.h.b16 %v534
    %v865 = vunpack.c.l.b16 %v535
    %v866 = vunpack.c.h.b16 %v535
    %v867 = vunpack.c.l.b16 %v536
    %v868 = vunpack.c.h.b16 %v536
    %v869 = vunpack.c.l.b16 %v537
    %v870 = vunpack.c.h.b16 %v537
    %v871 = vunpack.c.l.b16 %v538
    %v872 = vunpack.c.h.b16 %v538
    %v873 = vunpack.c.l.b16 %v539
    %v874 = vunpack.c.h.b16 %v539
    %v875 = vunpack.c.l.b16 %v540
    %v876 = vunpack.c.h.b16 %v540
    %v877 = vunpack.c.l.b16 %v541
    %v878 = vunpack.c.h.b16 %v541
    %v879 = vunpack.c.l.b16 %v542
    %v880 = vunpack.c.h.b16 %v542
    %v881 = vunpack.c.l.b16 %v543
    %v882 = vunpack.c.h.b16 %v543
    %v883 = vunpack.c.l.b16 %v544
    %v884 = vunpack.c.h.b16 %v544
    %v885 = vunpack.c.l.b16 %v545
    %v886 = vunpack.c.h.b16 %v545
    %v887 = vunpack.c.l.b16 %v546
    %v888 = vunpack.c.h.b16 %v546
    %v889 = vunpack.c.l.b16 %v547
    %v890 = vunpack.c.h.b16 %v547
    %v891 = vunpack.c.l.b16 %v548
    %v892 = vunpack.c.h.b16 %v548
    %v893 = vunpack.c.l.b16 %v549
    %v894 = vunpack.c.h.b16 %v549
    %v895 = vunpack.c.l.b16 %v550
    %v896 = vunpack.c.h.b16 %v550
    %v897 = vunpack.c.l.b16 %v551
    %v898 = vunpack.c.h.b16 %v551
    %v899 = vunpack.c.l.b16 %v552
    %v900 = vunpack.c.h.b16 %v552
    %v901 = vunpack.c.l.b16 %v553
    %v902 = vunpack.c.h.b16 %v553
    %v903 = vunpack.c.l.b16 %v554
    %v904 = vunpack.c.h.b16 %v554
    %v905 = vunpack.c.l.b16 %v555
    %v906 = vunpack.c.h.b16 %v555
    %v907 = vunpack.c.l.b16 %v556
    %v908 = vunpack.c.h.b16 %v556
    %v909 = vunpack.c.l.b16 %v557
    %v910 = vunpack.c.h.b16 %v557
    %v911 = vunpack.c.l.b16 %v558
    %v912 = vunpack.c.h.b16 %v558
    %v913 = vunpack.c.l.b16 %v559
    %v914 = vunpack.c.h.b16 %v559
    %v915 = vunpack.c.l.b16 %v560
    %v916 = vunpack.c.h.b16 %v560
    %v917 = vunpack.c.l.b16 %v561
    %v918 = vunpack.c.h.b16 %v561
    %v919 = vunpack.c.l.b16 %v562
    %v920 = vunpack.c.h.b16 %v562
    %v921 = vunpack.c.l.b16 %v563
    %v922 = vunpack.c.h.b16 %v563
    %v923 = vunpack.c.l.b16 %v564
    %v924 = vunpack.c.h.b16 %v564
    %v925 = vunpack.c.l.b16 %v565
    %v926 = vunpack.c.h.b16 %v565
    %v927 = vunpack.c.l.b16 %v566
    %v928 = vunpack.c.h.b16 %v566
    %v929 = vunpack.c.l.b16 %v567
    %v930 = vunpack.c.h.b16 %v567
    %v931 = vunpack.c.l.b16 %v568
    %v932 = vunpack.c.h.b16 %v568
    %v933 = vunpack.c.l.b16 %v569
    %v934 = vunpack.c.h.b16 %v569
    %v935 = vunpack.c.l.b16 %v570
    %v936 = vunpack.c.h.b16 %v570
    %v937 = vunpack.c.l.b16 %v571
    %v938 = vunpack.c.h.b16 %v571
    %v939 = vunpack.c.l.b16 %v572
    %v940 = vunpack.c.h.b16 %v572
    %v941 = vunpack.c.l.b16 %v573
    %v942 = vunpack.c.h.b16 %v573
    %v943 = vunpack.c.l.b16 %v574
    %v944 = vunpack.c.h.b16 %v574
    %v945 = vunpack.c.l.b16 %v575
    %v946 = vunpack.c.h.b16 %v575
    %v947 = vunpack.c.l.b16 %v576
    %v948 = vunpack.c.h.b16 %v576
    %v949 = vunpack.c.l.b16 %v577
    %v950 = vunpack.c.h.b16 %v577
    %v951 = vunpack.c.l.b16 %v578
    %v952 = vunpack.c.h.b16 %v578
    %v953 = vunpack.c.l.b16 %v579
    %v954 = vunpack.c.h.b16 %v579
    %v955 = vunpack.c.l.b16 %v580
    %v956 = vunpack.c.h.b16 %v580
    %v957 = vunpack.c.l.b16 %v581
    %v958 = vunpack.c.h.b16 %v581
    %v959 = vunpack.c.l.b16 %v582
    %v960 = vunpack.c.h.b16 %v582
    %v961 = vunpack.c.l.b16 %v583
    %v962 = vunpack.c.h.b16 %v583
    %v963 = vunpack.c.l.b16 %v584
    %v964 = vunpack.c.h.b16 %v584
    %v965 = vunpack.c.l.b16 %v585
    %v966 = vunpack.c.h.b16 %v585
    %v967 = vunpack.c.l.b16 %v586
    %v968 = vunpack.c.h.b16 %v586
    %v969 = vunpack.c.l.b16 %v587
    %v970 = vunpack.c.h.b16 %v587
    %v971 = vunpack.c.l.b16 %v588
    %v972 = vunpack.c.h.b16 %v588
    %v973 = vunpack.c.l.b16 %v589
    %v974 = vunpack.c.h.b16 %v589
    %v975 = vunpack.c.l.b16 %v590
    %v976 = vunpack.c.h.b16 %v590
    %v977 = vunpack.c.l.b16 %v591
    %v978 = vunpack.c.h.b16 %v591
    %v979 = vunpack.c.l.b16 %v592
    %v980 = vunpack.c.h.b16 %v592
    %v981 = vunpack.c.l.b16 %v593
    %v982 = vunpack.c.h.b16 %v593
    %v983 = vunpack.c.l.b16 %v594
    %v984 = vunpack.c.h.b16 %v594
    %v985 = vunpack.c.l.b16 %v595
    %v986 = vunpack.c.h.b16 %v595
    %v987 = vunpack.c.l.b16 %v596
    %v988 = vunpack.c.h.b16 %v596
    %v989 = vunpack.c.l.b16 %v597
    %v990 = vunpack.c.h.b16 %v597
    %v991 = vunpack.c.l.b16 %v598
    %v992 = vunpack.c.h.b16 %v598
    %v993 = vunpack.c.l.b16 %v599
    %v994 = vunpack.c.h.b16 %v599
    %v995 = vunpack.c.l.b16 %v600
    %v996 = vunpack.c.h.b16 %v600
    %v997 = vunpack.c.l.b16 %v601
    %v998 = vunpack.c.h.b16 %v601
    %v999 = vunpack.c.l.b16 %v602
    %v1000 = vunpack.c.h.b16 %v602
    %v1001 = vunpack.c.l.b16 %v603
    %v1002 = vunpack.c.h.b16 %v603
    %v1003 = vunpack.c.l.b16 %v604
    %v1004 = vunpack.c.h.b16 %v604
    %v1005 = vunpack.c.l.b16 %v605
    %v1006 = vunpack.c.h.b16 %v605
    %v1007 = vunpack.c.l.b16 %v606
    %v1008 = vunpack.c.h.b16 %v606
    %v1009 = vunpack.c.l.b16 %v607
    %v1010 = vunpack.c.h.b16 %v607
    %v1011 = vunpack.c.l.b16 %v608
    %v1012 = vunpack.c.h.b16 %v608
    %v1013 = vunpack.c.l.b16 %v609
    %v1014 = vunpack.c.h.b16 %v609
    %v1015 = vunpack.c.l.b16 %v610
    %v1016 = vunpack.c.h.b16 %v610
    %v1017 = vpack.c.b16 %v765, %v761
    %v1018 = vpack.c.b16 %v766, %v762
    %v1019 = vpack.c.b16 %v767, %v763
    %v1020 = vpack.c.b16 %v768, %v764
    %v1021 = vpack.c.b16 %v773, %v769
    %v1022 = vpack.c.b16 %v774, %v770
    %v1023 = vpack.c.b16 %v775, %v771
    %v1024 = vpack.c.b16 %v776, %v772
    %v1025 = vpack.c.b16 %v781, %v777
    %v1026 = vpack.c.b16 %v782, %v778
    %v1027 = vpack.c.b16 %v783, %v779
    %v1028 = vpack.c.b16 %v784, %v780
    %v1029 = vpack.c.b16 %v789, %v785
    %v1030 = vpack.c.b16 %v790, %v786
    %v1031 = vpack.c.b16 %v791, %v787
    %v1032 = vpack.c.b16 %v792, %v788
    %v1033 = vpack.c.b16 %v797, %v793
    %v1034 = vpack.c.b16 %v798, %v794
    %v1035 = vpack.c.b16 %v799, %v795
    %v1036 = vpack.c.b16 %v800, %v796
    %v1037 = vpack.c.b16 %v805, %v801
    %v1038 = vpack.c.b16 %v806, %v802
    %v1039 = vpack.c.b16 %v807, %v803
    %v1040 = vpack.c.b16 %v808, %v804
    %v1041 = vpack.c.b16 %v813, %v809
    %v1042 = vpack.c.b16 %v814, %v810
    %v1043 = vpack.c.b16 %v815, %v811
    %v1044 = vpack.c.b16 %v816, %v812
    %v1045 = vpack.c.b16 %v821, %v817
    %v1046 = vpack.c.b16 %v822, %v818
    %v1047 = vpack.c.b16 %v823, %v819
    %v1048 = vpack.c.b16 %v824, %v820
    %v1049 = vpack.c.b16 %v829, %v825
    %v1050 = vpack.c.b16 %v830, %v826
    %v1051 = vpack.c.b16 %v831, %v827
    %v1052 = vpack.c.b16 %v832, %v828
    %v1053 = vpack.c.b16 %v837, %v833
    %v1054 = vpack.c.b16 %v838, %v834
    %v1055 = vpack.c.b16 %v839, %v835
    %v1056 = vpack.c.b16 %v840, %v836
    %v1057 = vpack.c.b16 %v845, %v841
    %v1058 = vpack.c.b16 %v846, %v842
    %v1059 = vpack.c.b16 %v847, %v843
    %v1060 = vpack.c.b16 %v848, %v844
    %v1061 = vpack.c.b16 %v853, %v849
    %v1062 = vpack.c.b16 %v854, %v850
    %v1063 = vpack.c.b16 %v855, %v851
    %v1064 = vpack.c.b16 %v856, %v852
    %v1065 = vpack.c.b16 %v861, %v857
    %v1066 = vpack.c.b16 %v862, %v858
    %v1067 = vpack.c.b16 %v863, %v859
    %v1068 = vpack.c.b16 %v864, %v860
    %v1069 = vpack.c.b16 %v869, %v865
    %v1070 = vpack.c.b16 %v870, %v866
    %v1071 = vpack.c.b16 %v871, %v867
    %v1072 = vpack.c.b16 %v872, %v868
    %v1073 = vpack.c.b16 %v877, %v873
    %v1074 = vpack.c.b16 %v878, %v874
    %v1075 = vpack.c.b16 %v879, %v875
    %v1076 = vpack.c.b16 %v880, %v876
    %v1077 = vpack.c.b16 %v885, %v881
    %v1078 = vpack.c.b16 %v886, %v882
    %v1079 = vpack.c.b16 %v887, %v883
    %v1080 = vpack.c.b16 %v888, %v884
    %v1081 = vpack.c.b16 %v893, %v889
    %v1082 = vpack.c.b16 %v894, %v890
    %v1083 = vpack.c.b16 %v895, %v891
    %v1084 = vpack.c.b16 %v896, %v892
    %v1085 = vpack.c.b16 %v901, %v897
    %v1086 = vpack.c.b16 %v902, %v898
    %v1087 = vpack.c.b16 %v903, %v899
    %v1088 = vpack.c.b16 %v904, %v900
    %v1089 = vpack.c.b16 %v909, %v905
    %v1090 = vpack.c.b16 %v910, %v906
    %v1091 = vpack.c.b16 %v911, %v907
    %v1092 = vpack.c.b16 %v912, %v908
    %v1093 = vpack.c.b16 %v917, %v913
    %v1094 = vpack.c.b16 %v918, %v914
    %v1095 = vpack.c.b16 %v919, %v915
    %v1096 = vpack.c.b16 %v920, %v916
    %v1097 = vpack.c.b16 %v925, %v921
    %v1098 = vpack.c.b16 %v926, %v922
    %v1099 = vpack.c.b16 %v927, %v923
    %v1100 = vpack.c.b16 %v928, %v924
    %v1101 = vpack.c.b16 %v933, %v929
    %v1102 = vpack.c.b16 %v934, %v930
    %v1103 = vpack.c.b16 %v935, %v931
    %v1104 = vpack.c.b16 %v936, %v932
    %v1105 = vpack.c.b16 %v941, %v937
    %v1106 = vpack.c.b16 %v942, %v938
    %v1107 = vpack.c.b16 %v943, %v939
    %v1108 = vpack.c.b16 %v944, %v940
    %v1109 = vpack.c.b16 %v949, %v945
    %v1110 = vpack.c.b16 %v950, %v946
    %v1111 = vpack.c.b16 %v951, %v947
    %v1112 = vpack.c.b16 %v952, %v948
    %v1113 = vpack.c.b16 %v957, %v953
    %v1114 = vpack.c.b16 %v958, %v954
    %v1115 = vpack.c.b16 %v959, %v955
    %v1116 = vpack.c.b16 %v960, %v956
    %v1117 = vpack.c.b16 %v965, %v961
    %v1118 = vpack.c.b16 %v966, %v962
    %v1119 = vpack.c.b16 %v967, %v963
    %v1120 = vpack.c.b16 %v968, %v964
    %v1121 = vpack.c.b16 %v973, %v969
    %v1122 = vpack.c.b16 %v974, %v970
    %v1123 = vpack.c.b16 %v975, %v971
    %v1124 = vpack.c.b16 %v976, %v972
    %v1125 = vpack.c.b16 %v981, %v977
    %v1126 = vpack.c.b16 %v982, %v978
    %v1127 = vpack.c.b16 %v983, %v979
    %v1128 = vpack.c.b16 %v984, %v980
    %v1129 = vpack.c.b16 %v989, %v985
    %v1130 = vpack.c.b16 %v990, %v986
    %v1131 = vpack.c.b16 %v991, %v987
    %v1132 = vpack.c.b16 %v992, %v988
    %v1133 = vpack.c.b16 %v997, %v993
    %v1134 = vpack.c.b16 %v998, %v994
    %v1135 = vpack.c.b16 %v999, %v995
    %v1136 = vpack.c.b16 %v1000, %v996
    %v1137 = vpack.c.b16 %v1005, %v1001
    %v1138 = vpack.c.b16 %v1006, %v1002
    %v1139 = vpack.c.b16 %v1007, %v1003
    %v1140 = vpack.c.b16 %v1008, %v1004
    %v1141 = vpack.c.b16 %v1013, %v1009
    %v1142 = vpack.c.b16 %v1014, %v1010
    %v1143 = vpack.c.b16 %v1015, %v1011
    %v1144 = vpack.c.b16 %v1016, %v1012
    %1273 = vmatprep.subr.bf16.mxu0 %v1018
    %1274 = vmatpush1.bf16.msra.mxu0 %v1017
    %1275 = vmatprep.subr.bf16.mxu0 %v1022
    %1276 = vmatpush1.bf16.msra.mxu0 %v1021
    %1277 = vmatprep.subr.bf16.mxu0 %v1026
    %1278 = vmatpush1.bf16.msra.mxu0 %v1025
    %1279 = vmatprep.subr.bf16.mxu0 %v1030
    %1280 = vmatpush1.bf16.msra.mxu0 %v1029
    %1281 = vmatprep.subr.bf16.mxu0 %v1034
    %1282 = vmatpush1.bf16.msra.mxu0 %v1033
    %1283 = vmatprep.subr.bf16.mxu0 %v1038
    %1284 = vmatpush1.bf16.msra.mxu0 %v1037
    %1285 = vmatprep.subr.bf16.mxu0 %v1042
    %1286 = vmatpush1.bf16.msra.mxu0 %v1041
    %1287 = vmatprep.subr.bf16.mxu0 %v1046
    %1288 = vmatpush1.bf16.msra.mxu0 %v1045
    %1289 = vmatprep.subr.bf16.mxu0 %v1050
    %1290 = vmatpush1.bf16.msra.mxu0 %v1049
    %1291 = vmatprep.subr.bf16.mxu0 %v1054
    %1292 = vmatpush1.bf16.msra.mxu0 %v1053
    %1293 = vmatprep.subr.bf16.mxu0 %v1058
    %1294 = vmatpush1.bf16.msra.mxu0 %v1057
    %1295 = vmatprep.subr.bf16.mxu0 %v1062
    %1296 = vmatpush1.bf16.msra.mxu0 %v1061
    %1297 = vmatprep.subr.bf16.mxu0 %v1066
    %1298 = vmatpush1.bf16.msra.mxu0 %v1065
    %1299 = vmatprep.subr.bf16.mxu0 %v1070
    %1300 = vmatpush1.bf16.msra.mxu0 %v1069
    %1301 = vmatprep.subr.bf16.mxu0 %v1074
    %1302 = vmatpush1.bf16.msra.mxu0 %v1073
    %1303 = vmatprep.subr.bf16.mxu0 %v1078
    %1304 = vmatpush1.bf16.msra.mxu0 %v1077
    %1305 = vmatprep.mubr.bf16.mxu0 %v480
    %1306 = vmatmul.mubr.bf16.gmra.mrb[0].mxu0 %v479
    %v1307 = vpop.f32.mrb[0].mxu0
    %v1308 = vadd.f32 %v616, %v1307
    %v1309 = vpop.f32.mrb[0].mxu0
    %v1310 = vadd.f32 %v620, %v1309
    %v1311 = vpop.f32.mrb[0].mxu0
    %v1312 = vadd.f32 %v616, %v1311
    %v1313 = vpop.f32.mrb[0].mxu0
    %v1314 = vadd.f32 %v620, %v1313
    %1315 = vdwg.mxu0
    %1316 = vmatprep.subr.bf16.mxu0 %v1082
    %1317 = vmatpush1.bf16.msra.mxu0 %v1081
    %1318 = vmatprep.subr.bf16.mxu0 %v1086
    %1319 = vmatpush1.bf16.msra.mxu0 %v1085
    %1320 = vmatprep.subr.bf16.mxu0 %v1090
    %1321 = vmatpush1.bf16.msra.mxu0 %v1089
    %1322 = vmatprep.subr.bf16.mxu0 %v1094
    %1323 = vmatpush1.bf16.msra.mxu0 %v1093
    %1324 = vmatprep.subr.bf16.mxu0 %v1098
    %1325 = vmatpush1.bf16.msra.mxu0 %v1097
    %1326 = vmatprep.subr.bf16.mxu0 %v1102
    %1327 = vmatpush1.bf16.msra.mxu0 %v1101
    %1328 = vmatprep.subr.bf16.mxu0 %v1106
    %1329 = vmatpush1.bf16.msra.mxu0 %v1105
    %1330 = vmatprep.subr.bf16.mxu0 %v1110
    %1331 = vmatpush1.bf16.msra.mxu0 %v1109
    %1332 = vmatprep.subr.bf16.mxu0 %v1114
    %1333 = vmatpush1.bf16.msra.mxu0 %v1113
    %1334 = vmatprep.subr.bf16.mxu0 %v1118
    %1335 = vmatpush1.bf16.msra.mxu0 %v1117
    %1336 = vmatprep.subr.bf16.mxu0 %v1122
    %1337 = vmatpush1.bf16.msra.mxu0 %v1121
    %1338 = vmatprep.subr.bf16.mxu0 %v1126
    %1339 = vmatpush1.bf16.msra.mxu0 %v1125
    %1340 = vmatprep.subr.bf16.mxu0 %v1130
    %1341 = vmatpush1.bf16.msra.mxu0 %v1129
    %1342 = vmatprep.subr.bf16.mxu0 %v1134
    %1343 = vmatpush1.bf16.msra.mxu0 %v1133
    %1344 = vmatprep.subr.bf16.mxu0 %v1138
    %1345 = vmatpush1.bf16.msra.mxu0 %v1137
    %1346 = vmatprep.subr.bf16.mxu0 %v1142
    %1347 = vmatpush1.bf16.msra.mxu0 %v1141
    %1348 = vmatprep.mubr.bf16.mxu0 %v482
    %1349 = vmatmul.mubr.bf16.gmra.mrb[0].mxu0 %v481
    %v1350 = vpop.f32.mrb[0].mxu0
    %v1351 = vadd.f32 %v1308, %v1350
    %v1352 = vpop.f32.mrb[0].mxu0
    %v1353 = vadd.f32 %v1310, %v1352
    %v1354 = vpop.f32.mrb[0].mxu0
    %v1355 = vadd.f32 %v1312, %v1354
    %v1356 = vpop.f32.mrb[0].mxu0
    %v1357 = vadd.f32 %v1314, %v1356
    %1358 = vdwg.mxu0
    %1359 = vmatprep.subr.bf16.mxu0 %v1020
    %1360 = vmatpush1.bf16.msra.mxu0 %v1019
    %1361 = vmatprep.subr.bf16.mxu0 %v1024
    %1362 = vmatpush1.bf16.msra.mxu0 %v1023
    %1363 = vmatprep.subr.bf16.mxu0 %v1028
    %1364 = vmatpush1.bf16.msra.mxu0 %v1027
    %1365 = vmatprep.subr.bf16.mxu0 %v1032
    %1366 = vmatpush1.bf16.msra.mxu0 %v1031
    %1367 = vmatprep.subr.bf16.mxu0 %v1036
    %1368 = vmatpush1.bf16.msra.mxu0 %v1035
    %1369 = vmatprep.subr.bf16.mxu0 %v1040
    %1370 = vmatpush1.bf16.msra.mxu0 %v1039
    %1371 = vmatprep.subr.bf16.mxu0 %v1044
    %1372 = vmatpush1.bf16.msra.mxu0 %v1043
    %1373 = vmatprep.subr.bf16.mxu0 %v1048
    %1374 = vmatpush1.bf16.msra.mxu0 %v1047
    %1375 = vmatprep.subr.bf16.mxu0 %v1052
    %1376 = vmatpush1.bf16.msra.mxu0 %v1051
    %1377 = vmatprep.subr.bf16.mxu0 %v1056
    %1378 = vmatpush1.bf16.msra.mxu0 %v1055
    %1379 = vmatprep.subr.bf16.mxu0 %v1060
    %1380 = vmatpush1.bf16.msra.mxu0 %v1059
    %1381 = vmatprep.subr.bf16.mxu0 %v1064
    %1382 = vmatpush1.bf16.msra.mxu0 %v1063
    %1383 = vmatprep.subr.bf16.mxu0 %v1068
    %1384 = vmatpush1.bf16.msra.mxu0 %v1067
    %1385 = vmatprep.subr.bf16.mxu0 %v1072
    %1386 = vmatpush1.bf16.msra.mxu0 %v1071
    %1387 = vmatprep.subr.bf16.mxu0 %v1076
    %1388 = vmatpush1.bf16.msra.mxu0 %v1075
    %1389 = vmatprep.subr.bf16.mxu0 %v1080
    %1390 = vmatpush1.bf16.msra.mxu0 %v1079
    %1391 = vmatprep.mubr.bf16.mxu0 %v480
    %1392 = vmatmul.mubr.bf16.gmra.mrb[0].mxu0 %v479
    %v1393 = vpop.f32.mrb[0].mxu0
    %v1394 = vadd.f32 %v624, %v1393
    %v1395 = vpop.f32.mrb[0].mxu0
    %v1396 = vadd.f32 %v628, %v1395
    %v1397 = vpop.f32.mrb[0].mxu0
    %v1398 = vadd.f32 %v624, %v1397
    %v1399 = vpop.f32.mrb[0].mxu0
    %v1400 = vadd.f32 %v628, %v1399
    %1401 = vdwg.mxu0
    %1402 = vmatprep.subr.bf16.mxu0 %v1084
    %1403 = vmatpush1.bf16.msra.mxu0 %v1083
    %1404 = vmatprep.subr.bf16.mxu0 %v1088
    %1405 = vmatpush1.bf16.msra.mxu0 %v1087
    %1406 = vmatprep.subr.bf16.mxu0 %v1092
    %1407 = vmatpush1.bf16.msra.mxu0 %v1091
    %1408 = vmatprep.subr.bf16.mxu0 %v1096
    %1409 = vmatpush1.bf16.msra.mxu0 %v1095
    %1410 = vmatprep.subr.bf16.mxu0 %v1100
    %1411 = vmatpush1.bf16.msra.mxu0 %v1099
    %1412 = vmatprep.subr.bf16.mxu0 %v1104
    %1413 = vmatpush1.bf16.msra.mxu0 %v1103
    %1414 = vmatprep.subr.bf16.mxu0 %v1108
    %1415 = vmatpush1.bf16.msra.mxu0 %v1107
    %1416 = vmatprep.subr.bf16.mxu0 %v1112
    %1417 = vmatpush1.bf16.msra.mxu0 %v1111
    %1418 = vmatprep.subr.bf16.mxu0 %v1116
    %1419 = vmatpush1.bf16.msra.mxu0 %v1115
    %1420 = vmatprep.subr.bf16.mxu0 %v1120
    %1421 = vmatpush1.bf16.msra.mxu0 %v1119
    %1422 = vmatprep.subr.bf16.mxu0 %v1124
    %1423 = vmatpush1.bf16.msra.mxu0 %v1123
    %1424 = vmatprep.subr.bf16.mxu0 %v1128
    %1425 = vmatpush1.bf16.msra.mxu0 %v1127
    %1426 = vmatprep.subr.bf16.mxu0 %v1132
    %1427 = vmatpush1.bf16.msra.mxu0 %v1131
    %1428 = vmatprep.subr.bf16.mxu0 %v1136
    %1429 = vmatpush1.bf16.msra.mxu0 %v1135
    %1430 = vmatprep.subr.bf16.mxu0 %v1140
    %1431 = vmatpush1.bf16.msra.mxu0 %v1139
    %1432 = vmatprep.subr.bf16.mxu0 %v1144
    %1433 = vmatpush1.bf16.msra.mxu0 %v1143
    %1434 = vmatprep.mubr.bf16.mxu0 %v482
    %1435 = vmatmul.mubr.bf16.gmra.mrb[0].mxu0 %v481
    %v1436 = vpop.f32.mrb[0].mxu0
    %v1437 = vadd.f32 %v1394, %v1436
    %v1438 = vpop.f32.mrb[0].mxu0
    %v1439 = vadd.f32 %v1396, %v1438
    %v1440 = vpop.f32.mrb[0].mxu0
    %v1441 = vadd.f32 %v1398, %v1440
    %v1442 = vpop.f32.mrb[0].mxu0
    %v1443 = vadd.f32 %v1400, %v1442
    %1444 = vdwg.mxu0
    %1445 = vst [vmem:[#allocation2] sm:$0xff] %v1351
    %1446 = vst [vmem:[#allocation2 + $0x8] sm:$0xff] %v1353
    %1447 = vst [vmem:[#allocation2 + $0x10] sm:$0xff] %v1437
    %1448 = vst [vmem:[#allocation2 + $0x18] sm:$0xff] %v1439
    %1449 = vst [vmem:[#allocation2 + $0x20] sm:$0xf] %v1355
    %1450 = vst [vmem:[#allocation2 + $0x28] sm:$0xf] %v1357
    %1451 = vst [vmem:[#allocation2 + $0x30] sm:$0xf] %v1441
    %1452 = vst [vmem:[#allocation2 + $0x38] sm:$0xf] %v1443
    %v1453 = vld [vmem:[#allocation16] sm:$0xff]
    %v1455 = vcombine.high %v1453, %v1453
    %v1457 = vunpack.c.l.s4 1983009808
    %v1458 = vunpack.c.0.s8 %v1457
    %v1459 = vlaneseq
    %v1460 = vshrl.u32 %v1459, 7
    %v1461 = vsub.s32 %v1458, %v1460
    %v1462 = vrot.slane %v1453, %v1461
    %v1464 = vunpack.c.l.s4 1983009808
    %v1465 = vunpack.c.0.s8 %v1464
    %v1466 = vlaneseq
    %v1467 = vshrl.u32 %v1466, 7
    %v1468 = vsub.s32 %v1465, %v1467
    %v1469 = vrot.slane %v1455, %v1468
    %v1470 = vcombine.high %v1462, %v1462
    %v1471 = vcombine.high %v1469, %v1469
    %v1476 = vpack.c.bf16 %v1462, %v1462
    %v1477 = vpack.c.bf16 %v1470, %v1470
    %v1478 = vpack.c.bf16 %v1469, %v1469
    %v1479 = vpack.c.bf16 %v1471, %v1471
    %v1480 = vld [vmem:[#allocation18] sm:$0xf]
    %v1481 = vld [vmem:[#allocation18 + $0x4] sm:$0xf]
    %v1482 = vld [vmem:[#allocation18 + $0x8] sm:$0xf]
    %v1483 = vld [vmem:[#allocation18 + $0xc] sm:$0xf]
    %v1484 = vld [vmem:[#allocation18 + $0x10] sm:$0xf]
    %v1485 = vld [vmem:[#allocation18 + $0x14] sm:$0xf]
    %v1486 = vld [vmem:[#allocation18 + $0x18] sm:$0xf]
    %v1487 = vld [vmem:[#allocation18 + $0x1c] sm:$0xf]
    %v1488 = vld [vmem:[#allocation18 + $0x20] sm:$0xf]
    %v1489 = vld [vmem:[#allocation18 + $0x24] sm:$0xf]
    %v1490 = vld [vmem:[#allocation18 + $0x28] sm:$0xf]
    %v1491 = vld [vmem:[#allocation18 + $0x2c] sm:$0xf]
    %v1492 = vld [vmem:[#allocation18 + $0x30] sm:$0xf]
    %v1493 = vld [vmem:[#allocation18 + $0x34] sm:$0xf]
    %v1494 = vld [vmem:[#allocation18 + $0x38] sm:$0xf]
    %v1495 = vld [vmem:[#allocation18 + $0x3c] sm:$0xf]
    %v1496 = vld [vmem:[#allocation18 + $0x40] sm:$0xf]
    %v1497 = vld [vmem:[#allocation18 + $0x44] sm:$0xf]
    %v1498 = vld [vmem:[#allocation18 + $0x48] sm:$0xf]
    %v1499 = vld [vmem:[#allocation18 + $0x4c] sm:$0xf]
    %v1500 = vld [vmem:[#allocation18 + $0x50] sm:$0xf]
    %v1501 = vld [vmem:[#allocation18 + $0x54] sm:$0xf]
    %v1502 = vld [vmem:[#allocation18 + $0x58] sm:$0xf]
    %v1503 = vld [vmem:[#allocation18 + $0x5c] sm:$0xf]
    %v1504 = vld [vmem:[#allocation18 + $0x60] sm:$0xf]
    %v1505 = vld [vmem:[#allocation18 + $0x64] sm:$0xf]
    %v1506 = vld [vmem:[#allocation18 + $0x68] sm:$0xf]
    %v1507 = vld [vmem:[#allocation18 + $0x6c] sm:$0xf]
    %v1508 = vld [vmem:[#allocation18 + $0x70] sm:$0xf]
    %v1509 = vld [vmem:[#allocation18 + $0x74] sm:$0xf]
    %v1510 = vld [vmem:[#allocation18 + $0x78] sm:$0xf]
    %v1511 = vld [vmem:[#allocation18 + $0x7c] sm:$0xf]
    %v1512 = vld [vmem:[#allocation18 + $0x80] sm:$0xf]
    %v1513 = vld [vmem:[#allocation18 + $0x84] sm:$0xf]
    %v1514 = vld [vmem:[#allocation18 + $0x88] sm:$0xf]
    %v1515 = vld [vmem:[#allocation18 + $0x8c] sm:$0xf]
    %v1516 = vld [vmem:[#allocation18 + $0x90] sm:$0xf]
    %v1517 = vld [vmem:[#allocation18 + $0x94] sm:$0xf]
    %v1518 = vld [vmem:[#allocation18 + $0x98] sm:$0xf]
    %v1519 = vld [vmem:[#allocation18 + $0x9c] sm:$0xf]
    %v1520 = vld [vmem:[#allocation18 + $0xa0] sm:$0xf]
    %v1521 = vld [vmem:[#allocation18 + $0xa4] sm:$0xf]
    %v1522 = vld [vmem:[#allocation18 + $0xa8] sm:$0xf]
    %v1523 = vld [vmem:[#allocation18 + $0xac] sm:$0xf]
    %v1524 = vld [vmem:[#allocation18 + $0xb0] sm:$0xf]
    %v1525 = vld [vmem:[#allocation18 + $0xb4] sm:$0xf]
    %v1526 = vld [vmem:[#allocation18 + $0xb8] sm:$0xf]
    %v1527 = vld [vmem:[#allocation18 + $0xbc] sm:$0xf]
    %v1528 = vld [vmem:[#allocation18 + $0xc0] sm:$0xf]
    %v1529 = vld [vmem:[#allocation18 + $0xc4] sm:$0xf]
    %v1530 = vld [vmem:[#allocation18 + $0xc8] sm:$0xf]
    %v1531 = vld [vmem:[#allocation18 + $0xcc] sm:$0xf]
    %v1532 = vld [vmem:[#allocation18 + $0xd0] sm:$0xf]
    %v1533 = vld [vmem:[#allocation18 + $0xd4] sm:$0xf]
    %v1534 = vld [vmem:[#allocation18 + $0xd8] sm:$0xf]
    %v1535 = vld [vmem:[#allocation18 + $0xdc] sm:$0xf]
    %v1536 = vld [vmem:[#allocation18 + $0xe0] sm:$0xf]
    %v1537 = vld [vmem:[#allocation18 + $0xe4] sm:$0xf]
    %v1538 = vld [vmem:[#allocation18 + $0xe8] sm:$0xf]
    %v1539 = vld [vmem:[#allocation18 + $0xec] sm:$0xf]
    %v1540 = vld [vmem:[#allocation18 + $0xf0] sm:$0xf]
    %v1541 = vld [vmem:[#allocation18 + $0xf4] sm:$0xf]
    %v1542 = vld [vmem:[#allocation18 + $0xf8] sm:$0xf]
    %v1543 = vld [vmem:[#allocation18 + $0xfc] sm:$0xf]
    %v1544 = vld [vmem:[%s7] sm:$0x1]
    %v1546 = vlaneseq
    %v1547 = vshrl.u32 %v1546, 7
    %v1548 = vsub.s32 0, %v1547
    %v1549 = vrot.slane %v1544, %v1548
    %v1615 = vunpack.c.l.b16 %v1480
    %v1616 = vunpack.c.l.b16 %v1481
    %v1617 = vunpack.c.l.b16 %v1482
    %v1618 = vunpack.c.l.b16 %v1483
    %v1619 = vunpack.c.l.b16 %v1484
    %v1620 = vunpack.c.l.b16 %v1485
    %v1621 = vunpack.c.l.b16 %v1486
    %v1622 = vunpack.c.l.b16 %v1487
    %v1623 = vunpack.c.l.b16 %v1488
    %v1624 = vunpack.c.l.b16 %v1489
    %v1625 = vunpack.c.l.b16 %v1490
    %v1626 = vunpack.c.l.b16 %v1491
    %v1627 = vunpack.c.l.b16 %v1492
    %v1628 = vunpack.c.l.b16 %v1493
    %v1629 = vunpack.c.l.b16 %v1494
    %v1630 = vunpack.c.l.b16 %v1495
    %v1631 = vunpack.c.l.b16 %v1496
    %v1632 = vunpack.c.l.b16 %v1497
    %v1633 = vunpack.c.l.b16 %v1498
    %v1634 = vunpack.c.l.b16 %v1499
    %v1635 = vunpack.c.l.b16 %v1500
    %v1636 = vunpack.c.l.b16 %v1501
    %v1637 = vunpack.c.l.b16 %v1502
    %v1638 = vunpack.c.l.b16 %v1503
    %v1639 = vunpack.c.l.b16 %v1504
    %v1640 = vunpack.c.l.b16 %v1505
    %v1641 = vunpack.c.l.b16 %v1506
    %v1642 = vunpack.c.l.b16 %v1507
    %v1643 = vunpack.c.l.b16 %v1508
    %v1644 = vunpack.c.l.b16 %v1509
    %v1645 = vunpack.c.l.b16 %v1510
    %v1646 = vunpack.c.l.b16 %v1511
    %v1647 = vunpack.c.l.b16 %v1512
    %v1648 = vunpack.c.l.b16 %v1513
    %v1649 = vunpack.c.l.b16 %v1514
    %v1650 = vunpack.c.l.b16 %v1515
    %v1651 = vunpack.c.l.b16 %v1516
    %v1652 = vunpack.c.l.b16 %v1517
    %v1653 = vunpack.c.l.b16 %v1518
    %v1654 = vunpack.c.l.b16 %v1519
    %v1655 = vunpack.c.l.b16 %v1520
    %v1656 = vunpack.c.l.b16 %v1521
    %v1657 = vunpack.c.l.b16 %v1522
    %v1658 = vunpack.c.l.b16 %v1523
    %v1659 = vunpack.c.l.b16 %v1524
    %v1660 = vunpack.c.l.b16 %v1525
    %v1661 = vunpack.c.l.b16 %v1526
    %v1662 = vunpack.c.l.b16 %v1527
    %v1663 = vunpack.c.l.b16 %v1528
    %v1664 = vunpack.c.l.b16 %v1529
    %v1665 = vunpack.c.l.b16 %v1530
    %v1666 = vunpack.c.l.b16 %v1531
    %v1667 = vunpack.c.l.b16 %v1532
    %v1668 = vunpack.c.l.b16 %v1533
    %v1669 = vunpack.c.l.b16 %v1534
    %v1670 = vunpack.c.l.b16 %v1535
    %v1671 = vunpack.c.l.b16 %v1536
    %v1672 = vunpack.c.l.b16 %v1537
    %v1673 = vunpack.c.l.b16 %v1538
    %v1674 = vunpack.c.l.b16 %v1539
    %v1675 = vunpack.c.l.b16 %v1540
    %v1676 = vunpack.c.l.b16 %v1541
    %v1677 = vunpack.c.l.b16 %v1542
    %v1678 = vunpack.c.l.b16 %v1543
    %v1679 = vpack.c.b16 %v1616, %v1615
    %v1680 = vpack.c.b16 %v1618, %v1617
    %v1681 = vpack.c.b16 %v1620, %v1619
    %v1682 = vpack.c.b16 %v1622, %v1621
    %v1683 = vpack.c.b16 %v1624, %v1623
    %v1684 = vpack.c.b16 %v1626, %v1625
    %v1685 = vpack.c.b16 %v1628, %v1627
    %v1686 = vpack.c.b16 %v1630, %v1629
    %v1687 = vpack.c.b16 %v1632, %v1631
    %v1688 = vpack.c.b16 %v1634, %v1633
    %v1689 = vpack.c.b16 %v1636, %v1635
    %v1690 = vpack.c.b16 %v1638, %v1637
    %v1691 = vpack.c.b16 %v1640, %v1639
    %v1692 = vpack.c.b16 %v1642, %v1641
    %v1693 = vpack.c.b16 %v1644, %v1643
    %v1694 = vpack.c.b16 %v1646, %v1645
    %v1695 = vpack.c.b16 %v1648, %v1647
    %v1696 = vpack.c.b16 %v1650, %v1649
    %v1697 = vpack.c.b16 %v1652, %v1651
    %v1698 = vpack.c.b16 %v1654, %v1653
    %v1699 = vpack.c.b16 %v1656, %v1655
    %v1700 = vpack.c.b16 %v1658, %v1657
    %v1701 = vpack.c.b16 %v1660, %v1659
    %v1702 = vpack.c.b16 %v1662, %v1661
    %v1703 = vpack.c.b16 %v1664, %v1663
    %v1704 = vpack.c.b16 %v1666, %v1665
    %v1705 = vpack.c.b16 %v1668, %v1667
    %v1706 = vpack.c.b16 %v1670, %v1669
    %v1707 = vpack.c.b16 %v1672, %v1671
    %v1708 = vpack.c.b16 %v1674, %v1673
    %v1709 = vpack.c.b16 %v1676, %v1675
    %v1710 = vpack.c.b16 %v1678, %v1677
    %1743 = vmatprep.subr.bf16.mxu0 0
    %1744 = vmatpush1.bf16.msra.mxu0 %v1679
    %1745 = vmatprep.subr.bf16.mxu0 0
    %1746 = vmatpush1.bf16.msra.mxu0 %v1680
    %1747 = vmatprep.subr.bf16.mxu0 0
    %1748 = vmatpush1.bf16.msra.mxu0 %v1681
    %1749 = vmatprep.subr.bf16.mxu0 0
    %1750 = vmatpush1.bf16.msra.mxu0 %v1682
    %1751 = vmatprep.subr.bf16.mxu0 0
    %1752 = vmatpush1.bf16.msra.mxu0 %v1683
    %1753 = vmatprep.subr.bf16.mxu0 0
    %1754 = vmatpush1.bf16.msra.mxu0 %v1684
    %1755 = vmatprep.subr.bf16.mxu0 0
    %1756 = vmatpush1.bf16.msra.mxu0 %v1685
    %1757 = vmatprep.subr.bf16.mxu0 0
    %1758 = vmatpush1.bf16.msra.mxu0 %v1686
    %1759 = vmatprep.subr.bf16.mxu0 0
    %1760 = vmatpush1.bf16.msra.mxu0 %v1687
    %1761 = vmatprep.subr.bf16.mxu0 0
    %1762 = vmatpush1.bf16.msra.mxu0 %v1688
    %1763 = vmatprep.subr.bf16.mxu0 0
    %1764 = vmatpush1.bf16.msra.mxu0 %v1689
    %1765 = vmatprep.subr.bf16.mxu0 0
    %1766 = vmatpush1.bf16.msra.mxu0 %v1690
    %1767 = vmatprep.subr.bf16.mxu0 0
    %1768 = vmatpush1.bf16.msra.mxu0 %v1691
    %1769 = vmatprep.subr.bf16.mxu0 0
    %1770 = vmatpush1.bf16.msra.mxu0 %v1692
    %1771 = vmatprep.subr.bf16.mxu0 0
    %1772 = vmatpush1.bf16.msra.mxu0 %v1693
    %1773 = vmatprep.subr.bf16.mxu0 0
    %1774 = vmatpush1.bf16.msra.mxu0 %v1694
    %1775 = vmatprep.mubr.bf16.mxu0 %v1477
    %1776 = vmatmul.mubr.bf16.gmra.mrb[0].mxu0 %v1476
    %v1777 = vpop.f32.mrb[0].mxu0
    %v1778 = vadd.f32 %v1549, %v1777
    %v1779 = vpop.f32.mrb[0].mxu0
    %v1780 = vpop.f32.mrb[0].mxu0
    %v1781 = vpop.f32.mrb[0].mxu0
    %1782 = vdwg.mxu0
    %1783 = vmatprep.subr.bf16.mxu0 0
    %1784 = vmatpush1.bf16.msra.mxu0 %v1695
    %1785 = vmatprep.subr.bf16.mxu0 0
    %1786 = vmatpush1.bf16.msra.mxu0 %v1696
    %1787 = vmatprep.subr.bf16.mxu0 0
    %1788 = vmatpush1.bf16.msra.mxu0 %v1697
    %1789 = vmatprep.subr.bf16.mxu0 0
    %1790 = vmatpush1.bf16.msra.mxu0 %v1698
    %1791 = vmatprep.subr.bf16.mxu0 0
    %1792 = vmatpush1.bf16.msra.mxu0 %v1699
    %1793 = vmatprep.subr.bf16.mxu0 0
    %1794 = vmatpush1.bf16.msra.mxu0 %v1700
    %1795 = vmatprep.subr.bf16.mxu0 0
    %1796 = vmatpush1.bf16.msra.mxu0 %v1701
    %1797 = vmatprep.subr.bf16.mxu0 0
    %1798 = vmatpush1.bf16.msra.mxu0 %v1702
    %1799 = vmatprep.subr.bf16.mxu0 0
    %1800 = vmatpush1.bf16.msra.mxu0 %v1703
    %1801 = vmatprep.subr.bf16.mxu0 0
    %1802 = vmatpush1.bf16.msra.mxu0 %v1704
    %1803 = vmatprep.subr.bf16.mxu0 0
    %1804 = vmatpush1.bf16.msra.mxu0 %v1705
    %1805 = vmatprep.subr.bf16.mxu0 0
    %1806 = vmatpush1.bf16.msra.mxu0 %v1706
    %1807 = vmatprep.subr.bf16.mxu0 0
    %1808 = vmatpush1.bf16.msra.mxu0 %v1707
    %1809 = vmatprep.subr.bf16.mxu0 0
    %1810 = vmatpush1.bf16.msra.mxu0 %v1708
    %1811 = vmatprep.subr.bf16.mxu0 0
    %1812 = vmatpush1.bf16.msra.mxu0 %v1709
    %1813 = vmatprep.subr.bf16.mxu0 0
    %1814 = vmatpush1.bf16.msra.mxu0 %v1710
    %1815 = vmatprep.mubr.bf16.mxu0 %v1479
    %1816 = vmatmul.mubr.bf16.gmra.mrb[0].mxu0 %v1478
    %v1817 = vpop.f32.mrb[0].mxu0
    %v1818 = vadd.f32 %v1778, %v1817
    %v1819 = vpop.f32.mrb[0].mxu0
    %v1820 = vpop.f32.mrb[0].mxu0
    %v1821 = vpop.f32.mrb[0].mxu0
    %1822 = vdwg.mxu0
    %v1823 = vld [vmem:[#allocation25] sm:$0xff]
    %v1824 = vld [vmem:[#allocation25 + $0x8] sm:$0xf]
    %v1825 = vpack.c.bf16 %v1824, %v1823
    %v1826 = vld [vmem:[#allocation30] sm:$0xff]
    %v1827 = vld [vmem:[#allocation30 + $0x8] sm:$0xff]
    %v1828 = vld [vmem:[#allocation30 + $0x10] sm:$0xff]
    %v1829 = vld [vmem:[#allocation30 + $0x18] sm:$0xff]
    %v1830 = vld [vmem:[#allocation30 + $0x20] sm:$0xff]
    %v1831 = vld [vmem:[#allocation30 + $0x28] sm:$0xff]
    %v1832 = vld [vmem:[#allocation30 + $0x30] sm:$0xff]
    %v1833 = vld [vmem:[#allocation30 + $0x38] sm:$0xff]
    %v1834 = vld [vmem:[#allocation30 + $0x40] sm:$0xff]
    %v1835 = vld [vmem:[#allocation30 + $0x48] sm:$0xff]
    %v1836 = vld [vmem:[#allocation30 + $0x50] sm:$0xff]
    %v1837 = vld [vmem:[#allocation30 + $0x58] sm:$0xff]
    %v1838 = vld [vmem:[#allocation30 + $0x60] sm:$0xff]
    %v1839 = vld [vmem:[#allocation30 + $0x68] sm:$0xff]
    %v1840 = vld [vmem:[#allocation30 + $0x70] sm:$0xff]
    %v1841 = vld [vmem:[#allocation30 + $0x78] sm:$0xff]
    %v1842 = vld [vmem:[#allocation30 + $0x80] sm:$0xff]
    %v1843 = vld [vmem:[#allocation30 + $0x88] sm:$0xff]
    %v1844 = vld [vmem:[#allocation30 + $0x90] sm:$0xff]
    %v1845 = vld [vmem:[#allocation30 + $0x98] sm:$0xff]
    %v1846 = vld [vmem:[#allocation30 + $0xa0] sm:$0xff]
    %v1847 = vld [vmem:[#allocation30 + $0xa8] sm:$0xff]
    %v1848 = vld [vmem:[#allocation30 + $0xb0] sm:$0xff]
    %v1849 = vld [vmem:[#allocation30 + $0xb8] sm:$0xff]
    %v1850 = vld [vmem:[#allocation30 + $0xc0] sm:$0xff]
    %v1851 = vld [vmem:[#allocation30 + $0xc8] sm:$0xff]
    %v1852 = vld [vmem:[#allocation30 + $0xd0] sm:$0xff]
    %v1853 = vld [vmem:[#allocation30 + $0xd8] sm:$0xff]
    %v1854 = vld [vmem:[#allocation30 + $0xe0] sm:$0xff]
    %v1855 = vld [vmem:[#allocation30 + $0xe8] sm:$0xff]
    %v1856 = vld [vmem:[#allocation30 + $0xf0] sm:$0xff]
    %v1857 = vld [vmem:[#allocation30 + $0xf8] sm:$0xff]
    %v1858 = vld [vmem:[%s29] sm:$0xf]
    %v1860 = vlaneseq
    %v1861 = vshrl.u32 %v1860, 7
    %v1862 = vsub.s32 0, %v1861
    %v1863 = vrot.slane %v1858, %v1862
    %v1864 = vlaneseq
    %v1865 = vshrl.u32 %v1864, 7
    %v1866 = vsub.s32 1, %v1865
    %v1867 = vrot.slane %v1858, %v1866
    %v1868 = vlaneseq
    %v1869 = vshrl.u32 %v1868, 7
    %v1870 = vsub.s32 2, %v1869
    %v1871 = vrot.slane %v1858, %v1870
    %v1872 = vlaneseq
    %v1873 = vshrl.u32 %v1872, 7
    %v1874 = vsub.s32 3, %v1873
    %v1875 = vrot.slane %v1858, %v1874
    %v1912 = vunpack.c.l.b16 %v1826
    %v1913 = vunpack.c.h.b16 %v1826
    %v1914 = vunpack.c.l.b16 %v1827
    %v1915 = vunpack.c.h.b16 %v1827
    %v1916 = vunpack.c.l.b16 %v1828
    %v1917 = vunpack.c.h.b16 %v1828
    %v1918 = vunpack.c.l.b16 %v1829
    %v1919 = vunpack.c.h.b16 %v1829
    %v1920 = vunpack.c.l.b16 %v1830
    %v1921 = vunpack.c.h.b16 %v1830
    %v1922 = vunpack.c.l.b16 %v1831
    %v1923 = vunpack.c.h.b16 %v1831
    %v1924 = vunpack.c.l.b16 %v1832
    %v1925 = vunpack.c.h.b16 %v1832
    %v1926 = vunpack.c.l.b16 %v1833
    %v1927 = vunpack.c.h.b16 %v1833
    %v1928 = vunpack.c.l.b16 %v1834
    %v1929 = vunpack.c.h.b16 %v1834
    %v1930 = vunpack.c.l.b16 %v1835
    %v1931 = vunpack.c.h.b16 %v1835
    %v1932 = vunpack.c.l.b16 %v1836
    %v1933 = vunpack.c.h.b16 %v1836
    %v1934 = vunpack.c.l.b16 %v1837
    %v1935 = vunpack.c.h.b16 %v1837
    %v1936 = vunpack.c.l.b16 %v1838
    %v1937 = vunpack.c.h.b16 %v1838
    %v1938 = vunpack.c.l.b16 %v1839
    %v1939 = vunpack.c.h.b16 %v1839
    %v1940 = vunpack.c.l.b16 %v1840
    %v1941 = vunpack.c.h.b16 %v1840
    %v1942 = vunpack.c.l.b16 %v1841
    %v1943 = vunpack.c.h.b16 %v1841
    %v1944 = vunpack.c.l.b16 %v1842
    %v1945 = vunpack.c.h.b16 %v1842
    %v1946 = vunpack.c.l.b16 %v1843
    %v1947 = vunpack.c.h.b16 %v1843
    %v1948 = vunpack.c.l.b16 %v1844
    %v1949 = vunpack.c.h.b16 %v1844
    %v1950 = vunpack.c.l.b16 %v1845
    %v1951 = vunpack.c.h.b16 %v1845
    %v1952 = vunpack.c.l.b16 %v1846
    %v1953 = vunpack.c.h.b16 %v1846
    %v1954 = vunpack.c.l.b16 %v1847
    %v1955 = vunpack.c.h.b16 %v1847
    %v1956 = vunpack.c.l.b16 %v1848
    %v1957 = vunpack.c.h.b16 %v1848
    %v1958 = vunpack.c.l.b16 %v1849
    %v1959 = vunpack.c.h.b16 %v1849
    %v1960 = vunpack.c.l.b16 %v1850
    %v1961 = vunpack.c.h.b16 %v1850
    %v1962 = vunpack.c.l.b16 %v1851
    %v1963 = vunpack.c.h.b16 %v1851
    %v1964 = vunpack.c.l.b16 %v1852
    %v1965 = vunpack.c.h.b16 %v1852
    %v1966 = vunpack.c.l.b16 %v1853
    %v1967 = vunpack.c.h.b16 %v1853
    %v1968 = vunpack.c.l.b16 %v1854
    %v1969 = vunpack.c.h.b16 %v1854
    %v1970 = vunpack.c.l.b16 %v1855
    %v1971 = vunpack.c.h.b16 %v1855
    %v1972 = vunpack.c.l.b16 %v1856
    %v1973 = vunpack.c.h.b16 %v1856
    %v1974 = vunpack.c.l.b16 %v1857
    %v1975 = vunpack.c.h.b16 %v1857
    %v1976 = vpack.c.b16 %v1916, %v1912
    %v1977 = vpack.c.b16 %v1917, %v1913
    %v1978 = vpack.c.b16 %v1918, %v1914
    %v1979 = vpack.c.b16 %v1919, %v1915
    %v1980 = vpack.c.b16 %v1924, %v1920
    %v1981 = vpack.c.b16 %v1925, %v1921
    %v1982 = vpack.c.b16 %v1926, %v1922
    %v1983 = vpack.c.b16 %v1927, %v1923
    %v1984 = vpack.c.b16 %v1932, %v1928
    %v1985 = vpack.c.b16 %v1933, %v1929
    %v1986 = vpack.c.b16 %v1934, %v1930
    %v1987 = vpack.c.b16 %v1935, %v1931
    %v1988 = vpack.c.b16 %v1940, %v1936
    %v1989 = vpack.c.b16 %v1941, %v1937
    %v1990 = vpack.c.b16 %v1942, %v1938
    %v1991 = vpack.c.b16 %v1943, %v1939
    %v1992 = vpack.c.b16 %v1948, %v1944
    %v1993 = vpack.c.b16 %v1949, %v1945
    %v1994 = vpack.c.b16 %v1950, %v1946
    %v1995 = vpack.c.b16 %v1951, %v1947
    %v1996 = vpack.c.b16 %v1956, %v1952
    %v1997 = vpack.c.b16 %v1957, %v1953
    %v1998 = vpack.c.b16 %v1958, %v1954
    %v1999 = vpack.c.b16 %v1959, %v1955
    %v2000 = vpack.c.b16 %v1964, %v1960
    %v2001 = vpack.c.b16 %v1965, %v1961
    %v2002 = vpack.c.b16 %v1966, %v1962
    %v2003 = vpack.c.b16 %v1967, %v1963
    %v2004 = vpack.c.b16 %v1972, %v1968
    %v2005 = vpack.c.b16 %v1973, %v1969
    %v2006 = vpack.c.b16 %v1974, %v1970
    %v2007 = vpack.c.b16 %v1975, %v1971
    %2040 = vmatprep.subr.bf16.mxu0 %v1977
    %2041 = vmatpush1.bf16.msra.mxu0 %v1976
    %2042 = vmatprep.subr.bf16.mxu0 %v1981
    %2043 = vmatpush1.bf16.msra.mxu0 %v1980
    %2044 = vmatprep.subr.bf16.mxu0 %v1985
    %2045 = vmatpush1.bf16.msra.mxu0 %v1984
    %2046 = vmatprep.subr.bf16.mxu0 %v1989
    %2047 = vmatpush1.bf16.msra.mxu0 %v1988
    %2048 = vmatprep.subr.bf16.mxu0 %v1993
    %2049 = vmatpush1.bf16.msra.mxu0 %v1992
    %2050 = vmatprep.subr.bf16.mxu0 %v1997
    %2051 = vmatpush1.bf16.msra.mxu0 %v1996
    %2052 = vmatprep.subr.bf16.mxu0 %v2001
    %2053 = vmatpush1.bf16.msra.mxu0 %v2000
    %2054 = vmatprep.subr.bf16.mxu0 %v2005
    %2055 = vmatpush1.bf16.msra.mxu0 %v2004
    %2056 = vmatprep.subr.bf16.mxu0 0
    %2057 = vmatpush1.bf16.msra.mxu0 0
    %2058 = vmatprep.subr.bf16.mxu0 0
    %2059 = vmatpush1.bf16.msra.mxu0 0
    %2060 = vmatprep.subr.bf16.mxu0 0
    %2061 = vmatpush1.bf16.msra.mxu0 0
    %2062 = vmatprep.subr.bf16.mxu0 0
    %2063 = vmatpush1.bf16.msra.mxu0 0
    %2064 = vmatprep.subr.bf16.mxu0 0
    %2065 = vmatpush1.bf16.msra.mxu0 0
    %2066 = vmatprep.subr.bf16.mxu0 0
    %2067 = vmatpush1.bf16.msra.mxu0 0
    %2068 = vmatprep.subr.bf16.mxu0 0
    %2069 = vmatpush1.bf16.msra.mxu0 0
    %2070 = vmatprep.subr.bf16.mxu0 0
    %2071 = vmatpush1.bf16.msra.mxu0 0
    %2072 = vmatprep.mubr.bf16.mxu0 0
    %2073 = vmatmul.mubr.bf16.gmra.mrb[0].mxu0 %v1825
    %v2074 = vpop.f32.mrb[0].mxu0
    %v2075 = vadd.f32 %v1863, %v2074
    %v2076 = vpop.f32.mrb[0].mxu0
    %v2077 = vadd.f32 %v1867, %v2076
    %v2078 = vpop.f32.mrb[0].mxu0
    %v2079 = vadd.f32 %v1863, %v2078
    %v2080 = vpop.f32.mrb[0].mxu0
    %v2081 = vadd.f32 %v1867, %v2080
    %2082 = vdwg.mxu0
    %2083 = vmatprep.subr.bf16.mxu0 %v1979
    %2084 = vmatpush1.bf16.msra.mxu0 %v1978
    %2085 = vmatprep.subr.bf16.mxu0 %v1983
    %2086 = vmatpush1.bf16.msra.mxu0 %v1982
    %2087 = vmatprep.subr.bf16.mxu0 %v1987
    %2088 = vmatpush1.bf16.msra.mxu0 %v1986
    %2089 = vmatprep.subr.bf16.mxu0 %v1991
    %2090 = vmatpush1.bf16.msra.mxu0 %v1990
    %2091 = vmatprep.subr.bf16.mxu0 %v1995
    %2092 = vmatpush1.bf16.msra.mxu0 %v1994
    %2093 = vmatprep.subr.bf16.mxu0 %v1999
    %2094 = vmatpush1.bf16.msra.mxu0 %v1998
    %2095 = vmatprep.subr.bf16.mxu0 %v2003
    %2096 = vmatpush1.bf16.msra.mxu0 %v2002
    %2097 = vmatprep.subr.bf16.mxu0 %v2007
    %2098 = vmatpush1.bf16.msra.mxu0 %v2006
    %2099 = vmatprep.subr.bf16.mxu0 0
    %2100 = vmatpush1.bf16.msra.mxu0 0
    %2101 = vmatprep.subr.bf16.mxu0 0
    %2102 = vmatpush1.bf16.msra.mxu0 0
    %2103 = vmatprep.subr.bf16.mxu0 0
    %2104 = vmatpush1.bf16.msra.mxu0 0
    %2105 = vmatprep.subr.bf16.mxu0 0
    %2106 = vmatpush1.bf16.msra.mxu0 0
    %2107 = vmatprep.subr.bf16.mxu0 0
    %2108 = vmatpush1.bf16.msra.mxu0 0
    %2109 = vmatprep.subr.bf16.mxu0 0
    %2110 = vmatpush1.bf16.msra.mxu0 0
    %2111 = vmatprep.subr.bf16.mxu0 0
    %2112 = vmatpush1.bf16.msra.mxu0 0
    %2113 = vmatprep.subr.bf16.mxu0 0
    %2114 = vmatpush1.bf16.msra.mxu0 0
    %2115 = vmatprep.mubr.bf16.mxu0 0
    %2116 = vmatmul.mubr.bf16.gmra.mrb[0].mxu0 %v1825
    %v2117 = vpop.f32.mrb[0].mxu0
    %v2118 = vadd.f32 %v1871, %v2117
    %v2119 = vpop.f32.mrb[0].mxu0
    %v2120 = vadd.f32 %v1875, %v2119
    %v2121 = vpop.f32.mrb[0].mxu0
    %v2122 = vadd.f32 %v1871, %v2121
    %v2123 = vpop.f32.mrb[0].mxu0
    %v2124 = vadd.f32 %v1875, %v2123
    %2125 = vdwg.mxu0
    %2126 = vst [vmem:[#allocation3] sm:$0xff] %v2075
    %2127 = vst [vmem:[#allocation3 + $0x8] sm:$0xff] %v2077
    %2128 = vst [vmem:[#allocation3 + $0x10] sm:$0xff] %v2118
    %2129 = vst [vmem:[#allocation3 + $0x18] sm:$0xff] %v2120
    %2130 = vst [vmem:[#allocation3 + $0x20] sm:$0xf] %v2079
    %2131 = vst [vmem:[#allocation3 + $0x28] sm:$0xf] %v2081
    %2132 = vst [vmem:[#allocation3 + $0x30] sm:$0xf] %v2122
    %2133 = vst [vmem:[#allocation3 + $0x38] sm:$0xf] %v2124
    %v2134 = vld [vmem:[%s21] sm:$0x3]
    %v2135 = vpack.c.bf16 %v2134, %v2134
    %v2136 = vld [vmem:[#allocation27] sm:$0xf]
    %v2137 = vld [vmem:[#allocation27 + $0x4] sm:$0xf]
    %v2138 = vld [vmem:[#allocation27 + $0x8] sm:$0xf]
    %v2139 = vld [vmem:[#allocation27 + $0xc] sm:$0xf]
    %v2140 = vld [vmem:[#allocation27 + $0x10] sm:$0xf]
    %v2141 = vld [vmem:[#allocation27 + $0x14] sm:$0xf]
    %v2142 = vld [vmem:[#allocation27 + $0x18] sm:$0xf]
    %v2143 = vld [vmem:[#allocation27 + $0x1c] sm:$0xf]
    %v2144 = vld [vmem:[#allocation27 + $0x20] sm:$0xf]
    %v2145 = vld [vmem:[#allocation27 + $0x24] sm:$0xf]
    %v2146 = vld [vmem:[#allocation27 + $0x28] sm:$0xf]
    %v2147 = vld [vmem:[#allocation27 + $0x2c] sm:$0xf]
    %v2148 = vld [vmem:[#allocation27 + $0x30] sm:$0xf]
    %v2149 = vld [vmem:[#allocation27 + $0x34] sm:$0xf]
    %v2150 = vld [vmem:[#allocation27 + $0x38] sm:$0xf]
    %v2151 = vld [vmem:[#allocation27 + $0x3c] sm:$0xf]
    %v2152 = vld [vmem:[#allocation28] sm:$0x1]
    %v2154 = vlaneseq
    %v2155 = vshrl.u32 %v2154, 7
    %v2156 = vsub.s32 0, %v2155
    %v2157 = vrot.slane %v2152, %v2156
    %v2175 = vunpack.c.l.b16 %v2136
    %v2176 = vunpack.c.l.b16 %v2137
    %v2177 = vunpack.c.l.b16 %v2138
    %v2178 = vunpack.c.l.b16 %v2139
    %v2179 = vunpack.c.l.b16 %v2140
    %v2180 = vunpack.c.l.b16 %v2141
    %v2181 = vunpack.c.l.b16 %v2142
    %v2182 = vunpack.c.l.b16 %v2143
    %v2183 = vunpack.c.l.b16 %v2144
    %v2184 = vunpack.c.l.b16 %v2145
    %v2185 = vunpack.c.l.b16 %v2146
    %v2186 = vunpack.c.l.b16 %v2147
    %v2187 = vunpack.c.l.b16 %v2148
    %v2188 = vunpack.c.l.b16 %v2149
    %v2189 = vunpack.c.l.b16 %v2150
    %v2190 = vunpack.c.l.b16 %v2151
    %v2191 = vpack.c.b16 %v2176, %v2175
    %v2192 = vpack.c.b16 %v2178, %v2177
    %v2193 = vpack.c.b16 %v2180, %v2179
    %v2194 = vpack.c.b16 %v2182, %v2181
    %v2195 = vpack.c.b16 %v2184, %v2183
    %v2196 = vpack.c.b16 %v2186, %v2185
    %v2197 = vpack.c.b16 %v2188, %v2187
    %v2198 = vpack.c.b16 %v2190, %v2189
    %2207 = vmatprep.subr.bf16.mxu0 0
    %2208 = vmatpush1.bf16.msra.mxu0 %v2191
    %2209 = vmatprep.subr.bf16.mxu0 0
    %2210 = vmatpush1.bf16.msra.mxu0 %v2192
    %2211 = vmatprep.subr.bf16.mxu0 0
    %2212 = vmatpush1.bf16.msra.mxu0 %v2193
    %2213 = vmatprep.subr.bf16.mxu0 0
    %2214 = vmatpush1.bf16.msra.mxu0 %v2194
    %2215 = vmatprep.subr.bf16.mxu0 0
    %2216 = vmatpush1.bf16.msra.mxu0 %v2195
    %2217 = vmatprep.subr.bf16.mxu0 0
    %2218 = vmatpush1.bf16.msra.mxu0 %v2196
    %2219 = vmatprep.subr.bf16.mxu0 0
    %2220 = vmatpush1.bf16.msra.mxu0 %v2197
    %2221 = vmatprep.subr.bf16.mxu0 0
    %2222 = vmatpush1.bf16.msra.mxu0 %v2198
    %2223 = vmatprep.subr.bf16.mxu0 0
    %2224 = vmatpush1.bf16.msra.mxu0 0
    %2225 = vmatprep.subr.bf16.mxu0 0
    %2226 = vmatpush1.bf16.msra.mxu0 0
    %2227 = vmatprep.subr.bf16.mxu0 0
    %2228 = vmatpush1.bf16.msra.mxu0 0
    %2229 = vmatprep.subr.bf16.mxu0 0
    %2230 = vmatpush1.bf16.msra.mxu0 0
    %2231 = vmatprep.subr.bf16.mxu0 0
    %2232 = vmatpush1.bf16.msra.mxu0 0
    %2233 = vmatprep.subr.bf16.mxu0 0
    %2234 = vmatpush1.bf16.msra.mxu0 0
    %2235 = vmatprep.subr.bf16.mxu0 0
    %2236 = vmatpush1.bf16.msra.mxu0 0
    %2237 = vmatprep.subr.bf16.mxu0 0
    %2238 = vmatpush1.bf16.msra.mxu0 0
    %2239 = vmatprep.mubr.bf16.mxu0 0
    %2240 = vmatmul.mubr.bf16.gmra.mrb[0].mxu0 %v2135
    %v2241 = vpop.f32.mrb[0].mxu0
    %v2242 = vadd.f32 %v2157, %v2241
    %v2243 = vpop.f32.mrb[0].mxu0
    %v2244 = vpop.f32.mrb[0].mxu0
    %v2245 = vpop.f32.mrb[0].mxu0
    %2246 = vdwg.mxu0
    %v2247 = vld [vmem:[#allocation36] sm:$0xff]
    %v2248 = vld [vmem:[#allocation36 + $0x8] sm:$0xf]
    %v2249 = vpack.c.bf16 %v2248, %v2247
    %v2250 = vld [vmem:[#allocation40] sm:$0xff]
    %v2251 = vld [vmem:[#allocation40 + $0x8] sm:$0xff]
    %v2252 = vld [vmem:[#allocation40 + $0x10] sm:$0xff]
    %v2253 = vld [vmem:[#allocation40 + $0x18] sm:$0xff]
    %v2254 = vld [vmem:[#allocation40 + $0x20] sm:$0xff]
    %v2255 = vld [vmem:[#allocation40 + $0x28] sm:$0xff]
    %v2256 = vld [vmem:[#allocation40 + $0x30] sm:$0xff]
    %v2257 = vld [vmem:[#allocation40 + $0x38] sm:$0xff]
    %v2258 = vld [vmem:[#allocation40 + $0x40] sm:$0xff]
    %v2259 = vld [vmem:[#allocation40 + $0x48] sm:$0xff]
    %v2260 = vld [vmem:[#allocation40 + $0x50] sm:$0xff]
    %v2261 = vld [vmem:[#allocation40 + $0x58] sm:$0xff]
    %v2262 = vld [vmem:[#allocation40 + $0x60] sm:$0xff]
    %v2263 = vld [vmem:[#allocation40 + $0x68] sm:$0xff]
    %v2264 = vld [vmem:[#allocation40 + $0x70] sm:$0xff]
    %v2265 = vld [vmem:[#allocation40 + $0x78] sm:$0xff]
    %v2266 = vld [vmem:[#allocation40 + $0x80] sm:$0xff]
    %v2267 = vld [vmem:[#allocation40 + $0x88] sm:$0xff]
    %v2268 = vld [vmem:[#allocation40 + $0x90] sm:$0xff]
    %v2269 = vld [vmem:[#allocation40 + $0x98] sm:$0xff]
    %v2270 = vld [vmem:[#allocation40 + $0xa0] sm:$0xff]
    %v2271 = vld [vmem:[#allocation40 + $0xa8] sm:$0xff]
    %v2272 = vld [vmem:[#allocation40 + $0xb0] sm:$0xff]
    %v2273 = vld [vmem:[#allocation40 + $0xb8] sm:$0xff]
    %v2274 = vld [vmem:[#allocation40 + $0xc0] sm:$0xff]
    %v2275 = vld [vmem:[#allocation40 + $0xc8] sm:$0xff]
    %v2276 = vld [vmem:[#allocation40 + $0xd0] sm:$0xff]
    %v2277 = vld [vmem:[#allocation40 + $0xd8] sm:$0xff]
    %v2278 = vld [vmem:[#allocation40 + $0xe0] sm:$0xff]
    %v2279 = vld [vmem:[#allocation40 + $0xe8] sm:$0xff]
    %v2280 = vld [vmem:[#allocation40 + $0xf0] sm:$0xff]
    %v2281 = vld [vmem:[#allocation40 + $0xf8] sm:$0xff]
    %v2282 = vld [vmem:[%s47] sm:$0xf]
    %v2284 = vlaneseq
    %v2285 = vshrl.u32 %v2284, 7
    %v2286 = vsub.s32 0, %v2285
    %v2287 = vrot.slane %v2282, %v2286
    %v2288 = vlaneseq
    %v2289 = vshrl.u32 %v2288, 7
    %v2290 = vsub.s32 1, %v2289
    %v2291 = vrot.slane %v2282, %v2290
    %v2292 = vlaneseq
    %v2293 = vshrl.u32 %v2292, 7
    %v2294 = vsub.s32 2, %v2293
    %v2295 = vrot.slane %v2282, %v2294
    %v2296 = vlaneseq
    %v2297 = vshrl.u32 %v2296, 7
    %v2298 = vsub.s32 3, %v2297
    %v2299 = vrot.slane %v2282, %v2298
    %v2336 = vunpack.c.l.b16 %v2250
    %v2337 = vunpack.c.h.b16 %v2250
    %v2338 = vunpack.c.l.b16 %v2251
    %v2339 = vunpack.c.h.b16 %v2251
    %v2340 = vunpack.c.l.b16 %v2252
    %v2341 = vunpack.c.h.b16 %v2252
    %v2342 = vunpack.c.l.b16 %v2253
    %v2343 = vunpack.c.h.b16 %v2253
    %v2344 = vunpack.c.l.b16 %v2254
    %v2345 = vunpack.c.h.b16 %v2254
    %v2346 = vunpack.c.l.b16 %v2255
    %v2347 = vunpack.c.h.b16 %v2255
    %v2348 = vunpack.c.l.b16 %v2256
    %v2349 = vunpack.c.h.b16 %v2256
    %v2350 = vunpack.c.l.b16 %v2257
    %v2351 = vunpack.c.h.b16 %v2257
    %v2352 = vunpack.c.l.b16 %v2258
    %v2353 = vunpack.c.h.b16 %v2258
    %v2354 = vunpack.c.l.b16 %v2259
    %v2355 = vunpack.c.h.b16 %v2259
    %v2356 = vunpack.c.l.b16 %v2260
    %v2357 = vunpack.c.h.b16 %v2260
    %v2358 = vunpack.c.l.b16 %v2261
    %v2359 = vunpack.c.h.b16 %v2261
    %v2360 = vunpack.c.l.b16 %v2262
    %v2361 = vunpack.c.h.b16 %v2262
    %v2362 = vunpack.c.l.b16 %v2263
    %v2363 = vunpack.c.h.b16 %v2263
    %v2364 = vunpack.c.l.b16 %v2264
    %v2365 = vunpack.c.h.b16 %v2264
    %v2366 = vunpack.c.l.b16 %v2265
    %v2367 = vunpack.c.h.b16 %v2265
    %v2368 = vunpack.c.l.b16 %v2266
    %v2369 = vunpack.c.h.b16 %v2266
    %v2370 = vunpack.c.l.b16 %v2267
    %v2371 = vunpack.c.h.b16 %v2267
    %v2372 = vunpack.c.l.b16 %v2268
    %v2373 = vunpack.c.h.b16 %v2268
    %v2374 = vunpack.c.l.b16 %v2269
    %v2375 = vunpack.c.h.b16 %v2269
    %v2376 = vunpack.c.l.b16 %v2270
    %v2377 = vunpack.c.h.b16 %v2270
    %v2378 = vunpack.c.l.b16 %v2271
    %v2379 = vunpack.c.h.b16 %v2271
    %v2380 = vunpack.c.l.b16 %v2272
    %v2381 = vunpack.c.h.b16 %v2272
    %v2382 = vunpack.c.l.b16 %v2273
    %v2383 = vunpack.c.h.b16 %v2273
    %v2384 = vunpack.c.l.b16 %v2274
    %v2385 = vunpack.c.h.b16 %v2274
    %v2386 = vunpack.c.l.b16 %v2275
    %v2387 = vunpack.c.h.b16 %v2275
    %v2388 = vunpack.c.l.b16 %v2276
    %v2389 = vunpack.c.h.b16 %v2276
    %v2390 = vunpack.c.l.b16 %v2277
    %v2391 = vunpack.c.h.b16 %v2277
    %v2392 = vunpack.c.l.b16 %v2278
    %v2393 = vunpack.c.h.b16 %v2278
    %v2394 = vunpack.c.l.b16 %v2279
    %v2395 = vunpack.c.h.b16 %v2279
    %v2396 = vunpack.c.l.b16 %v2280
    %v2397 = vunpack.c.h.b16 %v2280
    %v2398 = vunpack.c.l.b16 %v2281
    %v2399 = vunpack.c.h.b16 %v2281
    %v2400 = vpack.c.b16 %v2340, %v2336
    %v2401 = vpack.c.b16 %v2341, %v2337
    %v2402 = vpack.c.b16 %v2342, %v2338
    %v2403 = vpack.c.b16 %v2343, %v2339
    %v2404 = vpack.c.b16 %v2348, %v2344
    %v2405 = vpack.c.b16 %v2349, %v2345
    %v2406 = vpack.c.b16 %v2350, %v2346
    %v2407 = vpack.c.b16 %v2351, %v2347
    %v2408 = vpack.c.b16 %v2356, %v2352
    %v2409 = vpack.c.b16 %v2357, %v2353
    %v2410 = vpack.c.b16 %v2358, %v2354
    %v2411 = vpack.c.b16 %v2359, %v2355
    %v2412 = vpack.c.b16 %v2364, %v2360
    %v2413 = vpack.c.b16 %v2365, %v2361
    %v2414 = vpack.c.b16 %v2366, %v2362
    %v2415 = vpack.c.b16 %v2367, %v2363
    %v2416 = vpack.c.b16 %v2372, %v2368
    %v2417 = vpack.c.b16 %v2373, %v2369
    %v2418 = vpack.c.b16 %v2374, %v2370
    %v2419 = vpack.c.b16 %v2375, %v2371
    %v2420 = vpack.c.b16 %v2380, %v2376
    %v2421 = vpack.c.b16 %v2381, %v2377
    %v2422 = vpack.c.b16 %v2382, %v2378
    %v2423 = vpack.c.b16 %v2383, %v2379
    %v2424 = vpack.c.b16 %v2388, %v2384
    %v2425 = vpack.c.b16 %v2389, %v2385
    %v2426 = vpack.c.b16 %v2390, %v2386
    %v2427 = vpack.c.b16 %v2391, %v2387
    %v2428 = vpack.c.b16 %v2396, %v2392
    %v2429 = vpack.c.b16 %v2397, %v2393
    %v2430 = vpack.c.b16 %v2398, %v2394
    %v2431 = vpack.c.b16 %v2399, %v2395
    %2464 = vmatprep.subr.bf16.mxu0 %v2401
    %2465 = vmatpush1.bf16.msra.mxu0 %v2400
    %2466 = vmatprep.subr.bf16.mxu0 %v2405
    %2467 = vmatpush1.bf16.msra.mxu0 %v2404
    %2468 = vmatprep.subr.bf16.mxu0 %v2409
    %2469 = vmatpush1.bf16.msra.mxu0 %v2408
    %2470 = vmatprep.subr.bf16.mxu0 %v2413
    %2471 = vmatpush1.bf16.msra.mxu0 %v2412
    %2472 = vmatprep.subr.bf16.mxu0 %v2417
    %2473 = vmatpush1.bf16.msra.mxu0 %v2416
    %2474 = vmatprep.subr.bf16.mxu0 %v2421
    %2475 = vmatpush1.bf16.msra.mxu0 %v2420
    %2476 = vmatprep.subr.bf16.mxu0 %v2425
    %2477 = vmatpush1.bf16.msra.mxu0 %v2424
    %2478 = vmatprep.subr.bf16.mxu0 %v2429
    %2479 = vmatpush1.bf16.msra.mxu0 %v2428
    %2480 = vmatprep.subr.bf16.mxu0 0
    %2481 = vmatpush1.bf16.msra.mxu0 0
    %2482 = vmatprep.subr.bf16.mxu0 0
    %2483 = vmatpush1.bf16.msra.mxu0 0
    %2484 = vmatprep.subr.bf16.mxu0 0
    %2485 = vmatpush1.bf16.msra.mxu0 0
    %2486 = vmatprep.subr.bf16.mxu0 0
    %2487 = vmatpush1.bf16.msra.mxu0 0
    %2488 = vmatprep.subr.bf16.mxu0 0
    %2489 = vmatpush1.bf16.msra.mxu0 0
    %2490 = vmatprep.subr.bf16.mxu0 0
    %2491 = vmatpush1.bf16.msra.mxu0 0
    %2492 = vmatprep.subr.bf16.mxu0 0
    %2493 = vmatpush1.bf16.msra.mxu0 0
    %2494 = vmatprep.subr.bf16.mxu0 0
    %2495 = vmatpush1.bf16.msra.mxu0 0
    %2496 = vmatprep.mubr.bf16.mxu0 0
    %2497 = vmatmul.mubr.bf16.gmra.mrb[0].mxu0 %v2249
    %v2498 = vpop.f32.mrb[0].mxu0
    %v2499 = vadd.f32 %v2287, %v2498
    %v2500 = vpop.f32.mrb[0].mxu0
    %v2501 = vadd.f32 %v2291, %v2500
    %v2502 = vpop.f32.mrb[0].mxu0
    %v2503 = vadd.f32 %v2287, %v2502
    %v2504 = vpop.f32.mrb[0].mxu0
    %v2505 = vadd.f32 %v2291, %v2504
    %2506 = vdwg.mxu0
    %2507 = vmatprep.subr.bf16.mxu0 %v2403
    %2508 = vmatpush1.bf16.msra.mxu0 %v2402
    %2509 = vmatprep.subr.bf16.mxu0 %v2407
    %2510 = vmatpush1.bf16.msra.mxu0 %v2406
    %2511 = vmatprep.subr.bf16.mxu0 %v2411
    %2512 = vmatpush1.bf16.msra.mxu0 %v2410
    %2513 = vmatprep.subr.bf16.mxu0 %v2415
    %2514 = vmatpush1.bf16.msra.mxu0 %v2414
    %2515 = vmatprep.subr.bf16.mxu0 %v2419
    %2516 = vmatpush1.bf16.msra.mxu0 %v2418
    %2517 = vmatprep.subr.bf16.mxu0 %v2423
    %2518 = vmatpush1.bf16.msra.mxu0 %v2422
    %2519 = vmatprep.subr.bf16.mxu0 %v2427
    %2520 = vmatpush1.bf16.msra.mxu0 %v2426
    %2521 = vmatprep.subr.bf16.mxu0 %v2431
    %2522 = vmatpush1.bf16.msra.mxu0 %v2430
    %2523 = vmatprep.subr.bf16.mxu0 0
    %2524 = vmatpush1.bf16.msra.mxu0 0
    %2525 = vmatprep.subr.bf16.mxu0 0
    %2526 = vmatpush1.bf16.msra.mxu0 0
    %2527 = vmatprep.subr.bf16.mxu0 0
    %2528 = vmatpush1.bf16.msra.mxu0 0
    %2529 = vmatprep.subr.bf16.mxu0 0
    %2530 = vmatpush1.bf16.msra.mxu0 0
    %2531 = vmatprep.subr.bf16.mxu0 0
    %2532 = vmatpush1.bf16.msra.mxu0 0
    %2533 = vmatprep.subr.bf16.mxu0 0
    %2534 = vmatpush1.bf16.msra.mxu0 0
    %2535 = vmatprep.subr.bf16.mxu0 0
    %2536 = vmatpush1.bf16.msra.mxu0 0
    %2537 = vmatprep.subr.bf16.mxu0 0
    %2538 = vmatpush1.bf16.msra.mxu0 0
    %2539 = vmatprep.mubr.bf16.mxu0 0
    %2540 = vmatmul.mubr.bf16.gmra.mrb[0].mxu0 %v2249
    %v2541 = vpop.f32.mrb[0].mxu0
    %v2542 = vadd.f32 %v2295, %v2541
    %v2543 = vpop.f32.mrb[0].mxu0
    %v2544 = vadd.f32 %v2299, %v2543
    %v2545 = vpop.f32.mrb[0].mxu0
    %v2546 = vadd.f32 %v2295, %v2545
    %v2547 = vpop.f32.mrb[0].mxu0
    %v2548 = vadd.f32 %v2299, %v2547
    %2549 = vdwg.mxu0
    %2550 = vst [vmem:[#allocation4] sm:$0xff] %v2499
    %2551 = vst [vmem:[#allocation4 + $0x8] sm:$0xff] %v2501
    %2552 = vst [vmem:[#allocation4 + $0x10] sm:$0xff] %v2542
    %2553 = vst [vmem:[#allocation4 + $0x18] sm:$0xff] %v2544
    %2554 = vst [vmem:[#allocation4 + $0x20] sm:$0xf] %v2503
    %2555 = vst [vmem:[#allocation4 + $0x28] sm:$0xf] %v2505
    %2556 = vst [vmem:[#allocation4 + $0x30] sm:$0xf] %v2546
    %2557 = vst [vmem:[#allocation4 + $0x38] sm:$0xf] %v2548
    %v2558 = vld [vmem:[#allocation37] sm:$0x3]
    %v2559 = vpack.c.bf16 %v2558, %v2558
    %v2560 = vld [vmem:[%s41] sm:$0xf]
    %v2561 = vld [vmem:[%s41 + $0x4] sm:$0xf]
    %v2562 = vld [vmem:[%s41 + $0x8] sm:$0xf]
    %v2563 = vld [vmem:[%s41 + $0xc] sm:$0xf]
    %v2564 = vld [vmem:[%s41 + $0x10] sm:$0xf]
    %v2565 = vld [vmem:[%s41 + $0x14] sm:$0xf]
    %v2566 = vld [vmem:[%s41 + $0x18] sm:$0xf]
    %v2567 = vld [vmem:[%s41 + $0x1c] sm:$0xf]
    %v2568 = vld [vmem:[%s41 + $0x20] sm:$0xf]
    %v2569 = vld [vmem:[%s41 + $0x24] sm:$0xf]
    %v2570 = vld [vmem:[%s41 + $0x28] sm:$0xf]
    %v2571 = vld [vmem:[%s41 + $0x2c] sm:$0xf]
    %v2572 = vld [vmem:[%s41 + $0x30] sm:$0xf]
    %v2573 = vld [vmem:[%s41 + $0x34] sm:$0xf]
    %v2574 = vld [vmem:[%s41 + $0x38] sm:$0xf]
    %v2575 = vld [vmem:[%s41 + $0x3c] sm:$0xf]
    %v2576 = vld [vmem:[#allocation39] sm:$0x1]
    %v2578 = vlaneseq
    %v2579 = vshrl.u32 %v2578, 7
    %v2580 = vsub.s32 0, %v2579
    %v2581 = vrot.slane %v2576, %v2580
    %v2599 = vunpack.c.l.b16 %v2560
    %v2600 = vunpack.c.l.b16 %v2561
    %v2601 = vunpack.c.l.b16 %v2562
    %v2602 = vunpack.c.l.b16 %v2563
    %v2603 = vunpack.c.l.b16 %v2564
    %v2604 = vunpack.c.l.b16 %v2565
    %v2605 = vunpack.c.l.b16 %v2566
    %v2606 = vunpack.c.l.b16 %v2567
    %v2607 = vunpack.c.l.b16 %v2568
    %v2608 = vunpack.c.l.b16 %v2569
    %v2609 = vunpack.c.l.b16 %v2570
    %v2610 = vunpack.c.l.b16 %v2571
    %v2611 = vunpack.c.l.b16 %v2572
    %v2612 = vunpack.c.l.b16 %v2573
    %v2613 = vunpack.c.l.b16 %v2574
    %v2614 = vunpack.c.l.b16 %v2575
    %v2615 = vpack.c.b16 %v2600, %v2599
    %v2616 = vpack.c.b16 %v2602, %v2601
    %v2617 = vpack.c.b16 %v2604, %v2603
    %v2618 = vpack.c.b16 %v2606, %v2605
    %v2619 = vpack.c.b16 %v2608, %v2607
    %v2620 = vpack.c.b16 %v2610, %v2609
    %v2621 = vpack.c.b16 %v2612, %v2611
    %v2622 = vpack.c.b16 %v2614, %v2613
    %2631 = vmatprep.subr.bf16.mxu0 0
    %2632 = vmatpush1.bf16.msra.mxu0 %v2615
    %2633 = vmatprep.subr.bf16.mxu0 0
    %2634 = vmatpush1.bf16.msra.mxu0 %v2616
    %2635 = vmatprep.subr.bf16.mxu0 0
    %2636 = vmatpush1.bf16.msra.mxu0 %v2617
    %2637 = vmatprep.subr.bf16.mxu0 0
    %2638 = vmatpush1.bf16.msra.mxu0 %v2618
    %2639 = vmatprep.subr.bf16.mxu0 0
    %2640 = vmatpush1.bf16.msra.mxu0 %v2619
    %2641 = vmatprep.subr.bf16.mxu0 0
    %2642 = vmatpush1.bf16.msra.mxu0 %v2620
    %2643 = vmatprep.subr.bf16.mxu0 0
    %2644 = vmatpush1.bf16.msra.mxu0 %v2621
    %2645 = vmatprep.subr.bf16.mxu0 0
    %2646 = vmatpush1.bf16.msra.mxu0 %v2622
    %2647 = vmatprep.subr.bf16.mxu0 0
    %2648 = vmatpush1.bf16.msra.mxu0 0
    %2649 = vmatprep.subr.bf16.mxu0 0
    %2650 = vmatpush1.bf16.msra.mxu0 0
    %2651 = vmatprep.subr.bf16.mxu0 0
    %2652 = vmatpush1.bf16.msra.mxu0 0
    %2653 = vmatprep.subr.bf16.mxu0 0
    %2654 = vmatpush1.bf16.msra.mxu0 0
    %2655 = vmatprep.subr.bf16.mxu0 0
    %2656 = vmatpush1.bf16.msra.mxu0 0
    %2657 = vmatprep.subr.bf16.mxu0 0
    %2658 = vmatpush1.bf16.msra.mxu0 0
    %2659 = vmatprep.subr.bf16.mxu0 0
    %2660 = vmatpush1.bf16.msra.mxu0 0
    %2661 = vmatprep.subr.bf16.mxu0 0
    %2662 = vmatpush1.bf16.msra.mxu0 0
    %2663 = vmatprep.mubr.bf16.mxu0 0
    %2664 = vmatmul.mubr.bf16.gmra.mrb[0].mxu0 %v2559
    %v2665 = vpop.f32.mrb[0].mxu0
    %v2666 = vadd.f32 %v2581, %v2665
    %v2667 = vpop.f32.mrb[0].mxu0
    %v2668 = vpop.f32.mrb[0].mxu0
    %v2669 = vpop.f32.mrb[0].mxu0
    %2670 = vdwg.mxu0
    %v2671 = vld [vmem:[#allocation2] sm:$0x3]
    %v2672 = vld [vmem:[#allocation2 + $0x8] sm:$0x3]
    %v2673 = vld [vmem:[#allocation2 + $0x10] sm:$0x3]
    %v2674 = vld [vmem:[#allocation2 + $0x18] sm:$0x3]
    %v2675 = vld [vmem:[#allocation21] sm:$0xff]
    %v2676 = vld [vmem:[#allocation21 + $0x8] sm:$0xff]
    %v2677 = vld [vmem:[#allocation21 + $0x10] sm:$0xff]
    %v2678 = vld [vmem:[#allocation21 + $0x18] sm:$0xff]
    %v2679 = vld [vmem:[#allocation21 + $0x20] sm:$0xff]
    %v2680 = vld [vmem:[#allocation21 + $0x28] sm:$0xff]
    %v2681 = vld [vmem:[#allocation21 + $0x30] sm:$0xff]
    %v2682 = vld [vmem:[#allocation21 + $0x38] sm:$0xff]
    %v2683 = vld [vmem:[#allocation21 + $0x40] sm:$0xff]
    %v2684 = vld [vmem:[#allocation21 + $0x48] sm:$0xff]
    %v2685 = vld [vmem:[#allocation21 + $0x50] sm:$0xff]
    %v2686 = vld [vmem:[#allocation21 + $0x58] sm:$0xff]
    %v2687 = vld [vmem:[#allocation21 + $0x60] sm:$0xff]
    %v2688 = vld [vmem:[#allocation21 + $0x68] sm:$0xff]
    %v2689 = vld [vmem:[#allocation21 + $0x70] sm:$0xff]
    %v2690 = vld [vmem:[#allocation21 + $0x78] sm:$0xff]
    %v2691 = vld [vmem:[#allocation21 + $0x80] sm:$0xff]
    %v2692 = vld [vmem:[#allocation21 + $0x88] sm:$0xff]
    %v2693 = vld [vmem:[#allocation21 + $0x90] sm:$0xff]
    %v2694 = vld [vmem:[#allocation21 + $0x98] sm:$0xff]
    %v2695 = vld [vmem:[#allocation21 + $0xa0] sm:$0xff]
    %v2696 = vld [vmem:[#allocation21 + $0xa8] sm:$0xff]
    %v2697 = vld [vmem:[#allocation21 + $0xb0] sm:$0xff]
    %v2698 = vld [vmem:[#allocation21 + $0xb8] sm:$0xff]
    %v2699 = vld [vmem:[#allocation21 + $0xc0] sm:$0xff]
    %v2700 = vld [vmem:[#allocation21 + $0xc8] sm:$0xff]
    %v2701 = vld [vmem:[#allocation21 + $0xd0] sm:$0xff]
    %v2702 = vld [vmem:[#allocation21 + $0xd8] sm:$0xff]
    %v2703 = vld [vmem:[#allocation21 + $0xe0] sm:$0xff]
    %v2704 = vld [vmem:[#allocation21 + $0xe8] sm:$0xff]
    %v2705 = vld [vmem:[#allocation21 + $0xf0] sm:$0xff]
    %v2706 = vld [vmem:[#allocation21 + $0xf8] sm:$0xff]
    %v2739 = vunpack.c.l.b16 %v2675
    %v2740 = vunpack.c.h.b16 %v2675
    %v2741 = vunpack.c.l.b16 %v2676
    %v2742 = vunpack.c.h.b16 %v2676
    %v2743 = vunpack.c.l.b16 %v2677
    %v2744 = vunpack.c.h.b16 %v2677
    %v2745 = vunpack.c.l.b16 %v2678
    %v2746 = vunpack.c.h.b16 %v2678
    %v2747 = vunpack.c.l.b16 %v2679
    %v2748 = vunpack.c.h.b16 %v2679
    %v2749 = vunpack.c.l.b16 %v2680
    %v2750 = vunpack.c.h.b16 %v2680
    %v2751 = vunpack.c.l.b16 %v2681
    %v2752 = vunpack.c.h.b16 %v2681
    %v2753 = vunpack.c.l.b16 %v2682
    %v2754 = vunpack.c.h.b16 %v2682
    %v2755 = vunpack.c.l.b16 %v2683
    %v2756 = vunpack.c.h.b16 %v2683
    %v2757 = vunpack.c.l.b16 %v2684
    %v2758 = vunpack.c.h.b16 %v2684
    %v2759 = vunpack.c.l.b16 %v2685
    %v2760 = vunpack.c.h.b16 %v2685
    %v2761 = vunpack.c.l.b16 %v2686
    %v2762 = vunpack.c.h.b16 %v2686
    %v2763 = vunpack.c.l.b16 %v2687
    %v2764 = vunpack.c.h.b16 %v2687
    %v2765 = vunpack.c.l.b16 %v2688
    %v2766 = vunpack.c.h.b16 %v2688
    %v2767 = vunpack.c.l.b16 %v2689
    %v2768 = vunpack.c.h.b16 %v2689
    %v2769 = vunpack.c.l.b16 %v2690
    %v2770 = vunpack.c.h.b16 %v2690
    %v2771 = vunpack.c.l.b16 %v2691
    %v2772 = vunpack.c.h.b16 %v2691
    %v2773 = vunpack.c.l.b16 %v2692
    %v2774 = vunpack.c.h.b16 %v2692
    %v2775 = vunpack.c.l.b16 %v2693
    %v2776 = vunpack.c.h.b16 %v2693
    %v2777 = vunpack.c.l.b16 %v2694
    %v2778 = vunpack.c.h.b16 %v2694
    %v2779 = vunpack.c.l.b16 %v2695
    %v2780 = vunpack.c.h.b16 %v2695
    %v2781 = vunpack.c.l.b16 %v2696
    %v2782 = vunpack.c.h.b16 %v2696
    %v2783 = vunpack.c.l.b16 %v2697
    %v2784 = vunpack.c.h.b16 %v2697
    %v2785 = vunpack.c.l.b16 %v2698
    %v2786 = vunpack.c.h.b16 %v2698
    %v2787 = vunpack.c.l.b16 %v2699
    %v2788 = vunpack.c.h.b16 %v2699
    %v2789 = vunpack.c.l.b16 %v2700
    %v2790 = vunpack.c.h.b16 %v2700
    %v2791 = vunpack.c.l.b16 %v2701
    %v2792 = vunpack.c.h.b16 %v2701
    %v2793 = vunpack.c.l.b16 %v2702
    %v2794 = vunpack.c.h.b16 %v2702
    %v2795 = vunpack.c.l.b16 %v2703
    %v2796 = vunpack.c.h.b16 %v2703
    %v2797 = vunpack.c.l.b16 %v2704
    %v2798 = vunpack.c.h.b16 %v2704
    %v2799 = vunpack.c.l.b16 %v2705
    %v2800 = vunpack.c.h.b16 %v2705
    %v2801 = vunpack.c.l.b16 %v2706
    %v2802 = vunpack.c.h.b16 %v2706
    %v2803 = vpack.c.b16 %v2743, %v2739
    %v2804 = vpack.c.b16 %v2744, %v2740
    %v2805 = vpack.c.b16 %v2745, %v2741
    %v2806 = vpack.c.b16 %v2746, %v2742
    %v2807 = vpack.c.b16 %v2751, %v2747
    %v2808 = vpack.c.b16 %v2752, %v2748
    %v2809 = vpack.c.b16 %v2753, %v2749
    %v2810 = vpack.c.b16 %v2754, %v2750
    %v2811 = vpack.c.b16 %v2759, %v2755
    %v2812 = vpack.c.b16 %v2760, %v2756
    %v2813 = vpack.c.b16 %v2761, %v2757
    %v2814 = vpack.c.b16 %v2762, %v2758
    %v2815 = vpack.c.b16 %v2767, %v2763
    %v2816 = vpack.c.b16 %v2768, %v2764
    %v2817 = vpack.c.b16 %v2769, %v2765
    %v2818 = vpack.c.b16 %v2770, %v2766
    %v2819 = vpack.c.b16 %v2775, %v2771
    %v2820 = vpack.c.b16 %v2776, %v2772
    %v2821 = vpack.c.b16 %v2777, %v2773
    %v2822 = vpack.c.b16 %v2778, %v2774
    %v2823 = vpack.c.b16 %v2783, %v2779
    %v2824 = vpack.c.b16 %v2784, %v2780
    %v2825 = vpack.c.b16 %v2785, %v2781
    %v2826 = vpack.c.b16 %v2786, %v2782
    %v2827 = vpack.c.b16 %v2791, %v2787
    %v2828 = vpack.c.b16 %v2792, %v2788
    %v2829 = vpack.c.b16 %v2793, %v2789
    %v2830 = vpack.c.b16 %v2794, %v2790
    %v2831 = vpack.c.b16 %v2799, %v2795
    %v2832 = vpack.c.b16 %v2800, %v2796
    %v2833 = vpack.c.b16 %v2801, %v2797
    %v2834 = vpack.c.b16 %v2802, %v2798
    %2867 = vmatprep.subr.bf16.mxu0 %v2804
    %2868 = vmatpush1.bf16.msra.mxu0 %v2803
    %2869 = vmatprep.subr.bf16.mxu0 %v2808
    %2870 = vmatpush1.bf16.msra.mxu0 %v2807
    %2871 = vmatprep.subr.bf16.mxu0 %v2812
    %2872 = vmatpush1.bf16.msra.mxu0 %v2811
    %2873 = vmatprep.subr.bf16.mxu0 %v2816
    %2874 = vmatpush1.bf16.msra.mxu0 %v2815
    %2875 = vmatprep.subr.bf16.mxu0 %v2820
    %2876 = vmatpush1.bf16.msra.mxu0 %v2819
    %2877 = vmatprep.subr.bf16.mxu0 %v2824
    %2878 = vmatpush1.bf16.msra.mxu0 %v2823
    %2879 = vmatprep.subr.bf16.mxu0 %v2828
    %2880 = vmatpush1.bf16.msra.mxu0 %v2827
    %2881 = vmatprep.subr.bf16.mxu0 %v2832
    %2882 = vmatpush1.bf16.msra.mxu0 %v2831
    %2883 = vmatprep.subr.bf16.mxu0 0
    %2884 = vmatpush1.bf16.msra.mxu0 0
    %2885 = vmatprep.subr.bf16.mxu0 0
    %2886 = vmatpush1.bf16.msra.mxu0 0
    %2887 = vmatprep.subr.bf16.mxu0 0
    %2888 = vmatpush1.bf16.msra.mxu0 0
    %2889 = vmatprep.subr.bf16.mxu0 0
    %2890 = vmatpush1.bf16.msra.mxu0 0
    %2891 = vmatprep.subr.bf16.mxu0 0
    %2892 = vmatpush1.bf16.msra.mxu0 0
    %2893 = vmatprep.subr.bf16.mxu0 0
    %2894 = vmatpush1.bf16.msra.mxu0 0
    %2895 = vmatprep.subr.bf16.mxu0 0
    %2896 = vmatpush1.bf16.msra.mxu0 0
    %2897 = vmatprep.subr.bf16.mxu0 0
    %2898 = vmatpush1.bf16.msra.mxu0 0
    %2899 = vmatprep.mubr.bf16.mxu0 0
    %2900 = vmatmul.mubr.bf16.gmra.mrb[0].mxu0 0
    %v2901 = vpop.f32.mrb[0].mxu0
    %v2902 = vadd.f32 0.0, %v2901
    %v2903 = vpop.f32.mrb[0].mxu0
    %v2904 = vadd.f32 0.0, %v2903
    %v2905 = vpop.f32.mrb[0].mxu0
    %v2906 = vpop.f32.mrb[0].mxu0
    %2907 = vdwg.mxu0
    %2908 = vmatprep.subr.bf16.mxu0 %v2806
    %2909 = vmatpush1.bf16.msra.mxu0 %v2805
    %2910 = vmatprep.subr.bf16.mxu0 %v2810
    %2911 = vmatpush1.bf16.msra.mxu0 %v2809
    %2912 = vmatprep.subr.bf16.mxu0 %v2814
    %2913 = vmatpush1.bf16.msra.mxu0 %v2813
    %2914 = vmatprep.subr.bf16.mxu0 %v2818
    %2915 = vmatpush1.bf16.msra.mxu0 %v2817
    %2916 = vmatprep.subr.bf16.mxu0 %v2822
    %2917 = vmatpush1.bf16.msra.mxu0 %v2821
    %2918 = vmatprep.subr.bf16.mxu0 %v2826
    %2919 = vmatpush1.bf16.msra.mxu0 %v2825
    %2920 = vmatprep.subr.bf16.mxu0 %v2830
    %2921 = vmatpush1.bf16.msra.mxu0 %v2829
    %2922 = vmatprep.subr.bf16.mxu0 %v2834
    %2923 = vmatpush1.bf16.msra.mxu0 %v2833
    %2924 = vmatprep.subr.bf16.mxu0 0
    %2925 = vmatpush1.bf16.msra.mxu0 0
    %2926 = vmatprep.subr.bf16.mxu0 0
    %2927 = vmatpush1.bf16.msra.mxu0 0
    %2928 = vmatprep.subr.bf16.mxu0 0
    %2929 = vmatpush1.bf16.msra.mxu0 0
    %2930 = vmatprep.subr.bf16.mxu0 0
    %2931 = vmatpush1.bf16.msra.mxu0 0
    %2932 = vmatprep.subr.bf16.mxu0 0
    %2933 = vmatpush1.bf16.msra.mxu0 0
    %2934 = vmatprep.subr.bf16.mxu0 0
    %2935 = vmatpush1.bf16.msra.mxu0 0
    %2936 = vmatprep.subr.bf16.mxu0 0
    %2937 = vmatpush1.bf16.msra.mxu0 0
    %2938 = vmatprep.subr.bf16.mxu0 0
    %2939 = vmatpush1.bf16.msra.mxu0 0
    %2940 = vmatprep.mubr.bf16.mxu0 0
    %2941 = vmatmul.mubr.bf16.gmra.mrb[0].mxu0 0
    %v2942 = vpop.f32.mrb[0].mxu0
    %v2943 = vadd.f32 0.0, %v2942
    %v2944 = vpop.f32.mrb[0].mxu0
    %v2945 = vadd.f32 0.0, %v2944
    %v2946 = vpop.f32.mrb[0].mxu0
    %v2947 = vpop.f32.mrb[0].mxu0
    %2948 = vdwg.mxu0
    %v2949 = vadd.f32 %v2671, %v2902
    %v2950 = vadd.f32 %v2672, %v2904
    %v2951 = vadd.f32 %v2673, %v2943
    %v2952 = vadd.f32 %v2674, %v2945
    %v2953 = vxor.u32 %v2949, 2147483648
    %v2954 = vmul.f32 %v2953, 1.442695
    %v2955 = vpow.pop %v2954
    %v2956 = vadd.f32 %v2955, 1.0
    %v2957 = vrcp.pop %v2956
    %v2958 = vmul.f32 1.0, %v2957
    %v2959 = vxor.u32 %v2950, 2147483648
    %v2960 = vmul.f32 %v2959, 1.442695
    %v2961 = vpow.pop %v2960
    %v2962 = vadd.f32 %v2961, 1.0
    %v2963 = vrcp.pop %v2962
    %v2964 = vmul.f32 1.0, %v2963
    %v2965 = vtanh.pop %v2951
    %v2966 = vxor.u32 %v2952, 2147483648
    %v2967 = vmul.f32 %v2966, 1.442695
    %v2968 = vpow.pop %v2967
    %v2969 = vadd.f32 %v2968, 1.0
    %v2970 = vrcp.pop %v2969
    %v2971 = vmul.f32 1.0, %v2970
    %v2972 = vmul.f32 %v2964, 0.0
    %v2973 = vmul.f32 %v2958, %v2965
    %v2974 = vadd.f32 %v2972, %v2973
    %v2975 = vtanh.pop %v2974
    %v2976 = vmul.f32 %v2971, %v2975
    %v2977 = vld [vmem:[#allocation3] sm:$0x3]
    %v2978 = vld [vmem:[#allocation3 + $0x8] sm:$0x3]
    %v2979 = vld [vmem:[#allocation3 + $0x10] sm:$0x3]
    %v2980 = vld [vmem:[#allocation3 + $0x18] sm:$0x3]
    %v2981 = vld [vmem:[#allocation31] sm:$0xff]
    %v2982 = vld [vmem:[#allocation31 + $0x8] sm:$0xff]
    %v2983 = vld [vmem:[#allocation31 + $0x10] sm:$0xff]
    %v2984 = vld [vmem:[#allocation31 + $0x18] sm:$0xff]
    %v2985 = vld [vmem:[#allocation31 + $0x20] sm:$0xff]
    %v2986 = vld [vmem:[#allocation31 + $0x28] sm:$0xff]
    %v2987 = vld [vmem:[#allocation31 + $0x30] sm:$0xff]
    %v2988 = vld [vmem:[#allocation31 + $0x38] sm:$0xff]
    %v2989 = vld [vmem:[#allocation31 + $0x40] sm:$0xff]
    %v2990 = vld [vmem:[#allocation31 + $0x48] sm:$0xff]
    %v2991 = vld [vmem:[#allocation31 + $0x50] sm:$0xff]
    %v2992 = vld [vmem:[#allocation31 + $0x58] sm:$0xff]
    %v2993 = vld [vmem:[#allocation31 + $0x60] sm:$0xff]
    %v2994 = vld [vmem:[#allocation31 + $0x68] sm:$0xff]
    %v2995 = vld [vmem:[#allocation31 + $0x70] sm:$0xff]
    %v2996 = vld [vmem:[#allocation31 + $0x78] sm:$0xff]
    %v2997 = vld [vmem:[#allocation31 + $0x80] sm:$0xff]
    %v2998 = vld [vmem:[#allocation31 + $0x88] sm:$0xff]
    %v2999 = vld [vmem:[#allocation31 + $0x90] sm:$0xff]
    %v3000 = vld [vmem:[#allocation31 + $0x98] sm:$0xff]
    %v3001 = vld [vmem:[#allocation31 + $0xa0] sm:$0xff]
    %v3002 = vld [vmem:[#allocation31 + $0xa8] sm:$0xff]
    %v3003 = vld [vmem:[#allocation31 + $0xb0] sm:$0xff]
    %v3004 = vld [vmem:[#allocation31 + $0xb8] sm:$0xff]
    %v3005 = vld [vmem:[#allocation31 + $0xc0] sm:$0xff]
    %v3006 = vld [vmem:[#allocation31 + $0xc8] sm:$0xff]
    %v3007 = vld [vmem:[#allocation31 + $0xd0] sm:$0xff]
    %v3008 = vld [vmem:[#allocation31 + $0xd8] sm:$0xff]
    %v3009 = vld [vmem:[#allocation31 + $0xe0] sm:$0xff]
    %v3010 = vld [vmem:[#allocation31 + $0xe8] sm:$0xff]
    %v3011 = vld [vmem:[#allocation31 + $0xf0] sm:$0xff]
    %v3012 = vld [vmem:[#allocation31 + $0xf8] sm:$0xff]
    %v3045 = vunpack.c.l.b16 %v2981
    %v3046 = vunpack.c.h.b16 %v2981
    %v3047 = vunpack.c.l.b16 %v2982
    %v3048 = vunpack.c.h.b16 %v2982
    %v3049 = vunpack.c.l.b16 %v2983
    %v3050 = vunpack.c.h.b16 %v2983
    %v3051 = vunpack.c.l.b16 %v2984
    %v3052 = vunpack.c.h.b16 %v2984
    %v3053 = vunpack.c.l.b16 %v2985
    %v3054 = vunpack.c.h.b16 %v2985
    %v3055 = vunpack.c.l.b16 %v2986
    %v3056 = vunpack.c.h.b16 %v2986
    %v3057 = vunpack.c.l.b16 %v2987
    %v3058 = vunpack.c.h.b16 %v2987
    %v3059 = vunpack.c.l.b16 %v2988
    %v3060 = vunpack.c.h.b16 %v2988
    %v3061 = vunpack.c.l.b16 %v2989
    %v3062 = vunpack.c.h.b16 %v2989
    %v3063 = vunpack.c.l.b16 %v2990
    %v3064 = vunpack.c.h.b16 %v2990
    %v3065 = vunpack.c.l.b16 %v2991
    %v3066 = vunpack.c.h.b16 %v2991
    %v3067 = vunpack.c.l.b16 %v2992
    %v3068 = vunpack.c.h.b16 %v2992
    %v3069 = vunpack.c.l.b16 %v2993
    %v3070 = vunpack.c.h.b16 %v2993
    %v3071 = vunpack.c.l.b16 %v2994
    %v3072 = vunpack.c.h.b16 %v2994
    %v3073 = vunpack.c.l.b16 %v2995
    %v3074 = vunpack.c.h.b16 %v2995
    %v3075 = vunpack.c.l.b16 %v2996
    %v3076 = vunpack.c.h.b16 %v2996
    %v3077 = vunpack.c.l.b16 %v2997
    %v3078 = vunpack.c.h.b16 %v2997
    %v3079 = vunpack.c.l.b16 %v2998
    %v3080 = vunpack.c.h.b16 %v2998
    %v3081 = vunpack.c.l.b16 %v2999
    %v3082 = vunpack.c.h.b16 %v2999
    %v3083 = vunpack.c.l.b16 %v3000
    %v3084 = vunpack.c.h.b16 %v3000
    %v3085 = vunpack.c.l.b16 %v3001
    %v3086 = vunpack.c.h.b16 %v3001
    %v3087 = vunpack.c.l.b16 %v3002
    %v3088 = vunpack.c.h.b16 %v3002
    %v3089 = vunpack.c.l.b16 %v3003
    %v3090 = vunpack.c.h.b16 %v3003
    %v3091 = vunpack.c.l.b16 %v3004
    %v3092 = vunpack.c.h.b16 %v3004
    %v3093 = vunpack.c.l.b16 %v3005
    %v3094 = vunpack.c.h.b16 %v3005
    %v3095 = vunpack.c.l.b16 %v3006
    %v3096 = vunpack.c.h.b16 %v3006
    %v3097 = vunpack.c.l.b16 %v3007
    %v3098 = vunpack.c.h.b16 %v3007
    %v3099 = vunpack.c.l.b16 %v3008
    %v3100 = vunpack.c.h.b16 %v3008
    %v3101 = vunpack.c.l.b16 %v3009
    %v3102 = vunpack.c.h.b16 %v3009
    %v3103 = vunpack.c.l.b16 %v3010
    %v3104 = vunpack.c.h.b16 %v3010
    %v3105 = vunpack.c.l.b16 %v3011
    %v3106 = vunpack.c.h.b16 %v3011
    %v3107 = vunpack.c.l.b16 %v3012
    %v3108 = vunpack.c.h.b16 %v3012
    %v3109 = vpack.c.b16 %v3049, %v3045
    %v3110 = vpack.c.b16 %v3050, %v3046
    %v3111 = vpack.c.b16 %v3051, %v3047
    %v3112 = vpack.c.b16 %v3052, %v3048
    %v3113 = vpack.c.b16 %v3057, %v3053
    %v3114 = vpack.c.b16 %v3058, %v3054
    %v3115 = vpack.c.b16 %v3059, %v3055
    %v3116 = vpack.c.b16 %v3060, %v3056
    %v3117 = vpack.c.b16 %v3065, %v3061
    %v3118 = vpack.c.b16 %v3066, %v3062
    %v3119 = vpack.c.b16 %v3067, %v3063
    %v3120 = vpack.c.b16 %v3068, %v3064
    %v3121 = vpack.c.b16 %v3073, %v3069
    %v3122 = vpack.c.b16 %v3074, %v3070
    %v3123 = vpack.c.b16 %v3075, %v3071
    %v3124 = vpack.c.b16 %v3076, %v3072
    %v3125 = vpack.c.b16 %v3081, %v3077
    %v3126 = vpack.c.b16 %v3082, %v3078
    %v3127 = vpack.c.b16 %v3083, %v3079
    %v3128 = vpack.c.b16 %v3084, %v3080
    %v3129 = vpack.c.b16 %v3089, %v3085
    %v3130 = vpack.c.b16 %v3090, %v3086
    %v3131 = vpack.c.b16 %v3091, %v3087
    %v3132 = vpack.c.b16 %v3092, %v3088
    %v3133 = vpack.c.b16 %v3097, %v3093
    %v3134 = vpack.c.b16 %v3098, %v3094
    %v3135 = vpack.c.b16 %v3099, %v3095
    %v3136 = vpack.c.b16 %v3100, %v3096
    %v3137 = vpack.c.b16 %v3105, %v3101
    %v3138 = vpack.c.b16 %v3106, %v3102
    %v3139 = vpack.c.b16 %v3107, %v3103
    %v3140 = vpack.c.b16 %v3108, %v3104
    %3173 = vmatprep.subr.bf16.mxu0 %v3110
    %3174 = vmatpush1.bf16.msra.mxu0 %v3109
    %3175 = vmatprep.subr.bf16.mxu0 %v3114
    %3176 = vmatpush1.bf16.msra.mxu0 %v3113
    %3177 = vmatprep.subr.bf16.mxu0 %v3118
    %3178 = vmatpush1.bf16.msra.mxu0 %v3117
    %3179 = vmatprep.subr.bf16.mxu0 %v3122
    %3180 = vmatpush1.bf16.msra.mxu0 %v3121
    %3181 = vmatprep.subr.bf16.mxu0 %v3126
    %3182 = vmatpush1.bf16.msra.mxu0 %v3125
    %3183 = vmatprep.subr.bf16.mxu0 %v3130
    %3184 = vmatpush1.bf16.msra.mxu0 %v3129
    %3185 = vmatprep.subr.bf16.mxu0 %v3134
    %3186 = vmatpush1.bf16.msra.mxu0 %v3133
    %3187 = vmatprep.subr.bf16.mxu0 %v3138
    %3188 = vmatpush1.bf16.msra.mxu0 %v3137
    %3189 = vmatprep.subr.bf16.mxu0 0
    %3190 = vmatpush1.bf16.msra.mxu0 0
    %3191 = vmatprep.subr.bf16.mxu0 0
    %3192 = vmatpush1.bf16.msra.mxu0 0
    %3193 = vmatprep.subr.bf16.mxu0 0
    %3194 = vmatpush1.bf16.msra.mxu0 0
    %3195 = vmatprep.subr.bf16.mxu0 0
    %3196 = vmatpush1.bf16.msra.mxu0 0
    %3197 = vmatprep.subr.bf16.mxu0 0
    %3198 = vmatpush1.bf16.msra.mxu0 0
    %3199 = vmatprep.subr.bf16.mxu0 0
    %3200 = vmatpush1.bf16.msra.mxu0 0
    %3201 = vmatprep.subr.bf16.mxu0 0
    %3202 = vmatpush1.bf16.msra.mxu0 0
    %3203 = vmatprep.subr.bf16.mxu0 0
    %3204 = vmatpush1.bf16.msra.mxu0 0
    %3205 = vmatprep.mubr.bf16.mxu0 0
    %3206 = vmatmul.mubr.bf16.gmra.mrb[0].mxu0 0
    %v3207 = vpop.f32.mrb[0].mxu0
    %v3208 = vadd.f32 0.0, %v3207
    %v3209 = vpop.f32.mrb[0].mxu0
    %v3210 = vadd.f32 0.0, %v3209
    %v3211 = vpop.f32.mrb[0].mxu0
    %v3212 = vpop.f32.mrb[0].mxu0
    %3213 = vdwg.mxu0
    %3214 = vmatprep.subr.bf16.mxu0 %v3112
    %3215 = vmatpush1.bf16.msra.mxu0 %v3111
    %3216 = vmatprep.subr.bf16.mxu0 %v3116
    %3217 = vmatpush1.bf16.msra.mxu0 %v3115
    %3218 = vmatprep.subr.bf16.mxu0 %v3120
    %3219 = vmatpush1.bf16.msra.mxu0 %v3119
    %3220 = vmatprep.subr.bf16.mxu0 %v3124
    %3221 = vmatpush1.bf16.msra.mxu0 %v3123
    %3222 = vmatprep.subr.bf16.mxu0 %v3128
    %3223 = vmatpush1.bf16.msra.mxu0 %v3127
    %3224 = vmatprep.subr.bf16.mxu0 %v3132
    %3225 = vmatpush1.bf16.msra.mxu0 %v3131
    %3226 = vmatprep.subr.bf16.mxu0 %v3136
    %3227 = vmatpush1.bf16.msra.mxu0 %v3135
    %3228 = vmatprep.subr.bf16.mxu0 %v3140
    %3229 = vmatpush1.bf16.msra.mxu0 %v3139
    %3230 = vmatprep.subr.bf16.mxu0 0
    %3231 = vmatpush1.bf16.msra.mxu0 0
    %3232 = vmatprep.subr.bf16.mxu0 0
    %3233 = vmatpush1.bf16.msra.mxu0 0
    %3234 = vmatprep.subr.bf16.mxu0 0
    %3235 = vmatpush1.bf16.msra.mxu0 0
    %3236 = vmatprep.subr.bf16.mxu0 0
    %3237 = vmatpush1.bf16.msra.mxu0 0
    %3238 = vmatprep.subr.bf16.mxu0 0
    %3239 = vmatpush1.bf16.msra.mxu0 0
    %3240 = vmatprep.subr.bf16.mxu0 0
    %3241 = vmatpush1.bf16.msra.mxu0 0
    %3242 = vmatprep.subr.bf16.mxu0 0
    %3243 = vmatpush1.bf16.msra.mxu0 0
    %3244 = vmatprep.subr.bf16.mxu0 0
    %3245 = vmatpush1.bf16.msra.mxu0 0
    %3246 = vmatprep.mubr.bf16.mxu0 0
    %3247 = vmatmul.mubr.bf16.gmra.mrb[0].mxu0 0
    %v3248 = vpop.f32.mrb[0].mxu0
    %v3249 = vadd.f32 0.0, %v3248
    %v3250 = vpop.f32.mrb[0].mxu0
    %v3251 = vadd.f32 0.0, %v3250
    %v3252 = vpop.f32.mrb[0].mxu0
    %v3253 = vpop.f32.mrb[0].mxu0
    %3254 = vdwg.mxu0
    %v3255 = vadd.f32 %v2977, %v3208
    %v3256 = vadd.f32 %v2978, %v3210
    %v3257 = vadd.f32 %v2979, %v3249
    %v3258 = vadd.f32 %v2980, %v3251
    %v3259 = vxor.u32 %v3255, 2147483648
    %v3260 = vmul.f32 %v3259, 1.442695
    %v3261 = vpow.pop %v3260
    %v3262 = vadd.f32 %v3261, 1.0
    %v3263 = vrcp.pop %v3262
    %v3264 = vmul.f32 1.0, %v3263
    %v3265 = vxor.u32 %v3256, 2147483648
    %v3266 = vmul.f32 %v3265, 1.442695
    %v3267 = vpow.pop %v3266
    %v3268 = vadd.f32 %v3267, 1.0
    %v3269 = vrcp.pop %v3268
    %v3270 = vmul.f32 1.0, %v3269
    %v3271 = vtanh.pop %v3257
    %v3272 = vxor.u32 %v3258, 2147483648
    %v3273 = vmul.f32 %v3272, 1.442695
    %v3274 = vpow.pop %v3273
    %v3275 = vadd.f32 %v3274, 1.0
    %v3276 = vrcp.pop %v3275
    %v3277 = vmul.f32 1.0, %v3276
    %v3278 = vmul.f32 %v3270, 0.0
    %v3279 = vmul.f32 %v3264, %v3271
    %v3280 = vadd.f32 %v3278, %v3279
    %v3281 = vtanh.pop %v3280
    %v3282 = vmul.f32 %v3277, %v3281
    %v3283 = vld [vmem:[#allocation4] sm:$0x3]
    %v3284 = vld [vmem:[#allocation4 + $0x8] sm:$0x3]
    %v3285 = vld [vmem:[#allocation4 + $0x10] sm:$0x3]
    %v3286 = vld [vmem:[#allocation4 + $0x18] sm:$0x3]
    %v3287 = vld [vmem:[#allocation42] sm:$0xff]
    %v3288 = vld [vmem:[#allocation42 + $0x8] sm:$0xff]
    %v3289 = vld [vmem:[#allocation42 + $0x10] sm:$0xff]
    %v3290 = vld [vmem:[#allocation42 + $0x18] sm:$0xff]
    %v3291 = vld [vmem:[#allocation42 + $0x20] sm:$0xff]
    %v3292 = vld [vmem:[#allocation42 + $0x28] sm:$0xff]
    %v3293 = vld [vmem:[#allocation42 + $0x30] sm:$0xff]
    %v3294 = vld [vmem:[#allocation42 + $0x38] sm:$0xff]
    %v3295 = vld [vmem:[#allocation42 + $0x40] sm:$0xff]
    %v3296 = vld [vmem:[#allocation42 + $0x48] sm:$0xff]
    %v3297 = vld [vmem:[#allocation42 + $0x50] sm:$0xff]
    %v3298 = vld [vmem:[#allocation42 + $0x58] sm:$0xff]
    %v3299 = vld [vmem:[#allocation42 + $0x60] sm:$0xff]
    %v3300 = vld [vmem:[#allocation42 + $0x68] sm:$0xff]
    %v3301 = vld [vmem:[#allocation42 + $0x70] sm:$0xff]
    %v3302 = vld [vmem:[#allocation42 + $0x78] sm:$0xff]
    %v3303 = vld [vmem:[#allocation42 + $0x80] sm:$0xff]
    %v3304 = vld [vmem:[#allocation42 + $0x88] sm:$0xff]
    %v3305 = vld [vmem:[#allocation42 + $0x90] sm:$0xff]
    %v3306 = vld [vmem:[#allocation42 + $0x98] sm:$0xff]
    %v3307 = vld [vmem:[#allocation42 + $0xa0] sm:$0xff]
    %v3308 = vld [vmem:[#allocation42 + $0xa8] sm:$0xff]
    %v3309 = vld [vmem:[#allocation42 + $0xb0] sm:$0xff]
    %v3310 = vld [vmem:[#allocation42 + $0xb8] sm:$0xff]
    %v3311 = vld [vmem:[#allocation42 + $0xc0] sm:$0xff]
    %v3312 = vld [vmem:[#allocation42 + $0xc8] sm:$0xff]
    %v3313 = vld [vmem:[#allocation42 + $0xd0] sm:$0xff]
    %v3314 = vld [vmem:[#allocation42 + $0xd8] sm:$0xff]
    %v3315 = vld [vmem:[#allocation42 + $0xe0] sm:$0xff]
    %v3316 = vld [vmem:[#allocation42 + $0xe8] sm:$0xff]
    %v3317 = vld [vmem:[#allocation42 + $0xf0] sm:$0xff]
    %v3318 = vld [vmem:[#allocation42 + $0xf8] sm:$0xff]
    %v3351 = vunpack.c.l.b16 %v3287
    %v3352 = vunpack.c.h.b16 %v3287
    %v3353 = vunpack.c.l.b16 %v3288
    %v3354 = vunpack.c.h.b16 %v3288
    %v3355 = vunpack.c.l.b16 %v3289
    %v3356 = vunpack.c.h.b16 %v3289
    %v3357 = vunpack.c.l.b16 %v3290
    %v3358 = vunpack.c.h.b16 %v3290
    %v3359 = vunpack.c.l.b16 %v3291
    %v3360 = vunpack.c.h.b16 %v3291
    %v3361 = vunpack.c.l.b16 %v3292
    %v3362 = vunpack.c.h.b16 %v3292
    %v3363 = vunpack.c.l.b16 %v3293
    %v3364 = vunpack.c.h.b16 %v3293
    %v3365 = vunpack.c.l.b16 %v3294
    %v3366 = vunpack.c.h.b16 %v3294
    %v3367 = vunpack.c.l.b16 %v3295
    %v3368 = vunpack.c.h.b16 %v3295
    %v3369 = vunpack.c.l.b16 %v3296
    %v3370 = vunpack.c.h.b16 %v3296
    %v3371 = vunpack.c.l.b16 %v3297
    %v3372 = vunpack.c.h.b16 %v3297
    %v3373 = vunpack.c.l.b16 %v3298
    %v3374 = vunpack.c.h.b16 %v3298
    %v3375 = vunpack.c.l.b16 %v3299
    %v3376 = vunpack.c.h.b16 %v3299
    %v3377 = vunpack.c.l.b16 %v3300
    %v3378 = vunpack.c.h.b16 %v3300
    %v3379 = vunpack.c.l.b16 %v3301
    %v3380 = vunpack.c.h.b16 %v3301
    %v3381 = vunpack.c.l.b16 %v3302
    %v3382 = vunpack.c.h.b16 %v3302
    %v3383 = vunpack.c.l.b16 %v3303
    %v3384 = vunpack.c.h.b16 %v3303
    %v3385 = vunpack.c.l.b16 %v3304
    %v3386 = vunpack.c.h.b16 %v3304
    %v3387 = vunpack.c.l.b16 %v3305
    %v3388 = vunpack.c.h.b16 %v3305
    %v3389 = vunpack.c.l.b16 %v3306
    %v3390 = vunpack.c.h.b16 %v3306
    %v3391 = vunpack.c.l.b16 %v3307
    %v3392 = vunpack.c.h.b16 %v3307
    %v3393 = vunpack.c.l.b16 %v3308
    %v3394 = vunpack.c.h.b16 %v3308
    %v3395 = vunpack.c.l.b16 %v3309
    %v3396 = vunpack.c.h.b16 %v3309
    %v3397 = vunpack.c.l.b16 %v3310
    %v3398 = vunpack.c.h.b16 %v3310
    %v3399 = vunpack.c.l.b16 %v3311
    %v3400 = vunpack.c.h.b16 %v3311
    %v3401 = vunpack.c.l.b16 %v3312
    %v3402 = vunpack.c.h.b16 %v3312
    %v3403 = vunpack.c.l.b16 %v3313
    %v3404 = vunpack.c.h.b16 %v3313
    %v3405 = vunpack.c.l.b16 %v3314
    %v3406 = vunpack.c.h.b16 %v3314
    %v3407 = vunpack.c.l.b16 %v3315
    %v3408 = vunpack.c.h.b16 %v3315
    %v3409 = vunpack.c.l.b16 %v3316
    %v3410 = vunpack.c.h.b16 %v3316
    %v3411 = vunpack.c.l.b16 %v3317
    %v3412 = vunpack.c.h.b16 %v3317
    %v3413 = vunpack.c.l.b16 %v3318
    %v3414 = vunpack.c.h.b16 %v3318
    %v3415 = vpack.c.b16 %v3355, %v3351
    %v3416 = vpack.c.b16 %v3356, %v3352
    %v3417 = vpack.c.b16 %v3357, %v3353
    %v3418 = vpack.c.b16 %v3358, %v3354
    %v3419 = vpack.c.b16 %v3363, %v3359
    %v3420 = vpack.c.b16 %v3364, %v3360
    %v3421 = vpack.c.b16 %v3365, %v3361
    %v3422 = vpack.c.b16 %v3366, %v3362
    %v3423 = vpack.c.b16 %v3371, %v3367
    %v3424 = vpack.c.b16 %v3372, %v3368
    %v3425 = vpack.c.b16 %v3373, %v3369
    %v3426 = vpack.c.b16 %v3374, %v3370
    %v3427 = vpack.c.b16 %v3379, %v3375
    %v3428 = vpack.c.b16 %v3380, %v3376
    %v3429 = vpack.c.b16 %v3381, %v3377
    %v3430 = vpack.c.b16 %v3382, %v3378
    %v3431 = vpack.c.b16 %v3387, %v3383
    %v3432 = vpack.c.b16 %v3388, %v3384
    %v3433 = vpack.c.b16 %v3389, %v3385
    %v3434 = vpack.c.b16 %v3390, %v3386
    %v3435 = vpack.c.b16 %v3395, %v3391
    %v3436 = vpack.c.b16 %v3396, %v3392
    %v3437 = vpack.c.b16 %v3397, %v3393
    %v3438 = vpack.c.b16 %v3398, %v3394
    %v3439 = vpack.c.b16 %v3403, %v3399
    %v3440 = vpack.c.b16 %v3404, %v3400
    %v3441 = vpack.c.b16 %v3405, %v3401
    %v3442 = vpack.c.b16 %v3406, %v3402
    %v3443 = vpack.c.b16 %v3411, %v3407
    %v3444 = vpack.c.b16 %v3412, %v3408
    %v3445 = vpack.c.b16 %v3413, %v3409
    %v3446 = vpack.c.b16 %v3414, %v3410
    %3479 = vmatprep.subr.bf16.mxu0 %v3416
    %3480 = vmatpush1.bf16.msra.mxu0 %v3415
    %3481 = vmatprep.subr.bf16.mxu0 %v3420
    %3482 = vmatpush1.bf16.msra.mxu0 %v3419
    %3483 = vmatprep.subr.bf16.mxu0 %v3424
    %3484 = vmatpush1.bf16.msra.mxu0 %v3423
    %3485 = vmatprep.subr.bf16.mxu0 %v3428
    %3486 = vmatpush1.bf16.msra.mxu0 %v3427
    %3487 = vmatprep.subr.bf16.mxu0 %v3432
    %3488 = vmatpush1.bf16.msra.mxu0 %v3431
    %3489 = vmatprep.subr.bf16.mxu0 %v3436
    %3490 = vmatpush1.bf16.msra.mxu0 %v3435
    %3491 = vmatprep.subr.bf16.mxu0 %v3440
    %3492 = vmatpush1.bf16.msra.mxu0 %v3439
    %3493 = vmatprep.subr.bf16.mxu0 %v3444
    %3494 = vmatpush1.bf16.msra.mxu0 %v3443
    %3495 = vmatprep.subr.bf16.mxu0 0
    %3496 = vmatpush1.bf16.msra.mxu0 0
    %3497 = vmatprep.subr.bf16.mxu0 0
    %3498 = vmatpush1.bf16.msra.mxu0 0
    %3499 = vmatprep.subr.bf16.mxu0 0
    %3500 = vmatpush1.bf16.msra.mxu0 0
    %3501 = vmatprep.subr.bf16.mxu0 0
    %3502 = vmatpush1.bf16.msra.mxu0 0
    %3503 = vmatprep.subr.bf16.mxu0 0
    %3504 = vmatpush1.bf16.msra.mxu0 0
    %3505 = vmatprep.subr.bf16.mxu0 0
    %3506 = vmatpush1.bf16.msra.mxu0 0
    %3507 = vmatprep.subr.bf16.mxu0 0
    %3508 = vmatpush1.bf16.msra.mxu0 0
    %3509 = vmatprep.subr.bf16.mxu0 0
    %3510 = vmatpush1.bf16.msra.mxu0 0
    %3511 = vmatprep.mubr.bf16.mxu0 0
    %3512 = vmatmul.mubr.bf16.gmra.mrb[0].mxu0 0
    %v3513 = vpop.f32.mrb[0].mxu0
    %v3514 = vadd.f32 0.0, %v3513
    %v3515 = vpop.f32.mrb[0].mxu0
    %v3516 = vadd.f32 0.0, %v3515
    %v3517 = vpop.f32.mrb[0].mxu0
    %v3518 = vpop.f32.mrb[0].mxu0
    %3519 = vdwg.mxu0
    %3520 = vmatprep.subr.bf16.mxu0 %v3418
    %3521 = vmatpush1.bf16.msra.mxu0 %v3417
    %3522 = vmatprep.subr.bf16.mxu0 %v3422
    %3523 = vmatpush1.bf16.msra.mxu0 %v3421
    %3524 = vmatprep.subr.bf16.mxu0 %v3426
    %3525 = vmatpush1.bf16.msra.mxu0 %v3425
    %3526 = vmatprep.subr.bf16.mxu0 %v3430
    %3527 = vmatpush1.bf16.msra.mxu0 %v3429
    %3528 = vmatprep.subr.bf16.mxu0 %v3434
    %3529 = vmatpush1.bf16.msra.mxu0 %v3433
    %3530 = vmatprep.subr.bf16.mxu0 %v3438
    %3531 = vmatpush1.bf16.msra.mxu0 %v3437
    %3532 = vmatprep.subr.bf16.mxu0 %v3442
    %3533 = vmatpush1.bf16.msra.mxu0 %v3441
    %3534 = vmatprep.subr.bf16.mxu0 %v3446
    %3535 = vmatpush1.bf16.msra.mxu0 %v3445
    %3536 = vmatprep.subr.bf16.mxu0 0
    %3537 = vmatpush1.bf16.msra.mxu0 0
    %3538 = vmatprep.subr.bf16.mxu0 0
    %3539 = vmatpush1.bf16.msra.mxu0 0
    %3540 = vmatprep.subr.bf16.mxu0 0
    %3541 = vmatpush1.bf16.msra.mxu0 0
    %3542 = vmatprep.subr.bf16.mxu0 0
    %3543 = vmatpush1.bf16.msra.mxu0 0
    %3544 = vmatprep.subr.bf16.mxu0 0
    %3545 = vmatpush1.bf16.msra.mxu0 0
    %3546 = vmatprep.subr.bf16.mxu0 0
    %3547 = vmatpush1.bf16.msra.mxu0 0
    %3548 = vmatprep.subr.bf16.mxu0 0
    %3549 = vmatpush1.bf16.msra.mxu0 0
    %3550 = vmatprep.subr.bf16.mxu0 0
    %3551 = vmatpush1.bf16.msra.mxu0 0
    %3552 = vmatprep.mubr.bf16.mxu0 0
    %3553 = vmatmul.mubr.bf16.gmra.mrb[0].mxu0 0
    %v3554 = vpop.f32.mrb[0].mxu0
    %v3555 = vadd.f32 0.0, %v3554
    %v3556 = vpop.f32.mrb[0].mxu0
    %v3557 = vadd.f32 0.0, %v3556
    %v3558 = vpop.f32.mrb[0].mxu0
    %v3559 = vpop.f32.mrb[0].mxu0
    %3560 = vdwg.mxu0
    %v3561 = vadd.f32 %v3283, %v3514
    %v3562 = vadd.f32 %v3284, %v3516
    %v3563 = vadd.f32 %v3285, %v3555
    %v3564 = vadd.f32 %v3286, %v3557
    %v3565 = vxor.u32 %v3561, 2147483648
    %v3566 = vmul.f32 %v3565, 1.442695
    %v3567 = vpow.pop %v3566
    %v3568 = vadd.f32 %v3567, 1.0
    %v3569 = vrcp.pop %v3568
    %v3570 = vmul.f32 1.0, %v3569
    %v3571 = vxor.u32 %v3562, 2147483648
    %v3572 = vmul.f32 %v3571, 1.442695
    %v3573 = vpow.pop %v3572
    %v3574 = vadd.f32 %v3573, 1.0
    %v3575 = vrcp.pop %v3574
    %v3576 = vmul.f32 1.0, %v3575
    %v3577 = vtanh.pop %v3563
    %v3578 = vxor.u32 %v3564, 2147483648
    %v3579 = vmul.f32 %v3578, 1.442695
    %v3580 = vpow.pop %v3579
    %v3581 = vadd.f32 %v3580, 1.0
    %v3582 = vrcp.pop %v3581
    %v3583 = vmul.f32 1.0, %v3582
    %v3584 = vmul.f32 %v3576, 0.0
    %v3585 = vmul.f32 %v3570, %v3577
    %v3586 = vadd.f32 %v3584, %v3585
    %v3587 = vtanh.pop %v3586
    %v3588 = vmul.f32 %v3583, %v3587
    %3589 = vst [vmem:[#allocation6] sm:$0x3] %v2976
    %3590 = vst [vmem:[#allocation7] sm:$0x3] %v3282
    %3591 = vst [vmem:[#allocation8] sm:$0x3] %v3588
    %v3592 = vld [vmem:[#allocation2] sm:$0xc]
    %v3593 = vld [vmem:[#allocation2 + $0x8] sm:$0xc]
    %v3594 = vld [vmem:[#allocation2 + $0x10] sm:$0xc]
    %v3595 = vld [vmem:[#allocation2 + $0x18] sm:$0xc]
    %v3596 = vpack.c.bf16 %v2976, %v2976
    %v3597 = vld [vmem:[#allocation21] sm:$0xff]
    %v3598 = vld [vmem:[#allocation21 + $0x8] sm:$0xff]
    %v3599 = vld [vmem:[#allocation21 + $0x10] sm:$0xff]
    %v3600 = vld [vmem:[#allocation21 + $0x18] sm:$0xff]
    %v3601 = vld [vmem:[#allocation21 + $0x20] sm:$0xff]
    %v3602 = vld [vmem:[#allocation21 + $0x28] sm:$0xff]
    %v3603 = vld [vmem:[#allocation21 + $0x30] sm:$0xff]
    %v3604 = vld [vmem:[#allocation21 + $0x38] sm:$0xff]
    %v3605 = vld [vmem:[#allocation21 + $0x40] sm:$0xff]
    %v3606 = vld [vmem:[#allocation21 + $0x48] sm:$0xff]
    %v3607 = vld [vmem:[#allocation21 + $0x50] sm:$0xff]
    %v3608 = vld [vmem:[#allocation21 + $0x58] sm:$0xff]
    %v3609 = vld [vmem:[#allocation21 + $0x60] sm:$0xff]
    %v3610 = vld [vmem:[#allocation21 + $0x68] sm:$0xff]
    %v3611 = vld [vmem:[#allocation21 + $0x70] sm:$0xff]
    %v3612 = vld [vmem:[#allocation21 + $0x78] sm:$0xff]
    %v3613 = vld [vmem:[#allocation21 + $0x80] sm:$0xff]
    %v3614 = vld [vmem:[#allocation21 + $0x88] sm:$0xff]
    %v3615 = vld [vmem:[#allocation21 + $0x90] sm:$0xff]
    %v3616 = vld [vmem:[#allocation21 + $0x98] sm:$0xff]
    %v3617 = vld [vmem:[#allocation21 + $0xa0] sm:$0xff]
    %v3618 = vld [vmem:[#allocation21 + $0xa8] sm:$0xff]
    %v3619 = vld [vmem:[#allocation21 + $0xb0] sm:$0xff]
    %v3620 = vld [vmem:[#allocation21 + $0xb8] sm:$0xff]
    %v3621 = vld [vmem:[#allocation21 + $0xc0] sm:$0xff]
    %v3622 = vld [vmem:[#allocation21 + $0xc8] sm:$0xff]
    %v3623 = vld [vmem:[#allocation21 + $0xd0] sm:$0xff]
    %v3624 = vld [vmem:[#allocation21 + $0xd8] sm:$0xff]
    %v3625 = vld [vmem:[#allocation21 + $0xe0] sm:$0xff]
    %v3626 = vld [vmem:[#allocation21 + $0xe8] sm:$0xff]
    %v3627 = vld [vmem:[#allocation21 + $0xf0] sm:$0xff]
    %v3628 = vld [vmem:[#allocation21 + $0xf8] sm:$0xff]
    %v3661 = vunpack.c.l.b16 %v3597
    %v3662 = vunpack.c.h.b16 %v3597
    %v3663 = vunpack.c.l.b16 %v3598
    %v3664 = vunpack.c.h.b16 %v3598
    %v3665 = vunpack.c.l.b16 %v3599
    %v3666 = vunpack.c.h.b16 %v3599
    %v3667 = vunpack.c.l.b16 %v3600
    %v3668 = vunpack.c.h.b16 %v3600
    %v3669 = vunpack.c.l.b16 %v3601
    %v3670 = vunpack.c.h.b16 %v3601
    %v3671 = vunpack.c.l.b16 %v3602
    %v3672 = vunpack.c.h.b16 %v3602
    %v3673 = vunpack.c.l.b16 %v3603
    %v3674 = vunpack.c.h.b16 %v3603
    %v3675 = vunpack.c.l.b16 %v3604
    %v3676 = vunpack.c.h.b16 %v3604
    %v3677 = vunpack.c.l.b16 %v3605
    %v3678 = vunpack.c.h.b16 %v3605
    %v3679 = vunpack.c.l.b16 %v3606
    %v3680 = vunpack.c.h.b16 %v3606
    %v3681 = vunpack.c.l.b16 %v3607
    %v3682 = vunpack.c.h.b16 %v3607
    %v3683 = vunpack.c.l.b16 %v3608
    %v3684 = vunpack.c.h.b16 %v3608
    %v3685 = vunpack.c.l.b16 %v3609
    %v3686 = vunpack.c.h.b16 %v3609
    %v3687 = vunpack.c.l.b16 %v3610
    %v3688 = vunpack.c.h.b16 %v3610
    %v3689 = vunpack.c.l.b16 %v3611
    %v3690 = vunpack.c.h.b16 %v3611
    %v3691 = vunpack.c.l.b16 %v3612
    %v3692 = vunpack.c.h.b16 %v3612
    %v3693 = vunpack.c.l.b16 %v3613
    %v3694 = vunpack.c.h.b16 %v3613
    %v3695 = vunpack.c.l.b16 %v3614
    %v3696 = vunpack.c.h.b16 %v3614
    %v3697 = vunpack.c.l.b16 %v3615
    %v3698 = vunpack.c.h.b16 %v3615
    %v3699 = vunpack.c.l.b16 %v3616
    %v3700 = vunpack.c.h.b16 %v3616
    %v3701 = vunpack.c.l.b16 %v3617
    %v3702 = vunpack.c.h.b16 %v3617
    %v3703 = vunpack.c.l.b16 %v3618
    %v3704 = vunpack.c.h.b16 %v3618
    %v3705 = vunpack.c.l.b16 %v3619
    %v3706 = vunpack.c.h.b16 %v3619
    %v3707 = vunpack.c.l.b16 %v3620
    %v3708 = vunpack.c.h.b16 %v3620
    %v3709 = vunpack.c.l.b16 %v3621
    %v3710 = vunpack.c.h.b16 %v3621
    %v3711 = vunpack.c.l.b16 %v3622
    %v3712 = vunpack.c.h.b16 %v3622
    %v3713 = vunpack.c.l.b16 %v3623
    %v3714 = vunpack.c.h.b16 %v3623
    %v3715 = vunpack.c.l.b16 %v3624
    %v3716 = vunpack.c.h.b16 %v3624
    %v3717 = vunpack.c.l.b16 %v3625
    %v3718 = vunpack.c.h.b16 %v3625
    %v3719 = vunpack.c.l.b16 %v3626
    %v3720 = vunpack.c.h.b16 %v3626
    %v3721 = vunpack.c.l.b16 %v3627
    %v3722 = vunpack.c.h.b16 %v3627
    %v3723 = vunpack.c.l.b16 %v3628
    %v3724 = vunpack.c.h.b16 %v3628
    %v3725 = vpack.c.b16 %v3665, %v3661
    %v3726 = vpack.c.b16 %v3666, %v3662
    %v3727 = vpack.c.b16 %v3667, %v3663
    %v3728 = vpack.c.b16 %v3668, %v3664
    %v3729 = vpack.c.b16 %v3673, %v3669
    %v3730 = vpack.c.b16 %v3674, %v3670
    %v3731 = vpack.c.b16 %v3675, %v3671
    %v3732 = vpack.c.b16 %v3676, %v3672
    %v3733 = vpack.c.b16 %v3681, %v3677
    %v3734 = vpack.c.b16 %v3682, %v3678
    %v3735 = vpack.c.b16 %v3683, %v3679
    %v3736 = vpack.c.b16 %v3684, %v3680
    %v3737 = vpack.c.b16 %v3689, %v3685
    %v3738 = vpack.c.b16 %v3690, %v3686
    %v3739 = vpack.c.b16 %v3691, %v3687
    %v3740 = vpack.c.b16 %v3692, %v3688
    %v3741 = vpack.c.b16 %v3697, %v3693
    %v3742 = vpack.c.b16 %v3698, %v3694
    %v3743 = vpack.c.b16 %v3699, %v3695
    %v3744 = vpack.c.b16 %v3700, %v3696
    %v3745 = vpack.c.b16 %v3705, %v3701
    %v3746 = vpack.c.b16 %v3706, %v3702
    %v3747 = vpack.c.b16 %v3707, %v3703
    %v3748 = vpack.c.b16 %v3708, %v3704
    %v3749 = vpack.c.b16 %v3713, %v3709
    %v3750 = vpack.c.b16 %v3714, %v3710
    %v3751 = vpack.c.b16 %v3715, %v3711
    %v3752 = vpack.c.b16 %v3716, %v3712
    %v3753 = vpack.c.b16 %v3721, %v3717
    %v3754 = vpack.c.b16 %v3722, %v3718
    %v3755 = vpack.c.b16 %v3723, %v3719
    %v3756 = vpack.c.b16 %v3724, %v3720
    %3789 = vmatprep.subr.bf16.mxu0 %v3726
    %3790 = vmatpush1.bf16.msra.mxu0 %v3725
    %3791 = vmatprep.subr.bf16.mxu0 %v3730
    %3792 = vmatpush1.bf16.msra.mxu0 %v3729
    %3793 = vmatprep.subr.bf16.mxu0 %v3734
    %3794 = vmatpush1.bf16.msra.mxu0 %v3733
    %3795 = vmatprep.subr.bf16.mxu0 %v3738
    %3796 = vmatpush1.bf16.msra.mxu0 %v3737
    %3797 = vmatprep.subr.bf16.mxu0 %v3742
    %3798 = vmatpush1.bf16.msra.mxu0 %v3741
    %3799 = vmatprep.subr.bf16.mxu0 %v3746
    %3800 = vmatpush1.bf16.msra.mxu0 %v3745
    %3801 = vmatprep.subr.bf16.mxu0 %v3750
    %3802 = vmatpush1.bf16.msra.mxu0 %v3749
    %3803 = vmatprep.subr.bf16.mxu0 %v3754
    %3804 = vmatpush1.bf16.msra.mxu0 %v3753
    %3805 = vmatprep.subr.bf16.mxu0 0
    %3806 = vmatpush1.bf16.msra.mxu0 0
    %3807 = vmatprep.subr.bf16.mxu0 0
    %3808 = vmatpush1.bf16.msra.mxu0 0
    %3809 = vmatprep.subr.bf16.mxu0 0
    %3810 = vmatpush1.bf16.msra.mxu0 0
    %3811 = vmatprep.subr.bf16.mxu0 0
    %3812 = vmatpush1.bf16.msra.mxu0 0
    %3813 = vmatprep.subr.bf16.mxu0 0
    %3814 = vmatpush1.bf16.msra.mxu0 0
    %3815 = vmatprep.subr.bf16.mxu0 0
    %3816 = vmatpush1.bf16.msra.mxu0 0
    %3817 = vmatprep.subr.bf16.mxu0 0
    %3818 = vmatpush1.bf16.msra.mxu0 0
    %3819 = vmatprep.subr.bf16.mxu0 0
    %3820 = vmatpush1.bf16.msra.mxu0 0
    %3821 = vmatprep.mubr.bf16.mxu0 0
    %3822 = vmatmul.mubr.bf16.gmra.mrb[0].mxu0 %v3596
    %v3823 = vpop.f32.mrb[0].mxu0
    %v3824 = vadd.f32 0.0, %v3823
    %v3825 = vpop.f32.mrb[0].mxu0
    %v3826 = vadd.f32 0.0, %v3825
    %v3827 = vpop.f32.mrb[0].mxu0
    %v3828 = vpop.f32.mrb[0].mxu0
    %3829 = vdwg.mxu0
    %3830 = vmatprep.subr.bf16.mxu0 %v3728
    %3831 = vmatpush1.bf16.msra.mxu0 %v3727
    %3832 = vmatprep.subr.bf16.mxu0 %v3732
    %3833 = vmatpush1.bf16.msra.mxu0 %v3731
    %3834 = vmatprep.subr.bf16.mxu0 %v3736
    %3835 = vmatpush1.bf16.msra.mxu0 %v3735
    %3836 = vmatprep.subr.bf16.mxu0 %v3740
    %3837 = vmatpush1.bf16.msra.mxu0 %v3739
    %3838 = vmatprep.subr.bf16.mxu0 %v3744
    %3839 = vmatpush1.bf16.msra.mxu0 %v3743
    %3840 = vmatprep.subr.bf16.mxu0 %v3748
    %3841 = vmatpush1.bf16.msra.mxu0 %v3747
    %3842 = vmatprep.subr.bf16.mxu0 %v3752
    %3843 = vmatpush1.bf16.msra.mxu0 %v3751
    %3844 = vmatprep.subr.bf16.mxu0 %v3756
    %3845 = vmatpush1.bf16.msra.mxu0 %v3755
    %3846 = vmatprep.subr.bf16.mxu0 0
    %3847 = vmatpush1.bf16.msra.mxu0 0
    %3848 = vmatprep.subr.bf16.mxu0 0
    %3849 = vmatpush1.bf16.msra.mxu0 0
    %3850 = vmatprep.subr.bf16.mxu0 0
    %3851 = vmatpush1.bf16.msra.mxu0 0
    %3852 = vmatprep.subr.bf16.mxu0 0
    %3853 = vmatpush1.bf16.msra.mxu0 0
    %3854 = vmatprep.subr.bf16.mxu0 0
    %3855 = vmatpush1.bf16.msra.mxu0 0
    %3856 = vmatprep.subr.bf16.mxu0 0
    %3857 = vmatpush1.bf16.msra.mxu0 0
    %3858 = vmatprep.subr.bf16.mxu0 0
    %3859 = vmatpush1.bf16.msra.mxu0 0
    %3860 = vmatprep.subr.bf16.mxu0 0
    %3861 = vmatpush1.bf16.msra.mxu0 0
    %3862 = vmatprep.mubr.bf16.mxu0 0
    %3863 = vmatmul.mubr.bf16.gmra.mrb[0].mxu0 %v3596
    %v3864 = vpop.f32.mrb[0].mxu0
    %v3865 = vadd.f32 0.0, %v3864
    %v3866 = vpop.f32.mrb[0].mxu0
    %v3867 = vadd.f32 0.0, %v3866
    %v3868 = vpop.f32.mrb[0].mxu0
    %v3869 = vpop.f32.mrb[0].mxu0
    %3870 = vdwg.mxu0
    %v3875 = vrot.slane %v3824, 6
    %v3876 = vrot.slane %v3826, 6
    %v3877 = vrot.slane %v3865, 6
    %v3878 = vrot.slane %v3867, 6
    %v3883 = vadd.f32 %v3592, %v3875
    %v3884 = vadd.f32 %v3593, %v3876
    %v3885 = vadd.f32 %v3594, %v3877
    %v3886 = vadd.f32 %v3595, %v3878
    %v3887 = vxor.u32 %v3883, 2147483648
    %v3888 = vmul.f32 %v3887, 1.442695
    %v3889 = vpow.pop %v3888
    %v3890 = vadd.f32 %v3889, 1.0
    %v3891 = vrcp.pop %v3890
    %v3892 = vmul.f32 1.0, %v3891
    %v3893 = vxor.u32 %v3884, 2147483648
    %v3894 = vmul.f32 %v3893, 1.442695
    %v3895 = vpow.pop %v3894
    %v3896 = vadd.f32 %v3895, 1.0
    %v3897 = vrcp.pop %v3896
    %v3898 = vmul.f32 1.0, %v3897
    %v3899 = vtanh.pop %v3885
    %v3900 = vxor.u32 %v3886, 2147483648
    %v3901 = vmul.f32 %v3900, 1.442695
    %v3902 = vpow.pop %v3901
    %v3903 = vadd.f32 %v3902, 1.0
    %v3904 = vrcp.pop %v3903
    %v3905 = vmul.f32 1.0, %v3904
    %v3907 = vrot.slane %v2974, 6
    %v3909 = vmul.f32 %v3898, %v3907
    %v3910 = vmul.f32 %v3892, %v3899
    %v3911 = vadd.f32 %v3909, %v3910
    %v3912 = vtanh.pop %v3911
    %v3913 = vmul.f32 %v3905, %v3912
    %v3914 = vld [vmem:[#allocation3] sm:$0xc]
    %v3915 = vld [vmem:[#allocation3 + $0x8] sm:$0xc]
    %v3916 = vld [vmem:[#allocation3 + $0x10] sm:$0xc]
    %v3917 = vld [vmem:[#allocation3 + $0x18] sm:$0xc]
    %v3918 = vpack.c.bf16 %v3282, %v3282
    %v3919 = vld [vmem:[#allocation31] sm:$0xff]
    %v3920 = vld [vmem:[#allocation31 + $0x8] sm:$0xff]
    %v3921 = vld [vmem:[#allocation31 + $0x10] sm:$0xff]
    %v3922 = vld [vmem:[#allocation31 + $0x18] sm:$0xff]
    %v3923 = vld [vmem:[#allocation31 + $0x20] sm:$0xff]
    %v3924 = vld [vmem:[#allocation31 + $0x28] sm:$0xff]
    %v3925 = vld [vmem:[#allocation31 + $0x30] sm:$0xff]
    %v3926 = vld [vmem:[#allocation31 + $0x38] sm:$0xff]
    %v3927 = vld [vmem:[#allocation31 + $0x40] sm:$0xff]
    %v3928 = vld [vmem:[#allocation31 + $0x48] sm:$0xff]
    %v3929 = vld [vmem:[#allocation31 + $0x50] sm:$0xff]
    %v3930 = vld [vmem:[#allocation31 + $0x58] sm:$0xff]
    %v3931 = vld [vmem:[#allocation31 + $0x60] sm:$0xff]
    %v3932 = vld [vmem:[#allocation31 + $0x68] sm:$0xff]
    %v3933 = vld [vmem:[#allocation31 + $0x70] sm:$0xff]
    %v3934 = vld [vmem:[#allocation31 + $0x78] sm:$0xff]
    %v3935 = vld [vmem:[#allocation31 + $0x80] sm:$0xff]
    %v3936 = vld [vmem:[#allocation31 + $0x88] sm:$0xff]
    %v3937 = vld [vmem:[#allocation31 + $0x90] sm:$0xff]
    %v3938 = vld [vmem:[#allocation31 + $0x98] sm:$0xff]
    %v3939 = vld [vmem:[#allocation31 + $0xa0] sm:$0xff]
    %v3940 = vld [vmem:[#allocation31 + $0xa8] sm:$0xff]
    %v3941 = vld [vmem:[#allocation31 + $0xb0] sm:$0xff]
    %v3942 = vld [vmem:[#allocation31 + $0xb8] sm:$0xff]
    %v3943 = vld [vmem:[#allocation31 + $0xc0] sm:$0xff]
    %v3944 = vld [vmem:[#allocation31 + $0xc8] sm:$0xff]
    %v3945 = vld [vmem:[#allocation31 + $0xd0] sm:$0xff]
    %v3946 = vld [vmem:[#allocation31 + $0xd8] sm:$0xff]
    %v3947 = vld [vmem:[#allocation31 + $0xe0] sm:$0xff]
    %v3948 = vld [vmem:[#allocation31 + $0xe8] sm:$0xff]
    %v3949 = vld [vmem:[#allocation31 + $0xf0] sm:$0xff]
    %v3950 = vld [vmem:[#allocation31 + $0xf8] sm:$0xff]
    %v3983 = vunpack.c.l.b16 %v3919
    %v3984 = vunpack.c.h.b16 %v3919
    %v3985 = vunpack.c.l.b16 %v3920
    %v3986 = vunpack.c.h.b16 %v3920
    %v3987 = vunpack.c.l.b16 %v3921
    %v3988 = vunpack.c.h.b16 %v3921
    %v3989 = vunpack.c.l.b16 %v3922
    %v3990 = vunpack.c.h.b16 %v3922
    %v3991 = vunpack.c.l.b16 %v3923
    %v3992 = vunpack.c.h.b16 %v3923
    %v3993 = vunpack.c.l.b16 %v3924
    %v3994 = vunpack.c.h.b16 %v3924
    %v3995 = vunpack.c.l.b16 %v3925
    %v3996 = vunpack.c.h.b16 %v3925
    %v3997 = vunpack.c.l.b16 %v3926
    %v3998 = vunpack.c.h.b16 %v3926
    %v3999 = vunpack.c.l.b16 %v3927
    %v4000 = vunpack.c.h.b16 %v3927
    %v4001 = vunpack.c.l.b16 %v3928
    %v4002 = vunpack.c.h.b16 %v3928
    %v4003 = vunpack.c.l.b16 %v3929
    %v4004 = vunpack.c.h.b16 %v3929
    %v4005 = vunpack.c.l.b16 %v3930
    %v4006 = vunpack.c.h.b16 %v3930
    %v4007 = vunpack.c.l.b16 %v3931
    %v4008 = vunpack.c.h.b16 %v3931
    %v4009 = vunpack.c.l.b16 %v3932
    %v4010 = vunpack.c.h.b16 %v3932
    %v4011 = vunpack.c.l.b16 %v3933
    %v4012 = vunpack.c.h.b16 %v3933
    %v4013 = vunpack.c.l.b16 %v3934
    %v4014 = vunpack.c.h.b16 %v3934
    %v4015 = vunpack.c.l.b16 %v3935
    %v4016 = vunpack.c.h.b16 %v3935
    %v4017 = vunpack.c.l.b16 %v3936
    %v4018 = vunpack.c.h.b16 %v3936
    %v4019 = vunpack.c.l.b16 %v3937
    %v4020 = vunpack.c.h.b16 %v3937
    %v4021 = vunpack.c.l.b16 %v3938
    %v4022 = vunpack.c.h.b16 %v3938
    %v4023 = vunpack.c.l.b16 %v3939
    %v4024 = vunpack.c.h.b16 %v3939
    %v4025 = vunpack.c.l.b16 %v3940
    %v4026 = vunpack.c.h.b16 %v3940
    %v4027 = vunpack.c.l.b16 %v3941
    %v4028 = vunpack.c.h.b16 %v3941
    %v4029 = vunpack.c.l.b16 %v3942
    %v4030 = vunpack.c.h.b16 %v3942
    %v4031 = vunpack.c.l.b16 %v3943
    %v4032 = vunpack.c.h.b16 %v3943
    %v4033 = vunpack.c.l.b16 %v3944
    %v4034 = vunpack.c.h.b16 %v3944
    %v4035 = vunpack.c.l.b16 %v3945
    %v4036 = vunpack.c.h.b16 %v3945
    %v4037 = vunpack.c.l.b16 %v3946
    %v4038 = vunpack.c.h.b16 %v3946
    %v4039 = vunpack.c.l.b16 %v3947
    %v4040 = vunpack.c.h.b16 %v3947
    %v4041 = vunpack.c.l.b16 %v3948
    %v4042 = vunpack.c.h.b16 %v3948
    %v4043 = vunpack.c.l.b16 %v3949
    %v4044 = vunpack.c.h.b16 %v3949
    %v4045 = vunpack.c.l.b16 %v3950
    %v4046 = vunpack.c.h.b16 %v3950
    %v4047 = vpack.c.b16 %v3987, %v3983
    %v4048 = vpack.c.b16 %v3988, %v3984
    %v4049 = vpack.c.b16 %v3989, %v3985
    %v4050 = vpack.c.b16 %v3990, %v3986
    %v4051 = vpack.c.b16 %v3995, %v3991
    %v4052 = vpack.c.b16 %v3996, %v3992
    %v4053 = vpack.c.b16 %v3997, %v3993
    %v4054 = vpack.c.b16 %v3998, %v3994
    %v4055 = vpack.c.b16 %v4003, %v3999
    %v4056 = vpack.c.b16 %v4004, %v4000
    %v4057 = vpack.c.b16 %v4005, %v4001
    %v4058 = vpack.c.b16 %v4006, %v4002
    %v4059 = vpack.c.b16 %v4011, %v4007
    %v4060 = vpack.c.b16 %v4012, %v4008
    %v4061 = vpack.c.b16 %v4013, %v4009
    %v4062 = vpack.c.b16 %v4014, %v4010
    %v4063 = vpack.c.b16 %v4019, %v4015
    %v4064 = vpack.c.b16 %v4020, %v4016
    %v4065 = vpack.c.b16 %v4021, %v4017
    %v4066 = vpack.c.b16 %v4022, %v4018
    %v4067 = vpack.c.b16 %v4027, %v4023
    %v4068 = vpack.c.b16 %v4028, %v4024
    %v4069 = vpack.c.b16 %v4029, %v4025
    %v4070 = vpack.c.b16 %v4030, %v4026
    %v4071 = vpack.c.b16 %v4035, %v4031
    %v4072 = vpack.c.b16 %v4036, %v4032
    %v4073 = vpack.c.b16 %v4037, %v4033
    %v4074 = vpack.c.b16 %v4038, %v4034
    %v4075 = vpack.c.b16 %v4043, %v4039
    %v4076 = vpack.c.b16 %v4044, %v4040
    %v4077 = vpack.c.b16 %v4045, %v4041
    %v4078 = vpack.c.b16 %v4046, %v4042
    %4111 = vmatprep.subr.bf16.mxu0 %v4048
    %4112 = vmatpush1.bf16.msra.mxu0 %v4047
    %4113 = vmatprep.subr.bf16.mxu0 %v4052
    %4114 = vmatpush1.bf16.msra.mxu0 %v4051
    %4115 = vmatprep.subr.bf16.mxu0 %v4056
    %4116 = vmatpush1.bf16.msra.mxu0 %v4055
    %4117 = vmatprep.subr.bf16.mxu0 %v4060
    %4118 = vmatpush1.bf16.msra.mxu0 %v4059
    %4119 = vmatprep.subr.bf16.mxu0 %v4064
    %4120 = vmatpush1.bf16.msra.mxu0 %v4063
    %4121 = vmatprep.subr.bf16.mxu0 %v4068
    %4122 = vmatpush1.bf16.msra.mxu0 %v4067
    %4123 = vmatprep.subr.bf16.mxu0 %v4072
    %4124 = vmatpush1.bf16.msra.mxu0 %v4071
    %4125 = vmatprep.subr.bf16.mxu0 %v4076
    %4126 = vmatpush1.bf16.msra.mxu0 %v4075
    %4127 = vmatprep.subr.bf16.mxu0 0
    %4128 = vmatpush1.bf16.msra.mxu0 0
    %4129 = vmatprep.subr.bf16.mxu0 0
    %4130 = vmatpush1.bf16.msra.mxu0 0
    %4131 = vmatprep.subr.bf16.mxu0 0
    %4132 = vmatpush1.bf16.msra.mxu0 0
    %4133 = vmatprep.subr.bf16.mxu0 0
    %4134 = vmatpush1.bf16.msra.mxu0 0
    %4135 = vmatprep.subr.bf16.mxu0 0
    %4136 = vmatpush1.bf16.msra.mxu0 0
    %4137 = vmatprep.subr.bf16.mxu0 0
    %4138 = vmatpush1.bf16.msra.mxu0 0
    %4139 = vmatprep.subr.bf16.mxu0 0
    %4140 = vmatpush1.bf16.msra.mxu0 0
    %4141 = vmatprep.subr.bf16.mxu0 0
    %4142 = vmatpush1.bf16.msra.mxu0 0
    %4143 = vmatprep.mubr.bf16.mxu0 0
    %4144 = vmatmul.mubr.bf16.gmra.mrb[0].mxu0 %v3918
    %v4145 = vpop.f32.mrb[0].mxu0
    %v4146 = vadd.f32 0.0, %v4145
    %v4147 = vpop.f32.mrb[0].mxu0
    %v4148 = vadd.f32 0.0, %v4147
    %v4149 = vpop.f32.mrb[0].mxu0
    %v4150 = vpop.f32.mrb[0].mxu0
    %4151 = vdwg.mxu0
    %4152 = vmatprep.subr.bf16.mxu0 %v4050
    %4153 = vmatpush1.bf16.msra.mxu0 %v4049
    %4154 = vmatprep.subr.bf16.mxu0 %v4054
    %4155 = vmatpush1.bf16.msra.mxu0 %v4053
    %4156 = vmatprep.subr.bf16.mxu0 %v4058
    %4157 = vmatpush1.bf16.msra.mxu0 %v4057
    %4158 = vmatprep.subr.bf16.mxu0 %v4062
    %4159 = vmatpush1.bf16.msra.mxu0 %v4061
    %4160 = vmatprep.subr.bf16.mxu0 %v4066
    %4161 = vmatpush1.bf16.msra.mxu0 %v4065
    %4162 = vmatprep.subr.bf16.mxu0 %v4070
    %4163 = vmatpush1.bf16.msra.mxu0 %v4069
    %4164 = vmatprep.subr.bf16.mxu0 %v4074
    %4165 = vmatpush1.bf16.msra.mxu0 %v4073
    %4166 = vmatprep.subr.bf16.mxu0 %v4078
    %4167 = vmatpush1.bf16.msra.mxu0 %v4077
    %4168 = vmatprep.subr.bf16.mxu0 0
    %4169 = vmatpush1.bf16.msra.mxu0 0
    %4170 = vmatprep.subr.bf16.mxu0 0
    %4171 = vmatpush1.bf16.msra.mxu0 0
    %4172 = vmatprep.subr.bf16.mxu0 0
    %4173 = vmatpush1.bf16.msra.mxu0 0
    %4174 = vmatprep.subr.bf16.mxu0 0
    %4175 = vmatpush1.bf16.msra.mxu0 0
    %4176 = vmatprep.subr.bf16.mxu0 0
    %4177 = vmatpush1.bf16.msra.mxu0 0
    %4178 = vmatprep.subr.bf16.mxu0 0
    %4179 = vmatpush1.bf16.msra.mxu0 0
    %4180 = vmatprep.subr.bf16.mxu0 0
    %4181 = vmatpush1.bf16.msra.mxu0 0
    %4182 = vmatprep.subr.bf16.mxu0 0
    %4183 = vmatpush1.bf16.msra.mxu0 0
    %4184 = vmatprep.mubr.bf16.mxu0 0
    %4185 = vmatmul.mubr.bf16.gmra.mrb[0].mxu0 %v3918
    %v4186 = vpop.f32.mrb[0].mxu0
    %v4187 = vadd.f32 0.0, %v4186
    %v4188 = vpop.f32.mrb[0].mxu0
    %v4189 = vadd.f32 0.0, %v4188
    %v4190 = vpop.f32.mrb[0].mxu0
    %v4191 = vpop.f32.mrb[0].mxu0
    %4192 = vdwg.mxu0
    %v4197 = vrot.slane %v4146, 6
    %v4198 = vrot.slane %v4148, 6
    %v4199 = vrot.slane %v4187, 6
    %v4200 = vrot.slane %v4189, 6
    %v4205 = vadd.f32 %v3914, %v4197
    %v4206 = vadd.f32 %v3915, %v4198
    %v4207 = vadd.f32 %v3916, %v4199
    %v4208 = vadd.f32 %v3917, %v4200
    %v4209 = vxor.u32 %v4205, 2147483648
    %v4210 = vmul.f32 %v4209, 1.442695
    %v4211 = vpow.pop %v4210
    %v4212 = vadd.f32 %v4211, 1.0
    %v4213 = vrcp.pop %v4212
    %v4214 = vmul.f32 1.0, %v4213
    %v4215 = vxor.u32 %v4206, 2147483648
    %v4216 = vmul.f32 %v4215, 1.442695
    %v4217 = vpow.pop %v4216
    %v4218 = vadd.f32 %v4217, 1.0
    %v4219 = vrcp.pop %v4218
    %v4220 = vmul.f32 1.0, %v4219
    %v4221 = vtanh.pop %v4207
    %v4222 = vxor.u32 %v4208, 2147483648
    %v4223 = vmul.f32 %v4222, 1.442695
    %v4224 = vpow.pop %v4223
    %v4225 = vadd.f32 %v4224, 1.0
    %v4226 = vrcp.pop %v4225
    %v4227 = vmul.f32 1.0, %v4226
    %v4229 = vrot.slane %v3280, 6
    %v4231 = vmul.f32 %v4220, %v4229
    %v4232 = vmul.f32 %v4214, %v4221
    %v4233 = vadd.f32 %v4231, %v4232
    %v4234 = vtanh.pop %v4233
    %v4235 = vmul.f32 %v4227, %v4234
    %v4236 = vld [vmem:[#allocation4] sm:$0xc]
    %v4237 = vld [vmem:[#allocation4 + $0x8] sm:$0xc]
    %v4238 = vld [vmem:[#allocation4 + $0x10] sm:$0xc]
    %v4239 = vld [vmem:[#allocation4 + $0x18] sm:$0xc]
    %v4240 = vpack.c.bf16 %v3588, %v3588
    %v4241 = vld [vmem:[#allocation42] sm:$0xff]
    %v4242 = vld [vmem:[#allocation42 + $0x8] sm:$0xff]
    %v4243 = vld [vmem:[#allocation42 + $0x10] sm:$0xff]
    %v4244 = vld [vmem:[#allocation42 + $0x18] sm:$0xff]
    %v4245 = vld [vmem:[#allocation42 + $0x20] sm:$0xff]
    %v4246 = vld [vmem:[#allocation42 + $0x28] sm:$0xff]
    %v4247 = vld [vmem:[#allocation42 + $0x30] sm:$0xff]
    %v4248 = vld [vmem:[#allocation42 + $0x38] sm:$0xff]
    %v4249 = vld [vmem:[#allocation42 + $0x40] sm:$0xff]
    %v4250 = vld [vmem:[#allocation42 + $0x48] sm:$0xff]
    %v4251 = vld [vmem:[#allocation42 + $0x50] sm:$0xff]
    %v4252 = vld [vmem:[#allocation42 + $0x58] sm:$0xff]
    %v4253 = vld [vmem:[#allocation42 + $0x60] sm:$0xff]
    %v4254 = vld [vmem:[#allocation42 + $0x68] sm:$0xff]
    %v4255 = vld [vmem:[#allocation42 + $0x70] sm:$0xff]
    %v4256 = vld [vmem:[#allocation42 + $0x78] sm:$0xff]
    %v4257 = vld [vmem:[#allocation42 + $0x80] sm:$0xff]
    %v4258 = vld [vmem:[#allocation42 + $0x88] sm:$0xff]
    %v4259 = vld [vmem:[#allocation42 + $0x90] sm:$0xff]
    %v4260 = vld [vmem:[#allocation42 + $0x98] sm:$0xff]
    %v4261 = vld [vmem:[#allocation42 + $0xa0] sm:$0xff]
    %v4262 = vld [vmem:[#allocation42 + $0xa8] sm:$0xff]
    %v4263 = vld [vmem:[#allocation42 + $0xb0] sm:$0xff]
    %v4264 = vld [vmem:[#allocation42 + $0xb8] sm:$0xff]
    %v4265 = vld [vmem:[#allocation42 + $0xc0] sm:$0xff]
    %v4266 = vld [vmem:[#allocation42 + $0xc8] sm:$0xff]
    %v4267 = vld [vmem:[#allocation42 + $0xd0] sm:$0xff]
    %v4268 = vld [vmem:[#allocation42 + $0xd8] sm:$0xff]
    %v4269 = vld [vmem:[#allocation42 + $0xe0] sm:$0xff]
    %v4270 = vld [vmem:[#allocation42 + $0xe8] sm:$0xff]
    %v4271 = vld [vmem:[#allocation42 + $0xf0] sm:$0xff]
    %v4272 = vld [vmem:[#allocation42 + $0xf8] sm:$0xff]
    %v4305 = vunpack.c.l.b16 %v4241
    %v4306 = vunpack.c.h.b16 %v4241
    %v4307 = vunpack.c.l.b16 %v4242
    %v4308 = vunpack.c.h.b16 %v4242
    %v4309 = vunpack.c.l.b16 %v4243
    %v4310 = vunpack.c.h.b16 %v4243
    %v4311 = vunpack.c.l.b16 %v4244
    %v4312 = vunpack.c.h.b16 %v4244
    %v4313 = vunpack.c.l.b16 %v4245
    %v4314 = vunpack.c.h.b16 %v4245
    %v4315 = vunpack.c.l.b16 %v4246
    %v4316 = vunpack.c.h.b16 %v4246
    %v4317 = vunpack.c.l.b16 %v4247
    %v4318 = vunpack.c.h.b16 %v4247
    %v4319 = vunpack.c.l.b16 %v4248
    %v4320 = vunpack.c.h.b16 %v4248
    %v4321 = vunpack.c.l.b16 %v4249
    %v4322 = vunpack.c.h.b16 %v4249
    %v4323 = vunpack.c.l.b16 %v4250
    %v4324 = vunpack.c.h.b16 %v4250
    %v4325 = vunpack.c.l.b16 %v4251
    %v4326 = vunpack.c.h.b16 %v4251
    %v4327 = vunpack.c.l.b16 %v4252
    %v4328 = vunpack.c.h.b16 %v4252
    %v4329 = vunpack.c.l.b16 %v4253
    %v4330 = vunpack.c.h.b16 %v4253
    %v4331 = vunpack.c.l.b16 %v4254
    %v4332 = vunpack.c.h.b16 %v4254
    %v4333 = vunpack.c.l.b16 %v4255
    %v4334 = vunpack.c.h.b16 %v4255
    %v4335 = vunpack.c.l.b16 %v4256
    %v4336 = vunpack.c.h.b16 %v4256
    %v4337 = vunpack.c.l.b16 %v4257
    %v4338 = vunpack.c.h.b16 %v4257
    %v4339 = vunpack.c.l.b16 %v4258
    %v4340 = vunpack.c.h.b16 %v4258
    %v4341 = vunpack.c.l.b16 %v4259
    %v4342 = vunpack.c.h.b16 %v4259
    %v4343 = vunpack.c.l.b16 %v4260
    %v4344 = vunpack.c.h.b16 %v4260
    %v4345 = vunpack.c.l.b16 %v4261
    %v4346 = vunpack.c.h.b16 %v4261
    %v4347 = vunpack.c.l.b16 %v4262
    %v4348 = vunpack.c.h.b16 %v4262
    %v4349 = vunpack.c.l.b16 %v4263
    %v4350 = vunpack.c.h.b16 %v4263
    %v4351 = vunpack.c.l.b16 %v4264
    %v4352 = vunpack.c.h.b16 %v4264
    %v4353 = vunpack.c.l.b16 %v4265
    %v4354 = vunpack.c.h.b16 %v4265
    %v4355 = vunpack.c.l.b16 %v4266
    %v4356 = vunpack.c.h.b16 %v4266
    %v4357 = vunpack.c.l.b16 %v4267
    %v4358 = vunpack.c.h.b16 %v4267
    %v4359 = vunpack.c.l.b16 %v4268
    %v4360 = vunpack.c.h.b16 %v4268
    %v4361 = vunpack.c.l.b16 %v4269
    %v4362 = vunpack.c.h.b16 %v4269
    %v4363 = vunpack.c.l.b16 %v4270
    %v4364 = vunpack.c.h.b16 %v4270
    %v4365 = vunpack.c.l.b16 %v4271
    %v4366 = vunpack.c.h.b16 %v4271
    %v4367 = vunpack.c.l.b16 %v4272
    %v4368 = vunpack.c.h.b16 %v4272
    %v4369 = vpack.c.b16 %v4309, %v4305
    %v4370 = vpack.c.b16 %v4310, %v4306
    %v4371 = vpack.c.b16 %v4311, %v4307
    %v4372 = vpack.c.b16 %v4312, %v4308
    %v4373 = vpack.c.b16 %v4317, %v4313
    %v4374 = vpack.c.b16 %v4318, %v4314
    %v4375 = vpack.c.b16 %v4319, %v4315
    %v4376 = vpack.c.b16 %v4320, %v4316
    %v4377 = vpack.c.b16 %v4325, %v4321
    %v4378 = vpack.c.b16 %v4326, %v4322
    %v4379 = vpack.c.b16 %v4327, %v4323
    %v4380 = vpack.c.b16 %v4328, %v4324
    %v4381 = vpack.c.b16 %v4333, %v4329
    %v4382 = vpack.c.b16 %v4334, %v4330
    %v4383 = vpack.c.b16 %v4335, %v4331
    %v4384 = vpack.c.b16 %v4336, %v4332
    %v4385 = vpack.c.b16 %v4341, %v4337
    %v4386 = vpack.c.b16 %v4342, %v4338
    %v4387 = vpack.c.b16 %v4343, %v4339
    %v4388 = vpack.c.b16 %v4344, %v4340
    %v4389 = vpack.c.b16 %v4349, %v4345
    %v4390 = vpack.c.b16 %v4350, %v4346
    %v4391 = vpack.c.b16 %v4351, %v4347
    %v4392 = vpack.c.b16 %v4352, %v4348
    %v4393 = vpack.c.b16 %v4357, %v4353
    %v4394 = vpack.c.b16 %v4358, %v4354
    %v4395 = vpack.c.b16 %v4359, %v4355
    %v4396 = vpack.c.b16 %v4360, %v4356
    %v4397 = vpack.c.b16 %v4365, %v4361
    %v4398 = vpack.c.b16 %v4366, %v4362
    %v4399 = vpack.c.b16 %v4367, %v4363
    %v4400 = vpack.c.b16 %v4368, %v4364
    %4433 = vmatprep.subr.bf16.mxu0 %v4370
    %4434 = vmatpush1.bf16.msra.mxu0 %v4369
    %4435 = vmatprep.subr.bf16.mxu0 %v4374
    %4436 = vmatpush1.bf16.msra.mxu0 %v4373
    %4437 = vmatprep.subr.bf16.mxu0 %v4378
    %4438 = vmatpush1.bf16.msra.mxu0 %v4377
    %4439 = vmatprep.subr.bf16.mxu0 %v4382
    %4440 = vmatpush1.bf16.msra.mxu0 %v4381
    %4441 = vmatprep.subr.bf16.mxu0 %v4386
    %4442 = vmatpush1.bf16.msra.mxu0 %v4385
    %4443 = vmatprep.subr.bf16.mxu0 %v4390
    %4444 = vmatpush1.bf16.msra.mxu0 %v4389
    %4445 = vmatprep.subr.bf16.mxu0 %v4394
    %4446 = vmatpush1.bf16.msra.mxu0 %v4393
    %4447 = vmatprep.subr.bf16.mxu0 %v4398
    %4448 = vmatpush1.bf16.msra.mxu0 %v4397
    %4449 = vmatprep.subr.bf16.mxu0 0
    %4450 = vmatpush1.bf16.msra.mxu0 0
    %4451 = vmatprep.subr.bf16.mxu0 0
    %4452 = vmatpush1.bf16.msra.mxu0 0
    %4453 = vmatprep.subr.bf16.mxu0 0
    %4454 = vmatpush1.bf16.msra.mxu0 0
    %4455 = vmatprep.subr.bf16.mxu0 0
    %4456 = vmatpush1.bf16.msra.mxu0 0
    %4457 = vmatprep.subr.bf16.mxu0 0
    %4458 = vmatpush1.bf16.msra.mxu0 0
    %4459 = vmatprep.subr.bf16.mxu0 0
    %4460 = vmatpush1.bf16.msra.mxu0 0
    %4461 = vmatprep.subr.bf16.mxu0 0
    %4462 = vmatpush1.bf16.msra.mxu0 0
    %4463 = vmatprep.subr.bf16.mxu0 0
    %4464 = vmatpush1.bf16.msra.mxu0 0
    %4465 = vmatprep.mubr.bf16.mxu0 0
    %4466 = vmatmul.mubr.bf16.gmra.mrb[0].mxu0 %v4240
    %v4467 = vpop.f32.mrb[0].mxu0
    %v4468 = vadd.f32 0.0, %v4467
    %v4469 = vpop.f32.mrb[0].mxu0
    %v4470 = vadd.f32 0.0, %v4469
    %v4471 = vpop.f32.mrb[0].mxu0
    %v4472 = vpop.f32.mrb[0].mxu0
    %4473 = vdwg.mxu0
    %4474 = vmatprep.subr.bf16.mxu0 %v4372
    %4475 = vmatpush1.bf16.msra.mxu0 %v4371
    %4476 = vmatprep.subr.bf16.mxu0 %v4376
    %4477 = vmatpush1.bf16.msra.mxu0 %v4375
    %4478 = vmatprep.subr.bf16.mxu0 %v4380
    %4479 = vmatpush1.bf16.msra.mxu0 %v4379
    %4480 = vmatprep.subr.bf16.mxu0 %v4384
    %4481 = vmatpush1.bf16.msra.mxu0 %v4383
    %4482 = vmatprep.subr.bf16.mxu0 %v4388
    %4483 = vmatpush1.bf16.msra.mxu0 %v4387
    %4484 = vmatprep.subr.bf16.mxu0 %v4392
    %4485 = vmatpush1.bf16.msra.mxu0 %v4391
    %4486 = vmatprep.subr.bf16.mxu0 %v4396
    %4487 = vmatpush1.bf16.msra.mxu0 %v4395
    %4488 = vmatprep.subr.bf16.mxu0 %v4400
    %4489 = vmatpush1.bf16.msra.mxu0 %v4399
    %4490 = vmatprep.subr.bf16.mxu0 0
    %4491 = vmatpush1.bf16.msra.mxu0 0
    %4492 = vmatprep.subr.bf16.mxu0 0
    %4493 = vmatpush1.bf16.msra.mxu0 0
    %4494 = vmatprep.subr.bf16.mxu0 0
    %4495 = vmatpush1.bf16.msra.mxu0 0
    %4496 = vmatprep.subr.bf16.mxu0 0
    %4497 = vmatpush1.bf16.msra.mxu0 0
    %4498 = vmatprep.subr.bf16.mxu0 0
    %4499 = vmatpush1.bf16.msra.mxu0 0
    %4500 = vmatprep.subr.bf16.mxu0 0
    %4501 = vmatpush1.bf16.msra.mxu0 0
    %4502 = vmatprep.subr.bf16.mxu0 0
    %4503 = vmatpush1.bf16.msra.mxu0 0
    %4504 = vmatprep.subr.bf16.mxu0 0
    %4505 = vmatpush1.bf16.msra.mxu0 0
    %4506 = vmatprep.mubr.bf16.mxu0 0
    %4507 = vmatmul.mubr.bf16.gmra.mrb[0].mxu0 %v4240
    %v4508 = vpop.f32.mrb[0].mxu0
    %v4509 = vadd.f32 0.0, %v4508
    %v4510 = vpop.f32.mrb[0].mxu0
    %v4511 = vadd.f32 0.0, %v4510
    %v4512 = vpop.f32.mrb[0].mxu0
    %v4513 = vpop.f32.mrb[0].mxu0
    %4514 = vdwg.mxu0
    %v4519 = vrot.slane %v4468, 6
    %v4520 = vrot.slane %v4470, 6
    %v4521 = vrot.slane %v4509, 6
    %v4522 = vrot.slane %v4511, 6
    %v4527 = vadd.f32 %v4236, %v4519
    %v4528 = vadd.f32 %v4237, %v4520
    %v4529 = vadd.f32 %v4238, %v4521
    %v4530 = vadd.f32 %v4239, %v4522
    %v4531 = vxor.u32 %v4527, 2147483648
    %v4532 = vmul.f32 %v4531, 1.442695
    %v4533 = vpow.pop %v4532
    %v4534 = vadd.f32 %v4533, 1.0
    %v4535 = vrcp.pop %v4534
    %v4536 = vmul.f32 1.0, %v4535
    %v4537 = vxor.u32 %v4528, 2147483648
    %v4538 = vmul.f32 %v4537, 1.442695
    %v4539 = vpow.pop %v4538
    %v4540 = vadd.f32 %v4539, 1.0
    %v4541 = vrcp.pop %v4540
    %v4542 = vmul.f32 1.0, %v4541
    %v4543 = vtanh.pop %v4529
    %v4544 = vxor.u32 %v4530, 2147483648
    %v4545 = vmul.f32 %v4544, 1.442695
    %v4546 = vpow.pop %v4545
    %v4547 = vadd.f32 %v4546, 1.0
    %v4548 = vrcp.pop %v4547
    %v4549 = vmul.f32 1.0, %v4548
    %v4551 = vrot.slane %v3586, 6
    %v4553 = vmul.f32 %v4542, %v4551
    %v4554 = vmul.f32 %v4536, %v4543
    %v4555 = vadd.f32 %v4553, %v4554
    %v4556 = vtanh.pop %v4555
    %v4557 = vmul.f32 %v4549, %v4556
    %4558 = vst [vmem:[#allocation6] sm:$0xc] %v3913
    %4559 = vst [vmem:[#allocation7] sm:$0xc] %v4235
    %4560 = vst [vmem:[#allocation8] sm:$0xc] %v4557
    %v4561 = vld [vmem:[#allocation2] sm:$0x30]
    %v4562 = vld [vmem:[#allocation2 + $0x8] sm:$0x30]
    %v4563 = vld [vmem:[#allocation2 + $0x10] sm:$0x30]
    %v4564 = vld [vmem:[#allocation2 + $0x18] sm:$0x30]
    %v4565 = vpack.c.bf16 %v3913, %v3913
    %v4566 = vld [vmem:[#allocation21] sm:$0xff]
    %v4567 = vld [vmem:[#allocation21 + $0x8] sm:$0xff]
    %v4568 = vld [vmem:[#allocation21 + $0x10] sm:$0xff]
    %v4569 = vld [vmem:[#allocation21 + $0x18] sm:$0xff]
    %v4570 = vld [vmem:[#allocation21 + $0x20] sm:$0xff]
    %v4571 = vld [vmem:[#allocation21 + $0x28] sm:$0xff]
    %v4572 = vld [vmem:[#allocation21 + $0x30] sm:$0xff]
    %v4573 = vld [vmem:[#allocation21 + $0x38] sm:$0xff]
    %v4574 = vld [vmem:[#allocation21 + $0x40] sm:$0xff]
    %v4575 = vld [vmem:[#allocation21 + $0x48] sm:$0xff]
    %v4576 = vld [vmem:[#allocation21 + $0x50] sm:$0xff]
    %v4577 = vld [vmem:[#allocation21 + $0x58] sm:$0xff]
    %v4578 = vld [vmem:[#allocation21 + $0x60] sm:$0xff]
    %v4579 = vld [vmem:[#allocation21 + $0x68] sm:$0xff]
    %v4580 = vld [vmem:[#allocation21 + $0x70] sm:$0xff]
    %v4581 = vld [vmem:[#allocation21 + $0x78] sm:$0xff]
    %v4582 = vld [vmem:[#allocation21 + $0x80] sm:$0xff]
    %v4583 = vld [vmem:[#allocation21 + $0x88] sm:$0xff]
    %v4584 = vld [vmem:[#allocation21 + $0x90] sm:$0xff]
    %v4585 = vld [vmem:[#allocation21 + $0x98] sm:$0xff]
    %v4586 = vld [vmem:[#allocation21 + $0xa0] sm:$0xff]
    %v4587 = vld [vmem:[#allocation21 + $0xa8] sm:$0xff]
    %v4588 = vld [vmem:[#allocation21 + $0xb0] sm:$0xff]
    %v4589 = vld [vmem:[#allocation21 + $0xb8] sm:$0xff]
    %v4590 = vld [vmem:[#allocation21 + $0xc0] sm:$0xff]
    %v4591 = vld [vmem:[#allocation21 + $0xc8] sm:$0xff]
    %v4592 = vld [vmem:[#allocation21 + $0xd0] sm:$0xff]
    %v4593 = vld [vmem:[#allocation21 + $0xd8] sm:$0xff]
    %v4594 = vld [vmem:[#allocation21 + $0xe0] sm:$0xff]
    %v4595 = vld [vmem:[#allocation21 + $0xe8] sm:$0xff]
    %v4596 = vld [vmem:[#allocation21 + $0xf0] sm:$0xff]
    %v4597 = vld [vmem:[#allocation21 + $0xf8] sm:$0xff]
    %v4599 = vrot.slane %v4565, 1
    %v4633 = vunpack.c.l.b16 %v4566
    %v4634 = vunpack.c.h.b16 %v4566
    %v4635 = vunpack.c.l.b16 %v4567
    %v4636 = vunpack.c.h.b16 %v4567
    %v4637 = vunpack.c.l.b16 %v4568
    %v4638 = vunpack.c.h.b16 %v4568
    %v4639 = vunpack.c.l.b16 %v4569
    %v4640 = vunpack.c.h.b16 %v4569
    %v4641 = vunpack.c.l.b16 %v4570
    %v4642 = vunpack.c.h.b16 %v4570
    %v4643 = vunpack.c.l.b16 %v4571
    %v4644 = vunpack.c.h.b16 %v4571
    %v4645 = vunpack.c.l.b16 %v4572
    %v4646 = vunpack.c.h.b16 %v4572
    %v4647 = vunpack.c.l.b16 %v4573
    %v4648 = vunpack.c.h.b16 %v4573
    %v4649 = vunpack.c.l.b16 %v4574
    %v4650 = vunpack.c.h.b16 %v4574
    %v4651 = vunpack.c.l.b16 %v4575
    %v4652 = vunpack.c.h.b16 %v4575
    %v4653 = vunpack.c.l.b16 %v4576
    %v4654 = vunpack.c.h.b16 %v4576
    %v4655 = vunpack.c.l.b16 %v4577
    %v4656 = vunpack.c.h.b16 %v4577
    %v4657 = vunpack.c.l.b16 %v4578
    %v4658 = vunpack.c.h.b16 %v4578
    %v4659 = vunpack.c.l.b16 %v4579
    %v4660 = vunpack.c.h.b16 %v4579
    %v4661 = vunpack.c.l.b16 %v4580
    %v4662 = vunpack.c.h.b16 %v4580
    %v4663 = vunpack.c.l.b16 %v4581
    %v4664 = vunpack.c.h.b16 %v4581
    %v4665 = vunpack.c.l.b16 %v4582
    %v4666 = vunpack.c.h.b16 %v4582
    %v4667 = vunpack.c.l.b16 %v4583
    %v4668 = vunpack.c.h.b16 %v4583
    %v4669 = vunpack.c.l.b16 %v4584
    %v4670 = vunpack.c.h.b16 %v4584
    %v4671 = vunpack.c.l.b16 %v4585
    %v4672 = vunpack.c.h.b16 %v4585
    %v4673 = vunpack.c.l.b16 %v4586
    %v4674 = vunpack.c.h.b16 %v4586
    %v4675 = vunpack.c.l.b16 %v4587
    %v4676 = vunpack.c.h.b16 %v4587
    %v4677 = vunpack.c.l.b16 %v4588
    %v4678 = vunpack.c.h.b16 %v4588
    %v4679 = vunpack.c.l.b16 %v4589
    %v4680 = vunpack.c.h.b16 %v4589
    %v4681 = vunpack.c.l.b16 %v4590
    %v4682 = vunpack.c.h.b16 %v4590
    %v4683 = vunpack.c.l.b16 %v4591
    %v4684 = vunpack.c.h.b16 %v4591
    %v4685 = vunpack.c.l.b16 %v4592
    %v4686 = vunpack.c.h.b16 %v4592
    %v4687 = vunpack.c.l.b16 %v4593
    %v4688 = vunpack.c.h.b16 %v4593
    %v4689 = vunpack.c.l.b16 %v4594
    %v4690 = vunpack.c.h.b16 %v4594
    %v4691 = vunpack.c.l.b16 %v4595
    %v4692 = vunpack.c.h.b16 %v4595
    %v4693 = vunpack.c.l.b16 %v4596
    %v4694 = vunpack.c.h.b16 %v4596
    %v4695 = vunpack.c.l.b16 %v4597
    %v4696 = vunpack.c.h.b16 %v4597
    %v4697 = vpack.c.b16 %v4637, %v4633
    %v4698 = vpack.c.b16 %v4638, %v4634
    %v4699 = vpack.c.b16 %v4639, %v4635
    %v4700 = vpack.c.b16 %v4640, %v4636
    %v4701 = vpack.c.b16 %v4645, %v4641
    %v4702 = vpack.c.b16 %v4646, %v4642
    %v4703 = vpack.c.b16 %v4647, %v4643
    %v4704 = vpack.c.b16 %v4648, %v4644
    %v4705 = vpack.c.b16 %v4653, %v4649
    %v4706 = vpack.c.b16 %v4654, %v4650
    %v4707 = vpack.c.b16 %v4655, %v4651
    %v4708 = vpack.c.b16 %v4656, %v4652
    %v4709 = vpack.c.b16 %v4661, %v4657
    %v4710 = vpack.c.b16 %v4662, %v4658
    %v4711 = vpack.c.b16 %v4663, %v4659
    %v4712 = vpack.c.b16 %v4664, %v4660
    %v4713 = vpack.c.b16 %v4669, %v4665
    %v4714 = vpack.c.b16 %v4670, %v4666
    %v4715 = vpack.c.b16 %v4671, %v4667
    %v4716 = vpack.c.b16 %v4672, %v4668
    %v4717 = vpack.c.b16 %v4677, %v4673
    %v4718 = vpack.c.b16 %v4678, %v4674
    %v4719 = vpack.c.b16 %v4679, %v4675
    %v4720 = vpack.c.b16 %v4680, %v4676
    %v4721 = vpack.c.b16 %v4685, %v4681
    %v4722 = vpack.c.b16 %v4686, %v4682
    %v4723 = vpack.c.b16 %v4687, %v4683
    %v4724 = vpack.c.b16 %v4688, %v4684
    %v4725 = vpack.c.b16 %v4693, %v4689
    %v4726 = vpack.c.b16 %v4694, %v4690
    %v4727 = vpack.c.b16 %v4695, %v4691
    %v4728 = vpack.c.b16 %v4696, %v4692
    %4761 = vmatprep.subr.bf16.mxu0 %v4698
    %4762 = vmatpush1.bf16.msra.mxu0 %v4697
    %4763 = vmatprep.subr.bf16.mxu0 %v4702
    %4764 = vmatpush1.bf16.msra.mxu0 %v4701
    %4765 = vmatprep.subr.bf16.mxu0 %v4706
    %4766 = vmatpush1.bf16.msra.mxu0 %v4705
    %4767 = vmatprep.subr.bf16.mxu0 %v4710
    %4768 = vmatpush1.bf16.msra.mxu0 %v4709
    %4769 = vmatprep.subr.bf16.mxu0 %v4714
    %4770 = vmatpush1.bf16.msra.mxu0 %v4713
    %4771 = vmatprep.subr.bf16.mxu0 %v4718
    %4772 = vmatpush1.bf16.msra.mxu0 %v4717
    %4773 = vmatprep.subr.bf16.mxu0 %v4722
    %4774 = vmatpush1.bf16.msra.mxu0 %v4721
    %4775 = vmatprep.subr.bf16.mxu0 %v4726
    %4776 = vmatpush1.bf16.msra.mxu0 %v4725
    %4777 = vmatprep.subr.bf16.mxu0 0
    %4778 = vmatpush1.bf16.msra.mxu0 0
    %4779 = vmatprep.subr.bf16.mxu0 0
    %4780 = vmatpush1.bf16.msra.mxu0 0
    %4781 = vmatprep.subr.bf16.mxu0 0
    %4782 = vmatpush1.bf16.msra.mxu0 0
    %4783 = vmatprep.subr.bf16.mxu0 0
    %4784 = vmatpush1.bf16.msra.mxu0 0
    %4785 = vmatprep.subr.bf16.mxu0 0
    %4786 = vmatpush1.bf16.msra.mxu0 0
    %4787 = vmatprep.subr.bf16.mxu0 0
    %4788 = vmatpush1.bf16.msra.mxu0 0
    %4789 = vmatprep.subr.bf16.mxu0 0
    %4790 = vmatpush1.bf16.msra.mxu0 0
    %4791 = vmatprep.subr.bf16.mxu0 0
    %4792 = vmatpush1.bf16.msra.mxu0 0
    %4793 = vmatprep.mubr.bf16.mxu0 0
    %4794 = vmatmul.mubr.bf16.gmra.mrb[0].mxu0 %v4599
    %v4795 = vpop.f32.mrb[0].mxu0
    %v4796 = vadd.f32 0.0, %v4795
    %v4797 = vpop.f32.mrb[0].mxu0
    %v4798 = vadd.f32 0.0, %v4797
    %v4799 = vpop.f32.mrb[0].mxu0
    %v4800 = vpop.f32.mrb[0].mxu0
    %4801 = vdwg.mxu0
    %4802 = vmatprep.subr.bf16.mxu0 %v4700
    %4803 = vmatpush1.bf16.msra.mxu0 %v4699
    %4804 = vmatprep.subr.bf16.mxu0 %v4704
    %4805 = vmatpush1.bf16.msra.mxu0 %v4703
    %4806 = vmatprep.subr.bf16.mxu0 %v4708
    %4807 = vmatpush1.bf16.msra.mxu0 %v4707
    %4808 = vmatprep.subr.bf16.mxu0 %v4712
    %4809 = vmatpush1.bf16.msra.mxu0 %v4711
    %4810 = vmatprep.subr.bf16.mxu0 %v4716
    %4811 = vmatpush1.bf16.msra.mxu0 %v4715
    %4812 = vmatprep.subr.bf16.mxu0 %v4720
    %4813 = vmatpush1.bf16.msra.mxu0 %v4719
    %4814 = vmatprep.subr.bf16.mxu0 %v4724
    %4815 = vmatpush1.bf16.msra.mxu0 %v4723
    %4816 = vmatprep.subr.bf16.mxu0 %v4728
    %4817 = vmatpush1.bf16.msra.mxu0 %v4727
    %4818 = vmatprep.subr.bf16.mxu0 0
    %4819 = vmatpush1.bf16.msra.mxu0 0
    %4820 = vmatprep.subr.bf16.mxu0 0
    %4821 = vmatpush1.bf16.msra.mxu0 0
    %4822 = vmatprep.subr.bf16.mxu0 0
    %4823 = vmatpush1.bf16.msra.mxu0 0
    %4824 = vmatprep.subr.bf16.mxu0 0
    %4825 = vmatpush1.bf16.msra.mxu0 0
    %4826 = vmatprep.subr.bf16.mxu0 0
    %4827 = vmatpush1.bf16.msra.mxu0 0
    %4828 = vmatprep.subr.bf16.mxu0 0
    %4829 = vmatpush1.bf16.msra.mxu0 0
    %4830 = vmatprep.subr.bf16.mxu0 0
    %4831 = vmatpush1.bf16.msra.mxu0 0
    %4832 = vmatprep.subr.bf16.mxu0 0
    %4833 = vmatpush1.bf16.msra.mxu0 0
    %4834 = vmatprep.mubr.bf16.mxu0 0
    %4835 = vmatmul.mubr.bf16.gmra.mrb[0].mxu0 %v4599
    %v4836 = vpop.f32.mrb[0].mxu0
    %v4837 = vadd.f32 0.0, %v4836
    %v4838 = vpop.f32.mrb[0].mxu0
    %v4839 = vadd.f32 0.0, %v4838
    %v4840 = vpop.f32.mrb[0].mxu0
    %v4841 = vpop.f32.mrb[0].mxu0
    %4842 = vdwg.mxu0
    %v4847 = vrot.slane %v4796, 4
    %v4848 = vrot.slane %v4798, 4
    %v4849 = vrot.slane %v4837, 4
    %v4850 = vrot.slane %v4839, 4
    %v4855 = vadd.f32 %v4561, %v4847
    %v4856 = vadd.f32 %v4562, %v4848
    %v4857 = vadd.f32 %v4563, %v4849
    %v4858 = vadd.f32 %v4564, %v4850
    %v4859 = vxor.u32 %v4855, 2147483648
    %v4860 = vmul.f32 %v4859, 1.442695
    %v4861 = vpow.pop %v4860
    %v4862 = vadd.f32 %v4861, 1.0
    %v4863 = vrcp.pop %v4862
    %v4864 = vmul.f32 1.0, %v4863
    %v4865 = vxor.u32 %v4856, 2147483648
    %v4866 = vmul.f32 %v4865, 1.442695
    %v4867 = vpow.pop %v4866
    %v4868 = vadd.f32 %v4867, 1.0
    %v4869 = vrcp.pop %v4868
    %v4870 = vmul.f32 1.0, %v4869
    %v4871 = vtanh.pop %v4857
    %v4872 = vxor.u32 %v4858, 2147483648
    %v4873 = vmul.f32 %v4872, 1.442695
    %v4874 = vpow.pop %v4873
    %v4875 = vadd.f32 %v4874, 1.0
    %v4876 = vrcp.pop %v4875
    %v4877 = vmul.f32 1.0, %v4876
    %v4879 = vrot.slane %v3911, 6
    %v4881 = vmul.f32 %v4870, %v4879
    %v4882 = vmul.f32 %v4864, %v4871
    %v4883 = vadd.f32 %v4881, %v4882
    %v4884 = vtanh.pop %v4883
    %v4885 = vmul.f32 %v4877, %v4884
    %v4886 = vld [vmem:[#allocation3] sm:$0x30]
    %v4887 = vld [vmem:[#allocation3 + $0x8] sm:$0x30]
    %v4888 = vld [vmem:[#allocation3 + $0x10] sm:$0x30]
    %v4889 = vld [vmem:[#allocation3 + $0x18] sm:$0x30]
    %v4890 = vpack.c.bf16 %v4235, %v4235
    %v4891 = vld [vmem:[#allocation31] sm:$0xff]
    %v4892 = vld [vmem:[#allocation31 + $0x8] sm:$0xff]
    %v4893 = vld [vmem:[#allocation31 + $0x10] sm:$0xff]
    %v4894 = vld [vmem:[#allocation31 + $0x18] sm:$0xff]
    %v4895 = vld [vmem:[#allocation31 + $0x20] sm:$0xff]
    %v4896 = vld [vmem:[#allocation31 + $0x28] sm:$0xff]
    %v4897 = vld [vmem:[#allocation31 + $0x30] sm:$0xff]
    %v4898 = vld [vmem:[#allocation31 + $0x38] sm:$0xff]
    %v4899 = vld [vmem:[#allocation31 + $0x40] sm:$0xff]
    %v4900 = vld [vmem:[#allocation31 + $0x48] sm:$0xff]
    %v4901 = vld [vmem:[#allocation31 + $0x50] sm:$0xff]
    %v4902 = vld [vmem:[#allocation31 + $0x58] sm:$0xff]
    %v4903 = vld [vmem:[#allocation31 + $0x60] sm:$0xff]
    %v4904 = vld [vmem:[#allocation31 + $0x68] sm:$0xff]
    %v4905 = vld [vmem:[#allocation31 + $0x70] sm:$0xff]
    %v4906 = vld [vmem:[#allocation31 + $0x78] sm:$0xff]
    %v4907 = vld [vmem:[#allocation31 + $0x80] sm:$0xff]
    %v4908 = vld [vmem:[#allocation31 + $0x88] sm:$0xff]
    %v4909 = vld [vmem:[#allocation31 + $0x90] sm:$0xff]
    %v4910 = vld [vmem:[#allocation31 + $0x98] sm:$0xff]
    %v4911 = vld [vmem:[#allocation31 + $0xa0] sm:$0xff]
    %v4912 = vld [vmem:[#allocation31 + $0xa8] sm:$0xff]
    %v4913 = vld [vmem:[#allocation31 + $0xb0] sm:$0xff]
    %v4914 = vld [vmem:[#allocation31 + $0xb8] sm:$0xff]
    %v4915 = vld [vmem:[#allocation31 + $0xc0] sm:$0xff]
    %v4916 = vld [vmem:[#allocation31 + $0xc8] sm:$0xff]
    %v4917 = vld [vmem:[#allocation31 + $0xd0] sm:$0xff]
    %v4918 = vld [vmem:[#allocation31 + $0xd8] sm:$0xff]
    %v4919 = vld [vmem:[#allocation31 + $0xe0] sm:$0xff]
    %v4920 = vld [vmem:[#allocation31 + $0xe8] sm:$0xff]
    %v4921 = vld [vmem:[#allocation31 + $0xf0] sm:$0xff]
    %v4922 = vld [vmem:[#allocation31 + $0xf8] sm:$0xff]
    %v4924 = vrot.slane %v4890, 1
    %v4958 = vunpack.c.l.b16 %v4891
    %v4959 = vunpack.c.h.b16 %v4891
    %v4960 = vunpack.c.l.b16 %v4892
    %v4961 = vunpack.c.h.b16 %v4892
    %v4962 = vunpack.c.l.b16 %v4893
    %v4963 = vunpack.c.h.b16 %v4893
    %v4964 = vunpack.c.l.b16 %v4894
    %v4965 = vunpack.c.h.b16 %v4894
    %v4966 = vunpack.c.l.b16 %v4895
    %v4967 = vunpack.c.h.b16 %v4895
    %v4968 = vunpack.c.l.b16 %v4896
    %v4969 = vunpack.c.h.b16 %v4896
    %v4970 = vunpack.c.l.b16 %v4897
    %v4971 = vunpack.c.h.b16 %v4897
    %v4972 = vunpack.c.l.b16 %v4898
    %v4973 = vunpack.c.h.b16 %v4898
    %v4974 = vunpack.c.l.b16 %v4899
    %v4975 = vunpack.c.h.b16 %v4899
    %v4976 = vunpack.c.l.b16 %v4900
    %v4977 = vunpack.c.h.b16 %v4900
    %v4978 = vunpack.c.l.b16 %v4901
    %v4979 = vunpack.c.h.b16 %v4901
    %v4980 = vunpack.c.l.b16 %v4902
    %v4981 = vunpack.c.h.b16 %v4902
    %v4982 = vunpack.c.l.b16 %v4903
    %v4983 = vunpack.c.h.b16 %v4903
    %v4984 = vunpack.c.l.b16 %v4904
    %v4985 = vunpack.c.h.b16 %v4904
    %v4986 = vunpack.c.l.b16 %v4905
    %v4987 = vunpack.c.h.b16 %v4905
    %v4988 = vunpack.c.l.b16 %v4906
    %v4989 = vunpack.c.h.b16 %v4906
    %v4990 = vunpack.c.l.b16 %v4907
    %v4991 = vunpack.c.h.b16 %v4907
    %v4992 = vunpack.c.l.b16 %v4908
    %v4993 = vunpack.c.h.b16 %v4908
    %v4994 = vunpack.c.l.b16 %v4909
    %v4995 = vunpack.c.h.b16 %v4909
    %v4996 = vunpack.c.l.b16 %v4910
    %v4997 = vunpack.c.h.b16 %v4910
    %v4998 = vunpack.c.l.b16 %v4911
    %v4999 = vunpack.c.h.b16 %v4911
    %v5000 = vunpack.c.l.b16 %v4912
    %v5001 = vunpack.c.h.b16 %v4912
    %v5002 = vunpack.c.l.b16 %v4913
    %v5003 = vunpack.c.h.b16 %v4913
    %v5004 = vunpack.c.l.b16 %v4914
    %v5005 = vunpack.c.h.b16 %v4914
    %v5006 = vunpack.c.l.b16 %v4915
    %v5007 = vunpack.c.h.b16 %v4915
    %v5008 = vunpack.c.l.b16 %v4916
    %v5009 = vunpack.c.h.b16 %v4916
    %v5010 = vunpack.c.l.b16 %v4917
    %v5011 = vunpack.c.h.b16 %v4917
    %v5012 = vunpack.c.l.b16 %v4918
    %v5013 = vunpack.c.h.b16 %v4918
    %v5014 = vunpack.c.l.b16 %v4919
    %v5015 = vunpack.c.h.b16 %v4919
    %v5016 = vunpack.c.l.b16 %v4920
    %v5017 = vunpack.c.h.b16 %v4920
    %v5018 = vunpack.c.l.b16 %v4921
    %v5019 = vunpack.c.h.b16 %v4921
    %v5020 = vunpack.c.l.b16 %v4922
    %v5021 = vunpack.c.h.b16 %v4922
    %v5022 = vpack.c.b16 %v4962, %v4958
    %v5023 = vpack.c.b16 %v4963, %v4959
    %v5024 = vpack.c.b16 %v4964, %v4960
    %v5025 = vpack.c.b16 %v4965, %v4961
    %v5026 = vpack.c.b16 %v4970, %v4966
    %v5027 = vpack.c.b16 %v4971, %v4967
    %v5028 = vpack.c.b16 %v4972, %v4968
    %v5029 = vpack.c.b16 %v4973, %v4969
    %v5030 = vpack.c.b16 %v4978, %v4974
    %v5031 = vpack.c.b16 %v4979, %v4975
    %v5032 = vpack.c.b16 %v4980, %v4976
    %v5033 = vpack.c.b16 %v4981, %v4977
    %v5034 = vpack.c.b16 %v4986, %v4982
    %v5035 = vpack.c.b16 %v4987, %v4983
    %v5036 = vpack.c.b16 %v4988, %v4984
    %v5037 = vpack.c.b16 %v4989, %v4985
    %v5038 = vpack.c.b16 %v4994, %v4990
    %v5039 = vpack.c.b16 %v4995, %v4991
    %v5040 = vpack.c.b16 %v4996, %v4992
    %v5041 = vpack.c.b16 %v4997, %v4993
    %v5042 = vpack.c.b16 %v5002, %v4998
    %v5043 = vpack.c.b16 %v5003, %v4999
    %v5044 = vpack.c.b16 %v5004, %v5000
    %v5045 = vpack.c.b16 %v5005, %v5001
    %v5046 = vpack.c.b16 %v5010, %v5006
    %v5047 = vpack.c.b16 %v5011, %v5007
    %v5048 = vpack.c.b16 %v5012, %v5008
    %v5049 = vpack.c.b16 %v5013, %v5009
    %v5050 = vpack.c.b16 %v5018, %v5014
    %v5051 = vpack.c.b16 %v5019, %v5015
    %v5052 = vpack.c.b16 %v5020, %v5016
    %v5053 = vpack.c.b16 %v5021, %v5017
    %5086 = vmatprep.subr.bf16.mxu0 %v5023
    %5087 = vmatpush1.bf16.msra.mxu0 %v5022
    %5088 = vmatprep.subr.bf16.mxu0 %v5027
    %5089 = vmatpush1.bf16.msra.mxu0 %v5026
    %5090 = vmatprep.subr.bf16.mxu0 %v5031
    %5091 = vmatpush1.bf16.msra.mxu0 %v5030
    %5092 = vmatprep.subr.bf16.mxu0 %v5035
    %5093 = vmatpush1.bf16.msra.mxu0 %v5034
    %5094 = vmatprep.subr.bf16.mxu0 %v5039
    %5095 = vmatpush1.bf16.msra.mxu0 %v5038
    %5096 = vmatprep.subr.bf16.mxu0 %v5043
    %5097 = vmatpush1.bf16.msra.mxu0 %v5042
    %5098 = vmatprep.subr.bf16.mxu0 %v5047
    %5099 = vmatpush1.bf16.msra.mxu0 %v5046
    %5100 = vmatprep.subr.bf16.mxu0 %v5051
    %5101 = vmatpush1.bf16.msra.mxu0 %v5050
    %5102 = vmatprep.subr.bf16.mxu0 0
    %5103 = vmatpush1.bf16.msra.mxu0 0
    %5104 = vmatprep.subr.bf16.mxu0 0
    %5105 = vmatpush1.bf16.msra.mxu0 0
    %5106 = vmatprep.subr.bf16.mxu0 0
    %5107 = vmatpush1.bf16.msra.mxu0 0
    %5108 = vmatprep.subr.bf16.mxu0 0
    %5109 = vmatpush1.bf16.msra.mxu0 0
    %5110 = vmatprep.subr.bf16.mxu0 0
    %5111 = vmatpush1.bf16.msra.mxu0 0
    %5112 = vmatprep.subr.bf16.mxu0 0
    %5113 = vmatpush1.bf16.msra.mxu0 0
    %5114 = vmatprep.subr.bf16.mxu0 0
    %5115 = vmatpush1.bf16.msra.mxu0 0
    %5116 = vmatprep.subr.bf16.mxu0 0
    %5117 = vmatpush1.bf16.msra.mxu0 0
    %5118 = vmatprep.mubr.bf16.mxu0 0
    %5119 = vmatmul.mubr.bf16.gmra.mrb[0].mxu0 %v4924
    %v5120 = vpop.f32.mrb[0].mxu0
    %v5121 = vadd.f32 0.0, %v5120
    %v5122 = vpop.f32.mrb[0].mxu0
    %v5123 = vadd.f32 0.0, %v5122
    %v5124 = vpop.f32.mrb[0].mxu0
    %v5125 = vpop.f32.mrb[0].mxu0
    %5126 = vdwg.mxu0
    %5127 = vmatprep.subr.bf16.mxu0 %v5025
    %5128 = vmatpush1.bf16.msra.mxu0 %v5024
    %5129 = vmatprep.subr.bf16.mxu0 %v5029
    %5130 = vmatpush1.bf16.msra.mxu0 %v5028
    %5131 = vmatprep.subr.bf16.mxu0 %v5033
    %5132 = vmatpush1.bf16.msra.mxu0 %v5032
    %5133 = vmatprep.subr.bf16.mxu0 %v5037
    %5134 = vmatpush1.bf16.msra.mxu0 %v5036
    %5135 = vmatprep.subr.bf16.mxu0 %v5041
    %5136 = vmatpush1.bf16.msra.mxu0 %v5040
    %5137 = vmatprep.subr.bf16.mxu0 %v5045
    %5138 = vmatpush1.bf16.msra.mxu0 %v5044
    %5139 = vmatprep.subr.bf16.mxu0 %v5049
    %5140 = vmatpush1.bf16.msra.mxu0 %v5048
    %5141 = vmatprep.subr.bf16.mxu0 %v5053
    %5142 = vmatpush1.bf16.msra.mxu0 %v5052
    %5143 = vmatprep.subr.bf16.mxu0 0
    %5144 = vmatpush1.bf16.msra.mxu0 0
    %5145 = vmatprep.subr.bf16.mxu0 0
    %5146 = vmatpush1.bf16.msra.mxu0 0
    %5147 = vmatprep.subr.bf16.mxu0 0
    %5148 = vmatpush1.bf16.msra.mxu0 0
    %5149 = vmatprep.subr.bf16.mxu0 0
    %5150 = vmatpush1.bf16.msra.mxu0 0
    %5151 = vmatprep.subr.bf16.mxu0 0
    %5152 = vmatpush1.bf16.msra.mxu0 0
    %5153 = vmatprep.subr.bf16.mxu0 0
    %5154 = vmatpush1.bf16.msra.mxu0 0
    %5155 = vmatprep.subr.bf16.mxu0 0
    %5156 = vmatpush1.bf16.msra.mxu0 0
    %5157 = vmatprep.subr.bf16.mxu0 0
    %5158 = vmatpush1.bf16.msra.mxu0 0
    %5159 = vmatprep.mubr.bf16.mxu0 0
    %5160 = vmatmul.mubr.bf16.gmra.mrb[0].mxu0 %v4924
    %v5161 = vpop.f32.mrb[0].mxu0
    %v5162 = vadd.f32 0.0, %v5161
    %v5163 = vpop.f32.mrb[0].mxu0
    %v5164 = vadd.f32 0.0, %v5163
    %v5165 = vpop.f32.mrb[0].mxu0
    %v5166 = vpop.f32.mrb[0].mxu0
    %5167 = vdwg.mxu0
    %v5172 = vrot.slane %v5121, 4
    %v5173 = vrot.slane %v5123, 4
    %v5174 = vrot.slane %v5162, 4
    %v5175 = vrot.slane %v5164, 4
    %v5180 = vadd.f32 %v4886, %v5172
    %v5181 = vadd.f32 %v4887, %v5173
    %v5182 = vadd.f32 %v4888, %v5174
    %v5183 = vadd.f32 %v4889, %v5175
    %v5184 = vxor.u32 %v5180, 2147483648
    %v5185 = vmul.f32 %v5184, 1.442695
    %v5186 = vpow.pop %v5185
    %v5187 = vadd.f32 %v5186, 1.0
    %v5188 = vrcp.pop %v5187
    %v5189 = vmul.f32 1.0, %v5188
    %v5190 = vxor.u32 %v5181, 2147483648
    %v5191 = vmul.f32 %v5190, 1.442695
    %v5192 = vpow.pop %v5191
    %v5193 = vadd.f32 %v5192, 1.0
    %v5194 = vrcp.pop %v5193
    %v5195 = vmul.f32 1.0, %v5194
    %v5196 = vtanh.pop %v5182
    %v5197 = vxor.u32 %v5183, 2147483648
    %v5198 = vmul.f32 %v5197, 1.442695
    %v5199 = vpow.pop %v5198
    %v5200 = vadd.f32 %v5199, 1.0
    %v5201 = vrcp.pop %v5200
    %v5202 = vmul.f32 1.0, %v5201
    %v5204 = vrot.slane %v4233, 6
    %v5206 = vmul.f32 %v5195, %v5204
    %v5207 = vmul.f32 %v5189, %v5196
    %v5208 = vadd.f32 %v5206, %v5207
    %v5209 = vtanh.pop %v5208
    %v5210 = vmul.f32 %v5202, %v5209
    %v5211 = vld [vmem:[#allocation4] sm:$0x30]
    %v5212 = vld [vmem:[#allocation4 + $0x8] sm:$0x30]
    %v5213 = vld [vmem:[#allocation4 + $0x10] sm:$0x30]
    %v5214 = vld [vmem:[#allocation4 + $0x18] sm:$0x30]
    %v5215 = vpack.c.bf16 %v4557, %v4557
    %v5216 = vld [vmem:[#allocation42] sm:$0xff]
    %v5217 = vld [vmem:[#allocation42 + $0x8] sm:$0xff]
    %v5218 = vld [vmem:[#allocation42 + $0x10] sm:$0xff]
    %v5219 = vld [vmem:[#allocation42 + $0x18] sm:$0xff]
    %v5220 = vld [vmem:[#allocation42 + $0x20] sm:$0xff]
    %v5221 = vld [vmem:[#allocation42 + $0x28] sm:$0xff]
    %v5222 = vld [vmem:[#allocation42 + $0x30] sm:$0xff]
    %v5223 = vld [vmem:[#allocation42 + $0x38] sm:$0xff]
    %v5224 = vld [vmem:[#allocation42 + $0x40] sm:$0xff]
    %v5225 = vld [vmem:[#allocation42 + $0x48] sm:$0xff]
    %v5226 = vld [vmem:[#allocation42 + $0x50] sm:$0xff]
    %v5227 = vld [vmem:[#allocation42 + $0x58] sm:$0xff]
    %v5228 = vld [vmem:[#allocation42 + $0x60] sm:$0xff]
    %v5229 = vld [vmem:[#allocation42 + $0x68] sm:$0xff]
    %v5230 = vld [vmem:[#allocation42 + $0x70] sm:$0xff]
    %v5231 = vld [vmem:[#allocation42 + $0x78] sm:$0xff]
    %v5232 = vld [vmem:[#allocation42 + $0x80] sm:$0xff]
    %v5233 = vld [vmem:[#allocation42 + $0x88] sm:$0xff]
    %v5234 = vld [vmem:[#allocation42 + $0x90] sm:$0xff]
    %v5235 = vld [vmem:[#allocation42 + $0x98] sm:$0xff]
    %v5236 = vld [vmem:[#allocation42 + $0xa0] sm:$0xff]
    %v5237 = vld [vmem:[#allocation42 + $0xa8] sm:$0xff]
    %v5238 = vld [vmem:[#allocation42 + $0xb0] sm:$0xff]
    %v5239 = vld [vmem:[#allocation42 + $0xb8] sm:$0xff]
    %v5240 = vld [vmem:[#allocation42 + $0xc0] sm:$0xff]
    %v5241 = vld [vmem:[#allocation42 + $0xc8] sm:$0xff]
    %v5242 = vld [vmem:[#allocation42 + $0xd0] sm:$0xff]
    %v5243 = vld [vmem:[#allocation42 + $0xd8] sm:$0xff]
    %v5244 = vld [vmem:[#allocation42 + $0xe0] sm:$0xff]
    %v5245 = vld [vmem:[#allocation42 + $0xe8] sm:$0xff]
    %v5246 = vld [vmem:[#allocation42 + $0xf0] sm:$0xff]
    %v5247 = vld [vmem:[#allocation42 + $0xf8] sm:$0xff]
    %v5249 = vrot.slane %v5215, 1
    %v5283 = vunpack.c.l.b16 %v5216
    %v5284 = vunpack.c.h.b16 %v5216
    %v5285 = vunpack.c.l.b16 %v5217
    %v5286 = vunpack.c.h.b16 %v5217
    %v5287 = vunpack.c.l.b16 %v5218
    %v5288 = vunpack.c.h.b16 %v5218
    %v5289 = vunpack.c.l.b16 %v5219
    %v5290 = vunpack.c.h.b16 %v5219
    %v5291 = vunpack.c.l.b16 %v5220
    %v5292 = vunpack.c.h.b16 %v5220
    %v5293 = vunpack.c.l.b16 %v5221
    %v5294 = vunpack.c.h.b16 %v5221
    %v5295 = vunpack.c.l.b16 %v5222
    %v5296 = vunpack.c.h.b16 %v5222
    %v5297 = vunpack.c.l.b16 %v5223
    %v5298 = vunpack.c.h.b16 %v5223
    %v5299 = vunpack.c.l.b16 %v5224
    %v5300 = vunpack.c.h.b16 %v5224
    %v5301 = vunpack.c.l.b16 %v5225
    %v5302 = vunpack.c.h.b16 %v5225
    %v5303 = vunpack.c.l.b16 %v5226
    %v5304 = vunpack.c.h.b16 %v5226
    %v5305 = vunpack.c.l.b16 %v5227
    %v5306 = vunpack.c.h.b16 %v5227
    %v5307 = vunpack.c.l.b16 %v5228
    %v5308 = vunpack.c.h.b16 %v5228
    %v5309 = vunpack.c.l.b16 %v5229
    %v5310 = vunpack.c.h.b16 %v5229
    %v5311 = vunpack.c.l.b16 %v5230
    %v5312 = vunpack.c.h.b16 %v5230
    %v5313 = vunpack.c.l.b16 %v5231
    %v5314 = vunpack.c.h.b16 %v5231
    %v5315 = vunpack.c.l.b16 %v5232
    %v5316 = vunpack.c.h.b16 %v5232
    %v5317 = vunpack.c.l.b16 %v5233
    %v5318 = vunpack.c.h.b16 %v5233
    %v5319 = vunpack.c.l.b16 %v5234
    %v5320 = vunpack.c.h.b16 %v5234
    %v5321 = vunpack.c.l.b16 %v5235
    %v5322 = vunpack.c.h.b16 %v5235
    %v5323 = vunpack.c.l.b16 %v5236
    %v5324 = vunpack.c.h.b16 %v5236
    %v5325 = vunpack.c.l.b16 %v5237
    %v5326 = vunpack.c.h.b16 %v5237
    %v5327 = vunpack.c.l.b16 %v5238
    %v5328 = vunpack.c.h.b16 %v5238
    %v5329 = vunpack.c.l.b16 %v5239
    %v5330 = vunpack.c.h.b16 %v5239
    %v5331 = vunpack.c.l.b16 %v5240
    %v5332 = vunpack.c.h.b16 %v5240
    %v5333 = vunpack.c.l.b16 %v5241
    %v5334 = vunpack.c.h.b16 %v5241
    %v5335 = vunpack.c.l.b16 %v5242
    %v5336 = vunpack.c.h.b16 %v5242
    %v5337 = vunpack.c.l.b16 %v5243
    %v5338 = vunpack.c.h.b16 %v5243
    %v5339 = vunpack.c.l.b16 %v5244
    %v5340 = vunpack.c.h.b16 %v5244
    %v5341 = vunpack.c.l.b16 %v5245
    %v5342 = vunpack.c.h.b16 %v5245
    %v5343 = vunpack.c.l.b16 %v5246
    %v5344 = vunpack.c.h.b16 %v5246
    %v5345 = vunpack.c.l.b16 %v5247
    %v5346 = vunpack.c.h.b16 %v5247
    %v5347 = vpack.c.b16 %v5287, %v5283
    %v5348 = vpack.c.b16 %v5288, %v5284
    %v5349 = vpack.c.b16 %v5289, %v5285
    %v5350 = vpack.c.b16 %v5290, %v5286
    %v5351 = vpack.c.b16 %v5295, %v5291
    %v5352 = vpack.c.b16 %v5296, %v5292
    %v5353 = vpack.c.b16 %v5297, %v5293
    %v5354 = vpack.c.b16 %v5298, %v5294
    %v5355 = vpack.c.b16 %v5303, %v5299
    %v5356 = vpack.c.b16 %v5304, %v5300
    %v5357 = vpack.c.b16 %v5305, %v5301
    %v5358 = vpack.c.b16 %v5306, %v5302
    %v5359 = vpack.c.b16 %v5311, %v5307
    %v5360 = vpack.c.b16 %v5312, %v5308
    %v5361 = vpack.c.b16 %v5313, %v5309
    %v5362 = vpack.c.b16 %v5314, %v5310
    %v5363 = vpack.c.b16 %v5319, %v5315
    %v5364 = vpack.c.b16 %v5320, %v5316
    %v5365 = vpack.c.b16 %v5321, %v5317
    %v5366 = vpack.c.b16 %v5322, %v5318
    %v5367 = vpack.c.b16 %v5327, %v5323
    %v5368 = vpack.c.b16 %v5328, %v5324
    %v5369 = vpack.c.b16 %v5329, %v5325
    %v5370 = vpack.c.b16 %v5330, %v5326
    %v5371 = vpack.c.b16 %v5335, %v5331
    %v5372 = vpack.c.b16 %v5336, %v5332
    %v5373 = vpack.c.b16 %v5337, %v5333
    %v5374 = vpack.c.b16 %v5338, %v5334
    %v5375 = vpack.c.b16 %v5343, %v5339
    %v5376 = vpack.c.b16 %v5344, %v5340
    %v5377 = vpack.c.b16 %v5345, %v5341
    %v5378 = vpack.c.b16 %v5346, %v5342
    %5411 = vmatprep.subr.bf16.mxu0 %v5348
    %5412 = vmatpush1.bf16.msra.mxu0 %v5347
    %5413 = vmatprep.subr.bf16.mxu0 %v5352
    %5414 = vmatpush1.bf16.msra.mxu0 %v5351
    %5415 = vmatprep.subr.bf16.mxu0 %v5356
    %5416 = vmatpush1.bf16.msra.mxu0 %v5355
    %5417 = vmatprep.subr.bf16.mxu0 %v5360
    %5418 = vmatpush1.bf16.msra.mxu0 %v5359
    %5419 = vmatprep.subr.bf16.mxu0 %v5364
    %5420 = vmatpush1.bf16.msra.mxu0 %v5363
    %5421 = vmatprep.subr.bf16.mxu0 %v5368
    %5422 = vmatpush1.bf16.msra.mxu0 %v5367
    %5423 = vmatprep.subr.bf16.mxu0 %v5372
    %5424 = vmatpush1.bf16.msra.mxu0 %v5371
    %5425 = vmatprep.subr.bf16.mxu0 %v5376
    %5426 = vmatpush1.bf16.msra.mxu0 %v5375
    %5427 = vmatprep.subr.bf16.mxu0 0
    %5428 = vmatpush1.bf16.msra.mxu0 0
    %5429 = vmatprep.subr.bf16.mxu0 0
    %5430 = vmatpush1.bf16.msra.mxu0 0
    %5431 = vmatprep.subr.bf16.mxu0 0
    %5432 = vmatpush1.bf16.msra.mxu0 0
    %5433 = vmatprep.subr.bf16.mxu0 0
    %5434 = vmatpush1.bf16.msra.mxu0 0
    %5435 = vmatprep.subr.bf16.mxu0 0
    %5436 = vmatpush1.bf16.msra.mxu0 0
    %5437 = vmatprep.subr.bf16.mxu0 0
    %5438 = vmatpush1.bf16.msra.mxu0 0
    %5439 = vmatprep.subr.bf16.mxu0 0
    %5440 = vmatpush1.bf16.msra.mxu0 0
    %5441 = vmatprep.subr.bf16.mxu0 0
    %5442 = vmatpush1.bf16.msra.mxu0 0
    %5443 = vmatprep.mubr.bf16.mxu0 0
    %5444 = vmatmul.mubr.bf16.gmra.mrb[0].mxu0 %v5249
    %v5445 = vpop.f32.mrb[0].mxu0
    %v5446 = vadd.f32 0.0, %v5445
    %v5447 = vpop.f32.mrb[0].mxu0
    %v5448 = vadd.f32 0.0, %v5447
    %v5449 = vpop.f32.mrb[0].mxu0
    %v5450 = vpop.f32.mrb[0].mxu0
    %5451 = vdwg.mxu0
    %5452 = vmatprep.subr.bf16.mxu0 %v5350
    %5453 = vmatpush1.bf16.msra.mxu0 %v5349
    %5454 = vmatprep.subr.bf16.mxu0 %v5354
    %5455 = vmatpush1.bf16.msra.mxu0 %v5353
    %5456 = vmatprep.subr.bf16.mxu0 %v5358
    %5457 = vmatpush1.bf16.msra.mxu0 %v5357
    %5458 = vmatprep.subr.bf16.mxu0 %v5362
    %5459 = vmatpush1.bf16.msra.mxu0 %v5361
    %5460 = vmatprep.subr.bf16.mxu0 %v5366
    %5461 = vmatpush1.bf16.msra.mxu0 %v5365
    %5462 = vmatprep.subr.bf16.mxu0 %v5370
    %5463 = vmatpush1.bf16.msra.mxu0 %v5369
    %5464 = vmatprep.subr.bf16.mxu0 %v5374
    %5465 = vmatpush1.bf16.msra.mxu0 %v5373
    %5466 = vmatprep.subr.bf16.mxu0 %v5378
    %5467 = vmatpush1.bf16.msra.mxu0 %v5377
    %5468 = vmatprep.subr.bf16.mxu0 0
    %5469 = vmatpush1.bf16.msra.mxu0 0
    %5470 = vmatprep.subr.bf16.mxu0 0
    %5471 = vmatpush1.bf16.msra.mxu0 0
    %5472 = vmatprep.subr.bf16.mxu0 0
    %5473 = vmatpush1.bf16.msra.mxu0 0
    %5474 = vmatprep.subr.bf16.mxu0 0
    %5475 = vmatpush1.bf16.msra.mxu0 0
    %5476 = vmatprep.subr.bf16.mxu0 0
    %5477 = vmatpush1.bf16.msra.mxu0 0
    %5478 = vmatprep.subr.bf16.mxu0 0
    %5479 = vmatpush1.bf16.msra.mxu0 0
    %5480 = vmatprep.subr.bf16.mxu0 0
    %5481 = vmatpush1.bf16.msra.mxu0 0
    %5482 = vmatprep.subr.bf16.mxu0 0
    %5483 = vmatpush1.bf16.msra.mxu0 0
    %5484 = vmatprep.mubr.bf16.mxu0 0
    %5485 = vmatmul.mubr.bf16.gmra.mrb[0].mxu0 %v5249
    %v5486 = vpop.f32.mrb[0].mxu0
    %v5487 = vadd.f32 0.0, %v5486
    %v5488 = vpop.f32.mrb[0].mxu0
    %v5489 = vadd.f32 0.0, %v5488
    %v5490 = vpop.f32.mrb[0].mxu0
    %v5491 = vpop.f32.mrb[0].mxu0
    %5492 = vdwg.mxu0
    %v5497 = vrot.slane %v5446, 4
    %v5498 = vrot.slane %v5448, 4
    %v5499 = vrot.slane %v5487, 4
    %v5500 = vrot.slane %v5489, 4
    %v5505 = vadd.f32 %v5211, %v5497
    %v5506 = vadd.f32 %v5212, %v5498
    %v5507 = vadd.f32 %v5213, %v5499
    %v5508 = vadd.f32 %v5214, %v5500
    %v5509 = vxor.u32 %v5505, 2147483648
    %v5510 = vmul.f32 %v5509, 1.442695
    %v5511 = vpow.pop %v5510
    %v5512 = vadd.f32 %v5511, 1.0
    %v5513 = vrcp.pop %v5512
    %v5514 = vmul.f32 1.0, %v5513
    %v5515 = vxor.u32 %v5506, 2147483648
    %v5516 = vmul.f32 %v5515, 1.442695
    %v5517 = vpow.pop %v5516
    %v5518 = vadd.f32 %v5517, 1.0
    %v5519 = vrcp.pop %v5518
    %v5520 = vmul.f32 1.0, %v5519
    %v5521 = vtanh.pop %v5507
    %v5522 = vxor.u32 %v5508, 2147483648
    %v5523 = vmul.f32 %v5522, 1.442695
    %v5524 = vpow.pop %v5523
    %v5525 = vadd.f32 %v5524, 1.0
    %v5526 = vrcp.pop %v5525
    %v5527 = vmul.f32 1.0, %v5526
    %v5529 = vrot.slane %v4555, 6
    %v5531 = vmul.f32 %v5520, %v5529
    %v5532 = vmul.f32 %v5514, %v5521
    %v5533 = vadd.f32 %v5531, %v5532
    %v5534 = vtanh.pop %v5533
    %v5535 = vmul.f32 %v5527, %v5534
    %5536 = vst [vmem:[#allocation6] sm:$0x30] %v4885
    %5537 = vst [vmem:[#allocation7] sm:$0x30] %v5210
    %5538 = vst [vmem:[#allocation8] sm:$0x30] %v5535
    %v5539 = vld [vmem:[#allocation2] sm:$0xc0]
    %v5540 = vld [vmem:[#allocation2 + $0x8] sm:$0xc0]
    %v5541 = vld [vmem:[#allocation2 + $0x10] sm:$0xc0]
    %v5542 = vld [vmem:[#allocation2 + $0x18] sm:$0xc0]
    %v5543 = vpack.c.bf16 %v4885, %v4885
    %v5544 = vld [vmem:[#allocation21] sm:$0xff]
    %v5545 = vld [vmem:[#allocation21 + $0x8] sm:$0xff]
    %v5546 = vld [vmem:[#allocation21 + $0x10] sm:$0xff]
    %v5547 = vld [vmem:[#allocation21 + $0x18] sm:$0xff]
    %v5548 = vld [vmem:[#allocation21 + $0x20] sm:$0xff]
    %v5549 = vld [vmem:[#allocation21 + $0x28] sm:$0xff]
    %v5550 = vld [vmem:[#allocation21 + $0x30] sm:$0xff]
    %v5551 = vld [vmem:[#allocation21 + $0x38] sm:$0xff]
    %v5552 = vld [vmem:[#allocation21 + $0x40] sm:$0xff]
    %v5553 = vld [vmem:[#allocation21 + $0x48] sm:$0xff]
    %v5554 = vld [vmem:[#allocation21 + $0x50] sm:$0xff]
    %v5555 = vld [vmem:[#allocation21 + $0x58] sm:$0xff]
    %v5556 = vld [vmem:[#allocation21 + $0x60] sm:$0xff]
    %v5557 = vld [vmem:[#allocation21 + $0x68] sm:$0xff]
    %v5558 = vld [vmem:[#allocation21 + $0x70] sm:$0xff]
    %v5559 = vld [vmem:[#allocation21 + $0x78] sm:$0xff]
    %v5560 = vld [vmem:[#allocation21 + $0x80] sm:$0xff]
    %v5561 = vld [vmem:[#allocation21 + $0x88] sm:$0xff]
    %v5562 = vld [vmem:[#allocation21 + $0x90] sm:$0xff]
    %v5563 = vld [vmem:[#allocation21 + $0x98] sm:$0xff]
    %v5564 = vld [vmem:[#allocation21 + $0xa0] sm:$0xff]
    %v5565 = vld [vmem:[#allocation21 + $0xa8] sm:$0xff]
    %v5566 = vld [vmem:[#allocation21 + $0xb0] sm:$0xff]
    %v5567 = vld [vmem:[#allocation21 + $0xb8] sm:$0xff]
    %v5568 = vld [vmem:[#allocation21 + $0xc0] sm:$0xff]
    %v5569 = vld [vmem:[#allocation21 + $0xc8] sm:$0xff]
    %v5570 = vld [vmem:[#allocation21 + $0xd0] sm:$0xff]
    %v5571 = vld [vmem:[#allocation21 + $0xd8] sm:$0xff]
    %v5572 = vld [vmem:[#allocation21 + $0xe0] sm:$0xff]
    %v5573 = vld [vmem:[#allocation21 + $0xe8] sm:$0xff]
    %v5574 = vld [vmem:[#allocation21 + $0xf0] sm:$0xff]
    %v5575 = vld [vmem:[#allocation21 + $0xf8] sm:$0xff]
    %v5577 = vrot.slane %v5543, 2
    %v5611 = vunpack.c.l.b16 %v5544
    %v5612 = vunpack.c.h.b16 %v5544
    %v5613 = vunpack.c.l.b16 %v5545
    %v5614 = vunpack.c.h.b16 %v5545
    %v5615 = vunpack.c.l.b16 %v5546
    %v5616 = vunpack.c.h.b16 %v5546
    %v5617 = vunpack.c.l.b16 %v5547
    %v5618 = vunpack.c.h.b16 %v5547
    %v5619 = vunpack.c.l.b16 %v5548
    %v5620 = vunpack.c.h.b16 %v5548
    %v5621 = vunpack.c.l.b16 %v5549
    %v5622 = vunpack.c.h.b16 %v5549
    %v5623 = vunpack.c.l.b16 %v5550
    %v5624 = vunpack.c.h.b16 %v5550
    %v5625 = vunpack.c.l.b16 %v5551
    %v5626 = vunpack.c.h.b16 %v5551
    %v5627 = vunpack.c.l.b16 %v5552
    %v5628 = vunpack.c.h.b16 %v5552
    %v5629 = vunpack.c.l.b16 %v5553
    %v5630 = vunpack.c.h.b16 %v5553
    %v5631 = vunpack.c.l.b16 %v5554
    %v5632 = vunpack.c.h.b16 %v5554
    %v5633 = vunpack.c.l.b16 %v5555
    %v5634 = vunpack.c.h.b16 %v5555
    %v5635 = vunpack.c.l.b16 %v5556
    %v5636 = vunpack.c.h.b16 %v5556
    %v5637 = vunpack.c.l.b16 %v5557
    %v5638 = vunpack.c.h.b16 %v5557
    %v5639 = vunpack.c.l.b16 %v5558
    %v5640 = vunpack.c.h.b16 %v5558
    %v5641 = vunpack.c.l.b16 %v5559
    %v5642 = vunpack.c.h.b16 %v5559
    %v5643 = vunpack.c.l.b16 %v5560
    %v5644 = vunpack.c.h.b16 %v5560
    %v5645 = vunpack.c.l.b16 %v5561
    %v5646 = vunpack.c.h.b16 %v5561
    %v5647 = vunpack.c.l.b16 %v5562
    %v5648 = vunpack.c.h.b16 %v5562
    %v5649 = vunpack.c.l.b16 %v5563
    %v5650 = vunpack.c.h.b16 %v5563
    %v5651 = vunpack.c.l.b16 %v5564
    %v5652 = vunpack.c.h.b16 %v5564
    %v5653 = vunpack.c.l.b16 %v5565
    %v5654 = vunpack.c.h.b16 %v5565
    %v5655 = vunpack.c.l.b16 %v5566
    %v5656 = vunpack.c.h.b16 %v5566
    %v5657 = vunpack.c.l.b16 %v5567
    %v5658 = vunpack.c.h.b16 %v5567
    %v5659 = vunpack.c.l.b16 %v5568
    %v5660 = vunpack.c.h.b16 %v5568
    %v5661 = vunpack.c.l.b16 %v5569
    %v5662 = vunpack.c.h.b16 %v5569
    %v5663 = vunpack.c.l.b16 %v5570
    %v5664 = vunpack.c.h.b16 %v5570
    %v5665 = vunpack.c.l.b16 %v5571
    %v5666 = vunpack.c.h.b16 %v5571
    %v5667 = vunpack.c.l.b16 %v5572
    %v5668 = vunpack.c.h.b16 %v5572
    %v5669 = vunpack.c.l.b16 %v5573
    %v5670 = vunpack.c.h.b16 %v5573
    %v5671 = vunpack.c.l.b16 %v5574
    %v5672 = vunpack.c.h.b16 %v5574
    %v5673 = vunpack.c.l.b16 %v5575
    %v5674 = vunpack.c.h.b16 %v5575
    %v5675 = vpack.c.b16 %v5615, %v5611
    %v5676 = vpack.c.b16 %v5616, %v5612
    %v5677 = vpack.c.b16 %v5617, %v5613
    %v5678 = vpack.c.b16 %v5618, %v5614
    %v5679 = vpack.c.b16 %v5623, %v5619
    %v5680 = vpack.c.b16 %v5624, %v5620
    %v5681 = vpack.c.b16 %v5625, %v5621
    %v5682 = vpack.c.b16 %v5626, %v5622
    %v5683 = vpack.c.b16 %v5631, %v5627
    %v5684 = vpack.c.b16 %v5632, %v5628
    %v5685 = vpack.c.b16 %v5633, %v5629
    %v5686 = vpack.c.b16 %v5634, %v5630
    %v5687 = vpack.c.b16 %v5639, %v5635
    %v5688 = vpack.c.b16 %v5640, %v5636
    %v5689 = vpack.c.b16 %v5641, %v5637
    %v5690 = vpack.c.b16 %v5642, %v5638
    %v5691 = vpack.c.b16 %v5647, %v5643
    %v5692 = vpack.c.b16 %v5648, %v5644
    %v5693 = vpack.c.b16 %v5649, %v5645
    %v5694 = vpack.c.b16 %v5650, %v5646
    %v5695 = vpack.c.b16 %v5655, %v5651
    %v5696 = vpack.c.b16 %v5656, %v5652
    %v5697 = vpack.c.b16 %v5657, %v5653
    %v5698 = vpack.c.b16 %v5658, %v5654
    %v5699 = vpack.c.b16 %v5663, %v5659
    %v5700 = vpack.c.b16 %v5664, %v5660
    %v5701 = vpack.c.b16 %v5665, %v5661
    %v5702 = vpack.c.b16 %v5666, %v5662
    %v5703 = vpack.c.b16 %v5671, %v5667
    %v5704 = vpack.c.b16 %v5672, %v5668
    %v5705 = vpack.c.b16 %v5673, %v5669
    %v5706 = vpack.c.b16 %v5674, %v5670
    %5739 = vmatprep.subr.bf16.mxu0 %v5676
    %5740 = vmatpush1.bf16.msra.mxu0 %v5675
    %5741 = vmatprep.subr.bf16.mxu0 %v5680
    %5742 = vmatpush1.bf16.msra.mxu0 %v5679
    %5743 = vmatprep.subr.bf16.mxu0 %v5684
    %5744 = vmatpush1.bf16.msra.mxu0 %v5683
    %5745 = vmatprep.subr.bf16.mxu0 %v5688
    %5746 = vmatpush1.bf16.msra.mxu0 %v5687
    %5747 = vmatprep.subr.bf16.mxu0 %v5692
    %5748 = vmatpush1.bf16.msra.mxu0 %v5691
    %5749 = vmatprep.subr.bf16.mxu0 %v5696
    %5750 = vmatpush1.bf16.msra.mxu0 %v5695
    %5751 = vmatprep.subr.bf16.mxu0 %v5700
    %5752 = vmatpush1.bf16.msra.mxu0 %v5699
    %5753 = vmatprep.subr.bf16.mxu0 %v5704
    %5754 = vmatpush1.bf16.msra.mxu0 %v5703
    %5755 = vmatprep.subr.bf16.mxu0 0
    %5756 = vmatpush1.bf16.msra.mxu0 0
    %5757 = vmatprep.subr.bf16.mxu0 0
    %5758 = vmatpush1.bf16.msra.mxu0 0
    %5759 = vmatprep.subr.bf16.mxu0 0
    %5760 = vmatpush1.bf16.msra.mxu0 0
    %5761 = vmatprep.subr.bf16.mxu0 0
    %5762 = vmatpush1.bf16.msra.mxu0 0
    %5763 = vmatprep.subr.bf16.mxu0 0
    %5764 = vmatpush1.bf16.msra.mxu0 0
    %5765 = vmatprep.subr.bf16.mxu0 0
    %5766 = vmatpush1.bf16.msra.mxu0 0
    %5767 = vmatprep.subr.bf16.mxu0 0
    %5768 = vmatpush1.bf16.msra.mxu0 0
    %5769 = vmatprep.subr.bf16.mxu0 0
    %5770 = vmatpush1.bf16.msra.mxu0 0
    %5771 = vmatprep.mubr.bf16.mxu0 0
    %5772 = vmatmul.mubr.bf16.gmra.mrb[0].mxu0 %v5577
    %v5773 = vpop.f32.mrb[0].mxu0
    %v5774 = vadd.f32 0.0, %v5773
    %v5775 = vpop.f32.mrb[0].mxu0
    %v5776 = vadd.f32 0.0, %v5775
    %v5777 = vpop.f32.mrb[0].mxu0
    %v5778 = vpop.f32.mrb[0].mxu0
    %5779 = vdwg.mxu0
    %5780 = vmatprep.subr.bf16.mxu0 %v5678
    %5781 = vmatpush1.bf16.msra.mxu0 %v5677
    %5782 = vmatprep.subr.bf16.mxu0 %v5682
    %5783 = vmatpush1.bf16.msra.mxu0 %v5681
    %5784 = vmatprep.subr.bf16.mxu0 %v5686
    %5785 = vmatpush1.bf16.msra.mxu0 %v5685
    %5786 = vmatprep.subr.bf16.mxu0 %v5690
    %5787 = vmatpush1.bf16.msra.mxu0 %v5689
    %5788 = vmatprep.subr.bf16.mxu0 %v5694
    %5789 = vmatpush1.bf16.msra.mxu0 %v5693
    %5790 = vmatprep.subr.bf16.mxu0 %v5698
    %5791 = vmatpush1.bf16.msra.mxu0 %v5697
    %5792 = vmatprep.subr.bf16.mxu0 %v5702
    %5793 = vmatpush1.bf16.msra.mxu0 %v5701
    %5794 = vmatprep.subr.bf16.mxu0 %v5706
    %5795 = vmatpush1.bf16.msra.mxu0 %v5705
    %5796 = vmatprep.subr.bf16.mxu0 0
    %5797 = vmatpush1.bf16.msra.mxu0 0
    %5798 = vmatprep.subr.bf16.mxu0 0
    %5799 = vmatpush1.bf16.msra.mxu0 0
    %5800 = vmatprep.subr.bf16.mxu0 0
    %5801 = vmatpush1.bf16.msra.mxu0 0
    %5802 = vmatprep.subr.bf16.mxu0 0
    %5803 = vmatpush1.bf16.msra.mxu0 0
    %5804 = vmatprep.subr.bf16.mxu0 0
    %5805 = vmatpush1.bf16.msra.mxu0 0
    %5806 = vmatprep.subr.bf16.mxu0 0
    %5807 = vmatpush1.bf16.msra.mxu0 0
    %5808 = vmatprep.subr.bf16.mxu0 0
    %5809 = vmatpush1.bf16.msra.mxu0 0
    %5810 = vmatprep.subr.bf16.mxu0 0
    %5811 = vmatpush1.bf16.msra.mxu0 0
    %5812 = vmatprep.mubr.bf16.mxu0 0
    %5813 = vmatmul.mubr.bf16.gmra.mrb[0].mxu0 %v5577
    %v5814 = vpop.f32.mrb[0].mxu0
    %v5815 = vadd.f32 0.0, %v5814
    %v5816 = vpop.f32.mrb[0].mxu0
    %v5817 = vadd.f32 0.0, %v5816
    %v5818 = vpop.f32.mrb[0].mxu0
    %v5819 = vpop.f32.mrb[0].mxu0
    %5820 = vdwg.mxu0
    %v5825 = vrot.slane %v5774, 2
    %v5826 = vrot.slane %v5776, 2
    %v5827 = vrot.slane %v5815, 2
    %v5828 = vrot.slane %v5817, 2
    %v5833 = vadd.f32 %v5539, %v5825
    %v5834 = vadd.f32 %v5540, %v5826
    %v5835 = vadd.f32 %v5541, %v5827
    %v5836 = vadd.f32 %v5542, %v5828
    %v5837 = vxor.u32 %v5833, 2147483648
    %v5838 = vmul.f32 %v5837, 1.442695
    %v5839 = vpow.pop %v5838
    %v5840 = vadd.f32 %v5839, 1.0
    %v5841 = vrcp.pop %v5840
    %v5842 = vmul.f32 1.0, %v5841
    %v5843 = vxor.u32 %v5834, 2147483648
    %v5844 = vmul.f32 %v5843, 1.442695
    %v5845 = vpow.pop %v5844
    %v5846 = vadd.f32 %v5845, 1.0
    %v5847 = vrcp.pop %v5846
    %v5848 = vmul.f32 1.0, %v5847
    %v5849 = vtanh.pop %v5835
    %v5850 = vxor.u32 %v5836, 2147483648
    %v5851 = vmul.f32 %v5850, 1.442695
    %v5852 = vpow.pop %v5851
    %v5853 = vadd.f32 %v5852, 1.0
    %v5854 = vrcp.pop %v5853
    %v5855 = vmul.f32 1.0, %v5854
    %v5857 = vrot.slane %v4883, 6
    %v5859 = vmul.f32 %v5848, %v5857
    %v5860 = vmul.f32 %v5842, %v5849
    %v5861 = vadd.f32 %v5859, %v5860
    %v5862 = vtanh.pop %v5861
    %v5863 = vmul.f32 %v5855, %v5862
    %v5864 = vld [vmem:[#allocation3] sm:$0xc0]
    %v5865 = vld [vmem:[#allocation3 + $0x8] sm:$0xc0]
    %v5866 = vld [vmem:[#allocation3 + $0x10] sm:$0xc0]
    %v5867 = vld [vmem:[#allocation3 + $0x18] sm:$0xc0]
    %v5868 = vpack.c.bf16 %v5210, %v5210
    %v5869 = vld [vmem:[#allocation31] sm:$0xff]
    %v5870 = vld [vmem:[#allocation31 + $0x8] sm:$0xff]
    %v5871 = vld [vmem:[#allocation31 + $0x10] sm:$0xff]
    %v5872 = vld [vmem:[#allocation31 + $0x18] sm:$0xff]
    %v5873 = vld [vmem:[#allocation31 + $0x20] sm:$0xff]
    %v5874 = vld [vmem:[#allocation31 + $0x28] sm:$0xff]
    %v5875 = vld [vmem:[#allocation31 + $0x30] sm:$0xff]
    %v5876 = vld [vmem:[#allocation31 + $0x38] sm:$0xff]
    %v5877 = vld [vmem:[#allocation31 + $0x40] sm:$0xff]
    %v5878 = vld [vmem:[#allocation31 + $0x48] sm:$0xff]
    %v5879 = vld [vmem:[#allocation31 + $0x50] sm:$0xff]
    %v5880 = vld [vmem:[#allocation31 + $0x58] sm:$0xff]
    %v5881 = vld [vmem:[#allocation31 + $0x60] sm:$0xff]
    %v5882 = vld [vmem:[#allocation31 + $0x68] sm:$0xff]
    %v5883 = vld [vmem:[#allocation31 + $0x70] sm:$0xff]
    %v5884 = vld [vmem:[#allocation31 + $0x78] sm:$0xff]
    %v5885 = vld [vmem:[#allocation31 + $0x80] sm:$0xff]
    %v5886 = vld [vmem:[#allocation31 + $0x88] sm:$0xff]
    %v5887 = vld [vmem:[#allocation31 + $0x90] sm:$0xff]
    %v5888 = vld [vmem:[#allocation31 + $0x98] sm:$0xff]
    %v5889 = vld [vmem:[#allocation31 + $0xa0] sm:$0xff]
    %v5890 = vld [vmem:[#allocation31 + $0xa8] sm:$0xff]
    %v5891 = vld [vmem:[#allocation31 + $0xb0] sm:$0xff]
    %v5892 = vld [vmem:[#allocation31 + $0xb8] sm:$0xff]
    %v5893 = vld [vmem:[#allocation31 + $0xc0] sm:$0xff]
    %v5894 = vld [vmem:[#allocation31 + $0xc8] sm:$0xff]
    %v5895 = vld [vmem:[#allocation31 + $0xd0] sm:$0xff]
    %v5896 = vld [vmem:[#allocation31 + $0xd8] sm:$0xff]
    %v5897 = vld [vmem:[#allocation31 + $0xe0] sm:$0xff]
    %v5898 = vld [vmem:[#allocation31 + $0xe8] sm:$0xff]
    %v5899 = vld [vmem:[#allocation31 + $0xf0] sm:$0xff]
    %v5900 = vld [vmem:[#allocation31 + $0xf8] sm:$0xff]
    %v5902 = vrot.slane %v5868, 2
    %v5936 = vunpack.c.l.b16 %v5869
    %v5937 = vunpack.c.h.b16 %v5869
    %v5938 = vunpack.c.l.b16 %v5870
    %v5939 = vunpack.c.h.b16 %v5870
    %v5940 = vunpack.c.l.b16 %v5871
    %v5941 = vunpack.c.h.b16 %v5871
    %v5942 = vunpack.c.l.b16 %v5872
    %v5943 = vunpack.c.h.b16 %v5872
    %v5944 = vunpack.c.l.b16 %v5873
    %v5945 = vunpack.c.h.b16 %v5873
    %v5946 = vunpack.c.l.b16 %v5874
    %v5947 = vunpack.c.h.b16 %v5874
    %v5948 = vunpack.c.l.b16 %v5875
    %v5949 = vunpack.c.h.b16 %v5875
    %v5950 = vunpack.c.l.b16 %v5876
    %v5951 = vunpack.c.h.b16 %v5876
    %v5952 = vunpack.c.l.b16 %v5877
    %v5953 = vunpack.c.h.b16 %v5877
    %v5954 = vunpack.c.l.b16 %v5878
    %v5955 = vunpack.c.h.b16 %v5878
    %v5956 = vunpack.c.l.b16 %v5879
    %v5957 = vunpack.c.h.b16 %v5879
    %v5958 = vunpack.c.l.b16 %v5880
    %v5959 = vunpack.c.h.b16 %v5880
    %v5960 = vunpack.c.l.b16 %v5881
    %v5961 = vunpack.c.h.b16 %v5881
    %v5962 = vunpack.c.l.b16 %v5882
    %v5963 = vunpack.c.h.b16 %v5882
    %v5964 = vunpack.c.l.b16 %v5883
    %v5965 = vunpack.c.h.b16 %v5883
    %v5966 = vunpack.c.l.b16 %v5884
    %v5967 = vunpack.c.h.b16 %v5884
    %v5968 = vunpack.c.l.b16 %v5885
    %v5969 = vunpack.c.h.b16 %v5885
    %v5970 = vunpack.c.l.b16 %v5886
    %v5971 = vunpack.c.h.b16 %v5886
    %v5972 = vunpack.c.l.b16 %v5887
    %v5973 = vunpack.c.h.b16 %v5887
    %v5974 = vunpack.c.l.b16 %v5888
    %v5975 = vunpack.c.h.b16 %v5888
    %v5976 = vunpack.c.l.b16 %v5889
    %v5977 = vunpack.c.h.b16 %v5889
    %v5978 = vunpack.c.l.b16 %v5890
    %v5979 = vunpack.c.h.b16 %v5890
    %v5980 = vunpack.c.l.b16 %v5891
    %v5981 = vunpack.c.h.b16 %v5891
    %v5982 = vunpack.c.l.b16 %v5892
    %v5983 = vunpack.c.h.b16 %v5892
    %v5984 = vunpack.c.l.b16 %v5893
    %v5985 = vunpack.c.h.b16 %v5893
    %v5986 = vunpack.c.l.b16 %v5894
    %v5987 = vunpack.c.h.b16 %v5894
    %v5988 = vunpack.c.l.b16 %v5895
    %v5989 = vunpack.c.h.b16 %v5895
    %v5990 = vunpack.c.l.b16 %v5896
    %v5991 = vunpack.c.h.b16 %v5896
    %v5992 = vunpack.c.l.b16 %v5897
    %v5993 = vunpack.c.h.b16 %v5897
    %v5994 = vunpack.c.l.b16 %v5898
    %v5995 = vunpack.c.h.b16 %v5898
    %v5996 = vunpack.c.l.b16 %v5899
    %v5997 = vunpack.c.h.b16 %v5899
    %v5998 = vunpack.c.l.b16 %v5900
    %v5999 = vunpack.c.h.b16 %v5900
    %v6000 = vpack.c.b16 %v5940, %v5936
    %v6001 = vpack.c.b16 %v5941, %v5937
    %v6002 = vpack.c.b16 %v5942, %v5938
    %v6003 = vpack.c.b16 %v5943, %v5939
    %v6004 = vpack.c.b16 %v5948, %v5944
    %v6005 = vpack.c.b16 %v5949, %v5945
    %v6006 = vpack.c.b16 %v5950, %v5946
    %v6007 = vpack.c.b16 %v5951, %v5947
    %v6008 = vpack.c.b16 %v5956, %v5952
    %v6009 = vpack.c.b16 %v5957, %v5953
    %v6010 = vpack.c.b16 %v5958, %v5954
    %v6011 = vpack.c.b16 %v5959, %v5955
    %v6012 = vpack.c.b16 %v5964, %v5960
    %v6013 = vpack.c.b16 %v5965, %v5961
    %v6014 = vpack.c.b16 %v5966, %v5962
    %v6015 = vpack.c.b16 %v5967, %v5963
    %v6016 = vpack.c.b16 %v5972, %v5968
    %v6017 = vpack.c.b16 %v5973, %v5969
    %v6018 = vpack.c.b16 %v5974, %v5970
    %v6019 = vpack.c.b16 %v5975, %v5971
    %v6020 = vpack.c.b16 %v5980, %v5976
    %v6021 = vpack.c.b16 %v5981, %v5977
    %v6022 = vpack.c.b16 %v5982, %v5978
    %v6023 = vpack.c.b16 %v5983, %v5979
    %v6024 = vpack.c.b16 %v5988, %v5984
    %v6025 = vpack.c.b16 %v5989, %v5985
    %v6026 = vpack.c.b16 %v5990, %v5986
    %v6027 = vpack.c.b16 %v5991, %v5987
    %v6028 = vpack.c.b16 %v5996, %v5992
    %v6029 = vpack.c.b16 %v5997, %v5993
    %v6030 = vpack.c.b16 %v5998, %v5994
    %v6031 = vpack.c.b16 %v5999, %v5995
    %6064 = vmatprep.subr.bf16.mxu0 %v6001
    %6065 = vmatpush1.bf16.msra.mxu0 %v6000
    %6066 = vmatprep.subr.bf16.mxu0 %v6005
    %6067 = vmatpush1.bf16.msra.mxu0 %v6004
    %6068 = vmatprep.subr.bf16.mxu0 %v6009
    %6069 = vmatpush1.bf16.msra.mxu0 %v6008
    %6070 = vmatprep.subr.bf16.mxu0 %v6013
    %6071 = vmatpush1.bf16.msra.mxu0 %v6012
    %6072 = vmatprep.subr.bf16.mxu0 %v6017
    %6073 = vmatpush1.bf16.msra.mxu0 %v6016
    %6074 = vmatprep.subr.bf16.mxu0 %v6021
    %6075 = vmatpush1.bf16.msra.mxu0 %v6020
    %6076 = vmatprep.subr.bf16.mxu0 %v6025
    %6077 = vmatpush1.bf16.msra.mxu0 %v6024
    %6078 = vmatprep.subr.bf16.mxu0 %v6029
    %6079 = vmatpush1.bf16.msra.mxu0 %v6028
    %6080 = vmatprep.subr.bf16.mxu0 0
    %6081 = vmatpush1.bf16.msra.mxu0 0
    %6082 = vmatprep.subr.bf16.mxu0 0
    %6083 = vmatpush1.bf16.msra.mxu0 0
    %6084 = vmatprep.subr.bf16.mxu0 0
    %6085 = vmatpush1.bf16.msra.mxu0 0
    %6086 = vmatprep.subr.bf16.mxu0 0
    %6087 = vmatpush1.bf16.msra.mxu0 0
    %6088 = vmatprep.subr.bf16.mxu0 0
    %6089 = vmatpush1.bf16.msra.mxu0 0
    %6090 = vmatprep.subr.bf16.mxu0 0
    %6091 = vmatpush1.bf16.msra.mxu0 0
    %6092 = vmatprep.subr.bf16.mxu0 0
    %6093 = vmatpush1.bf16.msra.mxu0 0
    %6094 = vmatprep.subr.bf16.mxu0 0
    %6095 = vmatpush1.bf16.msra.mxu0 0
    %6096 = vmatprep.mubr.bf16.mxu0 0
    %6097 = vmatmul.mubr.bf16.gmra.mrb[0].mxu0 %v5902
    %v6098 = vpop.f32.mrb[0].mxu0
    %v6099 = vadd.f32 0.0, %v6098
    %v6100 = vpop.f32.mrb[0].mxu0
    %v6101 = vadd.f32 0.0, %v6100
    %v6102 = vpop.f32.mrb[0].mxu0
    %v6103 = vpop.f32.mrb[0].mxu0
    %6104 = vdwg.mxu0
    %6105 = vmatprep.subr.bf16.mxu0 %v6003
    %6106 = vmatpush1.bf16.msra.mxu0 %v6002
    %6107 = vmatprep.subr.bf16.mxu0 %v6007
    %6108 = vmatpush1.bf16.msra.mxu0 %v6006
    %6109 = vmatprep.subr.bf16.mxu0 %v6011
    %6110 = vmatpush1.bf16.msra.mxu0 %v6010
    %6111 = vmatprep.subr.bf16.mxu0 %v6015
    %6112 = vmatpush1.bf16.msra.mxu0 %v6014
    %6113 = vmatprep.subr.bf16.mxu0 %v6019
    %6114 = vmatpush1.bf16.msra.mxu0 %v6018
    %6115 = vmatprep.subr.bf16.mxu0 %v6023
    %6116 = vmatpush1.bf16.msra.mxu0 %v6022
    %6117 = vmatprep.subr.bf16.mxu0 %v6027
    %6118 = vmatpush1.bf16.msra.mxu0 %v6026
    %6119 = vmatprep.subr.bf16.mxu0 %v6031
    %6120 = vmatpush1.bf16.msra.mxu0 %v6030
    %6121 = vmatprep.subr.bf16.mxu0 0
    %6122 = vmatpush1.bf16.msra.mxu0 0
    %6123 = vmatprep.subr.bf16.mxu0 0
    %6124 = vmatpush1.bf16.msra.mxu0 0
    %6125 = vmatprep.subr.bf16.mxu0 0
    %6126 = vmatpush1.bf16.msra.mxu0 0
    %6127 = vmatprep.subr.bf16.mxu0 0
    %6128 = vmatpush1.bf16.msra.mxu0 0
    %6129 = vmatprep.subr.bf16.mxu0 0
    %6130 = vmatpush1.bf16.msra.mxu0 0
    %6131 = vmatprep.subr.bf16.mxu0 0
    %6132 = vmatpush1.bf16.msra.mxu0 0
    %6133 = vmatprep.subr.bf16.mxu0 0
    %6134 = vmatpush1.bf16.msra.mxu0 0
    %6135 = vmatprep.subr.bf16.mxu0 0
    %6136 = vmatpush1.bf16.msra.mxu0 0
    %6137 = vmatprep.mubr.bf16.mxu0 0
    %6138 = vmatmul.mubr.bf16.gmra.mrb[0].mxu0 %v5902
    %v6139 = vpop.f32.mrb[0].mxu0
    %v6140 = vadd.f32 0.0, %v6139
    %v6141 = vpop.f32.mrb[0].mxu0
    %v6142 = vadd.f32 0.0, %v6141
    %v6143 = vpop.f32.mrb[0].mxu0
    %v6144 = vpop.f32.mrb[0].mxu0
    %6145 = vdwg.mxu0
    %v6150 = vrot.slane %v6099, 2
    %v6151 = vrot.slane %v6101, 2
    %v6152 = vrot.slane %v6140, 2
    %v6153 = vrot.slane %v6142, 2
    %v6158 = vadd.f32 %v5864, %v6150
    %v6159 = vadd.f32 %v5865, %v6151
    %v6160 = vadd.f32 %v5866, %v6152
    %v6161 = vadd.f32 %v5867, %v6153
    %v6162 = vxor.u32 %v6158, 2147483648
    %v6163 = vmul.f32 %v6162, 1.442695
    %v6164 = vpow.pop %v6163
    %v6165 = vadd.f32 %v6164, 1.0
    %v6166 = vrcp.pop %v6165
    %v6167 = vmul.f32 1.0, %v6166
    %v6168 = vxor.u32 %v6159, 2147483648
    %v6169 = vmul.f32 %v6168, 1.442695
    %v6170 = vpow.pop %v6169
    %v6171 = vadd.f32 %v6170, 1.0
    %v6172 = vrcp.pop %v6171
    %v6173 = vmul.f32 1.0, %v6172
    %v6174 = vtanh.pop %v6160
    %v6175 = vxor.u32 %v6161, 2147483648
    %v6176 = vmul.f32 %v6175, 1.442695
    %v6177 = vpow.pop %v6176
    %v6178 = vadd.f32 %v6177, 1.0
    %v6179 = vrcp.pop %v6178
    %v6180 = vmul.f32 1.0, %v6179
    %v6182 = vrot.slane %v5208, 6
    %v6184 = vmul.f32 %v6173, %v6182
    %v6185 = vmul.f32 %v6167, %v6174
    %v6186 = vadd.f32 %v6184, %v6185
    %v6187 = vtanh.pop %v6186
    %v6188 = vmul.f32 %v6180, %v6187
    %v6189 = vld [vmem:[#allocation4] sm:$0xc0]
    %v6190 = vld [vmem:[#allocation4 + $0x8] sm:$0xc0]
    %v6191 = vld [vmem:[#allocation4 + $0x10] sm:$0xc0]
    %v6192 = vld [vmem:[#allocation4 + $0x18] sm:$0xc0]
    %v6193 = vpack.c.bf16 %v5535, %v5535
    %v6194 = vld [vmem:[#allocation42] sm:$0xff]
    %v6195 = vld [vmem:[#allocation42 + $0x8] sm:$0xff]
    %v6196 = vld [vmem:[#allocation42 + $0x10] sm:$0xff]
    %v6197 = vld [vmem:[#allocation42 + $0x18] sm:$0xff]
    %v6198 = vld [vmem:[#allocation42 + $0x20] sm:$0xff]
    %v6199 = vld [vmem:[#allocation42 + $0x28] sm:$0xff]
    %v6200 = vld [vmem:[#allocation42 + $0x30] sm:$0xff]
    %v6201 = vld [vmem:[#allocation42 + $0x38] sm:$0xff]
    %v6202 = vld [vmem:[#allocation42 + $0x40] sm:$0xff]
    %v6203 = vld [vmem:[#allocation42 + $0x48] sm:$0xff]
    %v6204 = vld [vmem:[#allocation42 + $0x50] sm:$0xff]
    %v6205 = vld [vmem:[#allocation42 + $0x58] sm:$0xff]
    %v6206 = vld [vmem:[#allocation42 + $0x60] sm:$0xff]
    %v6207 = vld [vmem:[#allocation42 + $0x68] sm:$0xff]
    %v6208 = vld [vmem:[#allocation42 + $0x70] sm:$0xff]
    %v6209 = vld [vmem:[#allocation42 + $0x78] sm:$0xff]
    %v6210 = vld [vmem:[#allocation42 + $0x80] sm:$0xff]
    %v6211 = vld [vmem:[#allocation42 + $0x88] sm:$0xff]
    %v6212 = vld [vmem:[#allocation42 + $0x90] sm:$0xff]
    %v6213 = vld [vmem:[#allocation42 + $0x98] sm:$0xff]
    %v6214 = vld [vmem:[#allocation42 + $0xa0] sm:$0xff]
    %v6215 = vld [vmem:[#allocation42 + $0xa8] sm:$0xff]
    %v6216 = vld [vmem:[#allocation42 + $0xb0] sm:$0xff]
    %v6217 = vld [vmem:[#allocation42 + $0xb8] sm:$0xff]
    %v6218 = vld [vmem:[#allocation42 + $0xc0] sm:$0xff]
    %v6219 = vld [vmem:[#allocation42 + $0xc8] sm:$0xff]
    %v6220 = vld [vmem:[#allocation42 + $0xd0] sm:$0xff]
    %v6221 = vld [vmem:[#allocation42 + $0xd8] sm:$0xff]
    %v6222 = vld [vmem:[#allocation42 + $0xe0] sm:$0xff]
    %v6223 = vld [vmem:[#allocation42 + $0xe8] sm:$0xff]
    %v6224 = vld [vmem:[#allocation42 + $0xf0] sm:$0xff]
    %v6225 = vld [vmem:[#allocation42 + $0xf8] sm:$0xff]
    %v6227 = vrot.slane %v6193, 2
    %v6261 = vunpack.c.l.b16 %v6194
    %v6262 = vunpack.c.h.b16 %v6194
    %v6263 = vunpack.c.l.b16 %v6195
    %v6264 = vunpack.c.h.b16 %v6195
    %v6265 = vunpack.c.l.b16 %v6196
    %v6266 = vunpack.c.h.b16 %v6196
    %v6267 = vunpack.c.l.b16 %v6197
    %v6268 = vunpack.c.h.b16 %v6197
    %v6269 = vunpack.c.l.b16 %v6198
    %v6270 = vunpack.c.h.b16 %v6198
    %v6271 = vunpack.c.l.b16 %v6199
    %v6272 = vunpack.c.h.b16 %v6199
    %v6273 = vunpack.c.l.b16 %v6200
    %v6274 = vunpack.c.h.b16 %v6200
    %v6275 = vunpack.c.l.b16 %v6201
    %v6276 = vunpack.c.h.b16 %v6201
    %v6277 = vunpack.c.l.b16 %v6202
    %v6278 = vunpack.c.h.b16 %v6202
    %v6279 = vunpack.c.l.b16 %v6203
    %v6280 = vunpack.c.h.b16 %v6203
    %v6281 = vunpack.c.l.b16 %v6204
    %v6282 = vunpack.c.h.b16 %v6204
    %v6283 = vunpack.c.l.b16 %v6205
    %v6284 = vunpack.c.h.b16 %v6205
    %v6285 = vunpack.c.l.b16 %v6206
    %v6286 = vunpack.c.h.b16 %v6206
    %v6287 = vunpack.c.l.b16 %v6207
    %v6288 = vunpack.c.h.b16 %v6207
    %v6289 = vunpack.c.l.b16 %v6208
    %v6290 = vunpack.c.h.b16 %v6208
    %v6291 = vunpack.c.l.b16 %v6209
    %v6292 = vunpack.c.h.b16 %v6209
    %v6293 = vunpack.c.l.b16 %v6210
    %v6294 = vunpack.c.h.b16 %v6210
    %v6295 = vunpack.c.l.b16 %v6211
    %v6296 = vunpack.c.h.b16 %v6211
    %v6297 = vunpack.c.l.b16 %v6212
    %v6298 = vunpack.c.h.b16 %v6212
    %v6299 = vunpack.c.l.b16 %v6213
    %v6300 = vunpack.c.h.b16 %v6213
    %v6301 = vunpack.c.l.b16 %v6214
    %v6302 = vunpack.c.h.b16 %v6214
    %v6303 = vunpack.c.l.b16 %v6215
    %v6304 = vunpack.c.h.b16 %v6215
    %v6305 = vunpack.c.l.b16 %v6216
    %v6306 = vunpack.c.h.b16 %v6216
    %v6307 = vunpack.c.l.b16 %v6217
    %v6308 = vunpack.c.h.b16 %v6217
    %v6309 = vunpack.c.l.b16 %v6218
    %v6310 = vunpack.c.h.b16 %v6218
    %v6311 = vunpack.c.l.b16 %v6219
    %v6312 = vunpack.c.h.b16 %v6219
    %v6313 = vunpack.c.l.b16 %v6220
    %v6314 = vunpack.c.h.b16 %v6220
    %v6315 = vunpack.c.l.b16 %v6221
    %v6316 = vunpack.c.h.b16 %v6221
    %v6317 = vunpack.c.l.b16 %v6222
    %v6318 = vunpack.c.h.b16 %v6222
    %v6319 = vunpack.c.l.b16 %v6223
    %v6320 = vunpack.c.h.b16 %v6223
    %v6321 = vunpack.c.l.b16 %v6224
    %v6322 = vunpack.c.h.b16 %v6224
    %v6323 = vunpack.c.l.b16 %v6225
    %v6324 = vunpack.c.h.b16 %v6225
    %v6325 = vpack.c.b16 %v6265, %v6261
    %v6326 = vpack.c.b16 %v6266, %v6262
    %v6327 = vpack.c.b16 %v6267, %v6263
    %v6328 = vpack.c.b16 %v6268, %v6264
    %v6329 = vpack.c.b16 %v6273, %v6269
    %v6330 = vpack.c.b16 %v6274, %v6270
    %v6331 = vpack.c.b16 %v6275, %v6271
    %v6332 = vpack.c.b16 %v6276, %v6272
    %v6333 = vpack.c.b16 %v6281, %v6277
    %v6334 = vpack.c.b16 %v6282, %v6278
    %v6335 = vpack.c.b16 %v6283, %v6279
    %v6336 = vpack.c.b16 %v6284, %v6280
    %v6337 = vpack.c.b16 %v6289, %v6285
    %v6338 = vpack.c.b16 %v6290, %v6286
    %v6339 = vpack.c.b16 %v6291, %v6287
    %v6340 = vpack.c.b16 %v6292, %v6288
    %v6341 = vpack.c.b16 %v6297, %v6293
    %v6342 = vpack.c.b16 %v6298, %v6294
    %v6343 = vpack.c.b16 %v6299, %v6295
    %v6344 = vpack.c.b16 %v6300, %v6296
    %v6345 = vpack.c.b16 %v6305, %v6301
    %v6346 = vpack.c.b16 %v6306, %v6302
    %v6347 = vpack.c.b16 %v6307, %v6303
    %v6348 = vpack.c.b16 %v6308, %v6304
    %v6349 = vpack.c.b16 %v6313, %v6309
    %v6350 = vpack.c.b16 %v6314, %v6310
    %v6351 = vpack.c.b16 %v6315, %v6311
    %v6352 = vpack.c.b16 %v6316, %v6312
    %v6353 = vpack.c.b16 %v6321, %v6317
    %v6354 = vpack.c.b16 %v6322, %v6318
    %v6355 = vpack.c.b16 %v6323, %v6319
    %v6356 = vpack.c.b16 %v6324, %v6320
    %6389 = vmatprep.subr.bf16.mxu0 %v6326
    %6390 = vmatpush1.bf16.msra.mxu0 %v6325
    %6391 = vmatprep.subr.bf16.mxu0 %v6330
    %6392 = vmatpush1.bf16.msra.mxu0 %v6329
    %6393 = vmatprep.subr.bf16.mxu0 %v6334
    %6394 = vmatpush1.bf16.msra.mxu0 %v6333
    %6395 = vmatprep.subr.bf16.mxu0 %v6338
    %6396 = vmatpush1.bf16.msra.mxu0 %v6337
    %6397 = vmatprep.subr.bf16.mxu0 %v6342
    %6398 = vmatpush1.bf16.msra.mxu0 %v6341
    %6399 = vmatprep.subr.bf16.mxu0 %v6346
    %6400 = vmatpush1.bf16.msra.mxu0 %v6345
    %6401 = vmatprep.subr.bf16.mxu0 %v6350
    %6402 = vmatpush1.bf16.msra.mxu0 %v6349
    %6403 = vmatprep.subr.bf16.mxu0 %v6354
    %6404 = vmatpush1.bf16.msra.mxu0 %v6353
    %6405 = vmatprep.subr.bf16.mxu0 0
    %6406 = vmatpush1.bf16.msra.mxu0 0
    %6407 = vmatprep.subr.bf16.mxu0 0
    %6408 = vmatpush1.bf16.msra.mxu0 0
    %6409 = vmatprep.subr.bf16.mxu0 0
    %6410 = vmatpush1.bf16.msra.mxu0 0
    %6411 = vmatprep.subr.bf16.mxu0 0
    %6412 = vmatpush1.bf16.msra.mxu0 0
    %6413 = vmatprep.subr.bf16.mxu0 0
    %6414 = vmatpush1.bf16.msra.mxu0 0
    %6415 = vmatprep.subr.bf16.mxu0 0
    %6416 = vmatpush1.bf16.msra.mxu0 0
    %6417 = vmatprep.subr.bf16.mxu0 0
    %6418 = vmatpush1.bf16.msra.mxu0 0
    %6419 = vmatprep.subr.bf16.mxu0 0
    %6420 = vmatpush1.bf16.msra.mxu0 0
    %6421 = vmatprep.mubr.bf16.mxu0 0
    %6422 = vmatmul.mubr.bf16.gmra.mrb[0].mxu0 %v6227
    %v6423 = vpop.f32.mrb[0].mxu0
    %v6424 = vadd.f32 0.0, %v6423
    %v6425 = vpop.f32.mrb[0].mxu0
    %v6426 = vadd.f32 0.0, %v6425
    %v6427 = vpop.f32.mrb[0].mxu0
    %v6428 = vpop.f32.mrb[0].mxu0
    %6429 = vdwg.mxu0
    %6430 = vmatprep.subr.bf16.mxu0 %v6328
    %6431 = vmatpush1.bf16.msra.mxu0 %v6327
    %6432 = vmatprep.subr.bf16.mxu0 %v6332
    %6433 = vmatpush1.bf16.msra.mxu0 %v6331
    %6434 = vmatprep.subr.bf16.mxu0 %v6336
    %6435 = vmatpush1.bf16.msra.mxu0 %v6335
    %6436 = vmatprep.subr.bf16.mxu0 %v6340
    %6437 = vmatpush1.bf16.msra.mxu0 %v6339
    %6438 = vmatprep.subr.bf16.mxu0 %v6344
    %6439 = vmatpush1.bf16.msra.mxu0 %v6343
    %6440 = vmatprep.subr.bf16.mxu0 %v6348
    %6441 = vmatpush1.bf16.msra.mxu0 %v6347
    %6442 = vmatprep.subr.bf16.mxu0 %v6352
    %6443 = vmatpush1.bf16.msra.mxu0 %v6351
    %6444 = vmatprep.subr.bf16.mxu0 %v6356
    %6445 = vmatpush1.bf16.msra.mxu0 %v6355
    %6446 = vmatprep.subr.bf16.mxu0 0
    %6447 = vmatpush1.bf16.msra.mxu0 0
    %6448 = vmatprep.subr.bf16.mxu0 0
    %6449 = vmatpush1.bf16.msra.mxu0 0
    %6450 = vmatprep.subr.bf16.mxu0 0
    %6451 = vmatpush1.bf16.msra.mxu0 0
    %6452 = vmatprep.subr.bf16.mxu0 0
    %6453 = vmatpush1.bf16.msra.mxu0 0
    %6454 = vmatprep.subr.bf16.mxu0 0
    %6455 = vmatpush1.bf16.msra.mxu0 0
    %6456 = vmatprep.subr.bf16.mxu0 0
    %6457 = vmatpush1.bf16.msra.mxu0 0
    %6458 = vmatprep.subr.bf16.mxu0 0
    %6459 = vmatpush1.bf16.msra.mxu0 0
    %6460 = vmatprep.subr.bf16.mxu0 0
    %6461 = vmatpush1.bf16.msra.mxu0 0
    %6462 = vmatprep.mubr.bf16.mxu0 0
    %6463 = vmatmul.mubr.bf16.gmra.mrb[0].mxu0 %v6227
    %v6464 = vpop.f32.mrb[0].mxu0
    %v6465 = vadd.f32 0.0, %v6464
    %v6466 = vpop.f32.mrb[0].mxu0
    %v6467 = vadd.f32 0.0, %v6466
    %v6468 = vpop.f32.mrb[0].mxu0
    %v6469 = vpop.f32.mrb[0].mxu0
    %6470 = vdwg.mxu0
    %v6475 = vrot.slane %v6424, 2
    %v6476 = vrot.slane %v6426, 2
    %v6477 = vrot.slane %v6465, 2
    %v6478 = vrot.slane %v6467, 2
    %v6483 = vadd.f32 %v6189, %v6475
    %v6484 = vadd.f32 %v6190, %v6476
    %v6485 = vadd.f32 %v6191, %v6477
    %v6486 = vadd.f32 %v6192, %v6478
    %v6487 = vxor.u32 %v6483, 2147483648
    %v6488 = vmul.f32 %v6487, 1.442695
    %v6489 = vpow.pop %v6488
    %v6490 = vadd.f32 %v6489, 1.0
    %v6491 = vrcp.pop %v6490
    %v6492 = vmul.f32 1.0, %v6491
    %v6493 = vxor.u32 %v6484, 2147483648
    %v6494 = vmul.f32 %v6493, 1.442695
    %v6495 = vpow.pop %v6494
    %v6496 = vadd.f32 %v6495, 1.0
    %v6497 = vrcp.pop %v6496
    %v6498 = vmul.f32 1.0, %v6497
    %v6499 = vtanh.pop %v6485
    %v6500 = vxor.u32 %v6486, 2147483648
    %v6501 = vmul.f32 %v6500, 1.442695
    %v6502 = vpow.pop %v6501
    %v6503 = vadd.f32 %v6502, 1.0
    %v6504 = vrcp.pop %v6503
    %v6505 = vmul.f32 1.0, %v6504
    %v6507 = vrot.slane %v5533, 6
    %v6509 = vmul.f32 %v6498, %v6507
    %v6510 = vmul.f32 %v6492, %v6499
    %v6511 = vadd.f32 %v6509, %v6510
    %v6512 = vtanh.pop %v6511
    %v6513 = vmul.f32 %v6505, %v6512
    %6514 = vst [vmem:[#allocation6] sm:$0xc0] %v5863
    %6515 = vst [vmem:[#allocation7] sm:$0xc0] %v6188
    %6516 = vst [vmem:[#allocation8] sm:$0xc0] %v6513
    %v6517 = vld [vmem:[#allocation2 + $0x20] sm:$0x3]
    %v6518 = vld [vmem:[#allocation2 + $0x28] sm:$0x3]
    %v6519 = vld [vmem:[#allocation2 + $0x30] sm:$0x3]
    %v6520 = vld [vmem:[#allocation2 + $0x38] sm:$0x3]
    %v6521 = vpack.c.bf16 %v5863, %v5863
    %v6522 = vld [vmem:[#allocation21] sm:$0xff]
    %v6523 = vld [vmem:[#allocation21 + $0x8] sm:$0xff]
    %v6524 = vld [vmem:[#allocation21 + $0x10] sm:$0xff]
    %v6525 = vld [vmem:[#allocation21 + $0x18] sm:$0xff]
    %v6526 = vld [vmem:[#allocation21 + $0x20] sm:$0xff]
    %v6527 = vld [vmem:[#allocation21 + $0x28] sm:$0xff]
    %v6528 = vld [vmem:[#allocation21 + $0x30] sm:$0xff]
    %v6529 = vld [vmem:[#allocation21 + $0x38] sm:$0xff]
    %v6530 = vld [vmem:[#allocation21 + $0x40] sm:$0xff]
    %v6531 = vld [vmem:[#allocation21 + $0x48] sm:$0xff]
    %v6532 = vld [vmem:[#allocation21 + $0x50] sm:$0xff]
    %v6533 = vld [vmem:[#allocation21 + $0x58] sm:$0xff]
    %v6534 = vld [vmem:[#allocation21 + $0x60] sm:$0xff]
    %v6535 = vld [vmem:[#allocation21 + $0x68] sm:$0xff]
    %v6536 = vld [vmem:[#allocation21 + $0x70] sm:$0xff]
    %v6537 = vld [vmem:[#allocation21 + $0x78] sm:$0xff]
    %v6538 = vld [vmem:[#allocation21 + $0x80] sm:$0xff]
    %v6539 = vld [vmem:[#allocation21 + $0x88] sm:$0xff]
    %v6540 = vld [vmem:[#allocation21 + $0x90] sm:$0xff]
    %v6541 = vld [vmem:[#allocation21 + $0x98] sm:$0xff]
    %v6542 = vld [vmem:[#allocation21 + $0xa0] sm:$0xff]
    %v6543 = vld [vmem:[#allocation21 + $0xa8] sm:$0xff]
    %v6544 = vld [vmem:[#allocation21 + $0xb0] sm:$0xff]
    %v6545 = vld [vmem:[#allocation21 + $0xb8] sm:$0xff]
    %v6546 = vld [vmem:[#allocation21 + $0xc0] sm:$0xff]
    %v6547 = vld [vmem:[#allocation21 + $0xc8] sm:$0xff]
    %v6548 = vld [vmem:[#allocation21 + $0xd0] sm:$0xff]
    %v6549 = vld [vmem:[#allocation21 + $0xd8] sm:$0xff]
    %v6550 = vld [vmem:[#allocation21 + $0xe0] sm:$0xff]
    %v6551 = vld [vmem:[#allocation21 + $0xe8] sm:$0xff]
    %v6552 = vld [vmem:[#allocation21 + $0xf0] sm:$0xff]
    %v6553 = vld [vmem:[#allocation21 + $0xf8] sm:$0xff]
    %v6555 = vrot.slane %v6521, 3
    %v6589 = vunpack.c.l.b16 %v6522
    %v6590 = vunpack.c.h.b16 %v6522
    %v6591 = vunpack.c.l.b16 %v6523
    %v6592 = vunpack.c.h.b16 %v6523
    %v6593 = vunpack.c.l.b16 %v6524
    %v6594 = vunpack.c.h.b16 %v6524
    %v6595 = vunpack.c.l.b16 %v6525
    %v6596 = vunpack.c.h.b16 %v6525
    %v6597 = vunpack.c.l.b16 %v6526
    %v6598 = vunpack.c.h.b16 %v6526
    %v6599 = vunpack.c.l.b16 %v6527
    %v6600 = vunpack.c.h.b16 %v6527
    %v6601 = vunpack.c.l.b16 %v6528
    %v6602 = vunpack.c.h.b16 %v6528
    %v6603 = vunpack.c.l.b16 %v6529
    %v6604 = vunpack.c.h.b16 %v6529
    %v6605 = vunpack.c.l.b16 %v6530
    %v6606 = vunpack.c.h.b16 %v6530
    %v6607 = vunpack.c.l.b16 %v6531
    %v6608 = vunpack.c.h.b16 %v6531
    %v6609 = vunpack.c.l.b16 %v6532
    %v6610 = vunpack.c.h.b16 %v6532
    %v6611 = vunpack.c.l.b16 %v6533
    %v6612 = vunpack.c.h.b16 %v6533
    %v6613 = vunpack.c.l.b16 %v6534
    %v6614 = vunpack.c.h.b16 %v6534
    %v6615 = vunpack.c.l.b16 %v6535
    %v6616 = vunpack.c.h.b16 %v6535
    %v6617 = vunpack.c.l.b16 %v6536
    %v6618 = vunpack.c.h.b16 %v6536
    %v6619 = vunpack.c.l.b16 %v6537
    %v6620 = vunpack.c.h.b16 %v6537
    %v6621 = vunpack.c.l.b16 %v6538
    %v6622 = vunpack.c.h.b16 %v6538
    %v6623 = vunpack.c.l.b16 %v6539
    %v6624 = vunpack.c.h.b16 %v6539
    %v6625 = vunpack.c.l.b16 %v6540
    %v6626 = vunpack.c.h.b16 %v6540
    %v6627 = vunpack.c.l.b16 %v6541
    %v6628 = vunpack.c.h.b16 %v6541
    %v6629 = vunpack.c.l.b16 %v6542
    %v6630 = vunpack.c.h.b16 %v6542
    %v6631 = vunpack.c.l.b16 %v6543
    %v6632 = vunpack.c.h.b16 %v6543
    %v6633 = vunpack.c.l.b16 %v6544
    %v6634 = vunpack.c.h.b16 %v6544
    %v6635 = vunpack.c.l.b16 %v6545
    %v6636 = vunpack.c.h.b16 %v6545
    %v6637 = vunpack.c.l.b16 %v6546
    %v6638 = vunpack.c.h.b16 %v6546
    %v6639 = vunpack.c.l.b16 %v6547
    %v6640 = vunpack.c.h.b16 %v6547
    %v6641 = vunpack.c.l.b16 %v6548
    %v6642 = vunpack.c.h.b16 %v6548
    %v6643 = vunpack.c.l.b16 %v6549
    %v6644 = vunpack.c.h.b16 %v6549
    %v6645 = vunpack.c.l.b16 %v6550
    %v6646 = vunpack.c.h.b16 %v6550
    %v6647 = vunpack.c.l.b16 %v6551
    %v6648 = vunpack.c.h.b16 %v6551
    %v6649 = vunpack.c.l.b16 %v6552
    %v6650 = vunpack.c.h.b16 %v6552
    %v6651 = vunpack.c.l.b16 %v6553
    %v6652 = vunpack.c.h.b16 %v6553
    %v6653 = vpack.c.b16 %v6593, %v6589
    %v6654 = vpack.c.b16 %v6594, %v6590
    %v6655 = vpack.c.b16 %v6595, %v6591
    %v6656 = vpack.c.b16 %v6596, %v6592
    %v6657 = vpack.c.b16 %v6601, %v6597
    %v6658 = vpack.c.b16 %v6602, %v6598
    %v6659 = vpack.c.b16 %v6603, %v6599
    %v6660 = vpack.c.b16 %v6604, %v6600
    %v6661 = vpack.c.b16 %v6609, %v6605
    %v6662 = vpack.c.b16 %v6610, %v6606
    %v6663 = vpack.c.b16 %v6611, %v6607
    %v6664 = vpack.c.b16 %v6612, %v6608
    %v6665 = vpack.c.b16 %v6617, %v6613
    %v6666 = vpack.c.b16 %v6618, %v6614
    %v6667 = vpack.c.b16 %v6619, %v6615
    %v6668 = vpack.c.b16 %v6620, %v6616
    %v6669 = vpack.c.b16 %v6625, %v6621
    %v6670 = vpack.c.b16 %v6626, %v6622
    %v6671 = vpack.c.b16 %v6627, %v6623
    %v6672 = vpack.c.b16 %v6628, %v6624
    %v6673 = vpack.c.b16 %v6633, %v6629
    %v6674 = vpack.c.b16 %v6634, %v6630
    %v6675 = vpack.c.b16 %v6635, %v6631
    %v6676 = vpack.c.b16 %v6636, %v6632
    %v6677 = vpack.c.b16 %v6641, %v6637
    %v6678 = vpack.c.b16 %v6642, %v6638
    %v6679 = vpack.c.b16 %v6643, %v6639
    %v6680 = vpack.c.b16 %v6644, %v6640
    %v6681 = vpack.c.b16 %v6649, %v6645
    %v6682 = vpack.c.b16 %v6650, %v6646
    %v6683 = vpack.c.b16 %v6651, %v6647
    %v6684 = vpack.c.b16 %v6652, %v6648
    %6717 = vmatprep.subr.bf16.mxu0 %v6654
    %6718 = vmatpush1.bf16.msra.mxu0 %v6653
    %6719 = vmatprep.subr.bf16.mxu0 %v6658
    %6720 = vmatpush1.bf16.msra.mxu0 %v6657
    %6721 = vmatprep.subr.bf16.mxu0 %v6662
    %6722 = vmatpush1.bf16.msra.mxu0 %v6661
    %6723 = vmatprep.subr.bf16.mxu0 %v6666
    %6724 = vmatpush1.bf16.msra.mxu0 %v6665
    %6725 = vmatprep.subr.bf16.mxu0 %v6670
    %6726 = vmatpush1.bf16.msra.mxu0 %v6669
    %6727 = vmatprep.subr.bf16.mxu0 %v6674
    %6728 = vmatpush1.bf16.msra.mxu0 %v6673
    %6729 = vmatprep.subr.bf16.mxu0 %v6678
    %6730 = vmatpush1.bf16.msra.mxu0 %v6677
    %6731 = vmatprep.subr.bf16.mxu0 %v6682
    %6732 = vmatpush1.bf16.msra.mxu0 %v6681
    %6733 = vmatprep.subr.bf16.mxu0 0
    %6734 = vmatpush1.bf16.msra.mxu0 0
    %6735 = vmatprep.subr.bf16.mxu0 0
    %6736 = vmatpush1.bf16.msra.mxu0 0
    %6737 = vmatprep.subr.bf16.mxu0 0
    %6738 = vmatpush1.bf16.msra.mxu0 0
    %6739 = vmatprep.subr.bf16.mxu0 0
    %6740 = vmatpush1.bf16.msra.mxu0 0
    %6741 = vmatprep.subr.bf16.mxu0 0
    %6742 = vmatpush1.bf16.msra.mxu0 0
    %6743 = vmatprep.subr.bf16.mxu0 0
    %6744 = vmatpush1.bf16.msra.mxu0 0
    %6745 = vmatprep.subr.bf16.mxu0 0
    %6746 = vmatpush1.bf16.msra.mxu0 0
    %6747 = vmatprep.subr.bf16.mxu0 0
    %6748 = vmatpush1.bf16.msra.mxu0 0
    %6749 = vmatprep.mubr.bf16.mxu0 0
    %6750 = vmatmul.mubr.bf16.gmra.mrb[0].mxu0 %v6555
    %v6751 = vpop.f32.mrb[0].mxu0
    %v6752 = vadd.f32 0.0, %v6751
    %v6753 = vpop.f32.mrb[0].mxu0
    %v6754 = vadd.f32 0.0, %v6753
    %v6755 = vpop.f32.mrb[0].mxu0
    %v6756 = vpop.f32.mrb[0].mxu0
    %6757 = vdwg.mxu0
    %6758 = vmatprep.subr.bf16.mxu0 %v6656
    %6759 = vmatpush1.bf16.msra.mxu0 %v6655
    %6760 = vmatprep.subr.bf16.mxu0 %v6660
    %6761 = vmatpush1.bf16.msra.mxu0 %v6659
    %6762 = vmatprep.subr.bf16.mxu0 %v6664
    %6763 = vmatpush1.bf16.msra.mxu0 %v6663
    %6764 = vmatprep.subr.bf16.mxu0 %v6668
    %6765 = vmatpush1.bf16.msra.mxu0 %v6667
    %6766 = vmatprep.subr.bf16.mxu0 %v6672
    %6767 = vmatpush1.bf16.msra.mxu0 %v6671
    %6768 = vmatprep.subr.bf16.mxu0 %v6676
    %6769 = vmatpush1.bf16.msra.mxu0 %v6675
    %6770 = vmatprep.subr.bf16.mxu0 %v6680
    %6771 = vmatpush1.bf16.msra.mxu0 %v6679
    %6772 = vmatprep.subr.bf16.mxu0 %v6684
    %6773 = vmatpush1.bf16.msra.mxu0 %v6683
    %6774 = vmatprep.subr.bf16.mxu0 0
    %6775 = vmatpush1.bf16.msra.mxu0 0
    %6776 = vmatprep.subr.bf16.mxu0 0
    %6777 = vmatpush1.bf16.msra.mxu0 0
    %6778 = vmatprep.subr.bf16.mxu0 0
    %6779 = vmatpush1.bf16.msra.mxu0 0
    %6780 = vmatprep.subr.bf16.mxu0 0
    %6781 = vmatpush1.bf16.msra.mxu0 0
    %6782 = vmatprep.subr.bf16.mxu0 0
    %6783 = vmatpush1.bf16.msra.mxu0 0
    %6784 = vmatprep.subr.bf16.mxu0 0
    %6785 = vmatpush1.bf16.msra.mxu0 0
    %6786 = vmatprep.subr.bf16.mxu0 0
    %6787 = vmatpush1.bf16.msra.mxu0 0
    %6788 = vmatprep.subr.bf16.mxu0 0
    %6789 = vmatpush1.bf16.msra.mxu0 0
    %6790 = vmatprep.mubr.bf16.mxu0 0
    %6791 = vmatmul.mubr.bf16.gmra.mrb[0].mxu0 %v6555
    %v6792 = vpop.f32.mrb[0].mxu0
    %v6793 = vadd.f32 0.0, %v6792
    %v6794 = vpop.f32.mrb[0].mxu0
    %v6795 = vadd.f32 0.0, %v6794
    %v6796 = vpop.f32.mrb[0].mxu0
    %v6797 = vpop.f32.mrb[0].mxu0
    %6798 = vdwg.mxu0
    %v6799 = vadd.f32 %v6517, %v6752
    %v6800 = vadd.f32 %v6518, %v6754
    %v6801 = vadd.f32 %v6519, %v6793
    %v6802 = vadd.f32 %v6520, %v6795
    %v6803 = vxor.u32 %v6799, 2147483648
    %v6804 = vmul.f32 %v6803, 1.442695
    %v6805 = vpow.pop %v6804
    %v6806 = vadd.f32 %v6805, 1.0
    %v6807 = vrcp.pop %v6806
    %v6808 = vmul.f32 1.0, %v6807
    %v6809 = vxor.u32 %v6800, 2147483648
    %v6810 = vmul.f32 %v6809, 1.442695
    %v6811 = vpow.pop %v6810
    %v6812 = vadd.f32 %v6811, 1.0
    %v6813 = vrcp.pop %v6812
    %v6814 = vmul.f32 1.0, %v6813
    %v6815 = vtanh.pop %v6801
    %v6816 = vxor.u32 %v6802, 2147483648
    %v6817 = vmul.f32 %v6816, 1.442695
    %v6818 = vpow.pop %v6817
    %v6819 = vadd.f32 %v6818, 1.0
    %v6820 = vrcp.pop %v6819
    %v6821 = vmul.f32 1.0, %v6820
    %v6823 = vrot.slane %v5861, 6
    %v6825 = vmul.f32 %v6814, %v6823
    %v6826 = vmul.f32 %v6808, %v6815
    %v6827 = vadd.f32 %v6825, %v6826
    %v6828 = vtanh.pop %v6827
    %v6829 = vmul.f32 %v6821, %v6828
    %v6830 = vld [vmem:[#allocation3 + $0x20] sm:$0x3]
    %v6831 = vld [vmem:[#allocation3 + $0x28] sm:$0x3]
    %v6832 = vld [vmem:[#allocation3 + $0x30] sm:$0x3]
    %v6833 = vld [vmem:[#allocation3 + $0x38] sm:$0x3]
    %v6834 = vpack.c.bf16 %v6188, %v6188
    %v6835 = vld [vmem:[#allocation31] sm:$0xff]
    %v6836 = vld [vmem:[#allocation31 + $0x8] sm:$0xff]
    %v6837 = vld [vmem:[#allocation31 + $0x10] sm:$0xff]
    %v6838 = vld [vmem:[#allocation31 + $0x18] sm:$0xff]
    %v6839 = vld [vmem:[#allocation31 + $0x20] sm:$0xff]
    %v6840 = vld [vmem:[#allocation31 + $0x28] sm:$0xff]
    %v6841 = vld [vmem:[#allocation31 + $0x30] sm:$0xff]
    %v6842 = vld [vmem:[#allocation31 + $0x38] sm:$0xff]
    %v6843 = vld [vmem:[#allocation31 + $0x40] sm:$0xff]
    %v6844 = vld [vmem:[#allocation31 + $0x48] sm:$0xff]
    %v6845 = vld [vmem:[#allocation31 + $0x50] sm:$0xff]
    %v6846 = vld [vmem:[#allocation31 + $0x58] sm:$0xff]
    %v6847 = vld [vmem:[#allocation31 + $0x60] sm:$0xff]
    %v6848 = vld [vmem:[#allocation31 + $0x68] sm:$0xff]
    %v6849 = vld [vmem:[#allocation31 + $0x70] sm:$0xff]
    %v6850 = vld [vmem:[#allocation31 + $0x78] sm:$0xff]
    %v6851 = vld [vmem:[#allocation31 + $0x80] sm:$0xff]
    %v6852 = vld [vmem:[#allocation31 + $0x88] sm:$0xff]
    %v6853 = vld [vmem:[#allocation31 + $0x90] sm:$0xff]
    %v6854 = vld [vmem:[#allocation31 + $0x98] sm:$0xff]
    %v6855 = vld [vmem:[#allocation31 + $0xa0] sm:$0xff]
    %v6856 = vld [vmem:[#allocation31 + $0xa8] sm:$0xff]
    %v6857 = vld [vmem:[#allocation31 + $0xb0] sm:$0xff]
    %v6858 = vld [vmem:[#allocation31 + $0xb8] sm:$0xff]
    %v6859 = vld [vmem:[#allocation31 + $0xc0] sm:$0xff]
    %v6860 = vld [vmem:[#allocation31 + $0xc8] sm:$0xff]
    %v6861 = vld [vmem:[#allocation31 + $0xd0] sm:$0xff]
    %v6862 = vld [vmem:[#allocation31 + $0xd8] sm:$0xff]
    %v6863 = vld [vmem:[#allocation31 + $0xe0] sm:$0xff]
    %v6864 = vld [vmem:[#allocation31 + $0xe8] sm:$0xff]
    %v6865 = vld [vmem:[#allocation31 + $0xf0] sm:$0xff]
    %v6866 = vld [vmem:[#allocation31 + $0xf8] sm:$0xff]
    %v6868 = vrot.slane %v6834, 3
    %v6902 = vunpack.c.l.b16 %v6835
    %v6903 = vunpack.c.h.b16 %v6835
    %v6904 = vunpack.c.l.b16 %v6836
    %v6905 = vunpack.c.h.b16 %v6836
    %v6906 = vunpack.c.l.b16 %v6837
    %v6907 = vunpack.c.h.b16 %v6837
    %v6908 = vunpack.c.l.b16 %v6838
    %v6909 = vunpack.c.h.b16 %v6838
    %v6910 = vunpack.c.l.b16 %v6839
    %v6911 = vunpack.c.h.b16 %v6839
    %v6912 = vunpack.c.l.b16 %v6840
    %v6913 = vunpack.c.h.b16 %v6840
    %v6914 = vunpack.c.l.b16 %v6841
    %v6915 = vunpack.c.h.b16 %v6841
    %v6916 = vunpack.c.l.b16 %v6842
    %v6917 = vunpack.c.h.b16 %v6842
    %v6918 = vunpack.c.l.b16 %v6843
    %v6919 = vunpack.c.h.b16 %v6843
    %v6920 = vunpack.c.l.b16 %v6844
    %v6921 = vunpack.c.h.b16 %v6844
    %v6922 = vunpack.c.l.b16 %v6845
    %v6923 = vunpack.c.h.b16 %v6845
    %v6924 = vunpack.c.l.b16 %v6846
    %v6925 = vunpack.c.h.b16 %v6846
    %v6926 = vunpack.c.l.b16 %v6847
    %v6927 = vunpack.c.h.b16 %v6847
    %v6928 = vunpack.c.l.b16 %v6848
    %v6929 = vunpack.c.h.b16 %v6848
    %v6930 = vunpack.c.l.b16 %v6849
    %v6931 = vunpack.c.h.b16 %v6849
    %v6932 = vunpack.c.l.b16 %v6850
    %v6933 = vunpack.c.h.b16 %v6850
    %v6934 = vunpack.c.l.b16 %v6851
    %v6935 = vunpack.c.h.b16 %v6851
    %v6936 = vunpack.c.l.b16 %v6852
    %v6937 = vunpack.c.h.b16 %v6852
    %v6938 = vunpack.c.l.b16 %v6853
    %v6939 = vunpack.c.h.b16 %v6853
    %v6940 = vunpack.c.l.b16 %v6854
    %v6941 = vunpack.c.h.b16 %v6854
    %v6942 = vunpack.c.l.b16 %v6855
    %v6943 = vunpack.c.h.b16 %v6855
    %v6944 = vunpack.c.l.b16 %v6856
    %v6945 = vunpack.c.h.b16 %v6856
    %v6946 = vunpack.c.l.b16 %v6857
    %v6947 = vunpack.c.h.b16 %v6857
    %v6948 = vunpack.c.l.b16 %v6858
    %v6949 = vunpack.c.h.b16 %v6858
    %v6950 = vunpack.c.l.b16 %v6859
    %v6951 = vunpack.c.h.b16 %v6859
    %v6952 = vunpack.c.l.b16 %v6860
    %v6953 = vunpack.c.h.b16 %v6860
    %v6954 = vunpack.c.l.b16 %v6861
    %v6955 = vunpack.c.h.b16 %v6861
    %v6956 = vunpack.c.l.b16 %v6862
    %v6957 = vunpack.c.h.b16 %v6862
    %v6958 = vunpack.c.l.b16 %v6863
    %v6959 = vunpack.c.h.b16 %v6863
    %v6960 = vunpack.c.l.b16 %v6864
    %v6961 = vunpack.c.h.b16 %v6864
    %v6962 = vunpack.c.l.b16 %v6865
    %v6963 = vunpack.c.h.b16 %v6865
    %v6964 = vunpack.c.l.b16 %v6866
    %v6965 = vunpack.c.h.b16 %v6866
    %v6966 = vpack.c.b16 %v6906, %v6902
    %v6967 = vpack.c.b16 %v6907, %v6903
    %v6968 = vpack.c.b16 %v6908, %v6904
    %v6969 = vpack.c.b16 %v6909, %v6905
    %v6970 = vpack.c.b16 %v6914, %v6910
    %v6971 = vpack.c.b16 %v6915, %v6911
    %v6972 = vpack.c.b16 %v6916, %v6912
    %v6973 = vpack.c.b16 %v6917, %v6913
    %v6974 = vpack.c.b16 %v6922, %v6918
    %v6975 = vpack.c.b16 %v6923, %v6919
    %v6976 = vpack.c.b16 %v6924, %v6920
    %v6977 = vpack.c.b16 %v6925, %v6921
    %v6978 = vpack.c.b16 %v6930, %v6926
    %v6979 = vpack.c.b16 %v6931, %v6927
    %v6980 = vpack.c.b16 %v6932, %v6928
    %v6981 = vpack.c.b16 %v6933, %v6929
    %v6982 = vpack.c.b16 %v6938, %v6934
    %v6983 = vpack.c.b16 %v6939, %v6935
    %v6984 = vpack.c.b16 %v6940, %v6936
    %v6985 = vpack.c.b16 %v6941, %v6937
    %v6986 = vpack.c.b16 %v6946, %v6942
    %v6987 = vpack.c.b16 %v6947, %v6943
    %v6988 = vpack.c.b16 %v6948, %v6944
    %v6989 = vpack.c.b16 %v6949, %v6945
    %v6990 = vpack.c.b16 %v6954, %v6950
    %v6991 = vpack.c.b16 %v6955, %v6951
    %v6992 = vpack.c.b16 %v6956, %v6952
    %v6993 = vpack.c.b16 %v6957, %v6953
    %v6994 = vpack.c.b16 %v6962, %v6958
    %v6995 = vpack.c.b16 %v6963, %v6959
    %v6996 = vpack.c.b16 %v6964, %v6960
    %v6997 = vpack.c.b16 %v6965, %v6961
    %7030 = vmatprep.subr.bf16.mxu0 %v6967
    %7031 = vmatpush1.bf16.msra.mxu0 %v6966
    %7032 = vmatprep.subr.bf16.mxu0 %v6971
    %7033 = vmatpush1.bf16.msra.mxu0 %v6970
    %7034 = vmatprep.subr.bf16.mxu0 %v6975
    %7035 = vmatpush1.bf16.msra.mxu0 %v6974
    %7036 = vmatprep.subr.bf16.mxu0 %v6979
    %7037 = vmatpush1.bf16.msra.mxu0 %v6978
    %7038 = vmatprep.subr.bf16.mxu0 %v6983
    %7039 = vmatpush1.bf16.msra.mxu0 %v6982
    %7040 = vmatprep.subr.bf16.mxu0 %v6987
    %7041 = vmatpush1.bf16.msra.mxu0 %v6986
    %7042 = vmatprep.subr.bf16.mxu0 %v6991
    %7043 = vmatpush1.bf16.msra.mxu0 %v6990
    %7044 = vmatprep.subr.bf16.mxu0 %v6995
    %7045 = vmatpush1.bf16.msra.mxu0 %v6994
    %7046 = vmatprep.subr.bf16.mxu0 0
    %7047 = vmatpush1.bf16.msra.mxu0 0
    %7048 = vmatprep.subr.bf16.mxu0 0
    %7049 = vmatpush1.bf16.msra.mxu0 0
    %7050 = vmatprep.subr.bf16.mxu0 0
    %7051 = vmatpush1.bf16.msra.mxu0 0
    %7052 = vmatprep.subr.bf16.mxu0 0
    %7053 = vmatpush1.bf16.msra.mxu0 0
    %7054 = vmatprep.subr.bf16.mxu0 0
    %7055 = vmatpush1.bf16.msra.mxu0 0
    %7056 = vmatprep.subr.bf16.mxu0 0
    %7057 = vmatpush1.bf16.msra.mxu0 0
    %7058 = vmatprep.subr.bf16.mxu0 0
    %7059 = vmatpush1.bf16.msra.mxu0 0
    %7060 = vmatprep.subr.bf16.mxu0 0
    %7061 = vmatpush1.bf16.msra.mxu0 0
    %7062 = vmatprep.mubr.bf16.mxu0 0
    %7063 = vmatmul.mubr.bf16.gmra.mrb[0].mxu0 %v6868
    %v7064 = vpop.f32.mrb[0].mxu0
    %v7065 = vadd.f32 0.0, %v7064
    %v7066 = vpop.f32.mrb[0].mxu0
    %v7067 = vadd.f32 0.0, %v7066
    %v7068 = vpop.f32.mrb[0].mxu0
    %v7069 = vpop.f32.mrb[0].mxu0
    %7070 = vdwg.mxu0
    %7071 = vmatprep.subr.bf16.mxu0 %v6969
    %7072 = vmatpush1.bf16.msra.mxu0 %v6968
    %7073 = vmatprep.subr.bf16.mxu0 %v6973
    %7074 = vmatpush1.bf16.msra.mxu0 %v6972
    %7075 = vmatprep.subr.bf16.mxu0 %v6977
    %7076 = vmatpush1.bf16.msra.mxu0 %v6976
    %7077 = vmatprep.subr.bf16.mxu0 %v6981
    %7078 = vmatpush1.bf16.msra.mxu0 %v6980
    %7079 = vmatprep.subr.bf16.mxu0 %v6985
    %7080 = vmatpush1.bf16.msra.mxu0 %v6984
    %7081 = vmatprep.subr.bf16.mxu0 %v6989
    %7082 = vmatpush1.bf16.msra.mxu0 %v6988
    %7083 = vmatprep.subr.bf16.mxu0 %v6993
    %7084 = vmatpush1.bf16.msra.mxu0 %v6992
    %7085 = vmatprep.subr.bf16.mxu0 %v6997
    %7086 = vmatpush1.bf16.msra.mxu0 %v6996
    %7087 = vmatprep.subr.bf16.mxu0 0
    %7088 = vmatpush1.bf16.msra.mxu0 0
    %7089 = vmatprep.subr.bf16.mxu0 0
    %7090 = vmatpush1.bf16.msra.mxu0 0
    %7091 = vmatprep.subr.bf16.mxu0 0
    %7092 = vmatpush1.bf16.msra.mxu0 0
    %7093 = vmatprep.subr.bf16.mxu0 0
    %7094 = vmatpush1.bf16.msra.mxu0 0
    %7095 = vmatprep.subr.bf16.mxu0 0
    %7096 = vmatpush1.bf16.msra.mxu0 0
    %7097 = vmatprep.subr.bf16.mxu0 0
    %7098 = vmatpush1.bf16.msra.mxu0 0
    %7099 = vmatprep.subr.bf16.mxu0 0
    %7100 = vmatpush1.bf16.msra.mxu0 0
    %7101 = vmatprep.subr.bf16.mxu0 0
    %7102 = vmatpush1.bf16.msra.mxu0 0
    %7103 = vmatprep.mubr.bf16.mxu0 0
    %7104 = vmatmul.mubr.bf16.gmra.mrb[0].mxu0 %v6868
    %v7105 = vpop.f32.mrb[0].mxu0
    %v7106 = vadd.f32 0.0, %v7105
    %v7107 = vpop.f32.mrb[0].mxu0
    %v7108 = vadd.f32 0.0, %v7107
    %v7109 = vpop.f32.mrb[0].mxu0
    %v7110 = vpop.f32.mrb[0].mxu0
    %7111 = vdwg.mxu0
    %v7112 = vadd.f32 %v6830, %v7065
    %v7113 = vadd.f32 %v6831, %v7067
    %v7114 = vadd.f32 %v6832, %v7106
    %v7115 = vadd.f32 %v6833, %v7108
    %v7116 = vxor.u32 %v7112, 2147483648
    %v7117 = vmul.f32 %v7116, 1.442695
    %v7118 = vpow.pop %v7117
    %v7119 = vadd.f32 %v7118, 1.0
    %v7120 = vrcp.pop %v7119
    %v7121 = vmul.f32 1.0, %v7120
    %v7122 = vxor.u32 %v7113, 2147483648
    %v7123 = vmul.f32 %v7122, 1.442695
    %v7124 = vpow.pop %v7123
    %v7125 = vadd.f32 %v7124, 1.0
    %v7126 = vrcp.pop %v7125
    %v7127 = vmul.f32 1.0, %v7126
    %v7128 = vtanh.pop %v7114
    %v7129 = vxor.u32 %v7115, 2147483648
    %v7130 = vmul.f32 %v7129, 1.442695
    %v7131 = vpow.pop %v7130
    %v7132 = vadd.f32 %v7131, 1.0
    %v7133 = vrcp.pop %v7132
    %v7134 = vmul.f32 1.0, %v7133
    %v7136 = vrot.slane %v6186, 6
    %v7138 = vmul.f32 %v7127, %v7136
    %v7139 = vmul.f32 %v7121, %v7128
    %v7140 = vadd.f32 %v7138, %v7139
    %v7141 = vtanh.pop %v7140
    %v7142 = vmul.f32 %v7134, %v7141
    %v7143 = vld [vmem:[#allocation4 + $0x20] sm:$0x3]
    %v7144 = vld [vmem:[#allocation4 + $0x28] sm:$0x3]
    %v7145 = vld [vmem:[#allocation4 + $0x30] sm:$0x3]
    %v7146 = vld [vmem:[#allocation4 + $0x38] sm:$0x3]
    %v7147 = vpack.c.bf16 %v6513, %v6513
    %v7148 = vld [vmem:[#allocation42] sm:$0xff]
    %v7149 = vld [vmem:[#allocation42 + $0x8] sm:$0xff]
    %v7150 = vld [vmem:[#allocation42 + $0x10] sm:$0xff]
    %v7151 = vld [vmem:[#allocation42 + $0x18] sm:$0xff]
    %v7152 = vld [vmem:[#allocation42 + $0x20] sm:$0xff]
    %v7153 = vld [vmem:[#allocation42 + $0x28] sm:$0xff]
    %v7154 = vld [vmem:[#allocation42 + $0x30] sm:$0xff]
    %v7155 = vld [vmem:[#allocation42 + $0x38] sm:$0xff]
    %v7156 = vld [vmem:[#allocation42 + $0x40] sm:$0xff]
    %v7157 = vld [vmem:[#allocation42 + $0x48] sm:$0xff]
    %v7158 = vld [vmem:[#allocation42 + $0x50] sm:$0xff]
    %v7159 = vld [vmem:[#allocation42 + $0x58] sm:$0xff]
    %v7160 = vld [vmem:[#allocation42 + $0x60] sm:$0xff]
    %v7161 = vld [vmem:[#allocation42 + $0x68] sm:$0xff]
    %v7162 = vld [vmem:[#allocation42 + $0x70] sm:$0xff]
    %v7163 = vld [vmem:[#allocation42 + $0x78] sm:$0xff]
    %v7164 = vld [vmem:[#allocation42 + $0x80] sm:$0xff]
    %v7165 = vld [vmem:[#allocation42 + $0x88] sm:$0xff]
    %v7166 = vld [vmem:[#allocation42 + $0x90] sm:$0xff]
    %v7167 = vld [vmem:[#allocation42 + $0x98] sm:$0xff]
    %v7168 = vld [vmem:[#allocation42 + $0xa0] sm:$0xff]
    %v7169 = vld [vmem:[#allocation42 + $0xa8] sm:$0xff]
    %v7170 = vld [vmem:[#allocation42 + $0xb0] sm:$0xff]
    %v7171 = vld [vmem:[#allocation42 + $0xb8] sm:$0xff]
    %v7172 = vld [vmem:[#allocation42 + $0xc0] sm:$0xff]
    %v7173 = vld [vmem:[#allocation42 + $0xc8] sm:$0xff]
    %v7174 = vld [vmem:[#allocation42 + $0xd0] sm:$0xff]
    %v7175 = vld [vmem:[#allocation42 + $0xd8] sm:$0xff]
    %v7176 = vld [vmem:[#allocation42 + $0xe0] sm:$0xff]
    %v7177 = vld [vmem:[#allocation42 + $0xe8] sm:$0xff]
    %v7178 = vld [vmem:[#allocation42 + $0xf0] sm:$0xff]
    %v7179 = vld [vmem:[#allocation42 + $0xf8] sm:$0xff]
    %v7181 = vrot.slane %v7147, 3
    %v7215 = vunpack.c.l.b16 %v7148
    %v7216 = vunpack.c.h.b16 %v7148
    %v7217 = vunpack.c.l.b16 %v7149
    %v7218 = vunpack.c.h.b16 %v7149
    %v7219 = vunpack.c.l.b16 %v7150
    %v7220 = vunpack.c.h.b16 %v7150
    %v7221 = vunpack.c.l.b16 %v7151
    %v7222 = vunpack.c.h.b16 %v7151
    %v7223 = vunpack.c.l.b16 %v7152
    %v7224 = vunpack.c.h.b16 %v7152
    %v7225 = vunpack.c.l.b16 %v7153
    %v7226 = vunpack.c.h.b16 %v7153
    %v7227 = vunpack.c.l.b16 %v7154
    %v7228 = vunpack.c.h.b16 %v7154
    %v7229 = vunpack.c.l.b16 %v7155
    %v7230 = vunpack.c.h.b16 %v7155
    %v7231 = vunpack.c.l.b16 %v7156
    %v7232 = vunpack.c.h.b16 %v7156
    %v7233 = vunpack.c.l.b16 %v7157
    %v7234 = vunpack.c.h.b16 %v7157
    %v7235 = vunpack.c.l.b16 %v7158
    %v7236 = vunpack.c.h.b16 %v7158
    %v7237 = vunpack.c.l.b16 %v7159
    %v7238 = vunpack.c.h.b16 %v7159
    %v7239 = vunpack.c.l.b16 %v7160
    %v7240 = vunpack.c.h.b16 %v7160
    %v7241 = vunpack.c.l.b16 %v7161
    %v7242 = vunpack.c.h.b16 %v7161
    %v7243 = vunpack.c.l.b16 %v7162
    %v7244 = vunpack.c.h.b16 %v7162
    %v7245 = vunpack.c.l.b16 %v7163
    %v7246 = vunpack.c.h.b16 %v7163
    %v7247 = vunpack.c.l.b16 %v7164
    %v7248 = vunpack.c.h.b16 %v7164
    %v7249 = vunpack.c.l.b16 %v7165
    %v7250 = vunpack.c.h.b16 %v7165
    %v7251 = vunpack.c.l.b16 %v7166
    %v7252 = vunpack.c.h.b16 %v7166
    %v7253 = vunpack.c.l.b16 %v7167
    %v7254 = vunpack.c.h.b16 %v7167
    %v7255 = vunpack.c.l.b16 %v7168
    %v7256 = vunpack.c.h.b16 %v7168
    %v7257 = vunpack.c.l.b16 %v7169
    %v7258 = vunpack.c.h.b16 %v7169
    %v7259 = vunpack.c.l.b16 %v7170
    %v7260 = vunpack.c.h.b16 %v7170
    %v7261 = vunpack.c.l.b16 %v7171
    %v7262 = vunpack.c.h.b16 %v7171
    %v7263 = vunpack.c.l.b16 %v7172
    %v7264 = vunpack.c.h.b16 %v7172
    %v7265 = vunpack.c.l.b16 %v7173
    %v7266 = vunpack.c.h.b16 %v7173
    %v7267 = vunpack.c.l.b16 %v7174
    %v7268 = vunpack.c.h.b16 %v7174
    %v7269 = vunpack.c.l.b16 %v7175
    %v7270 = vunpack.c.h.b16 %v7175
    %v7271 = vunpack.c.l.b16 %v7176
    %v7272 = vunpack.c.h.b16 %v7176
    %v7273 = vunpack.c.l.b16 %v7177
    %v7274 = vunpack.c.h.b16 %v7177
    %v7275 = vunpack.c.l.b16 %v7178
    %v7276 = vunpack.c.h.b16 %v7178
    %v7277 = vunpack.c.l.b16 %v7179
    %v7278 = vunpack.c.h.b16 %v7179
    %v7279 = vpack.c.b16 %v7219, %v7215
    %v7280 = vpack.c.b16 %v7220, %v7216
    %v7281 = vpack.c.b16 %v7221, %v7217
    %v7282 = vpack.c.b16 %v7222, %v7218
    %v7283 = vpack.c.b16 %v7227, %v7223
    %v7284 = vpack.c.b16 %v7228, %v7224
    %v7285 = vpack.c.b16 %v7229, %v7225
    %v7286 = vpack.c.b16 %v7230, %v7226
    %v7287 = vpack.c.b16 %v7235, %v7231
    %v7288 = vpack.c.b16 %v7236, %v7232
    %v7289 = vpack.c.b16 %v7237, %v7233
    %v7290 = vpack.c.b16 %v7238, %v7234
    %v7291 = vpack.c.b16 %v7243, %v7239
    %v7292 = vpack.c.b16 %v7244, %v7240
    %v7293 = vpack.c.b16 %v7245, %v7241
    %v7294 = vpack.c.b16 %v7246, %v7242
    %v7295 = vpack.c.b16 %v7251, %v7247
    %v7296 = vpack.c.b16 %v7252, %v7248
    %v7297 = vpack.c.b16 %v7253, %v7249
    %v7298 = vpack.c.b16 %v7254, %v7250
    %v7299 = vpack.c.b16 %v7259, %v7255
    %v7300 = vpack.c.b16 %v7260, %v7256
    %v7301 = vpack.c.b16 %v7261, %v7257
    %v7302 = vpack.c.b16 %v7262, %v7258
    %v7303 = vpack.c.b16 %v7267, %v7263
    %v7304 = vpack.c.b16 %v7268, %v7264
    %v7305 = vpack.c.b16 %v7269, %v7265
    %v7306 = vpack.c.b16 %v7270, %v7266
    %v7307 = vpack.c.b16 %v7275, %v7271
    %v7308 = vpack.c.b16 %v7276, %v7272
    %v7309 = vpack.c.b16 %v7277, %v7273
    %v7310 = vpack.c.b16 %v7278, %v7274
    %7343 = vmatprep.subr.bf16.mxu0 %v7280
    %7344 = vmatpush1.bf16.msra.mxu0 %v7279
    %7345 = vmatprep.subr.bf16.mxu0 %v7284
    %7346 = vmatpush1.bf16.msra.mxu0 %v7283
    %7347 = vmatprep.subr.bf16.mxu0 %v7288
    %7348 = vmatpush1.bf16.msra.mxu0 %v7287
    %7349 = vmatprep.subr.bf16.mxu0 %v7292
    %7350 = vmatpush1.bf16.msra.mxu0 %v7291
    %7351 = vmatprep.subr.bf16.mxu0 %v7296
    %7352 = vmatpush1.bf16.msra.mxu0 %v7295
    %7353 = vmatprep.subr.bf16.mxu0 %v7300
    %7354 = vmatpush1.bf16.msra.mxu0 %v7299
    %7355 = vmatprep.subr.bf16.mxu0 %v7304
    %7356 = vmatpush1.bf16.msra.mxu0 %v7303
    %7357 = vmatprep.subr.bf16.mxu0 %v7308
    %7358 = vmatpush1.bf16.msra.mxu0 %v7307
    %7359 = vmatprep.subr.bf16.mxu0 0
    %7360 = vmatpush1.bf16.msra.mxu0 0
    %7361 = vmatprep.subr.bf16.mxu0 0
    %7362 = vmatpush1.bf16.msra.mxu0 0
    %7363 = vmatprep.subr.bf16.mxu0 0
    %7364 = vmatpush1.bf16.msra.mxu0 0
    %7365 = vmatprep.subr.bf16.mxu0 0
    %7366 = vmatpush1.bf16.msra.mxu0 0
    %7367 = vmatprep.subr.bf16.mxu0 0
    %7368 = vmatpush1.bf16.msra.mxu0 0
    %7369 = vmatprep.subr.bf16.mxu0 0
    %7370 = vmatpush1.bf16.msra.mxu0 0
    %7371 = vmatprep.subr.bf16.mxu0 0
    %7372 = vmatpush1.bf16.msra.mxu0 0
    %7373 = vmatprep.subr.bf16.mxu0 0
    %7374 = vmatpush1.bf16.msra.mxu0 0
    %7375 = vmatprep.mubr.bf16.mxu0 0
    %7376 = vmatmul.mubr.bf16.gmra.mrb[0].mxu0 %v7181
    %v7377 = vpop.f32.mrb[0].mxu0
    %v7378 = vadd.f32 0.0, %v7377
    %v7379 = vpop.f32.mrb[0].mxu0
    %v7380 = vadd.f32 0.0, %v7379
    %v7381 = vpop.f32.mrb[0].mxu0
    %v7382 = vpop.f32.mrb[0].mxu0
    %7383 = vdwg.mxu0
    %7384 = vmatprep.subr.bf16.mxu0 %v7282
    %7385 = vmatpush1.bf16.msra.mxu0 %v7281
    %7386 = vmatprep.subr.bf16.mxu0 %v7286
    %7387 = vmatpush1.bf16.msra.mxu0 %v7285
    %7388 = vmatprep.subr.bf16.mxu0 %v7290
    %7389 = vmatpush1.bf16.msra.mxu0 %v7289
    %7390 = vmatprep.subr.bf16.mxu0 %v7294
    %7391 = vmatpush1.bf16.msra.mxu0 %v7293
    %7392 = vmatprep.subr.bf16.mxu0 %v7298
    %7393 = vmatpush1.bf16.msra.mxu0 %v7297
    %7394 = vmatprep.subr.bf16.mxu0 %v7302
    %7395 = vmatpush1.bf16.msra.mxu0 %v7301
    %7396 = vmatprep.subr.bf16.mxu0 %v7306
    %7397 = vmatpush1.bf16.msra.mxu0 %v7305
    %7398 = vmatprep.subr.bf16.mxu0 %v7310
    %7399 = vmatpush1.bf16.msra.mxu0 %v7309
    %7400 = vmatprep.subr.bf16.mxu0 0
    %7401 = vmatpush1.bf16.msra.mxu0 0
    %7402 = vmatprep.subr.bf16.mxu0 0
    %7403 = vmatpush1.bf16.msra.mxu0 0
    %7404 = vmatprep.subr.bf16.mxu0 0
    %7405 = vmatpush1.bf16.msra.mxu0 0
    %7406 = vmatprep.subr.bf16.mxu0 0
    %7407 = vmatpush1.bf16.msra.mxu0 0
    %7408 = vmatprep.subr.bf16.mxu0 0
    %7409 = vmatpush1.bf16.msra.mxu0 0
    %7410 = vmatprep.subr.bf16.mxu0 0
    %7411 = vmatpush1.bf16.msra.mxu0 0
    %7412 = vmatprep.subr.bf16.mxu0 0
    %7413 = vmatpush1.bf16.msra.mxu0 0
    %7414 = vmatprep.subr.bf16.mxu0 0
    %7415 = vmatpush1.bf16.msra.mxu0 0
    %7416 = vmatprep.mubr.bf16.mxu0 0
    %7417 = vmatmul.mubr.bf16.gmra.mrb[0].mxu0 %v7181
    %v7418 = vpop.f32.mrb[0].mxu0
    %v7419 = vadd.f32 0.0, %v7418
    %v7420 = vpop.f32.mrb[0].mxu0
    %v7421 = vadd.f32 0.0, %v7420
    %v7422 = vpop.f32.mrb[0].mxu0
    %v7423 = vpop.f32.mrb[0].mxu0
    %7424 = vdwg.mxu0
    %v7425 = vadd.f32 %v7143, %v7378
    %v7426 = vadd.f32 %v7144, %v7380
    %v7427 = vadd.f32 %v7145, %v7419
    %v7428 = vadd.f32 %v7146, %v7421
    %v7429 = vxor.u32 %v7425, 2147483648
    %v7430 = vmul.f32 %v7429, 1.442695
    %v7431 = vpow.pop %v7430
    %v7432 = vadd.f32 %v7431, 1.0
    %v7433 = vrcp.pop %v7432
    %v7434 = vmul.f32 1.0, %v7433
    %v7435 = vxor.u32 %v7426, 2147483648
    %v7436 = vmul.f32 %v7435, 1.442695
    %v7437 = vpow.pop %v7436
    %v7438 = vadd.f32 %v7437, 1.0
    %v7439 = vrcp.pop %v7438
    %v7440 = vmul.f32 1.0, %v7439
    %v7441 = vtanh.pop %v7427
    %v7442 = vxor.u32 %v7428, 2147483648
    %v7443 = vmul.f32 %v7442, 1.442695
    %v7444 = vpow.pop %v7443
    %v7445 = vadd.f32 %v7444, 1.0
    %v7446 = vrcp.pop %v7445
    %v7447 = vmul.f32 1.0, %v7446
    %v7449 = vrot.slane %v6511, 6
    %v7451 = vmul.f32 %v7440, %v7449
    %v7452 = vmul.f32 %v7434, %v7441
    %v7453 = vadd.f32 %v7451, %v7452
    %v7454 = vtanh.pop %v7453
    %v7455 = vmul.f32 %v7447, %v7454
    %7456 = vst [vmem:[#allocation6 + $0x8] sm:$0x3] %v6829
    %7457 = vst [vmem:[#allocation7 + $0x8] sm:$0x3] %v7142
    %7458 = vst [vmem:[#allocation8 + $0x8] sm:$0x3] %v7455
    %v7459 = vld [vmem:[#allocation2 + $0x20] sm:$0xc]
    %v7460 = vld [vmem:[#allocation2 + $0x28] sm:$0xc]
    %v7461 = vld [vmem:[#allocation2 + $0x30] sm:$0xc]
    %v7462 = vld [vmem:[#allocation2 + $0x38] sm:$0xc]
    %v7463 = vpack.c.bf16 %v6829, %v6829
    %v7464 = vld [vmem:[#allocation21] sm:$0xff]
    %v7465 = vld [vmem:[#allocation21 + $0x8] sm:$0xff]
    %v7466 = vld [vmem:[#allocation21 + $0x10] sm:$0xff]
    %v7467 = vld [vmem:[#allocation21 + $0x18] sm:$0xff]
    %v7468 = vld [vmem:[#allocation21 + $0x20] sm:$0xff]
    %v7469 = vld [vmem:[#allocation21 + $0x28] sm:$0xff]
    %v7470 = vld [vmem:[#allocation21 + $0x30] sm:$0xff]
    %v7471 = vld [vmem:[#allocation21 + $0x38] sm:$0xff]
    %v7472 = vld [vmem:[#allocation21 + $0x40] sm:$0xff]
    %v7473 = vld [vmem:[#allocation21 + $0x48] sm:$0xff]
    %v7474 = vld [vmem:[#allocation21 + $0x50] sm:$0xff]
    %v7475 = vld [vmem:[#allocation21 + $0x58] sm:$0xff]
    %v7476 = vld [vmem:[#allocation21 + $0x60] sm:$0xff]
    %v7477 = vld [vmem:[#allocation21 + $0x68] sm:$0xff]
    %v7478 = vld [vmem:[#allocation21 + $0x70] sm:$0xff]
    %v7479 = vld [vmem:[#allocation21 + $0x78] sm:$0xff]
    %v7480 = vld [vmem:[#allocation21 + $0x80] sm:$0xff]
    %v7481 = vld [vmem:[#allocation21 + $0x88] sm:$0xff]
    %v7482 = vld [vmem:[#allocation21 + $0x90] sm:$0xff]
    %v7483 = vld [vmem:[#allocation21 + $0x98] sm:$0xff]
    %v7484 = vld [vmem:[#allocation21 + $0xa0] sm:$0xff]
    %v7485 = vld [vmem:[#allocation21 + $0xa8] sm:$0xff]
    %v7486 = vld [vmem:[#allocation21 + $0xb0] sm:$0xff]
    %v7487 = vld [vmem:[#allocation21 + $0xb8] sm:$0xff]
    %v7488 = vld [vmem:[#allocation21 + $0xc0] sm:$0xff]
    %v7489 = vld [vmem:[#allocation21 + $0xc8] sm:$0xff]
    %v7490 = vld [vmem:[#allocation21 + $0xd0] sm:$0xff]
    %v7491 = vld [vmem:[#allocation21 + $0xd8] sm:$0xff]
    %v7492 = vld [vmem:[#allocation21 + $0xe0] sm:$0xff]
    %v7493 = vld [vmem:[#allocation21 + $0xe8] sm:$0xff]
    %v7494 = vld [vmem:[#allocation21 + $0xf0] sm:$0xff]
    %v7495 = vld [vmem:[#allocation21 + $0xf8] sm:$0xff]
    %v7528 = vunpack.c.l.b16 %v7464
    %v7529 = vunpack.c.h.b16 %v7464
    %v7530 = vunpack.c.l.b16 %v7465
    %v7531 = vunpack.c.h.b16 %v7465
    %v7532 = vunpack.c.l.b16 %v7466
    %v7533 = vunpack.c.h.b16 %v7466
    %v7534 = vunpack.c.l.b16 %v7467
    %v7535 = vunpack.c.h.b16 %v7467
    %v7536 = vunpack.c.l.b16 %v7468
    %v7537 = vunpack.c.h.b16 %v7468
    %v7538 = vunpack.c.l.b16 %v7469
    %v7539 = vunpack.c.h.b16 %v7469
    %v7540 = vunpack.c.l.b16 %v7470
    %v7541 = vunpack.c.h.b16 %v7470
    %v7542 = vunpack.c.l.b16 %v7471
    %v7543 = vunpack.c.h.b16 %v7471
    %v7544 = vunpack.c.l.b16 %v7472
    %v7545 = vunpack.c.h.b16 %v7472
    %v7546 = vunpack.c.l.b16 %v7473
    %v7547 = vunpack.c.h.b16 %v7473
    %v7548 = vunpack.c.l.b16 %v7474
    %v7549 = vunpack.c.h.b16 %v7474
    %v7550 = vunpack.c.l.b16 %v7475
    %v7551 = vunpack.c.h.b16 %v7475
    %v7552 = vunpack.c.l.b16 %v7476
    %v7553 = vunpack.c.h.b16 %v7476
    %v7554 = vunpack.c.l.b16 %v7477
    %v7555 = vunpack.c.h.b16 %v7477
    %v7556 = vunpack.c.l.b16 %v7478
    %v7557 = vunpack.c.h.b16 %v7478
    %v7558 = vunpack.c.l.b16 %v7479
    %v7559 = vunpack.c.h.b16 %v7479
    %v7560 = vunpack.c.l.b16 %v7480
    %v7561 = vunpack.c.h.b16 %v7480
    %v7562 = vunpack.c.l.b16 %v7481
    %v7563 = vunpack.c.h.b16 %v7481
    %v7564 = vunpack.c.l.b16 %v7482
    %v7565 = vunpack.c.h.b16 %v7482
    %v7566 = vunpack.c.l.b16 %v7483
    %v7567 = vunpack.c.h.b16 %v7483
    %v7568 = vunpack.c.l.b16 %v7484
    %v7569 = vunpack.c.h.b16 %v7484
    %v7570 = vunpack.c.l.b16 %v7485
    %v7571 = vunpack.c.h.b16 %v7485
    %v7572 = vunpack.c.l.b16 %v7486
    %v7573 = vunpack.c.h.b16 %v7486
    %v7574 = vunpack.c.l.b16 %v7487
    %v7575 = vunpack.c.h.b16 %v7487
    %v7576 = vunpack.c.l.b16 %v7488
    %v7577 = vunpack.c.h.b16 %v7488
    %v7578 = vunpack.c.l.b16 %v7489
    %v7579 = vunpack.c.h.b16 %v7489
    %v7580 = vunpack.c.l.b16 %v7490
    %v7581 = vunpack.c.h.b16 %v7490
    %v7582 = vunpack.c.l.b16 %v7491
    %v7583 = vunpack.c.h.b16 %v7491
    %v7584 = vunpack.c.l.b16 %v7492
    %v7585 = vunpack.c.h.b16 %v7492
    %v7586 = vunpack.c.l.b16 %v7493
    %v7587 = vunpack.c.h.b16 %v7493
    %v7588 = vunpack.c.l.b16 %v7494
    %v7589 = vunpack.c.h.b16 %v7494
    %v7590 = vunpack.c.l.b16 %v7495
    %v7591 = vunpack.c.h.b16 %v7495
    %v7592 = vpack.c.b16 %v7532, %v7528
    %v7593 = vpack.c.b16 %v7533, %v7529
    %v7594 = vpack.c.b16 %v7534, %v7530
    %v7595 = vpack.c.b16 %v7535, %v7531
    %v7596 = vpack.c.b16 %v7540, %v7536
    %v7597 = vpack.c.b16 %v7541, %v7537
    %v7598 = vpack.c.b16 %v7542, %v7538
    %v7599 = vpack.c.b16 %v7543, %v7539
    %v7600 = vpack.c.b16 %v7548, %v7544
    %v7601 = vpack.c.b16 %v7549, %v7545
    %v7602 = vpack.c.b16 %v7550, %v7546
    %v7603 = vpack.c.b16 %v7551, %v7547
    %v7604 = vpack.c.b16 %v7556, %v7552
    %v7605 = vpack.c.b16 %v7557, %v7553
    %v7606 = vpack.c.b16 %v7558, %v7554
    %v7607 = vpack.c.b16 %v7559, %v7555
    %v7608 = vpack.c.b16 %v7564, %v7560
    %v7609 = vpack.c.b16 %v7565, %v7561
    %v7610 = vpack.c.b16 %v7566, %v7562
    %v7611 = vpack.c.b16 %v7567, %v7563
    %v7612 = vpack.c.b16 %v7572, %v7568
    %v7613 = vpack.c.b16 %v7573, %v7569
    %v7614 = vpack.c.b16 %v7574, %v7570
    %v7615 = vpack.c.b16 %v7575, %v7571
    %v7616 = vpack.c.b16 %v7580, %v7576
    %v7617 = vpack.c.b16 %v7581, %v7577
    %v7618 = vpack.c.b16 %v7582, %v7578
    %v7619 = vpack.c.b16 %v7583, %v7579
    %v7620 = vpack.c.b16 %v7588, %v7584
    %v7621 = vpack.c.b16 %v7589, %v7585
    %v7622 = vpack.c.b16 %v7590, %v7586
    %v7623 = vpack.c.b16 %v7591, %v7587
    %7656 = vmatprep.subr.bf16.mxu0 %v7593
    %7657 = vmatpush1.bf16.msra.mxu0 %v7592
    %7658 = vmatprep.subr.bf16.mxu0 %v7597
    %7659 = vmatpush1.bf16.msra.mxu0 %v7596
    %7660 = vmatprep.subr.bf16.mxu0 %v7601
    %7661 = vmatpush1.bf16.msra.mxu0 %v7600
    %7662 = vmatprep.subr.bf16.mxu0 %v7605
    %7663 = vmatpush1.bf16.msra.mxu0 %v7604
    %7664 = vmatprep.subr.bf16.mxu0 %v7609
    %7665 = vmatpush1.bf16.msra.mxu0 %v7608
    %7666 = vmatprep.subr.bf16.mxu0 %v7613
    %7667 = vmatpush1.bf16.msra.mxu0 %v7612
    %7668 = vmatprep.subr.bf16.mxu0 %v7617
    %7669 = vmatpush1.bf16.msra.mxu0 %v7616
    %7670 = vmatprep.subr.bf16.mxu0 %v7621
    %7671 = vmatpush1.bf16.msra.mxu0 %v7620
    %7672 = vmatprep.subr.bf16.mxu0 0
    %7673 = vmatpush1.bf16.msra.mxu0 0
    %7674 = vmatprep.subr.bf16.mxu0 0
    %7675 = vmatpush1.bf16.msra.mxu0 0
    %7676 = vmatprep.subr.bf16.mxu0 0
    %7677 = vmatpush1.bf16.msra.mxu0 0
    %7678 = vmatprep.subr.bf16.mxu0 0
    %7679 = vmatpush1.bf16.msra.mxu0 0
    %7680 = vmatprep.subr.bf16.mxu0 0
    %7681 = vmatpush1.bf16.msra.mxu0 0
    %7682 = vmatprep.subr.bf16.mxu0 0
    %7683 = vmatpush1.bf16.msra.mxu0 0
    %7684 = vmatprep.subr.bf16.mxu0 0
    %7685 = vmatpush1.bf16.msra.mxu0 0
    %7686 = vmatprep.subr.bf16.mxu0 0
    %7687 = vmatpush1.bf16.msra.mxu0 0
    %7688 = vmatprep.mubr.bf16.mxu0 0
    %7689 = vmatmul.mubr.bf16.gmra.mrb[0].mxu0 %v7463
    %v7690 = vpop.f32.mrb[0].mxu0
    %v7691 = vadd.f32 0.0, %v7690
    %v7692 = vpop.f32.mrb[0].mxu0
    %v7693 = vadd.f32 0.0, %v7692
    %v7694 = vpop.f32.mrb[0].mxu0
    %v7695 = vpop.f32.mrb[0].mxu0
    %7696 = vdwg.mxu0
    %7697 = vmatprep.subr.bf16.mxu0 %v7595
    %7698 = vmatpush1.bf16.msra.mxu0 %v7594
    %7699 = vmatprep.subr.bf16.mxu0 %v7599
    %7700 = vmatpush1.bf16.msra.mxu0 %v7598
    %7701 = vmatprep.subr.bf16.mxu0 %v7603
    %7702 = vmatpush1.bf16.msra.mxu0 %v7602
    %7703 = vmatprep.subr.bf16.mxu0 %v7607
    %7704 = vmatpush1.bf16.msra.mxu0 %v7606
    %7705 = vmatprep.subr.bf16.mxu0 %v7611
    %7706 = vmatpush1.bf16.msra.mxu0 %v7610
    %7707 = vmatprep.subr.bf16.mxu0 %v7615
    %7708 = vmatpush1.bf16.msra.mxu0 %v7614
    %7709 = vmatprep.subr.bf16.mxu0 %v7619
    %7710 = vmatpush1.bf16.msra.mxu0 %v7618
    %7711 = vmatprep.subr.bf16.mxu0 %v7623
    %7712 = vmatpush1.bf16.msra.mxu0 %v7622
    %7713 = vmatprep.subr.bf16.mxu0 0
    %7714 = vmatpush1.bf16.msra.mxu0 0
    %7715 = vmatprep.subr.bf16.mxu0 0
    %7716 = vmatpush1.bf16.msra.mxu0 0
    %7717 = vmatprep.subr.bf16.mxu0 0
    %7718 = vmatpush1.bf16.msra.mxu0 0
    %7719 = vmatprep.subr.bf16.mxu0 0
    %7720 = vmatpush1.bf16.msra.mxu0 0
    %7721 = vmatprep.subr.bf16.mxu0 0
    %7722 = vmatpush1.bf16.msra.mxu0 0
    %7723 = vmatprep.subr.bf16.mxu0 0
    %7724 = vmatpush1.bf16.msra.mxu0 0
    %7725 = vmatprep.subr.bf16.mxu0 0
    %7726 = vmatpush1.bf16.msra.mxu0 0
    %7727 = vmatprep.subr.bf16.mxu0 0
    %7728 = vmatpush1.bf16.msra.mxu0 0
    %7729 = vmatprep.mubr.bf16.mxu0 0
    %7730 = vmatmul.mubr.bf16.gmra.mrb[0].mxu0 %v7463
    %v7731 = vpop.f32.mrb[0].mxu0
    %v7732 = vadd.f32 0.0, %v7731
    %v7733 = vpop.f32.mrb[0].mxu0
    %v7734 = vadd.f32 0.0, %v7733
    %v7735 = vpop.f32.mrb[0].mxu0
    %v7736 = vpop.f32.mrb[0].mxu0
    %7737 = vdwg.mxu0
    %v7742 = vrot.slane %v7691, 6
    %v7743 = vrot.slane %v7693, 6
    %v7744 = vrot.slane %v7732, 6
    %v7745 = vrot.slane %v7734, 6
    %v7750 = vadd.f32 %v7459, %v7742
    %v7751 = vadd.f32 %v7460, %v7743
    %v7752 = vadd.f32 %v7461, %v7744
    %v7753 = vadd.f32 %v7462, %v7745
    %v7754 = vxor.u32 %v7750, 2147483648
    %v7755 = vmul.f32 %v7754, 1.442695
    %v7756 = vpow.pop %v7755
    %v7757 = vadd.f32 %v7756, 1.0
    %v7758 = vrcp.pop %v7757
    %v7759 = vmul.f32 1.0, %v7758
    %v7760 = vxor.u32 %v7751, 2147483648
    %v7761 = vmul.f32 %v7760, 1.442695
    %v7762 = vpow.pop %v7761
    %v7763 = vadd.f32 %v7762, 1.0
    %v7764 = vrcp.pop %v7763
    %v7765 = vmul.f32 1.0, %v7764
    %v7766 = vtanh.pop %v7752
    %v7767 = vxor.u32 %v7753, 2147483648
    %v7768 = vmul.f32 %v7767, 1.442695
    %v7769 = vpow.pop %v7768
    %v7770 = vadd.f32 %v7769, 1.0
    %v7771 = vrcp.pop %v7770
    %v7772 = vmul.f32 1.0, %v7771
    %v7774 = vrot.slane %v6827, 6
    %v7776 = vmul.f32 %v7765, %v7774
    %v7777 = vmul.f32 %v7759, %v7766
    %v7778 = vadd.f32 %v7776, %v7777
    %v7779 = vtanh.pop %v7778
    %v7780 = vmul.f32 %v7772, %v7779
    %v7781 = vld [vmem:[#allocation3 + $0x20] sm:$0xc]
    %v7782 = vld [vmem:[#allocation3 + $0x28] sm:$0xc]
    %v7783 = vld [vmem:[#allocation3 + $0x30] sm:$0xc]
    %v7784 = vld [vmem:[#allocation3 + $0x38] sm:$0xc]
    %v7785 = vpack.c.bf16 %v7142, %v7142
    %v7786 = vld [vmem:[#allocation31] sm:$0xff]
    %v7787 = vld [vmem:[#allocation31 + $0x8] sm:$0xff]
    %v7788 = vld [vmem:[#allocation31 + $0x10] sm:$0xff]
    %v7789 = vld [vmem:[#allocation31 + $0x18] sm:$0xff]
    %v7790 = vld [vmem:[#allocation31 + $0x20] sm:$0xff]
    %v7791 = vld [vmem:[#allocation31 + $0x28] sm:$0xff]
    %v7792 = vld [vmem:[#allocation31 + $0x30] sm:$0xff]
    %v7793 = vld [vmem:[#allocation31 + $0x38] sm:$0xff]
    %v7794 = vld [vmem:[#allocation31 + $0x40] sm:$0xff]
    %v7795 = vld [vmem:[#allocation31 + $0x48] sm:$0xff]
    %v7796 = vld [vmem:[#allocation31 + $0x50] sm:$0xff]
    %v7797 = vld [vmem:[#allocation31 + $0x58] sm:$0xff]
    %v7798 = vld [vmem:[#allocation31 + $0x60] sm:$0xff]
    %v7799 = vld [vmem:[#allocation31 + $0x68] sm:$0xff]
    %v7800 = vld [vmem:[#allocation31 + $0x70] sm:$0xff]
    %v7801 = vld [vmem:[#allocation31 + $0x78] sm:$0xff]
    %v7802 = vld [vmem:[#allocation31 + $0x80] sm:$0xff]
    %v7803 = vld [vmem:[#allocation31 + $0x88] sm:$0xff]
    %v7804 = vld [vmem:[#allocation31 + $0x90] sm:$0xff]
    %v7805 = vld [vmem:[#allocation31 + $0x98] sm:$0xff]
    %v7806 = vld [vmem:[#allocation31 + $0xa0] sm:$0xff]
    %v7807 = vld [vmem:[#allocation31 + $0xa8] sm:$0xff]
    %v7808 = vld [vmem:[#allocation31 + $0xb0] sm:$0xff]
    %v7809 = vld [vmem:[#allocation31 + $0xb8] sm:$0xff]
    %v7810 = vld [vmem:[#allocation31 + $0xc0] sm:$0xff]
    %v7811 = vld [vmem:[#allocation31 + $0xc8] sm:$0xff]
    %v7812 = vld [vmem:[#allocation31 + $0xd0] sm:$0xff]
    %v7813 = vld [vmem:[#allocation31 + $0xd8] sm:$0xff]
    %v7814 = vld [vmem:[#allocation31 + $0xe0] sm:$0xff]
    %v7815 = vld [vmem:[#allocation31 + $0xe8] sm:$0xff]
    %v7816 = vld [vmem:[#allocation31 + $0xf0] sm:$0xff]
    %v7817 = vld [vmem:[#allocation31 + $0xf8] sm:$0xff]
    %v7850 = vunpack.c.l.b16 %v7786
    %v7851 = vunpack.c.h.b16 %v7786
    %v7852 = vunpack.c.l.b16 %v7787
    %v7853 = vunpack.c.h.b16 %v7787
    %v7854 = vunpack.c.l.b16 %v7788
    %v7855 = vunpack.c.h.b16 %v7788
    %v7856 = vunpack.c.l.b16 %v7789
    %v7857 = vunpack.c.h.b16 %v7789
    %v7858 = vunpack.c.l.b16 %v7790
    %v7859 = vunpack.c.h.b16 %v7790
    %v7860 = vunpack.c.l.b16 %v7791
    %v7861 = vunpack.c.h.b16 %v7791
    %v7862 = vunpack.c.l.b16 %v7792
    %v7863 = vunpack.c.h.b16 %v7792
    %v7864 = vunpack.c.l.b16 %v7793
    %v7865 = vunpack.c.h.b16 %v7793
    %v7866 = vunpack.c.l.b16 %v7794
    %v7867 = vunpack.c.h.b16 %v7794
    %v7868 = vunpack.c.l.b16 %v7795
    %v7869 = vunpack.c.h.b16 %v7795
    %v7870 = vunpack.c.l.b16 %v7796
    %v7871 = vunpack.c.h.b16 %v7796
    %v7872 = vunpack.c.l.b16 %v7797
    %v7873 = vunpack.c.h.b16 %v7797
    %v7874 = vunpack.c.l.b16 %v7798
    %v7875 = vunpack.c.h.b16 %v7798
    %v7876 = vunpack.c.l.b16 %v7799
    %v7877 = vunpack.c.h.b16 %v7799
    %v7878 = vunpack.c.l.b16 %v7800
    %v7879 = vunpack.c.h.b16 %v7800
    %v7880 = vunpack.c.l.b16 %v7801
    %v7881 = vunpack.c.h.b16 %v7801
    %v7882 = vunpack.c.l.b16 %v7802
    %v7883 = vunpack.c.h.b16 %v7802
    %v7884 = vunpack.c.l.b16 %v7803
    %v7885 = vunpack.c.h.b16 %v7803
    %v7886 = vunpack.c.l.b16 %v7804
    %v7887 = vunpack.c.h.b16 %v7804
    %v7888 = vunpack.c.l.b16 %v7805
    %v7889 = vunpack.c.h.b16 %v7805
    %v7890 = vunpack.c.l.b16 %v7806
    %v7891 = vunpack.c.h.b16 %v7806
    %v7892 = vunpack.c.l.b16 %v7807
    %v7893 = vunpack.c.h.b16 %v7807
    %v7894 = vunpack.c.l.b16 %v7808
    %v7895 = vunpack.c.h.b16 %v7808
    %v7896 = vunpack.c.l.b16 %v7809
    %v7897 = vunpack.c.h.b16 %v7809
    %v7898 = vunpack.c.l.b16 %v7810
    %v7899 = vunpack.c.h.b16 %v7810
    %v7900 = vunpack.c.l.b16 %v7811
    %v7901 = vunpack.c.h.b16 %v7811
    %v7902 = vunpack.c.l.b16 %v7812
    %v7903 = vunpack.c.h.b16 %v7812
    %v7904 = vunpack.c.l.b16 %v7813
    %v7905 = vunpack.c.h.b16 %v7813
    %v7906 = vunpack.c.l.b16 %v7814
    %v7907 = vunpack.c.h.b16 %v7814
    %v7908 = vunpack.c.l.b16 %v7815
    %v7909 = vunpack.c.h.b16 %v7815
    %v7910 = vunpack.c.l.b16 %v7816
    %v7911 = vunpack.c.h.b16 %v7816
    %v7912 = vunpack.c.l.b16 %v7817
    %v7913 = vunpack.c.h.b16 %v7817
    %v7914 = vpack.c.b16 %v7854, %v7850
    %v7915 = vpack.c.b16 %v7855, %v7851
    %v7916 = vpack.c.b16 %v7856, %v7852
    %v7917 = vpack.c.b16 %v7857, %v7853
    %v7918 = vpack.c.b16 %v7862, %v7858
    %v7919 = vpack.c.b16 %v7863, %v7859
    %v7920 = vpack.c.b16 %v7864, %v7860
    %v7921 = vpack.c.b16 %v7865, %v7861
    %v7922 = vpack.c.b16 %v7870, %v7866
    %v7923 = vpack.c.b16 %v7871, %v7867
    %v7924 = vpack.c.b16 %v7872, %v7868
    %v7925 = vpack.c.b16 %v7873, %v7869
    %v7926 = vpack.c.b16 %v7878, %v7874
    %v7927 = vpack.c.b16 %v7879, %v7875
    %v7928 = vpack.c.b16 %v7880, %v7876
    %v7929 = vpack.c.b16 %v7881, %v7877
    %v7930 = vpack.c.b16 %v7886, %v7882
    %v7931 = vpack.c.b16 %v7887, %v7883
    %v7932 = vpack.c.b16 %v7888, %v7884
    %v7933 = vpack.c.b16 %v7889, %v7885
    %v7934 = vpack.c.b16 %v7894, %v7890
    %v7935 = vpack.c.b16 %v7895, %v7891
    %v7936 = vpack.c.b16 %v7896, %v7892
    %v7937 = vpack.c.b16 %v7897, %v7893
    %v7938 = vpack.c.b16 %v7902, %v7898
    %v7939 = vpack.c.b16 %v7903, %v7899
    %v7940 = vpack.c.b16 %v7904, %v7900
    %v7941 = vpack.c.b16 %v7905, %v7901
    %v7942 = vpack.c.b16 %v7910, %v7906
    %v7943 = vpack.c.b16 %v7911, %v7907
    %v7944 = vpack.c.b16 %v7912, %v7908
    %v7945 = vpack.c.b16 %v7913, %v7909
    %7978 = vmatprep.subr.bf16.mxu0 %v7915
    %7979 = vmatpush1.bf16.msra.mxu0 %v7914
    %7980 = vmatprep.subr.bf16.mxu0 %v7919
    %7981 = vmatpush1.bf16.msra.mxu0 %v7918
    %7982 = vmatprep.subr.bf16.mxu0 %v7923
    %7983 = vmatpush1.bf16.msra.mxu0 %v7922
    %7984 = vmatprep.subr.bf16.mxu0 %v7927
    %7985 = vmatpush1.bf16.msra.mxu0 %v7926
    %7986 = vmatprep.subr.bf16.mxu0 %v7931
    %7987 = vmatpush1.bf16.msra.mxu0 %v7930
    %7988 = vmatprep.subr.bf16.mxu0 %v7935
    %7989 = vmatpush1.bf16.msra.mxu0 %v7934
    %7990 = vmatprep.subr.bf16.mxu0 %v7939
    %7991 = vmatpush1.bf16.msra.mxu0 %v7938
    %7992 = vmatprep.subr.bf16.mxu0 %v7943
    %7993 = vmatpush1.bf16.msra.mxu0 %v7942
    %7994 = vmatprep.subr.bf16.mxu0 0
    %7995 = vmatpush1.bf16.msra.mxu0 0
    %7996 = vmatprep.subr.bf16.mxu0 0
    %7997 = vmatpush1.bf16.msra.mxu0 0
    %7998 = vmatprep.subr.bf16.mxu0 0
    %7999 = vmatpush1.bf16.msra.mxu0 0
    %8000 = vmatprep.subr.bf16.mxu0 0
    %8001 = vmatpush1.bf16.msra.mxu0 0
    %8002 = vmatprep.subr.bf16.mxu0 0
    %8003 = vmatpush1.bf16.msra.mxu0 0
    %8004 = vmatprep.subr.bf16.mxu0 0
    %8005 = vmatpush1.bf16.msra.mxu0 0
    %8006 = vmatprep.subr.bf16.mxu0 0
    %8007 = vmatpush1.bf16.msra.mxu0 0
    %8008 = vmatprep.subr.bf16.mxu0 0
    %8009 = vmatpush1.bf16.msra.mxu0 0
    %8010 = vmatprep.mubr.bf16.mxu0 0
    %8011 = vmatmul.mubr.bf16.gmra.mrb[0].mxu0 %v7785
    %v8012 = vpop.f32.mrb[0].mxu0
    %v8013 = vadd.f32 0.0, %v8012
    %v8014 = vpop.f32.mrb[0].mxu0
    %v8015 = vadd.f32 0.0, %v8014
    %v8016 = vpop.f32.mrb[0].mxu0
    %v8017 = vpop.f32.mrb[0].mxu0
    %8018 = vdwg.mxu0
    %8019 = vmatprep.subr.bf16.mxu0 %v7917
    %8020 = vmatpush1.bf16.msra.mxu0 %v7916
    %8021 = vmatprep.subr.bf16.mxu0 %v7921
    %8022 = vmatpush1.bf16.msra.mxu0 %v7920
    %8023 = vmatprep.subr.bf16.mxu0 %v7925
    %8024 = vmatpush1.bf16.msra.mxu0 %v7924
    %8025 = vmatprep.subr.bf16.mxu0 %v7929
    %8026 = vmatpush1.bf16.msra.mxu0 %v7928
    %8027 = vmatprep.subr.bf16.mxu0 %v7933
    %8028 = vmatpush1.bf16.msra.mxu0 %v7932
    %8029 = vmatprep.subr.bf16.mxu0 %v7937
    %8030 = vmatpush1.bf16.msra.mxu0 %v7936
    %8031 = vmatprep.subr.bf16.mxu0 %v7941
    %8032 = vmatpush1.bf16.msra.mxu0 %v7940
    %8033 = vmatprep.subr.bf16.mxu0 %v7945
    %8034 = vmatpush1.bf16.msra.mxu0 %v7944
    %8035 = vmatprep.subr.bf16.mxu0 0
    %8036 = vmatpush1.bf16.msra.mxu0 0
    %8037 = vmatprep.subr.bf16.mxu0 0
    %8038 = vmatpush1.bf16.msra.mxu0 0
    %8039 = vmatprep.subr.bf16.mxu0 0
    %8040 = vmatpush1.bf16.msra.mxu0 0
    %8041 = vmatprep.subr.bf16.mxu0 0
    %8042 = vmatpush1.bf16.msra.mxu0 0
    %8043 = vmatprep.subr.bf16.mxu0 0
    %8044 = vmatpush1.bf16.msra.mxu0 0
    %8045 = vmatprep.subr.bf16.mxu0 0
    %8046 = vmatpush1.bf16.msra.mxu0 0
    %8047 = vmatprep.subr.bf16.mxu0 0
    %8048 = vmatpush1.bf16.msra.mxu0 0
    %8049 = vmatprep.subr.bf16.mxu0 0
    %8050 = vmatpush1.bf16.msra.mxu0 0
    %8051 = vmatprep.mubr.bf16.mxu0 0
    %8052 = vmatmul.mubr.bf16.gmra.mrb[0].mxu0 %v7785
    %v8053 = vpop.f32.mrb[0].mxu0
    %v8054 = vadd.f32 0.0, %v8053
    %v8055 = vpop.f32.mrb[0].mxu0
    %v8056 = vadd.f32 0.0, %v8055
    %v8057 = vpop.f32.mrb[0].mxu0
    %v8058 = vpop.f32.mrb[0].mxu0
    %8059 = vdwg.mxu0
    %v8064 = vrot.slane %v8013, 6
    %v8065 = vrot.slane %v8015, 6
    %v8066 = vrot.slane %v8054, 6
    %v8067 = vrot.slane %v8056, 6
    %v8072 = vadd.f32 %v7781, %v8064
    %v8073 = vadd.f32 %v7782, %v8065
    %v8074 = vadd.f32 %v7783, %v8066
    %v8075 = vadd.f32 %v7784, %v8067
    %v8076 = vxor.u32 %v8072, 2147483648
    %v8077 = vmul.f32 %v8076, 1.442695
    %v8078 = vpow.pop %v8077
    %v8079 = vadd.f32 %v8078, 1.0
    %v8080 = vrcp.pop %v8079
    %v8081 = vmul.f32 1.0, %v8080
    %v8082 = vxor.u32 %v8073, 2147483648
    %v8083 = vmul.f32 %v8082, 1.442695
    %v8084 = vpow.pop %v8083
    %v8085 = vadd.f32 %v8084, 1.0
    %v8086 = vrcp.pop %v8085
    %v8087 = vmul.f32 1.0, %v8086
    %v8088 = vtanh.pop %v8074
    %v8089 = vxor.u32 %v8075, 2147483648
    %v8090 = vmul.f32 %v8089, 1.442695
    %v8091 = vpow.pop %v8090
    %v8092 = vadd.f32 %v8091, 1.0
    %v8093 = vrcp.pop %v8092
    %v8094 = vmul.f32 1.0, %v8093
    %v8096 = vrot.slane %v7140, 6
    %v8098 = vmul.f32 %v8087, %v8096
    %v8099 = vmul.f32 %v8081, %v8088
    %v8100 = vadd.f32 %v8098, %v8099
    %v8101 = vtanh.pop %v8100
    %v8102 = vmul.f32 %v8094, %v8101
    %v8103 = vld [vmem:[#allocation4 + $0x20] sm:$0xc]
    %v8104 = vld [vmem:[#allocation4 + $0x28] sm:$0xc]
    %v8105 = vld [vmem:[#allocation4 + $0x30] sm:$0xc]
    %v8106 = vld [vmem:[#allocation4 + $0x38] sm:$0xc]
    %v8107 = vpack.c.bf16 %v7455, %v7455
    %v8108 = vld [vmem:[#allocation42] sm:$0xff]
    %v8109 = vld [vmem:[#allocation42 + $0x8] sm:$0xff]
    %v8110 = vld [vmem:[#allocation42 + $0x10] sm:$0xff]
    %v8111 = vld [vmem:[#allocation42 + $0x18] sm:$0xff]
    %v8112 = vld [vmem:[#allocation42 + $0x20] sm:$0xff]
    %v8113 = vld [vmem:[#allocation42 + $0x28] sm:$0xff]
    %v8114 = vld [vmem:[#allocation42 + $0x30] sm:$0xff]
    %v8115 = vld [vmem:[#allocation42 + $0x38] sm:$0xff]
    %v8116 = vld [vmem:[#allocation42 + $0x40] sm:$0xff]
    %v8117 = vld [vmem:[#allocation42 + $0x48] sm:$0xff]
    %v8118 = vld [vmem:[#allocation42 + $0x50] sm:$0xff]
    %v8119 = vld [vmem:[#allocation42 + $0x58] sm:$0xff]
    %v8120 = vld [vmem:[#allocation42 + $0x60] sm:$0xff]
    %v8121 = vld [vmem:[#allocation42 + $0x68] sm:$0xff]
    %v8122 = vld [vmem:[#allocation42 + $0x70] sm:$0xff]
    %v8123 = vld [vmem:[#allocation42 + $0x78] sm:$0xff]
    %v8124 = vld [vmem:[#allocation42 + $0x80] sm:$0xff]
    %v8125 = vld [vmem:[#allocation42 + $0x88] sm:$0xff]
    %v8126 = vld [vmem:[#allocation42 + $0x90] sm:$0xff]
    %v8127 = vld [vmem:[#allocation42 + $0x98] sm:$0xff]
    %v8128 = vld [vmem:[#allocation42 + $0xa0] sm:$0xff]
    %v8129 = vld [vmem:[#allocation42 + $0xa8] sm:$0xff]
    %v8130 = vld [vmem:[#allocation42 + $0xb0] sm:$0xff]
    %v8131 = vld [vmem:[#allocation42 + $0xb8] sm:$0xff]
    %v8132 = vld [vmem:[#allocation42 + $0xc0] sm:$0xff]
    %v8133 = vld [vmem:[#allocation42 + $0xc8] sm:$0xff]
    %v8134 = vld [vmem:[#allocation42 + $0xd0] sm:$0xff]
    %v8135 = vld [vmem:[#allocation42 + $0xd8] sm:$0xff]
    %v8136 = vld [vmem:[#allocation42 + $0xe0] sm:$0xff]
    %v8137 = vld [vmem:[#allocation42 + $0xe8] sm:$0xff]
    %v8138 = vld [vmem:[#allocation42 + $0xf0] sm:$0xff]
    %v8139 = vld [vmem:[#allocation42 + $0xf8] sm:$0xff]
    %v8172 = vunpack.c.l.b16 %v8108
    %v8173 = vunpack.c.h.b16 %v8108
    %v8174 = vunpack.c.l.b16 %v8109
    %v8175 = vunpack.c.h.b16 %v8109
    %v8176 = vunpack.c.l.b16 %v8110
    %v8177 = vunpack.c.h.b16 %v8110
    %v8178 = vunpack.c.l.b16 %v8111
    %v8179 = vunpack.c.h.b16 %v8111
    %v8180 = vunpack.c.l.b16 %v8112
    %v8181 = vunpack.c.h.b16 %v8112
    %v8182 = vunpack.c.l.b16 %v8113
    %v8183 = vunpack.c.h.b16 %v8113
    %v8184 = vunpack.c.l.b16 %v8114
    %v8185 = vunpack.c.h.b16 %v8114
    %v8186 = vunpack.c.l.b16 %v8115
    %v8187 = vunpack.c.h.b16 %v8115
    %v8188 = vunpack.c.l.b16 %v8116
    %v8189 = vunpack.c.h.b16 %v8116
    %v8190 = vunpack.c.l.b16 %v8117
    %v8191 = vunpack.c.h.b16 %v8117
    %v8192 = vunpack.c.l.b16 %v8118
    %v8193 = vunpack.c.h.b16 %v8118
    %v8194 = vunpack.c.l.b16 %v8119
    %v8195 = vunpack.c.h.b16 %v8119
    %v8196 = vunpack.c.l.b16 %v8120
    %v8197 = vunpack.c.h.b16 %v8120
    %v8198 = vunpack.c.l.b16 %v8121
    %v8199 = vunpack.c.h.b16 %v8121
    %v8200 = vunpack.c.l.b16 %v8122
    %v8201 = vunpack.c.h.b16 %v8122
    %v8202 = vunpack.c.l.b16 %v8123
    %v8203 = vunpack.c.h.b16 %v8123
    %v8204 = vunpack.c.l.b16 %v8124
    %v8205 = vunpack.c.h.b16 %v8124
    %v8206 = vunpack.c.l.b16 %v8125
    %v8207 = vunpack.c.h.b16 %v8125
    %v8208 = vunpack.c.l.b16 %v8126
    %v8209 = vunpack.c.h.b16 %v8126
    %v8210 = vunpack.c.l.b16 %v8127
    %v8211 = vunpack.c.h.b16 %v8127
    %v8212 = vunpack.c.l.b16 %v8128
    %v8213 = vunpack.c.h.b16 %v8128
    %v8214 = vunpack.c.l.b16 %v8129
    %v8215 = vunpack.c.h.b16 %v8129
    %v8216 = vunpack.c.l.b16 %v8130
    %v8217 = vunpack.c.h.b16 %v8130
    %v8218 = vunpack.c.l.b16 %v8131
    %v8219 = vunpack.c.h.b16 %v8131
    %v8220 = vunpack.c.l.b16 %v8132
    %v8221 = vunpack.c.h.b16 %v8132
    %v8222 = vunpack.c.l.b16 %v8133
    %v8223 = vunpack.c.h.b16 %v8133
    %v8224 = vunpack.c.l.b16 %v8134
    %v8225 = vunpack.c.h.b16 %v8134
    %v8226 = vunpack.c.l.b16 %v8135
    %v8227 = vunpack.c.h.b16 %v8135
    %v8228 = vunpack.c.l.b16 %v8136
    %v8229 = vunpack.c.h.b16 %v8136
    %v8230 = vunpack.c.l.b16 %v8137
    %v8231 = vunpack.c.h.b16 %v8137
    %v8232 = vunpack.c.l.b16 %v8138
    %v8233 = vunpack.c.h.b16 %v8138
    %v8234 = vunpack.c.l.b16 %v8139
    %v8235 = vunpack.c.h.b16 %v8139
    %v8236 = vpack.c.b16 %v8176, %v8172
    %v8237 = vpack.c.b16 %v8177, %v8173
    %v8238 = vpack.c.b16 %v8178, %v8174
    %v8239 = vpack.c.b16 %v8179, %v8175
    %v8240 = vpack.c.b16 %v8184, %v8180
    %v8241 = vpack.c.b16 %v8185, %v8181
    %v8242 = vpack.c.b16 %v8186, %v8182
    %v8243 = vpack.c.b16 %v8187, %v8183
    %v8244 = vpack.c.b16 %v8192, %v8188
    %v8245 = vpack.c.b16 %v8193, %v8189
    %v8246 = vpack.c.b16 %v8194, %v8190
    %v8247 = vpack.c.b16 %v8195, %v8191
    %v8248 = vpack.c.b16 %v8200, %v8196
    %v8249 = vpack.c.b16 %v8201, %v8197
    %v8250 = vpack.c.b16 %v8202, %v8198
    %v8251 = vpack.c.b16 %v8203, %v8199
    %v8252 = vpack.c.b16 %v8208, %v8204
    %v8253 = vpack.c.b16 %v8209, %v8205
    %v8254 = vpack.c.b16 %v8210, %v8206
    %v8255 = vpack.c.b16 %v8211, %v8207
    %v8256 = vpack.c.b16 %v8216, %v8212
    %v8257 = vpack.c.b16 %v8217, %v8213
    %v8258 = vpack.c.b16 %v8218, %v8214
    %v8259 = vpack.c.b16 %v8219, %v8215
    %v8260 = vpack.c.b16 %v8224, %v8220
    %v8261 = vpack.c.b16 %v8225, %v8221
    %v8262 = vpack.c.b16 %v8226, %v8222
    %v8263 = vpack.c.b16 %v8227, %v8223
    %v8264 = vpack.c.b16 %v8232, %v8228
    %v8265 = vpack.c.b16 %v8233, %v8229
    %v8266 = vpack.c.b16 %v8234, %v8230
    %v8267 = vpack.c.b16 %v8235, %v8231
    %8300 = vmatprep.subr.bf16.mxu0 %v8237
    %8301 = vmatpush1.bf16.msra.mxu0 %v8236
    %8302 = vmatprep.subr.bf16.mxu0 %v8241
    %8303 = vmatpush1.bf16.msra.mxu0 %v8240
    %8304 = vmatprep.subr.bf16.mxu0 %v8245
    %8305 = vmatpush1.bf16.msra.mxu0 %v8244
    %8306 = vmatprep.subr.bf16.mxu0 %v8249
    %8307 = vmatpush1.bf16.msra.mxu0 %v8248
    %8308 = vmatprep.subr.bf16.mxu0 %v8253
    %8309 = vmatpush1.bf16.msra.mxu0 %v8252
    %8310 = vmatprep.subr.bf16.mxu0 %v8257
    %8311 = vmatpush1.bf16.msra.mxu0 %v8256
    %8312 = vmatprep.subr.bf16.mxu0 %v8261
    %8313 = vmatpush1.bf16.msra.mxu0 %v8260
    %8314 = vmatprep.subr.bf16.mxu0 %v8265
    %8315 = vmatpush1.bf16.msra.mxu0 %v8264
    %8316 = vmatprep.subr.bf16.mxu0 0
    %8317 = vmatpush1.bf16.msra.mxu0 0
    %8318 = vmatprep.subr.bf16.mxu0 0
    %8319 = vmatpush1.bf16.msra.mxu0 0
    %8320 = vmatprep.subr.bf16.mxu0 0
    %8321 = vmatpush1.bf16.msra.mxu0 0
    %8322 = vmatprep.subr.bf16.mxu0 0
    %8323 = vmatpush1.bf16.msra.mxu0 0
    %8324 = vmatprep.subr.bf16.mxu0 0
    %8325 = vmatpush1.bf16.msra.mxu0 0
    %8326 = vmatprep.subr.bf16.mxu0 0
    %8327 = vmatpush1.bf16.msra.mxu0 0
    %8328 = vmatprep.subr.bf16.mxu0 0
    %8329 = vmatpush1.bf16.msra.mxu0 0
    %8330 = vmatprep.subr.bf16.mxu0 0
    %8331 = vmatpush1.bf16.msra.mxu0 0
    %8332 = vmatprep.mubr.bf16.mxu0 0
    %8333 = vmatmul.mubr.bf16.gmra.mrb[0].mxu0 %v8107
    %v8334 = vpop.f32.mrb[0].mxu0
    %v8335 = vadd.f32 0.0, %v8334
    %v8336 = vpop.f32.mrb[0].mxu0
    %v8337 = vadd.f32 0.0, %v8336
    %v8338 = vpop.f32.mrb[0].mxu0
    %v8339 = vpop.f32.mrb[0].mxu0
    %8340 = vdwg.mxu0
    %8341 = vmatprep.subr.bf16.mxu0 %v8239
    %8342 = vmatpush1.bf16.msra.mxu0 %v8238
    %8343 = vmatprep.subr.bf16.mxu0 %v8243
    %8344 = vmatpush1.bf16.msra.mxu0 %v8242
    %8345 = vmatprep.subr.bf16.mxu0 %v8247
    %8346 = vmatpush1.bf16.msra.mxu0 %v8246
    %8347 = vmatprep.subr.bf16.mxu0 %v8251
    %8348 = vmatpush1.bf16.msra.mxu0 %v8250
    %8349 = vmatprep.subr.bf16.mxu0 %v8255
    %8350 = vmatpush1.bf16.msra.mxu0 %v8254
    %8351 = vmatprep.subr.bf16.mxu0 %v8259
    %8352 = vmatpush1.bf16.msra.mxu0 %v8258
    %8353 = vmatprep.subr.bf16.mxu0 %v8263
    %8354 = vmatpush1.bf16.msra.mxu0 %v8262
    %8355 = vmatprep.subr.bf16.mxu0 %v8267
    %8356 = vmatpush1.bf16.msra.mxu0 %v8266
    %8357 = vmatprep.subr.bf16.mxu0 0
    %8358 = vmatpush1.bf16.msra.mxu0 0
    %8359 = vmatprep.subr.bf16.mxu0 0
    %8360 = vmatpush1.bf16.msra.mxu0 0
    %8361 = vmatprep.subr.bf16.mxu0 0
    %8362 = vmatpush1.bf16.msra.mxu0 0
    %8363 = vmatprep.subr.bf16.mxu0 0
    %8364 = vmatpush1.bf16.msra.mxu0 0
    %8365 = vmatprep.subr.bf16.mxu0 0
    %8366 = vmatpush1.bf16.msra.mxu0 0
    %8367 = vmatprep.subr.bf16.mxu0 0
    %8368 = vmatpush1.bf16.msra.mxu0 0
    %8369 = vmatprep.subr.bf16.mxu0 0
    %8370 = vmatpush1.bf16.msra.mxu0 0
    %8371 = vmatprep.subr.bf16.mxu0 0
    %8372 = vmatpush1.bf16.msra.mxu0 0
    %8373 = vmatprep.mubr.bf16.mxu0 0
    %8374 = vmatmul.mubr.bf16.gmra.mrb[0].mxu0 %v8107
    %v8375 = vpop.f32.mrb[0].mxu0
    %v8376 = vadd.f32 0.0, %v8375
    %v8377 = vpop.f32.mrb[0].mxu0
    %v8378 = vadd.f32 0.0, %v8377
    %v8379 = vpop.f32.mrb[0].mxu0
    %v8380 = vpop.f32.mrb[0].mxu0
    %8381 = vdwg.mxu0
    %v8386 = vrot.slane %v8335, 6
    %v8387 = vrot.slane %v8337, 6
    %v8388 = vrot.slane %v8376, 6
    %v8389 = vrot.slane %v8378, 6
    %v8394 = vadd.f32 %v8103, %v8386
    %v8395 = vadd.f32 %v8104, %v8387
    %v8396 = vadd.f32 %v8105, %v8388
    %v8397 = vadd.f32 %v8106, %v8389
    %v8398 = vxor.u32 %v8394, 2147483648
    %v8399 = vmul.f32 %v8398, 1.442695
    %v8400 = vpow.pop %v8399
    %v8401 = vadd.f32 %v8400, 1.0
    %v8402 = vrcp.pop %v8401
    %v8403 = vmul.f32 1.0, %v8402
    %v8404 = vxor.u32 %v8395, 2147483648
    %v8405 = vmul.f32 %v8404, 1.442695
    %v8406 = vpow.pop %v8405
    %v8407 = vadd.f32 %v8406, 1.0
    %v8408 = vrcp.pop %v8407
    %v8409 = vmul.f32 1.0, %v8408
    %v8410 = vtanh.pop %v8396
    %v8411 = vxor.u32 %v8397, 2147483648
    %v8412 = vmul.f32 %v8411, 1.442695
    %v8413 = vpow.pop %v8412
    %v8414 = vadd.f32 %v8413, 1.0
    %v8415 = vrcp.pop %v8414
    %v8416 = vmul.f32 1.0, %v8415
    %v8418 = vrot.slane %v7453, 6
    %v8420 = vmul.f32 %v8409, %v8418
    %v8421 = vmul.f32 %v8403, %v8410
    %v8422 = vadd.f32 %v8420, %v8421
    %v8423 = vtanh.pop %v8422
    %v8424 = vmul.f32 %v8416, %v8423
    %8425 = vst [vmem:[#allocation6 + $0x8] sm:$0xc] %v7780
    %8426 = vst [vmem:[#allocation7 + $0x8] sm:$0xc] %v8102
    %8427 = vst [vmem:[#allocation8 + $0x8] sm:$0xc] %v8424
    %v8428 = vld [vmem:[#allocation6] sm:$0xff]
    %v8429 = vld [vmem:[#allocation6 + $0x8] sm:$0xf]
    %v8431 = vrot.slane %v1818, 6
    %v8433 = vrot.slane %v1818, 4
    %v8435 = vrot.slane %v1818, 2
    %vm8437 = vcmask 1041408
    %v8438 = vsel %vm8437, %v1818, %v8431
    %vm8439 = vcmask 1043456
    %v8440 = vsel %vm8439, %v8438, %v8433
    %vm8441 = vcmask 1045504
    %v8442 = vsel %vm8441, %v8440, %v8435
    %v8443 = vpack.c.bf16 %v8429, %v8428
    %v8444 = vpack.c.bf16 %v8438, %v8442
    %v8445 = vld [vmem:[#allocation22] sm:$0xf]
    %v8446 = vld [vmem:[#allocation22 + $0x4] sm:$0xf]
    %v8447 = vld [vmem:[#allocation22 + $0x8] sm:$0xf]
    %v8448 = vld [vmem:[#allocation22 + $0xc] sm:$0xf]
    %v8449 = vld [vmem:[#allocation22 + $0x10] sm:$0xf]
    %v8450 = vld [vmem:[#allocation22 + $0x14] sm:$0xf]
    %v8451 = vld [vmem:[#allocation22 + $0x18] sm:$0xf]
    %v8452 = vld [vmem:[#allocation22 + $0x1c] sm:$0xf]
    %v8453 = vld [vmem:[#allocation22 + $0x20] sm:$0xf]
    %v8454 = vld [vmem:[#allocation22 + $0x24] sm:$0xf]
    %v8455 = vld [vmem:[#allocation22 + $0x28] sm:$0xf]
    %v8456 = vld [vmem:[#allocation22 + $0x2c] sm:$0xf]
    %v8457 = vld [vmem:[#allocation22 + $0x30] sm:$0xf]
    %v8458 = vld [vmem:[#allocation22 + $0x34] sm:$0xf]
    %v8459 = vld [vmem:[#allocation22 + $0x38] sm:$0xf]
    %v8460 = vld [vmem:[#allocation22 + $0x3c] sm:$0xf]
    %v8461 = vld [vmem:[#allocation22 + $0x40] sm:$0xf]
    %v8462 = vld [vmem:[#allocation22 + $0x44] sm:$0xf]
    %v8463 = vld [vmem:[#allocation22 + $0x48] sm:$0xf]
    %v8464 = vld [vmem:[#allocation22 + $0x4c] sm:$0xf]
    %v8465 = vld [vmem:[#allocation22 + $0x50] sm:$0xf]
    %v8466 = vld [vmem:[#allocation22 + $0x54] sm:$0xf]
    %v8467 = vld [vmem:[#allocation22 + $0x58] sm:$0xf]
    %v8468 = vld [vmem:[#allocation22 + $0x5c] sm:$0xf]
    %v8469 = vld [vmem:[#allocation22 + $0x60] sm:$0xf]
    %v8470 = vld [vmem:[#allocation22 + $0x64] sm:$0xf]
    %v8471 = vld [vmem:[#allocation22 + $0x68] sm:$0xf]
    %v8472 = vld [vmem:[#allocation22 + $0x6c] sm:$0xf]
    %v8473 = vld [vmem:[#allocation22 + $0x70] sm:$0xf]
    %v8474 = vld [vmem:[#allocation22 + $0x74] sm:$0xf]
    %v8475 = vld [vmem:[#allocation22 + $0x78] sm:$0xf]
    %v8476 = vld [vmem:[#allocation22 + $0x7c] sm:$0xf]
    %v8477 = vld [vmem:[#allocation24] sm:$0x1]
    %v8479 = vlaneseq
    %v8480 = vshrl.u32 %v8479, 7
    %v8481 = vsub.s32 0, %v8480
    %v8482 = vrot.slane %v8477, %v8481
    %v8516 = vunpack.c.l.b16 %v8445
    %v8517 = vunpack.c.l.b16 %v8446
    %v8518 = vunpack.c.l.b16 %v8447
    %v8519 = vunpack.c.l.b16 %v8448
    %v8520 = vunpack.c.l.b16 %v8449
    %v8521 = vunpack.c.l.b16 %v8450
    %v8522 = vunpack.c.l.b16 %v8451
    %v8523 = vunpack.c.l.b16 %v8452
    %v8524 = vunpack.c.l.b16 %v8453
    %v8525 = vunpack.c.l.b16 %v8454
    %v8526 = vunpack.c.l.b16 %v8455
    %v8527 = vunpack.c.l.b16 %v8456
    %v8528 = vunpack.c.l.b16 %v8457
    %v8529 = vunpack.c.l.b16 %v8458
    %v8530 = vunpack.c.l.b16 %v8459
    %v8531 = vunpack.c.l.b16 %v8460
    %v8532 = vunpack.c.l.b16 %v8461
    %v8533 = vunpack.c.l.b16 %v8462
    %v8534 = vunpack.c.l.b16 %v8463
    %v8535 = vunpack.c.l.b16 %v8464
    %v8536 = vunpack.c.l.b16 %v8465
    %v8537 = vunpack.c.l.b16 %v8466
    %v8538 = vunpack.c.l.b16 %v8467
    %v8539 = vunpack.c.l.b16 %v8468
    %v8540 = vunpack.c.l.b16 %v8469
    %v8541 = vunpack.c.l.b16 %v8470
    %v8542 = vunpack.c.l.b16 %v8471
    %v8543 = vunpack.c.l.b16 %v8472
    %v8544 = vunpack.c.l.b16 %v8473
    %v8545 = vunpack.c.l.b16 %v8474
    %v8546 = vunpack.c.l.b16 %v8475
    %v8547 = vunpack.c.l.b16 %v8476
    %v8548 = vpack.c.b16 %v8517, %v8516
    %v8549 = vpack.c.b16 %v8519, %v8518
    %v8550 = vpack.c.b16 %v8521, %v8520
    %v8551 = vpack.c.b16 %v8523, %v8522
    %v8552 = vpack.c.b16 %v8525, %v8524
    %v8553 = vpack.c.b16 %v8527, %v8526
    %v8554 = vpack.c.b16 %v8529, %v8528
    %v8555 = vpack.c.b16 %v8531, %v8530
    %v8556 = vpack.c.b16 %v8533, %v8532
    %v8557 = vpack.c.b16 %v8535, %v8534
    %v8558 = vpack.c.b16 %v8537, %v8536
    %v8559 = vpack.c.b16 %v8539, %v8538
    %v8560 = vpack.c.b16 %v8541, %v8540
    %v8561 = vpack.c.b16 %v8543, %v8542
    %v8562 = vpack.c.b16 %v8545, %v8544
    %v8563 = vpack.c.b16 %v8547, %v8546
    %8580 = vmatprep.subr.bf16.mxu0 0
    %8581 = vmatpush1.bf16.msra.mxu0 %v8548
    %8582 = vmatprep.subr.bf16.mxu0 0
    %8583 = vmatpush1.bf16.msra.mxu0 %v8549
    %8584 = vmatprep.subr.bf16.mxu0 0
    %8585 = vmatpush1.bf16.msra.mxu0 %v8550
    %8586 = vmatprep.subr.bf16.mxu0 0
    %8587 = vmatpush1.bf16.msra.mxu0 %v8551
    %8588 = vmatprep.subr.bf16.mxu0 0
    %8589 = vmatpush1.bf16.msra.mxu0 %v8552
    %8590 = vmatprep.subr.bf16.mxu0 0
    %8591 = vmatpush1.bf16.msra.mxu0 %v8553
    %8592 = vmatprep.subr.bf16.mxu0 0
    %8593 = vmatpush1.bf16.msra.mxu0 %v8554
    %8594 = vmatprep.subr.bf16.mxu0 0
    %8595 = vmatpush1.bf16.msra.mxu0 %v8555
    %8596 = vmatprep.subr.bf16.mxu0 0
    %8597 = vmatpush1.bf16.msra.mxu0 %v8556
    %8598 = vmatprep.subr.bf16.mxu0 0
    %8599 = vmatpush1.bf16.msra.mxu0 %v8557
    %8600 = vmatprep.subr.bf16.mxu0 0
    %8601 = vmatpush1.bf16.msra.mxu0 %v8558
    %8602 = vmatprep.subr.bf16.mxu0 0
    %8603 = vmatpush1.bf16.msra.mxu0 %v8559
    %8604 = vmatprep.subr.bf16.mxu0 0
    %8605 = vmatpush1.bf16.msra.mxu0 %v8560
    %8606 = vmatprep.subr.bf16.mxu0 0
    %8607 = vmatpush1.bf16.msra.mxu0 %v8561
    %8608 = vmatprep.subr.bf16.mxu0 0
    %8609 = vmatpush1.bf16.msra.mxu0 %v8562
    %8610 = vmatprep.subr.bf16.mxu0 0
    %8611 = vmatpush1.bf16.msra.mxu0 %v8563
    %8612 = vmatprep.mubr.bf16.mxu0 %v8444
    %8613 = vmatmul.mubr.bf16.gmra.mrb[0].mxu0 %v8443
    %v8614 = vpop.f32.mrb[0].mxu0
    %v8615 = vadd.f32 %v8482, %v8614
    %v8616 = vpop.f32.mrb[0].mxu0
    %v8617 = vpop.f32.mrb[0].mxu0
    %v8618 = vadd.f32 %v8482, %v8617
    %v8619 = vpop.f32.mrb[0].mxu0
    %8620 = vdwg.mxu0
    %v8621 = vmax.f32 %v8615, 0.0
    %v8622 = vmax.f32 %v8618, 0.0
    %v8623 = vld [vmem:[#allocation7] sm:$0xff]
    %v8624 = vld [vmem:[#allocation7 + $0x8] sm:$0xf]
    %v8626 = vrot.slane %v2242, 6
    %v8628 = vrot.slane %v2242, 4
    %v8630 = vrot.slane %v2242, 2
    %v8632 = vsel %vm8437, %v2242, %v8626
    %v8633 = vsel %vm8439, %v8632, %v8628
    %v8634 = vsel %vm8441, %v8633, %v8630
    %v8635 = vpack.c.bf16 %v8624, %v8623
    %v8636 = vpack.c.bf16 %v8632, %v8634
    %v8637 = vld [vmem:[#allocation33] sm:$0xf]
    %v8638 = vld [vmem:[#allocation33 + $0x4] sm:$0xf]
    %v8639 = vld [vmem:[#allocation33 + $0x8] sm:$0xf]
    %v8640 = vld [vmem:[#allocation33 + $0xc] sm:$0xf]
    %v8641 = vld [vmem:[#allocation33 + $0x10] sm:$0xf]
    %v8642 = vld [vmem:[#allocation33 + $0x14] sm:$0xf]
    %v8643 = vld [vmem:[#allocation33 + $0x18] sm:$0xf]
    %v8644 = vld [vmem:[#allocation33 + $0x1c] sm:$0xf]
    %v8645 = vld [vmem:[#allocation33 + $0x20] sm:$0xf]
    %v8646 = vld [vmem:[#allocation33 + $0x24] sm:$0xf]
    %v8647 = vld [vmem:[#allocation33 + $0x28] sm:$0xf]
    %v8648 = vld [vmem:[#allocation33 + $0x2c] sm:$0xf]
    %v8649 = vld [vmem:[#allocation33 + $0x30] sm:$0xf]
    %v8650 = vld [vmem:[#allocation33 + $0x34] sm:$0xf]
    %v8651 = vld [vmem:[#allocation33 + $0x38] sm:$0xf]
    %v8652 = vld [vmem:[#allocation33 + $0x3c] sm:$0xf]
    %v8653 = vld [vmem:[#allocation33 + $0x40] sm:$0xf]
    %v8654 = vld [vmem:[#allocation33 + $0x44] sm:$0xf]
    %v8655 = vld [vmem:[#allocation33 + $0x48] sm:$0xf]
    %v8656 = vld [vmem:[#allocation33 + $0x4c] sm:$0xf]
    %v8657 = vld [vmem:[#allocation33 + $0x50] sm:$0xf]
    %v8658 = vld [vmem:[#allocation33 + $0x54] sm:$0xf]
    %v8659 = vld [vmem:[#allocation33 + $0x58] sm:$0xf]
    %v8660 = vld [vmem:[#allocation33 + $0x5c] sm:$0xf]
    %v8661 = vld [vmem:[#allocation33 + $0x60] sm:$0xf]
    %v8662 = vld [vmem:[#allocation33 + $0x64] sm:$0xf]
    %v8663 = vld [vmem:[#allocation33 + $0x68] sm:$0xf]
    %v8664 = vld [vmem:[#allocation33 + $0x6c] sm:$0xf]
    %v8665 = vld [vmem:[#allocation33 + $0x70] sm:$0xf]
    %v8666 = vld [vmem:[#allocation33 + $0x74] sm:$0xf]
    %v8667 = vld [vmem:[#allocation33 + $0x78] sm:$0xf]
    %v8668 = vld [vmem:[#allocation33 + $0x7c] sm:$0xf]
    %v8669 = vld [vmem:[#allocation34] sm:$0x1]
    %v8671 = vlaneseq
    %v8672 = vshrl.u32 %v8671, 7
    %v8673 = vsub.s32 0, %v8672
    %v8674 = vrot.slane %v8669, %v8673
    %v8708 = vunpack.c.l.b16 %v8637
    %v8709 = vunpack.c.l.b16 %v8638
    %v8710 = vunpack.c.l.b16 %v8639
    %v8711 = vunpack.c.l.b16 %v8640
    %v8712 = vunpack.c.l.b16 %v8641
    %v8713 = vunpack.c.l.b16 %v8642
    %v8714 = vunpack.c.l.b16 %v8643
    %v8715 = vunpack.c.l.b16 %v8644
    %v8716 = vunpack.c.l.b16 %v8645
    %v8717 = vunpack.c.l.b16 %v8646
    %v8718 = vunpack.c.l.b16 %v8647
    %v8719 = vunpack.c.l.b16 %v8648
    %v8720 = vunpack.c.l.b16 %v8649
    %v8721 = vunpack.c.l.b16 %v8650
    %v8722 = vunpack.c.l.b16 %v8651
    %v8723 = vunpack.c.l.b16 %v8652
    %v8724 = vunpack.c.l.b16 %v8653
    %v8725 = vunpack.c.l.b16 %v8654
    %v8726 = vunpack.c.l.b16 %v8655
    %v8727 = vunpack.c.l.b16 %v8656
    %v8728 = vunpack.c.l.b16 %v8657
    %v8729 = vunpack.c.l.b16 %v8658
    %v8730 = vunpack.c.l.b16 %v8659
    %v8731 = vunpack.c.l.b16 %v8660
    %v8732 = vunpack.c.l.b16 %v8661
    %v8733 = vunpack.c.l.b16 %v8662
    %v8734 = vunpack.c.l.b16 %v8663
    %v8735 = vunpack.c.l.b16 %v8664
    %v8736 = vunpack.c.l.b16 %v8665
    %v8737 = vunpack.c.l.b16 %v8666
    %v8738 = vunpack.c.l.b16 %v8667
    %v8739 = vunpack.c.l.b16 %v8668
    %v8740 = vpack.c.b16 %v8709, %v8708
    %v8741 = vpack.c.b16 %v8711, %v8710
    %v8742 = vpack.c.b16 %v8713, %v8712
    %v8743 = vpack.c.b16 %v8715, %v8714
    %v8744 = vpack.c.b16 %v8717, %v8716
    %v8745 = vpack.c.b16 %v8719, %v8718
    %v8746 = vpack.c.b16 %v8721, %v8720
    %v8747 = vpack.c.b16 %v8723, %v8722
    %v8748 = vpack.c.b16 %v8725, %v8724
    %v8749 = vpack.c.b16 %v8727, %v8726
    %v8750 = vpack.c.b16 %v8729, %v8728
    %v8751 = vpack.c.b16 %v8731, %v8730
    %v8752 = vpack.c.b16 %v8733, %v8732
    %v8753 = vpack.c.b16 %v8735, %v8734
    %v8754 = vpack.c.b16 %v8737, %v8736
    %v8755 = vpack.c.b16 %v8739, %v8738
    %8772 = vmatprep.subr.bf16.mxu0 0
    %8773 = vmatpush1.bf16.msra.mxu0 %v8740
    %8774 = vmatprep.subr.bf16.mxu0 0
    %8775 = vmatpush1.bf16.msra.mxu0 %v8741
    %8776 = vmatprep.subr.bf16.mxu0 0
    %8777 = vmatpush1.bf16.msra.mxu0 %v8742
    %8778 = vmatprep.subr.bf16.mxu0 0
    %8779 = vmatpush1.bf16.msra.mxu0 %v8743
    %8780 = vmatprep.subr.bf16.mxu0 0
    %8781 = vmatpush1.bf16.msra.mxu0 %v8744
    %8782 = vmatprep.subr.bf16.mxu0 0
    %8783 = vmatpush1.bf16.msra.mxu0 %v8745
    %8784 = vmatprep.subr.bf16.mxu0 0
    %8785 = vmatpush1.bf16.msra.mxu0 %v8746
    %8786 = vmatprep.subr.bf16.mxu0 0
    %8787 = vmatpush1.bf16.msra.mxu0 %v8747
    %8788 = vmatprep.subr.bf16.mxu0 0
    %8789 = vmatpush1.bf16.msra.mxu0 %v8748
    %8790 = vmatprep.subr.bf16.mxu0 0
    %8791 = vmatpush1.bf16.msra.mxu0 %v8749
    %8792 = vmatprep.subr.bf16.mxu0 0
    %8793 = vmatpush1.bf16.msra.mxu0 %v8750
    %8794 = vmatprep.subr.bf16.mxu0 0
    %8795 = vmatpush1.bf16.msra.mxu0 %v8751
    %8796 = vmatprep.subr.bf16.mxu0 0
    %8797 = vmatpush1.bf16.msra.mxu0 %v8752
    %8798 = vmatprep.subr.bf16.mxu0 0
    %8799 = vmatpush1.bf16.msra.mxu0 %v8753
    %8800 = vmatprep.subr.bf16.mxu0 0
    %8801 = vmatpush1.bf16.msra.mxu0 %v8754
    %8802 = vmatprep.subr.bf16.mxu0 0
    %8803 = vmatpush1.bf16.msra.mxu0 %v8755
    %8804 = vmatprep.mubr.bf16.mxu0 %v8636
    %8805 = vmatmul.mubr.bf16.gmra.mrb[0].mxu0 %v8635
    %v8806 = vpop.f32.mrb[0].mxu0
    %v8807 = vadd.f32 %v8674, %v8806
    %v8808 = vpop.f32.mrb[0].mxu0
    %v8809 = vpop.f32.mrb[0].mxu0
    %v8810 = vadd.f32 %v8674, %v8809
    %v8811 = vpop.f32.mrb[0].mxu0
    %8812 = vdwg.mxu0
    %v8813 = vmax.f32 %v8807, 0.0
    %v8814 = vmax.f32 %v8810, 0.0
    %v8815 = vld [vmem:[#allocation8] sm:$0xff]
    %v8816 = vld [vmem:[#allocation8 + $0x8] sm:$0xf]
    %v8818 = vrot.slane %v2666, 6
    %v8820 = vrot.slane %v2666, 4
    %v8822 = vrot.slane %v2666, 2
    %v8824 = vsel %vm8437, %v2666, %v8818
    %v8825 = vsel %vm8439, %v8824, %v8820
    %v8826 = vsel %vm8441, %v8825, %v8822
    %v8827 = vpack.c.bf16 %v8816, %v8815
    %v8828 = vpack.c.bf16 %v8824, %v8826
    %v8829 = vld [vmem:[#allocation43] sm:$0xf]
    %v8830 = vld [vmem:[#allocation43 + $0x4] sm:$0xf]
    %v8831 = vld [vmem:[#allocation43 + $0x8] sm:$0xf]
    %v8832 = vld [vmem:[#allocation43 + $0xc] sm:$0xf]
    %v8833 = vld [vmem:[#allocation43 + $0x10] sm:$0xf]
    %v8834 = vld [vmem:[#allocation43 + $0x14] sm:$0xf]
    %v8835 = vld [vmem:[#allocation43 + $0x18] sm:$0xf]
    %v8836 = vld [vmem:[#allocation43 + $0x1c] sm:$0xf]
    %v8837 = vld [vmem:[#allocation43 + $0x20] sm:$0xf]
    %v8838 = vld [vmem:[#allocation43 + $0x24] sm:$0xf]
    %v8839 = vld [vmem:[#allocation43 + $0x28] sm:$0xf]
    %v8840 = vld [vmem:[#allocation43 + $0x2c] sm:$0xf]
    %v8841 = vld [vmem:[#allocation43 + $0x30] sm:$0xf]
    %v8842 = vld [vmem:[#allocation43 + $0x34] sm:$0xf]
    %v8843 = vld [vmem:[#allocation43 + $0x38] sm:$0xf]
    %v8844 = vld [vmem:[#allocation43 + $0x3c] sm:$0xf]
    %v8845 = vld [vmem:[#allocation43 + $0x40] sm:$0xf]
    %v8846 = vld [vmem:[#allocation43 + $0x44] sm:$0xf]
    %v8847 = vld [vmem:[#allocation43 + $0x48] sm:$0xf]
    %v8848 = vld [vmem:[#allocation43 + $0x4c] sm:$0xf]
    %v8849 = vld [vmem:[#allocation43 + $0x50] sm:$0xf]
    %v8850 = vld [vmem:[#allocation43 + $0x54] sm:$0xf]
    %v8851 = vld [vmem:[#allocation43 + $0x58] sm:$0xf]
    %v8852 = vld [vmem:[#allocation43 + $0x5c] sm:$0xf]
    %v8853 = vld [vmem:[#allocation43 + $0x60] sm:$0xf]
    %v8854 = vld [vmem:[#allocation43 + $0x64] sm:$0xf]
    %v8855 = vld [vmem:[#allocation43 + $0x68] sm:$0xf]
    %v8856 = vld [vmem:[#allocation43 + $0x6c] sm:$0xf]
    %v8857 = vld [vmem:[#allocation43 + $0x70] sm:$0xf]
    %v8858 = vld [vmem:[#allocation43 + $0x74] sm:$0xf]
    %v8859 = vld [vmem:[#allocation43 + $0x78] sm:$0xf]
    %v8860 = vld [vmem:[#allocation43 + $0x7c] sm:$0xf]
    %v8861 = vld [vmem:[%s53] sm:$0x1]
    %v8863 = vlaneseq
    %v8864 = vshrl.u32 %v8863, 7
    %v8865 = vsub.s32 0, %v8864
    %v8866 = vrot.slane %v8861, %v8865
    %v8900 = vunpack.c.l.b16 %v8829
    %v8901 = vunpack.c.l.b16 %v8830
    %v8902 = vunpack.c.l.b16 %v8831
    %v8903 = vunpack.c.l.b16 %v8832
    %v8904 = vunpack.c.l.b16 %v8833
    %v8905 = vunpack.c.l.b16 %v8834
    %v8906 = vunpack.c.l.b16 %v8835
    %v8907 = vunpack.c.l.b16 %v8836
    %v8908 = vunpack.c.l.b16 %v8837
    %v8909 = vunpack.c.l.b16 %v8838
    %v8910 = vunpack.c.l.b16 %v8839
    %v8911 = vunpack.c.l.b16 %v8840
    %v8912 = vunpack.c.l.b16 %v8841
    %v8913 = vunpack.c.l.b16 %v8842
    %v8914 = vunpack.c.l.b16 %v8843
    %v8915 = vunpack.c.l.b16 %v8844
    %v8916 = vunpack.c.l.b16 %v8845
    %v8917 = vunpack.c.l.b16 %v8846
    %v8918 = vunpack.c.l.b16 %v8847
    %v8919 = vunpack.c.l.b16 %v8848
    %v8920 = vunpack.c.l.b16 %v8849
    %v8921 = vunpack.c.l.b16 %v8850
    %v8922 = vunpack.c.l.b16 %v8851
    %v8923 = vunpack.c.l.b16 %v8852
    %v8924 = vunpack.c.l.b16 %v8853
    %v8925 = vunpack.c.l.b16 %v8854
    %v8926 = vunpack.c.l.b16 %v8855
    %v8927 = vunpack.c.l.b16 %v8856
    %v8928 = vunpack.c.l.b16 %v8857
    %v8929 = vunpack.c.l.b16 %v8858
    %v8930 = vunpack.c.l.b16 %v8859
    %v8931 = vunpack.c.l.b16 %v8860
    %v8932 = vpack.c.b16 %v8901, %v8900
    %v8933 = vpack.c.b16 %v8903, %v8902
    %v8934 = vpack.c.b16 %v8905, %v8904
    %v8935 = vpack.c.b16 %v8907, %v8906
    %v8936 = vpack.c.b16 %v8909, %v8908
    %v8937 = vpack.c.b16 %v8911, %v8910
    %v8938 = vpack.c.b16 %v8913, %v8912
    %v8939 = vpack.c.b16 %v8915, %v8914
    %v8940 = vpack.c.b16 %v8917, %v8916
    %v8941 = vpack.c.b16 %v8919, %v8918
    %v8942 = vpack.c.b16 %v8921, %v8920
    %v8943 = vpack.c.b16 %v8923, %v8922
    %v8944 = vpack.c.b16 %v8925, %v8924
    %v8945 = vpack.c.b16 %v8927, %v8926
    %v8946 = vpack.c.b16 %v8929, %v8928
    %v8947 = vpack.c.b16 %v8931, %v8930
    %8964 = vmatprep.subr.bf16.mxu0 0
    %8965 = vmatpush1.bf16.msra.mxu0 %v8932
    %8966 = vmatprep.subr.bf16.mxu0 0
    %8967 = vmatpush1.bf16.msra.mxu0 %v8933
    %8968 = vmatprep.subr.bf16.mxu0 0
    %8969 = vmatpush1.bf16.msra.mxu0 %v8934
    %8970 = vmatprep.subr.bf16.mxu0 0
    %8971 = vmatpush1.bf16.msra.mxu0 %v8935
    %8972 = vmatprep.subr.bf16.mxu0 0
    %8973 = vmatpush1.bf16.msra.mxu0 %v8936
    %8974 = vmatprep.subr.bf16.mxu0 0
    %8975 = vmatpush1.bf16.msra.mxu0 %v8937
    %8976 = vmatprep.subr.bf16.mxu0 0
    %8977 = vmatpush1.bf16.msra.mxu0 %v8938
    %8978 = vmatprep.subr.bf16.mxu0 0
    %8979 = vmatpush1.bf16.msra.mxu0 %v8939
    %8980 = vmatprep.subr.bf16.mxu0 0
    %8981 = vmatpush1.bf16.msra.mxu0 %v8940
    %8982 = vmatprep.subr.bf16.mxu0 0
    %8983 = vmatpush1.bf16.msra.mxu0 %v8941
    %8984 = vmatprep.subr.bf16.mxu0 0
    %8985 = vmatpush1.bf16.msra.mxu0 %v8942
    %8986 = vmatprep.subr.bf16.mxu0 0
    %8987 = vmatpush1.bf16.msra.mxu0 %v8943
    %8988 = vmatprep.subr.bf16.mxu0 0
    %8989 = vmatpush1.bf16.msra.mxu0 %v8944
    %8990 = vmatprep.subr.bf16.mxu0 0
    %8991 = vmatpush1.bf16.msra.mxu0 %v8945
    %8992 = vmatprep.subr.bf16.mxu0 0
    %8993 = vmatpush1.bf16.msra.mxu0 %v8946
    %8994 = vmatprep.subr.bf16.mxu0 0
    %8995 = vmatpush1.bf16.msra.mxu0 %v8947
    %8996 = vmatprep.mubr.bf16.mxu0 %v8828
    %8997 = vmatmul.mubr.bf16.gmra.mrb[0].mxu0 %v8827
    %v8998 = vpop.f32.mrb[0].mxu0
    %v8999 = vadd.f32 %v8866, %v8998
    %v9000 = vpop.f32.mrb[0].mxu0
    %v9001 = vpop.f32.mrb[0].mxu0
    %v9002 = vadd.f32 %v8866, %v9001
    %v9003 = vpop.f32.mrb[0].mxu0
    %9004 = vdwg.mxu0
    %v9005 = vmax.f32 %v8999, 0.0
    %v9006 = vmax.f32 %v9002, 0.0
    %v9007 = vpack.c.bf16 %v8622, %v8621
    %v9008 = vpack.c.bf16 %v8814, %v8813
    %v9009 = vpack.c.bf16 %v9006, %v9005
    %s9010 = smul.u32 4, 48
    %s9011 = smul.u32 %s9010, 4
    %s9012 = sshll.u32 %s9011, 4
    %9013 = dma.done [#allocation12], %s9012
    %s9014 = smul.u32 4, 16
    %s9015 = smul.u32 %s9014, 4
    %s9016 = sshll.u32 %s9015, 4
    %9017 = dma.done %s424, %s9016
    %s9018 = smul.u32 %s9014, 1
    %s9019 = sshll.u32 %s9018, 4
    %9020 = dma.done %s459, %s9019
    %v9021 = vld [vmem:[#allocation9] sm:$0xff]
    %v9022 = vld [vmem:[#allocation9 + $0x8] sm:$0xff]
    %v9023 = vld [vmem:[#allocation9 + $0x10] sm:$0xff]
    %v9024 = vld [vmem:[#allocation9 + $0x18] sm:$0xff]
    %v9025 = vld [vmem:[#allocation9 + $0x20] sm:$0xff]
    %v9026 = vld [vmem:[#allocation9 + $0x28] sm:$0xff]
    %v9027 = vld [vmem:[#allocation9 + $0x30] sm:$0xff]
    %v9028 = vld [vmem:[#allocation9 + $0x38] sm:$0xff]
    %v9029 = vld [vmem:[#allocation9 + $0x40] sm:$0xff]
    %v9030 = vld [vmem:[#allocation9 + $0x48] sm:$0xff]
    %v9031 = vld [vmem:[#allocation9 + $0x50] sm:$0xff]
    %v9032 = vld [vmem:[#allocation9 + $0x58] sm:$0xff]
    %v9033 = vld [vmem:[#allocation9 + $0x60] sm:$0xff]
    %v9034 = vld [vmem:[#allocation9 + $0x68] sm:$0xff]
    %v9035 = vld [vmem:[#allocation9 + $0x70] sm:$0xff]
    %v9036 = vld [vmem:[#allocation9 + $0x78] sm:$0xff]
    %v9037 = vld [vmem:[#allocation9 + $0x80] sm:$0xff]
    %v9038 = vld [vmem:[#allocation9 + $0x88] sm:$0xff]
    %v9039 = vld [vmem:[#allocation9 + $0x90] sm:$0xff]
    %v9040 = vld [vmem:[#allocation9 + $0x98] sm:$0xff]
    %v9041 = vld [vmem:[#allocation9 + $0xa0] sm:$0xff]
    %v9042 = vld [vmem:[#allocation9 + $0xa8] sm:$0xff]
    %v9043 = vld [vmem:[#allocation9 + $0xb0] sm:$0xff]
    %v9044 = vld [vmem:[#allocation9 + $0xb8] sm:$0xff]
    %v9045 = vld [vmem:[#allocation9 + $0xc0] sm:$0xff]
    %v9046 = vld [vmem:[#allocation9 + $0xc8] sm:$0xff]
    %v9047 = vld [vmem:[#allocation9 + $0xd0] sm:$0xff]
    %v9048 = vld [vmem:[#allocation9 + $0xd8] sm:$0xff]
    %v9049 = vld [vmem:[#allocation9 + $0xe0] sm:$0xff]
    %v9050 = vld [vmem:[#allocation9 + $0xe8] sm:$0xff]
    %v9051 = vld [vmem:[#allocation9 + $0xf0] sm:$0xff]
    %v9052 = vld [vmem:[#allocation9 + $0xf8] sm:$0xff]
    %v9053 = vld [vmem:[#allocation9 + $0x100] sm:$0xff]
    %v9054 = vld [vmem:[#allocation9 + $0x108] sm:$0xff]
    %v9055 = vld [vmem:[#allocation9 + $0x110] sm:$0xff]
    %v9056 = vld [vmem:[#allocation9 + $0x118] sm:$0xff]
    %v9057 = vld [vmem:[#allocation9 + $0x120] sm:$0xff]
    %v9058 = vld [vmem:[#allocation9 + $0x128] sm:$0xff]
    %v9059 = vld [vmem:[#allocation9 + $0x130] sm:$0xff]
    %v9060 = vld [vmem:[#allocation9 + $0x138] sm:$0xff]
    %v9061 = vld [vmem:[#allocation9 + $0x140] sm:$0xff]
    %v9062 = vld [vmem:[#allocation9 + $0x148] sm:$0xff]
    %v9063 = vld [vmem:[#allocation9 + $0x150] sm:$0xff]
    %v9064 = vld [vmem:[#allocation9 + $0x158] sm:$0xff]
    %v9065 = vld [vmem:[#allocation9 + $0x160] sm:$0xff]
    %v9066 = vld [vmem:[#allocation9 + $0x168] sm:$0xff]
    %v9067 = vld [vmem:[#allocation9 + $0x170] sm:$0xff]
    %v9068 = vld [vmem:[#allocation9 + $0x178] sm:$0xff]
    %v9069 = vld [vmem:[#allocation9 + $0x180] sm:$0xff]
    %v9070 = vld [vmem:[#allocation9 + $0x188] sm:$0xff]
    %v9071 = vld [vmem:[#allocation9 + $0x190] sm:$0xff]
    %v9072 = vld [vmem:[#allocation9 + $0x198] sm:$0xff]
    %v9073 = vld [vmem:[#allocation9 + $0x1a0] sm:$0xff]
    %v9074 = vld [vmem:[#allocation9 + $0x1a8] sm:$0xff]
    %v9075 = vld [vmem:[#allocation9 + $0x1b0] sm:$0xff]
    %v9076 = vld [vmem:[#allocation9 + $0x1b8] sm:$0xff]
    %v9077 = vld [vmem:[#allocation9 + $0x1c0] sm:$0xff]
    %v9078 = vld [vmem:[#allocation9 + $0x1c8] sm:$0xff]
    %v9079 = vld [vmem:[#allocation9 + $0x1d0] sm:$0xff]
    %v9080 = vld [vmem:[#allocation9 + $0x1d8] sm:$0xff]
    %v9081 = vld [vmem:[#allocation9 + $0x1e0] sm:$0xff]
    %v9082 = vld [vmem:[#allocation9 + $0x1e8] sm:$0xff]
    %v9083 = vld [vmem:[#allocation9 + $0x1f0] sm:$0xff]
    %v9084 = vld [vmem:[#allocation9 + $0x1f8] sm:$0xff]
    %v9085 = vld [vmem:[#allocation9 + $0x200] sm:$0xff]
    %v9086 = vld [vmem:[#allocation9 + $0x208] sm:$0xff]
    %v9087 = vld [vmem:[#allocation9 + $0x210] sm:$0xff]
    %v9088 = vld [vmem:[#allocation9 + $0x218] sm:$0xff]
    %v9089 = vld [vmem:[#allocation9 + $0x220] sm:$0xff]
    %v9090 = vld [vmem:[#allocation9 + $0x228] sm:$0xff]
    %v9091 = vld [vmem:[#allocation9 + $0x230] sm:$0xff]
    %v9092 = vld [vmem:[#allocation9 + $0x238] sm:$0xff]
    %v9093 = vld [vmem:[#allocation9 + $0x240] sm:$0xff]
    %v9094 = vld [vmem:[#allocation9 + $0x248] sm:$0xff]
    %v9095 = vld [vmem:[#allocation9 + $0x250] sm:$0xff]
    %v9096 = vld [vmem:[#allocation9 + $0x258] sm:$0xff]
    %v9097 = vld [vmem:[#allocation9 + $0x260] sm:$0xff]
    %v9098 = vld [vmem:[#allocation9 + $0x268] sm:$0xff]
    %v9099 = vld [vmem:[#allocation9 + $0x270] sm:$0xff]
    %v9100 = vld [vmem:[#allocation9 + $0x278] sm:$0xff]
    %v9101 = vld [vmem:[#allocation9 + $0x280] sm:$0xff]
    %v9102 = vld [vmem:[#allocation9 + $0x288] sm:$0xff]
    %v9103 = vld [vmem:[#allocation9 + $0x290] sm:$0xff]
    %v9104 = vld [vmem:[#allocation9 + $0x298] sm:$0xff]
    %v9105 = vld [vmem:[#allocation9 + $0x2a0] sm:$0xff]
    %v9106 = vld [vmem:[#allocation9 + $0x2a8] sm:$0xff]
    %v9107 = vld [vmem:[#allocation9 + $0x2b0] sm:$0xff]
    %v9108 = vld [vmem:[#allocation9 + $0x2b8] sm:$0xff]
    %v9109 = vld [vmem:[#allocation9 + $0x2c0] sm:$0xff]
    %v9110 = vld [vmem:[#allocation9 + $0x2c8] sm:$0xff]
    %v9111 = vld [vmem:[#allocation9 + $0x2d0] sm:$0xff]
    %v9112 = vld [vmem:[#allocation9 + $0x2d8] sm:$0xff]
    %v9113 = vld [vmem:[#allocation9 + $0x2e0] sm:$0xff]
    %v9114 = vld [vmem:[#allocation9 + $0x2e8] sm:$0xff]
    %v9115 = vld [vmem:[#allocation9 + $0x2f0] sm:$0xff]
    %v9116 = vld [vmem:[#allocation9 + $0x2f8] sm:$0xff]
    %v9117 = vld [vmem:[%s55] sm:$0xf]
    %v9119 = vlaneseq
    %v9120 = vshrl.u32 %v9119, 7
    %v9121 = vsub.s32 0, %v9120
    %v9122 = vrot.slane %v9117, %v9121
    %v9123 = vlaneseq
    %v9124 = vshrl.u32 %v9123, 7
    %v9125 = vsub.s32 1, %v9124
    %v9126 = vrot.slane %v9117, %v9125
    %v9127 = vlaneseq
    %v9128 = vshrl.u32 %v9127, 7
    %v9129 = vsub.s32 2, %v9128
    %v9130 = vrot.slane %v9117, %v9129
    %v9131 = vlaneseq
    %v9132 = vshrl.u32 %v9131, 7
    %v9133 = vsub.s32 3, %v9132
    %v9134 = vrot.slane %v9117, %v9133
    %9139 = vmatprep.subr.bf16.mxu0 %v9022
    %9140 = vmatpush1.bf16.msra.mxu0 %v9021
    %9141 = vmatprep.subr.bf16.mxu0 %v9026
    %9142 = vmatpush1.bf16.msra.mxu0 %v9025
    %9143 = vmatprep.subr.bf16.mxu0 %v9030
    %9144 = vmatpush1.bf16.msra.mxu0 %v9029
    %9145 = vmatprep.subr.bf16.mxu0 %v9034
    %9146 = vmatpush1.bf16.msra.mxu0 %v9033
    %9147 = vmatprep.subr.bf16.mxu0 %v9038
    %9148 = vmatpush1.bf16.msra.mxu0 %v9037
    %9149 = vmatprep.subr.bf16.mxu0 %v9042
    %9150 = vmatpush1.bf16.msra.mxu0 %v9041
    %9151 = vmatprep.subr.bf16.mxu0 %v9046
    %9152 = vmatpush1.bf16.msra.mxu0 %v9045
    %9153 = vmatprep.subr.bf16.mxu0 %v9050
    %9154 = vmatpush1.bf16.msra.mxu0 %v9049
    %9155 = vmatprep.subr.bf16.mxu0 %v9054
    %9156 = vmatpush1.bf16.msra.mxu0 %v9053
    %9157 = vmatprep.subr.bf16.mxu0 %v9058
    %9158 = vmatpush1.bf16.msra.mxu0 %v9057
    %9159 = vmatprep.subr.bf16.mxu0 %v9062
    %9160 = vmatpush1.bf16.msra.mxu0 %v9061
    %9161 = vmatprep.subr.bf16.mxu0 %v9066
    %9162 = vmatpush1.bf16.msra.mxu0 %v9065
    %9163 = vmatprep.subr.bf16.mxu0 %v9070
    %9164 = vmatpush1.bf16.msra.mxu0 %v9069
    %9165 = vmatprep.subr.bf16.mxu0 %v9074
    %9166 = vmatpush1.bf16.msra.mxu0 %v9073
    %9167 = vmatprep.subr.bf16.mxu0 %v9078
    %9168 = vmatpush1.bf16.msra.mxu0 %v9077
    %9169 = vmatprep.subr.bf16.mxu0 %v9082
    %9170 = vmatpush1.bf16.msra.mxu0 %v9081
    %9171 = vmatprep.mubr.bf16.mxu0 %v9008
    %9172 = vmatmul.mubr.bf16.gmra.mrb[0].mxu0 %v9007
    %v9173 = vpop.f32.mrb[0].mxu0
    %v9174 = vadd.f32 %v9122, %v9173
    %v9175 = vpop.f32.mrb[0].mxu0
    %v9176 = vadd.f32 %v9126, %v9175
    %v9177 = vpop.f32.mrb[0].mxu0
    %v9178 = vadd.f32 %v9122, %v9177
    %v9179 = vpop.f32.mrb[0].mxu0
    %v9180 = vadd.f32 %v9126, %v9179
    %9181 = vdwg.mxu0
    %9182 = vmatprep.subr.bf16.mxu0 %v9086
    %9183 = vmatpush1.bf16.msra.mxu0 %v9085
    %9184 = vmatprep.subr.bf16.mxu0 %v9090
    %9185 = vmatpush1.bf16.msra.mxu0 %v9089
    %9186 = vmatprep.subr.bf16.mxu0 %v9094
    %9187 = vmatpush1.bf16.msra.mxu0 %v9093
    %9188 = vmatprep.subr.bf16.mxu0 %v9098
    %9189 = vmatpush1.bf16.msra.mxu0 %v9097
    %9190 = vmatprep.subr.bf16.mxu0 %v9102
    %9191 = vmatpush1.bf16.msra.mxu0 %v9101
    %9192 = vmatprep.subr.bf16.mxu0 %v9106
    %9193 = vmatpush1.bf16.msra.mxu0 %v9105
    %9194 = vmatprep.subr.bf16.mxu0 %v9110
    %9195 = vmatpush1.bf16.msra.mxu0 %v9109
    %9196 = vmatprep.subr.bf16.mxu0 %v9114
    %9197 = vmatpush1.bf16.msra.mxu0 %v9113
    %9198 = vmatprep.subr.bf16.mxu0 0
    %9199 = vmatpush1.bf16.msra.mxu0 0
    %9200 = vmatprep.subr.bf16.mxu0 0
    %9201 = vmatpush1.bf16.msra.mxu0 0
    %9202 = vmatprep.subr.bf16.mxu0 0
    %9203 = vmatpush1.bf16.msra.mxu0 0
    %9204 = vmatprep.subr.bf16.mxu0 0
    %9205 = vmatpush1.bf16.msra.mxu0 0
    %9206 = vmatprep.subr.bf16.mxu0 0
    %9207 = vmatpush1.bf16.msra.mxu0 0
    %9208 = vmatprep.subr.bf16.mxu0 0
    %9209 = vmatpush1.bf16.msra.mxu0 0
    %9210 = vmatprep.subr.bf16.mxu0 0
    %9211 = vmatpush1.bf16.msra.mxu0 0
    %9212 = vmatprep.subr.bf16.mxu0 0
    %9213 = vmatpush1.bf16.msra.mxu0 0
    %9214 = vmatprep.mubr.bf16.mxu0 0
    %9215 = vmatmul.mubr.bf16.gmra.mrb[0].mxu0 %v9009
    %v9216 = vpop.f32.mrb[0].mxu0
    %v9217 = vadd.f32 %v9174, %v9216
    %v9218 = vpop.f32.mrb[0].mxu0
    %v9219 = vadd.f32 %v9176, %v9218
    %v9220 = vpop.f32.mrb[0].mxu0
    %v9221 = vadd.f32 %v9178, %v9220
    %v9222 = vpop.f32.mrb[0].mxu0
    %v9223 = vadd.f32 %v9180, %v9222
    %9224 = vdwg.mxu0
    %9225 = vmatprep.subr.bf16.mxu0 %v9024
    %9226 = vmatpush1.bf16.msra.mxu0 %v9023
    %9227 = vmatprep.subr.bf16.mxu0 %v9028
    %9228 = vmatpush1.bf16.msra.mxu0 %v9027
    %9229 = vmatprep.subr.bf16.mxu0 %v9032
    %9230 = vmatpush1.bf16.msra.mxu0 %v9031
    %9231 = vmatprep.subr.bf16.mxu0 %v9036
    %9232 = vmatpush1.bf16.msra.mxu0 %v9035
    %9233 = vmatprep.subr.bf16.mxu0 %v9040
    %9234 = vmatpush1.bf16.msra.mxu0 %v9039
    %9235 = vmatprep.subr.bf16.mxu0 %v9044
    %9236 = vmatpush1.bf16.msra.mxu0 %v9043
    %9237 = vmatprep.subr.bf16.mxu0 %v9048
    %9238 = vmatpush1.bf16.msra.mxu0 %v9047
    %9239 = vmatprep.subr.bf16.mxu0 %v9052
    %9240 = vmatpush1.bf16.msra.mxu0 %v9051
    %9241 = vmatprep.subr.bf16.mxu0 %v9056
    %9242 = vmatpush1.bf16.msra.mxu0 %v9055
    %9243 = vmatprep.subr.bf16.mxu0 %v9060
    %9244 = vmatpush1.bf16.msra.mxu0 %v9059
    %9245 = vmatprep.subr.bf16.mxu0 %v9064
    %9246 = vmatpush1.bf16.msra.mxu0 %v9063
    %9247 = vmatprep.subr.bf16.mxu0 %v9068
    %9248 = vmatpush1.bf16.msra.mxu0 %v9067
    %9249 = vmatprep.subr.bf16.mxu0 %v9072
    %9250 = vmatpush1.bf16.msra.mxu0 %v9071
    %9251 = vmatprep.subr.bf16.mxu0 %v9076
    %9252 = vmatpush1.bf16.msra.mxu0 %v9075
    %9253 = vmatprep.subr.bf16.mxu0 %v9080
    %9254 = vmatpush1.bf16.msra.mxu0 %v9079
    %9255 = vmatprep.subr.bf16.mxu0 %v9084
    %9256 = vmatpush1.bf16.msra.mxu0 %v9083
    %9257 = vmatprep.mubr.bf16.mxu0 %v9008
    %9258 = vmatmul.mubr.bf16.gmra.mrb[0].mxu0 %v9007
    %v9259 = vpop.f32.mrb[0].mxu0
    %v9260 = vadd.f32 %v9130, %v9259
    %v9261 = vpop.f32.mrb[0].mxu0
    %v9262 = vadd.f32 %v9134, %v9261
    %v9263 = vpop.f32.mrb[0].mxu0
    %v9264 = vadd.f32 %v9130, %v9263
    %v9265 = vpop.f32.mrb[0].mxu0
    %v9266 = vadd.f32 %v9134, %v9265
    %9267 = vdwg.mxu0
    %9268 = vmatprep.subr.bf16.mxu0 %v9088
    %9269 = vmatpush1.bf16.msra.mxu0 %v9087
    %9270 = vmatprep.subr.bf16.mxu0 %v9092
    %9271 = vmatpush1.bf16.msra.mxu0 %v9091
    %9272 = vmatprep.subr.bf16.mxu0 %v9096
    %9273 = vmatpush1.bf16.msra.mxu0 %v9095
    %9274 = vmatprep.subr.bf16.mxu0 %v9100
    %9275 = vmatpush1.bf16.msra.mxu0 %v9099
    %9276 = vmatprep.subr.bf16.mxu0 %v9104
    %9277 = vmatpush1.bf16.msra.mxu0 %v9103
    %9278 = vmatprep.subr.bf16.mxu0 %v9108
    %9279 = vmatpush1.bf16.msra.mxu0 %v9107
    %9280 = vmatprep.subr.bf16.mxu0 %v9112
    %9281 = vmatpush1.bf16.msra.mxu0 %v9111
    %9282 = vmatprep.subr.bf16.mxu0 %v9116
    %9283 = vmatpush1.bf16.msra.mxu0 %v9115
    %9284 = vmatprep.subr.bf16.mxu0 0
    %9285 = vmatpush1.bf16.msra.mxu0 0
    %9286 = vmatprep.subr.bf16.mxu0 0
    %9287 = vmatpush1.bf16.msra.mxu0 0
    %9288 = vmatprep.subr.bf16.mxu0 0
    %9289 = vmatpush1.bf16.msra.mxu0 0
    %9290 = vmatprep.subr.bf16.mxu0 0
    %9291 = vmatpush1.bf16.msra.mxu0 0
    %9292 = vmatprep.subr.bf16.mxu0 0
    %9293 = vmatpush1.bf16.msra.mxu0 0
    %9294 = vmatprep.subr.bf16.mxu0 0
    %9295 = vmatpush1.bf16.msra.mxu0 0
    %9296 = vmatprep.subr.bf16.mxu0 0
    %9297 = vmatpush1.bf16.msra.mxu0 0
    %9298 = vmatprep.subr.bf16.mxu0 0
    %9299 = vmatpush1.bf16.msra.mxu0 0
    %9300 = vmatprep.mubr.bf16.mxu0 0
    %9301 = vmatmul.mubr.bf16.gmra.mrb[0].mxu0 %v9009
    %v9302 = vpop.f32.mrb[0].mxu0
    %v9303 = vadd.f32 %v9260, %v9302
    %v9304 = vpop.f32.mrb[0].mxu0
    %v9305 = vadd.f32 %v9262, %v9304
    %v9306 = vpop.f32.mrb[0].mxu0
    %v9307 = vadd.f32 %v9264, %v9306
    %v9308 = vpop.f32.mrb[0].mxu0
    %v9309 = vadd.f32 %v9266, %v9308
    %9310 = vdwg.mxu0
    %9311 = vst [vmem:[#allocation5] sm:$0xff] %v9217
    %9312 = vst [vmem:[#allocation5 + $0x8] sm:$0xff] %v9219
    %9313 = vst [vmem:[#allocation5 + $0x10] sm:$0xff] %v9303
    %9314 = vst [vmem:[#allocation5 + $0x18] sm:$0xff] %v9305
    %9315 = vst [vmem:[#allocation5 + $0x20] sm:$0xf] %v9221
    %9316 = vst [vmem:[#allocation5 + $0x28] sm:$0xf] %v9223
    %9317 = vst [vmem:[#allocation5 + $0x30] sm:$0xf] %v9307
    %9318 = vst [vmem:[#allocation5 + $0x38] sm:$0xf] %v9309
    %v9319 = vld [vmem:[#allocation5] sm:$0x3]
    %v9320 = vld [vmem:[#allocation5 + $0x8] sm:$0x3]
    %v9321 = vld [vmem:[#allocation5 + $0x10] sm:$0x3]
    %v9322 = vld [vmem:[#allocation5 + $0x18] sm:$0x3]
    %v9323 = vld [vmem:[#allocation10] sm:$0xff]
    %v9324 = vld [vmem:[#allocation10 + $0x8] sm:$0xff]
    %v9325 = vld [vmem:[#allocation10 + $0x10] sm:$0xff]
    %v9326 = vld [vmem:[#allocation10 + $0x18] sm:$0xff]
    %v9327 = vld [vmem:[#allocation10 + $0x20] sm:$0xff]
    %v9328 = vld [vmem:[#allocation10 + $0x28] sm:$0xff]
    %v9329 = vld [vmem:[#allocation10 + $0x30] sm:$0xff]
    %v9330 = vld [vmem:[#allocation10 + $0x38] sm:$0xff]
    %v9331 = vld [vmem:[#allocation10 + $0x40] sm:$0xff]
    %v9332 = vld [vmem:[#allocation10 + $0x48] sm:$0xff]
    %v9333 = vld [vmem:[#allocation10 + $0x50] sm:$0xff]
    %v9334 = vld [vmem:[#allocation10 + $0x58] sm:$0xff]
    %v9335 = vld [vmem:[#allocation10 + $0x60] sm:$0xff]
    %v9336 = vld [vmem:[#allocation10 + $0x68] sm:$0xff]
    %v9337 = vld [vmem:[#allocation10 + $0x70] sm:$0xff]
    %v9338 = vld [vmem:[#allocation10 + $0x78] sm:$0xff]
    %v9339 = vld [vmem:[#allocation10 + $0x80] sm:$0xff]
    %v9340 = vld [vmem:[#allocation10 + $0x88] sm:$0xff]
    %v9341 = vld [vmem:[#allocation10 + $0x90] sm:$0xff]
    %v9342 = vld [vmem:[#allocation10 + $0x98] sm:$0xff]
    %v9343 = vld [vmem:[#allocation10 + $0xa0] sm:$0xff]
    %v9344 = vld [vmem:[#allocation10 + $0xa8] sm:$0xff]
    %v9345 = vld [vmem:[#allocation10 + $0xb0] sm:$0xff]
    %v9346 = vld [vmem:[#allocation10 + $0xb8] sm:$0xff]
    %v9347 = vld [vmem:[#allocation10 + $0xc0] sm:$0xff]
    %v9348 = vld [vmem:[#allocation10 + $0xc8] sm:$0xff]
    %v9349 = vld [vmem:[#allocation10 + $0xd0] sm:$0xff]
    %v9350 = vld [vmem:[#allocation10 + $0xd8] sm:$0xff]
    %v9351 = vld [vmem:[#allocation10 + $0xe0] sm:$0xff]
    %v9352 = vld [vmem:[#allocation10 + $0xe8] sm:$0xff]
    %v9353 = vld [vmem:[#allocation10 + $0xf0] sm:$0xff]
    %v9354 = vld [vmem:[#allocation10 + $0xf8] sm:$0xff]
    %9355 = vmatprep.subr.bf16.mxu0 %v9324
    %9356 = vmatpush1.bf16.msra.mxu0 %v9323
    %9357 = vmatprep.subr.bf16.mxu0 %v9328
    %9358 = vmatpush1.bf16.msra.mxu0 %v9327
    %9359 = vmatprep.subr.bf16.mxu0 %v9332
    %9360 = vmatpush1.bf16.msra.mxu0 %v9331
    %9361 = vmatprep.subr.bf16.mxu0 %v9336
    %9362 = vmatpush1.bf16.msra.mxu0 %v9335
    %9363 = vmatprep.subr.bf16.mxu0 %v9340
    %9364 = vmatpush1.bf16.msra.mxu0 %v9339
    %9365 = vmatprep.subr.bf16.mxu0 %v9344
    %9366 = vmatpush1.bf16.msra.mxu0 %v9343
    %9367 = vmatprep.subr.bf16.mxu0 %v9348
    %9368 = vmatpush1.bf16.msra.mxu0 %v9347
    %9369 = vmatprep.subr.bf16.mxu0 %v9352
    %9370 = vmatpush1.bf16.msra.mxu0 %v9351
    %9371 = vmatprep.subr.bf16.mxu0 0
    %9372 = vmatpush1.bf16.msra.mxu0 0
    %9373 = vmatprep.subr.bf16.mxu0 0
    %9374 = vmatpush1.bf16.msra.mxu0 0
    %9375 = vmatprep.subr.bf16.mxu0 0
    %9376 = vmatpush1.bf16.msra.mxu0 0
    %9377 = vmatprep.subr.bf16.mxu0 0
    %9378 = vmatpush1.bf16.msra.mxu0 0
    %9379 = vmatprep.subr.bf16.mxu0 0
    %9380 = vmatpush1.bf16.msra.mxu0 0
    %9381 = vmatprep.subr.bf16.mxu0 0
    %9382 = vmatpush1.bf16.msra.mxu0 0
    %9383 = vmatprep.subr.bf16.mxu0 0
    %9384 = vmatpush1.bf16.msra.mxu0 0
    %9385 = vmatprep.subr.bf16.mxu0 0
    %9386 = vmatpush1.bf16.msra.mxu0 0
    %9387 = vmatprep.mubr.bf16.mxu0 0
    %9388 = vmatmul.mubr.bf16.gmra.mrb[0].mxu0 0
    %v9389 = vpop.f32.mrb[0].mxu0
    %v9390 = vadd.f32 0.0, %v9389
    %v9391 = vpop.f32.mrb[0].mxu0
    %v9392 = vadd.f32 0.0, %v9391
    %v9393 = vpop.f32.mrb[0].mxu0
    %v9394 = vpop.f32.mrb[0].mxu0
    %9395 = vdwg.mxu0
    %9396 = vmatprep.subr.bf16.mxu0 %v9326
    %9397 = vmatpush1.bf16.msra.mxu0 %v9325
    %9398 = vmatprep.subr.bf16.mxu0 %v9330
    %9399 = vmatpush1.bf16.msra.mxu0 %v9329
    %9400 = vmatprep.subr.bf16.mxu0 %v9334
    %9401 = vmatpush1.bf16.msra.mxu0 %v9333
    %9402 = vmatprep.subr.bf16.mxu0 %v9338
    %9403 = vmatpush1.bf16.msra.mxu0 %v9337
    %9404 = vmatprep.subr.bf16.mxu0 %v9342
    %9405 = vmatpush1.bf16.msra.mxu0 %v9341
    %9406 = vmatprep.subr.bf16.mxu0 %v9346
    %9407 = vmatpush1.bf16.msra.mxu0 %v9345
    %9408 = vmatprep.subr.bf16.mxu0 %v9350
    %9409 = vmatpush1.bf16.msra.mxu0 %v9349
    %9410 = vmatprep.subr.bf16.mxu0 %v9354
    %9411 = vmatpush1.bf16.msra.mxu0 %v9353
    %9412 = vmatprep.subr.bf16.mxu0 0
    %9413 = vmatpush1.bf16.msra.mxu0 0
    %9414 = vmatprep.subr.bf16.mxu0 0
    %9415 = vmatpush1.bf16.msra.mxu0 0
    %9416 = vmatprep.subr.bf16.mxu0 0
    %9417 = vmatpush1.bf16.msra.mxu0 0
    %9418 = vmatprep.subr.bf16.mxu0 0
    %9419 = vmatpush1.bf16.msra.mxu0 0
    %9420 = vmatprep.subr.bf16.mxu0 0
    %9421 = vmatpush1.bf16.msra.mxu0 0
    %9422 = vmatprep.subr.bf16.mxu0 0
    %9423 = vmatpush1.bf16.msra.mxu0 0
    %9424 = vmatprep.subr.bf16.mxu0 0
    %9425 = vmatpush1.bf16.msra.mxu0 0
    %9426 = vmatprep.subr.bf16.mxu0 0
    %9427 = vmatpush1.bf16.msra.mxu0 0
    %9428 = vmatprep.mubr.bf16.mxu0 0
    %9429 = vmatmul.mubr.bf16.gmra.mrb[0].mxu0 0
    %v9430 = vpop.f32.mrb[0].mxu0
    %v9431 = vadd.f32 0.0, %v9430
    %v9432 = vpop.f32.mrb[0].mxu0
    %v9433 = vadd.f32 0.0, %v9432
    %v9434 = vpop.f32.mrb[0].mxu0
    %v9435 = vpop.f32.mrb[0].mxu0
    %9436 = vdwg.mxu0
    %v9437 = vadd.f32 %v9319, %v9390
    %v9438 = vadd.f32 %v9320, %v9392
    %v9439 = vadd.f32 %v9321, %v9431
    %v9440 = vadd.f32 %v9322, %v9433
    %v9441 = vxor.u32 %v9437, 2147483648
    %v9442 = vmul.f32 %v9441, 1.442695
    %v9443 = vpow.pop %v9442
    %v9444 = vadd.f32 %v9443, 1.0
    %v9445 = vrcp.pop %v9444
    %v9446 = vmul.f32 1.0, %v9445
    %v9447 = vxor.u32 %v9438, 2147483648
    %v9448 = vmul.f32 %v9447, 1.442695
    %v9449 = vpow.pop %v9448
    %v9450 = vadd.f32 %v9449, 1.0
    %v9451 = vrcp.pop %v9450
    %v9452 = vmul.f32 1.0, %v9451
    %v9453 = vtanh.pop %v9439
    %v9454 = vxor.u32 %v9440, 2147483648
    %v9455 = vmul.f32 %v9454, 1.442695
    %v9456 = vpow.pop %v9455
    %v9457 = vadd.f32 %v9456, 1.0
    %v9458 = vrcp.pop %v9457
    %v9459 = vmul.f32 1.0, %v9458
    %v9460 = vmul.f32 %v9452, 0.0
    %v9461 = vmul.f32 %v9446, %v9453
    %v9462 = vadd.f32 %v9460, %v9461
    %v9463 = vtanh.pop %v9462
    %v9464 = vmul.f32 %v9459, %v9463
    %v9465 = vld [vmem:[#allocation5] sm:$0xc]
    %v9466 = vld [vmem:[#allocation5 + $0x8] sm:$0xc]
    %v9467 = vld [vmem:[#allocation5 + $0x10] sm:$0xc]
    %v9468 = vld [vmem:[#allocation5 + $0x18] sm:$0xc]
    %v9469 = vpack.c.bf16 %v9464, %v9464
    %9470 = vmatprep.subr.bf16.mxu0 %v9324
    %9471 = vmatpush1.bf16.msra.mxu0 %v9323
    %9472 = vmatprep.subr.bf16.mxu0 %v9328
    %9473 = vmatpush1.bf16.msra.mxu0 %v9327
    %9474 = vmatprep.subr.bf16.mxu0 %v9332
    %9475 = vmatpush1.bf16.msra.mxu0 %v9331
    %9476 = vmatprep.subr.bf16.mxu0 %v9336
    %9477 = vmatpush1.bf16.msra.mxu0 %v9335
    %9478 = vmatprep.subr.bf16.mxu0 %v9340
    %9479 = vmatpush1.bf16.msra.mxu0 %v9339
    %9480 = vmatprep.subr.bf16.mxu0 %v9344
    %9481 = vmatpush1.bf16.msra.mxu0 %v9343
    %9482 = vmatprep.subr.bf16.mxu0 %v9348
    %9483 = vmatpush1.bf16.msra.mxu0 %v9347
    %9484 = vmatprep.subr.bf16.mxu0 %v9352
    %9485 = vmatpush1.bf16.msra.mxu0 %v9351
    %9486 = vmatprep.subr.bf16.mxu0 0
    %9487 = vmatpush1.bf16.msra.mxu0 0
    %9488 = vmatprep.subr.bf16.mxu0 0
    %9489 = vmatpush1.bf16.msra.mxu0 0
    %9490 = vmatprep.subr.bf16.mxu0 0
    %9491 = vmatpush1.bf16.msra.mxu0 0
    %9492 = vmatprep.subr.bf16.mxu0 0
    %9493 = vmatpush1.bf16.msra.mxu0 0
    %9494 = vmatprep.subr.bf16.mxu0 0
    %9495 = vmatpush1.bf16.msra.mxu0 0
    %9496 = vmatprep.subr.bf16.mxu0 0
    %9497 = vmatpush1.bf16.msra.mxu0 0
    %9498 = vmatprep.subr.bf16.mxu0 0
    %9499 = vmatpush1.bf16.msra.mxu0 0
    %9500 = vmatprep.subr.bf16.mxu0 0
    %9501 = vmatpush1.bf16.msra.mxu0 0
    %9502 = vmatprep.mubr.bf16.mxu0 0
    %9503 = vmatmul.mubr.bf16.gmra.mrb[0].mxu0 %v9469
    %v9504 = vpop.f32.mrb[0].mxu0
    %v9505 = vadd.f32 0.0, %v9504
    %v9506 = vpop.f32.mrb[0].mxu0
    %v9507 = vadd.f32 0.0, %v9506
    %v9508 = vpop.f32.mrb[0].mxu0
    %v9509 = vpop.f32.mrb[0].mxu0
    %9510 = vdwg.mxu0
    %9511 = vmatprep.subr.bf16.mxu0 %v9326
    %9512 = vmatpush1.bf16.msra.mxu0 %v9325
    %9513 = vmatprep.subr.bf16.mxu0 %v9330
    %9514 = vmatpush1.bf16.msra.mxu0 %v9329
    %9515 = vmatprep.subr.bf16.mxu0 %v9334
    %9516 = vmatpush1.bf16.msra.mxu0 %v9333
    %9517 = vmatprep.subr.bf16.mxu0 %v9338
    %9518 = vmatpush1.bf16.msra.mxu0 %v9337
    %9519 = vmatprep.subr.bf16.mxu0 %v9342
    %9520 = vmatpush1.bf16.msra.mxu0 %v9341
    %9521 = vmatprep.subr.bf16.mxu0 %v9346
    %9522 = vmatpush1.bf16.msra.mxu0 %v9345
    %9523 = vmatprep.subr.bf16.mxu0 %v9350
    %9524 = vmatpush1.bf16.msra.mxu0 %v9349
    %9525 = vmatprep.subr.bf16.mxu0 %v9354
    %9526 = vmatpush1.bf16.msra.mxu0 %v9353
    %9527 = vmatprep.subr.bf16.mxu0 0
    %9528 = vmatpush1.bf16.msra.mxu0 0
    %9529 = vmatprep.subr.bf16.mxu0 0
    %9530 = vmatpush1.bf16.msra.mxu0 0
    %9531 = vmatprep.subr.bf16.mxu0 0
    %9532 = vmatpush1.bf16.msra.mxu0 0
    %9533 = vmatprep.subr.bf16.mxu0 0
    %9534 = vmatpush1.bf16.msra.mxu0 0
    %9535 = vmatprep.subr.bf16.mxu0 0
    %9536 = vmatpush1.bf16.msra.mxu0 0
    %9537 = vmatprep.subr.bf16.mxu0 0
    %9538 = vmatpush1.bf16.msra.mxu0 0
    %9539 = vmatprep.subr.bf16.mxu0 0
    %9540 = vmatpush1.bf16.msra.mxu0 0
    %9541 = vmatprep.subr.bf16.mxu0 0
    %9542 = vmatpush1.bf16.msra.mxu0 0
    %9543 = vmatprep.mubr.bf16.mxu0 0
    %9544 = vmatmul.mubr.bf16.gmra.mrb[0].mxu0 %v9469
    %v9545 = vpop.f32.mrb[0].mxu0
    %v9546 = vadd.f32 0.0, %v9545
    %v9547 = vpop.f32.mrb[0].mxu0
    %v9548 = vadd.f32 0.0, %v9547
    %v9549 = vpop.f32.mrb[0].mxu0
    %v9550 = vpop.f32.mrb[0].mxu0
    %9551 = vdwg.mxu0
    %v9556 = vrot.slane %v9505, 6
    %v9557 = vrot.slane %v9507, 6
    %v9558 = vrot.slane %v9546, 6
    %v9559 = vrot.slane %v9548, 6
    %v9564 = vadd.f32 %v9465, %v9556
    %v9565 = vadd.f32 %v9466, %v9557
    %v9566 = vadd.f32 %v9467, %v9558
    %v9567 = vadd.f32 %v9468, %v9559
    %v9568 = vxor.u32 %v9564, 2147483648
    %v9569 = vmul.f32 %v9568, 1.442695
    %v9570 = vpow.pop %v9569
    %v9571 = vadd.f32 %v9570, 1.0
    %v9572 = vrcp.pop %v9571
    %v9573 = vmul.f32 1.0, %v9572
    %v9574 = vxor.u32 %v9565, 2147483648
    %v9575 = vmul.f32 %v9574, 1.442695
    %v9576 = vpow.pop %v9575
    %v9577 = vadd.f32 %v9576, 1.0
    %v9578 = vrcp.pop %v9577
    %v9579 = vmul.f32 1.0, %v9578
    %v9580 = vtanh.pop %v9566
    %v9581 = vxor.u32 %v9567, 2147483648
    %v9582 = vmul.f32 %v9581, 1.442695
    %v9583 = vpow.pop %v9582
    %v9584 = vadd.f32 %v9583, 1.0
    %v9585 = vrcp.pop %v9584
    %v9586 = vmul.f32 1.0, %v9585
    %v9588 = vrot.slane %v9462, 6
    %v9590 = vmul.f32 %v9579, %v9588
    %v9591 = vmul.f32 %v9573, %v9580
    %v9592 = vadd.f32 %v9590, %v9591
    %v9593 = vtanh.pop %v9592
    %v9594 = vmul.f32 %v9586, %v9593
    %v9595 = vld [vmem:[#allocation5] sm:$0x30]
    %v9596 = vld [vmem:[#allocation5 + $0x8] sm:$0x30]
    %v9597 = vld [vmem:[#allocation5 + $0x10] sm:$0x30]
    %v9598 = vld [vmem:[#allocation5 + $0x18] sm:$0x30]
    %v9599 = vpack.c.bf16 %v9594, %v9594
    %v9601 = vrot.slane %v9599, 1
    %9603 = vmatprep.subr.bf16.mxu0 %v9324
    %9604 = vmatpush1.bf16.msra.mxu0 %v9323
    %9605 = vmatprep.subr.bf16.mxu0 %v9328
    %9606 = vmatpush1.bf16.msra.mxu0 %v9327
    %9607 = vmatprep.subr.bf16.mxu0 %v9332
    %9608 = vmatpush1.bf16.msra.mxu0 %v9331
    %9609 = vmatprep.subr.bf16.mxu0 %v9336
    %9610 = vmatpush1.bf16.msra.mxu0 %v9335
    %9611 = vmatprep.subr.bf16.mxu0 %v9340
    %9612 = vmatpush1.bf16.msra.mxu0 %v9339
    %9613 = vmatprep.subr.bf16.mxu0 %v9344
    %9614 = vmatpush1.bf16.msra.mxu0 %v9343
    %9615 = vmatprep.subr.bf16.mxu0 %v9348
    %9616 = vmatpush1.bf16.msra.mxu0 %v9347
    %9617 = vmatprep.subr.bf16.mxu0 %v9352
    %9618 = vmatpush1.bf16.msra.mxu0 %v9351
    %9619 = vmatprep.subr.bf16.mxu0 0
    %9620 = vmatpush1.bf16.msra.mxu0 0
    %9621 = vmatprep.subr.bf16.mxu0 0
    %9622 = vmatpush1.bf16.msra.mxu0 0
    %9623 = vmatprep.subr.bf16.mxu0 0
    %9624 = vmatpush1.bf16.msra.mxu0 0
    %9625 = vmatprep.subr.bf16.mxu0 0
    %9626 = vmatpush1.bf16.msra.mxu0 0
    %9627 = vmatprep.subr.bf16.mxu0 0
    %9628 = vmatpush1.bf16.msra.mxu0 0
    %9629 = vmatprep.subr.bf16.mxu0 0
    %9630 = vmatpush1.bf16.msra.mxu0 0
    %9631 = vmatprep.subr.bf16.mxu0 0
    %9632 = vmatpush1.bf16.msra.mxu0 0
    %9633 = vmatprep.subr.bf16.mxu0 0
    %9634 = vmatpush1.bf16.msra.mxu0 0
    %9635 = vmatprep.mubr.bf16.mxu0 0
    %9636 = vmatmul.mubr.bf16.gmra.mrb[0].mxu0 %v9601
    %v9637 = vpop.f32.mrb[0].mxu0
    %v9638 = vadd.f32 0.0, %v9637
    %v9639 = vpop.f32.mrb[0].mxu0
    %v9640 = vadd.f32 0.0, %v9639
    %v9641 = vpop.f32.mrb[0].mxu0
    %v9642 = vpop.f32.mrb[0].mxu0
    %9643 = vdwg.mxu0
    %9644 = vmatprep.subr.bf16.mxu0 %v9326
    %9645 = vmatpush1.bf16.msra.mxu0 %v9325
    %9646 = vmatprep.subr.bf16.mxu0 %v9330
    %9647 = vmatpush1.bf16.msra.mxu0 %v9329
    %9648 = vmatprep.subr.bf16.mxu0 %v9334
    %9649 = vmatpush1.bf16.msra.mxu0 %v9333
    %9650 = vmatprep.subr.bf16.mxu0 %v9338
    %9651 = vmatpush1.bf16.msra.mxu0 %v9337
    %9652 = vmatprep.subr.bf16.mxu0 %v9342
    %9653 = vmatpush1.bf16.msra.mxu0 %v9341
    %9654 = vmatprep.subr.bf16.mxu0 %v9346
    %9655 = vmatpush1.bf16.msra.mxu0 %v9345
    %9656 = vmatprep.subr.bf16.mxu0 %v9350
    %9657 = vmatpush1.bf16.msra.mxu0 %v9349
    %9658 = vmatprep.subr.bf16.mxu0 %v9354
    %9659 = vmatpush1.bf16.msra.mxu0 %v9353
    %9660 = vmatprep.subr.bf16.mxu0 0
    %9661 = vmatpush1.bf16.msra.mxu0 0
    %9662 = vmatprep.subr.bf16.mxu0 0
    %9663 = vmatpush1.bf16.msra.mxu0 0
    %9664 = vmatprep.subr.bf16.mxu0 0
    %9665 = vmatpush1.bf16.msra.mxu0 0
    %9666 = vmatprep.subr.bf16.mxu0 0
    %9667 = vmatpush1.bf16.msra.mxu0 0
    %9668 = vmatprep.subr.bf16.mxu0 0
    %9669 = vmatpush1.bf16.msra.mxu0 0
    %9670 = vmatprep.subr.bf16.mxu0 0
    %9671 = vmatpush1.bf16.msra.mxu0 0
    %9672 = vmatprep.subr.bf16.mxu0 0
    %9673 = vmatpush1.bf16.msra.mxu0 0
    %9674 = vmatprep.subr.bf16.mxu0 0
    %9675 = vmatpush1.bf16.msra.mxu0 0
    %9676 = vmatprep.mubr.bf16.mxu0 0
    %9677 = vmatmul.mubr.bf16.gmra.mrb[0].mxu0 %v9601
    %v9678 = vpop.f32.mrb[0].mxu0
    %v9679 = vadd.f32 0.0, %v9678
    %v9680 = vpop.f32.mrb[0].mxu0
    %v9681 = vadd.f32 0.0, %v9680
    %v9682 = vpop.f32.mrb[0].mxu0
    %v9683 = vpop.f32.mrb[0].mxu0
    %9684 = vdwg.mxu0
    %v9689 = vrot.slane %v9638, 4
    %v9690 = vrot.slane %v9640, 4
    %v9691 = vrot.slane %v9679, 4
    %v9692 = vrot.slane %v9681, 4
    %v9697 = vadd.f32 %v9595, %v9689
    %v9698 = vadd.f32 %v9596, %v9690
    %v9699 = vadd.f32 %v9597, %v9691
    %v9700 = vadd.f32 %v9598, %v9692
    %v9701 = vxor.u32 %v9697, 2147483648
    %v9702 = vmul.f32 %v9701, 1.442695
    %v9703 = vpow.pop %v9702
    %v9704 = vadd.f32 %v9703, 1.0
    %v9705 = vrcp.pop %v9704
    %v9706 = vmul.f32 1.0, %v9705
    %v9707 = vxor.u32 %v9698, 2147483648
    %v9708 = vmul.f32 %v9707, 1.442695
    %v9709 = vpow.pop %v9708
    %v9710 = vadd.f32 %v9709, 1.0
    %v9711 = vrcp.pop %v9710
    %v9712 = vmul.f32 1.0, %v9711
    %v9713 = vtanh.pop %v9699
    %v9714 = vxor.u32 %v9700, 2147483648
    %v9715 = vmul.f32 %v9714, 1.442695
    %v9716 = vpow.pop %v9715
    %v9717 = vadd.f32 %v9716, 1.0
    %v9718 = vrcp.pop %v9717
    %v9719 = vmul.f32 1.0, %v9718
    %v9721 = vrot.slane %v9592, 6
    %v9723 = vmul.f32 %v9712, %v9721
    %v9724 = vmul.f32 %v9706, %v9713
    %v9725 = vadd.f32 %v9723, %v9724
    %v9726 = vtanh.pop %v9725
    %v9727 = vmul.f32 %v9719, %v9726
    %v9728 = vld [vmem:[#allocation5] sm:$0xc0]
    %v9729 = vld [vmem:[#allocation5 + $0x8] sm:$0xc0]
    %v9730 = vld [vmem:[#allocation5 + $0x10] sm:$0xc0]
    %v9731 = vld [vmem:[#allocation5 + $0x18] sm:$0xc0]
    %v9732 = vpack.c.bf16 %v9727, %v9727
    %v9734 = vrot.slane %v9732, 2
    %9736 = vmatprep.subr.bf16.mxu0 %v9324
    %9737 = vmatpush1.bf16.msra.mxu0 %v9323
    %9738 = vmatprep.subr.bf16.mxu0 %v9328
    %9739 = vmatpush1.bf16.msra.mxu0 %v9327
    %9740 = vmatprep.subr.bf16.mxu0 %v9332
    %9741 = vmatpush1.bf16.msra.mxu0 %v9331
    %9742 = vmatprep.subr.bf16.mxu0 %v9336
    %9743 = vmatpush1.bf16.msra.mxu0 %v9335
    %9744 = vmatprep.subr.bf16.mxu0 %v9340
    %9745 = vmatpush1.bf16.msra.mxu0 %v9339
    %9746 = vmatprep.subr.bf16.mxu0 %v9344
    %9747 = vmatpush1.bf16.msra.mxu0 %v9343
    %9748 = vmatprep.subr.bf16.mxu0 %v9348
    %9749 = vmatpush1.bf16.msra.mxu0 %v9347
    %9750 = vmatprep.subr.bf16.mxu0 %v9352
    %9751 = vmatpush1.bf16.msra.mxu0 %v9351
    %9752 = vmatprep.subr.bf16.mxu0 0
    %9753 = vmatpush1.bf16.msra.mxu0 0
    %9754 = vmatprep.subr.bf16.mxu0 0
    %9755 = vmatpush1.bf16.msra.mxu0 0
    %9756 = vmatprep.subr.bf16.mxu0 0
    %9757 = vmatpush1.bf16.msra.mxu0 0
    %9758 = vmatprep.subr.bf16.mxu0 0
    %9759 = vmatpush1.bf16.msra.mxu0 0
    %9760 = vmatprep.subr.bf16.mxu0 0
    %9761 = vmatpush1.bf16.msra.mxu0 0
    %9762 = vmatprep.subr.bf16.mxu0 0
    %9763 = vmatpush1.bf16.msra.mxu0 0
    %9764 = vmatprep.subr.bf16.mxu0 0
    %9765 = vmatpush1.bf16.msra.mxu0 0
    %9766 = vmatprep.subr.bf16.mxu0 0
    %9767 = vmatpush1.bf16.msra.mxu0 0
    %9768 = vmatprep.mubr.bf16.mxu0 0
    %9769 = vmatmul.mubr.bf16.gmra.mrb[0].mxu0 %v9734
    %v9770 = vpop.f32.mrb[0].mxu0
    %v9771 = vadd.f32 0.0, %v9770
    %v9772 = vpop.f32.mrb[0].mxu0
    %v9773 = vadd.f32 0.0, %v9772
    %v9774 = vpop.f32.mrb[0].mxu0
    %v9775 = vpop.f32.mrb[0].mxu0
    %9776 = vdwg.mxu0
    %9777 = vmatprep.subr.bf16.mxu0 %v9326
    %9778 = vmatpush1.bf16.msra.mxu0 %v9325
    %9779 = vmatprep.subr.bf16.mxu0 %v9330
    %9780 = vmatpush1.bf16.msra.mxu0 %v9329
    %9781 = vmatprep.subr.bf16.mxu0 %v9334
    %9782 = vmatpush1.bf16.msra.mxu0 %v9333
    %9783 = vmatprep.subr.bf16.mxu0 %v9338
    %9784 = vmatpush1.bf16.msra.mxu0 %v9337
    %9785 = vmatprep.subr.bf16.mxu0 %v9342
    %9786 = vmatpush1.bf16.msra.mxu0 %v9341
    %9787 = vmatprep.subr.bf16.mxu0 %v9346
    %9788 = vmatpush1.bf16.msra.mxu0 %v9345
    %9789 = vmatprep.subr.bf16.mxu0 %v9350
    %9790 = vmatpush1.bf16.msra.mxu0 %v9349
    %9791 = vmatprep.subr.bf16.mxu0 %v9354
    %9792 = vmatpush1.bf16.msra.mxu0 %v9353
    %9793 = vmatprep.subr.bf16.mxu0 0
    %9794 = vmatpush1.bf16.msra.mxu0 0
    %9795 = vmatprep.subr.bf16.mxu0 0
    %9796 = vmatpush1.bf16.msra.mxu0 0
    %9797 = vmatprep.subr.bf16.mxu0 0
    %9798 = vmatpush1.bf16.msra.mxu0 0
    %9799 = vmatprep.subr.bf16.mxu0 0
    %9800 = vmatpush1.bf16.msra.mxu0 0
    %9801 = vmatprep.subr.bf16.mxu0 0
    %9802 = vmatpush1.bf16.msra.mxu0 0
    %9803 = vmatprep.subr.bf16.mxu0 0
    %9804 = vmatpush1.bf16.msra.mxu0 0
    %9805 = vmatprep.subr.bf16.mxu0 0
    %9806 = vmatpush1.bf16.msra.mxu0 0
    %9807 = vmatprep.subr.bf16.mxu0 0
    %9808 = vmatpush1.bf16.msra.mxu0 0
    %9809 = vmatprep.mubr.bf16.mxu0 0
    %9810 = vmatmul.mubr.bf16.gmra.mrb[0].mxu0 %v9734
    %v9811 = vpop.f32.mrb[0].mxu0
    %v9812 = vadd.f32 0.0, %v9811
    %v9813 = vpop.f32.mrb[0].mxu0
    %v9814 = vadd.f32 0.0, %v9813
    %v9815 = vpop.f32.mrb[0].mxu0
    %v9816 = vpop.f32.mrb[0].mxu0
    %9817 = vdwg.mxu0
    %v9822 = vrot.slane %v9771, 2
    %v9823 = vrot.slane %v9773, 2
    %v9824 = vrot.slane %v9812, 2
    %v9825 = vrot.slane %v9814, 2
    %v9830 = vadd.f32 %v9728, %v9822
    %v9831 = vadd.f32 %v9729, %v9823
    %v9832 = vadd.f32 %v9730, %v9824
    %v9833 = vadd.f32 %v9731, %v9825
    %v9834 = vxor.u32 %v9830, 2147483648
    %v9835 = vmul.f32 %v9834, 1.442695
    %v9836 = vpow.pop %v9835
    %v9837 = vadd.f32 %v9836, 1.0
    %v9838 = vrcp.pop %v9837
    %v9839 = vmul.f32 1.0, %v9838
    %v9840 = vxor.u32 %v9831, 2147483648
    %v9841 = vmul.f32 %v9840, 1.442695
    %v9842 = vpow.pop %v9841
    %v9843 = vadd.f32 %v9842, 1.0
    %v9844 = vrcp.pop %v9843
    %v9845 = vmul.f32 1.0, %v9844
    %v9846 = vtanh.pop %v9832
    %v9847 = vxor.u32 %v9833, 2147483648
    %v9848 = vmul.f32 %v9847, 1.442695
    %v9849 = vpow.pop %v9848
    %v9850 = vadd.f32 %v9849, 1.0
    %v9851 = vrcp.pop %v9850
    %v9852 = vmul.f32 1.0, %v9851
    %v9854 = vrot.slane %v9725, 6
    %v9856 = vmul.f32 %v9845, %v9854
    %v9857 = vmul.f32 %v9839, %v9846
    %v9858 = vadd.f32 %v9856, %v9857
    %v9859 = vtanh.pop %v9858
    %v9860 = vmul.f32 %v9852, %v9859
    %v9861 = vld [vmem:[#allocation5 + $0x20] sm:$0x3]
    %v9862 = vld [vmem:[#allocation5 + $0x28] sm:$0x3]
    %v9863 = vld [vmem:[#allocation5 + $0x30] sm:$0x3]
    %v9864 = vld [vmem:[#allocation5 + $0x38] sm:$0x3]
    %v9865 = vpack.c.bf16 %v9860, %v9860
    %v9867 = vrot.slane %v9865, 3
    %9869 = vmatprep.subr.bf16.mxu0 %v9324
    %9870 = vmatpush1.bf16.msra.mxu0 %v9323
    %9871 = vmatprep.subr.bf16.mxu0 %v9328
    %9872 = vmatpush1.bf16.msra.mxu0 %v9327
    %9873 = vmatprep.subr.bf16.mxu0 %v9332
    %9874 = vmatpush1.bf16.msra.mxu0 %v9331
    %9875 = vmatprep.subr.bf16.mxu0 %v9336
    %9876 = vmatpush1.bf16.msra.mxu0 %v9335
    %9877 = vmatprep.subr.bf16.mxu0 %v9340
    %9878 = vmatpush1.bf16.msra.mxu0 %v9339
    %9879 = vmatprep.subr.bf16.mxu0 %v9344
    %9880 = vmatpush1.bf16.msra.mxu0 %v9343
    %9881 = vmatprep.subr.bf16.mxu0 %v9348
    %9882 = vmatpush1.bf16.msra.mxu0 %v9347
    %9883 = vmatprep.subr.bf16.mxu0 %v9352
    %9884 = vmatpush1.bf16.msra.mxu0 %v9351
    %9885 = vmatprep.subr.bf16.mxu0 0
    %9886 = vmatpush1.bf16.msra.mxu0 0
    %9887 = vmatprep.subr.bf16.mxu0 0
    %9888 = vmatpush1.bf16.msra.mxu0 0
    %9889 = vmatprep.subr.bf16.mxu0 0
    %9890 = vmatpush1.bf16.msra.mxu0 0
    %9891 = vmatprep.subr.bf16.mxu0 0
    %9892 = vmatpush1.bf16.msra.mxu0 0
    %9893 = vmatprep.subr.bf16.mxu0 0
    %9894 = vmatpush1.bf16.msra.mxu0 0
    %9895 = vmatprep.subr.bf16.mxu0 0
    %9896 = vmatpush1.bf16.msra.mxu0 0
    %9897 = vmatprep.subr.bf16.mxu0 0
    %9898 = vmatpush1.bf16.msra.mxu0 0
    %9899 = vmatprep.subr.bf16.mxu0 0
    %9900 = vmatpush1.bf16.msra.mxu0 0
    %9901 = vmatprep.mubr.bf16.mxu0 0
    %9902 = vmatmul.mubr.bf16.gmra.mrb[0].mxu0 %v9867
    %v9903 = vpop.f32.mrb[0].mxu0
    %v9904 = vadd.f32 0.0, %v9903
    %v9905 = vpop.f32.mrb[0].mxu0
    %v9906 = vadd.f32 0.0, %v9905
    %v9907 = vpop.f32.mrb[0].mxu0
    %v9908 = vpop.f32.mrb[0].mxu0
    %9909 = vdwg.mxu0
    %9910 = vmatprep.subr.bf16.mxu0 %v9326
    %9911 = vmatpush1.bf16.msra.mxu0 %v9325
    %9912 = vmatprep.subr.bf16.mxu0 %v9330
    %9913 = vmatpush1.bf16.msra.mxu0 %v9329
    %9914 = vmatprep.subr.bf16.mxu0 %v9334
    %9915 = vmatpush1.bf16.msra.mxu0 %v9333
    %9916 = vmatprep.subr.bf16.mxu0 %v9338
    %9917 = vmatpush1.bf16.msra.mxu0 %v9337
    %9918 = vmatprep.subr.bf16.mxu0 %v9342
    %9919 = vmatpush1.bf16.msra.mxu0 %v9341
    %9920 = vmatprep.subr.bf16.mxu0 %v9346
    %9921 = vmatpush1.bf16.msra.mxu0 %v9345
    %9922 = vmatprep.subr.bf16.mxu0 %v9350
    %9923 = vmatpush1.bf16.msra.mxu0 %v9349
    %9924 = vmatprep.subr.bf16.mxu0 %v9354
    %9925 = vmatpush1.bf16.msra.mxu0 %v9353
    %9926 = vmatprep.subr.bf16.mxu0 0
    %9927 = vmatpush1.bf16.msra.mxu0 0
    %9928 = vmatprep.subr.bf16.mxu0 0
    %9929 = vmatpush1.bf16.msra.mxu0 0
    %9930 = vmatprep.subr.bf16.mxu0 0
    %9931 = vmatpush1.bf16.msra.mxu0 0
    %9932 = vmatprep.subr.bf16.mxu0 0
    %9933 = vmatpush1.bf16.msra.mxu0 0
    %9934 = vmatprep.subr.bf16.mxu0 0
    %9935 = vmatpush1.bf16.msra.mxu0 0
    %9936 = vmatprep.subr.bf16.mxu0 0
    %9937 = vmatpush1.bf16.msra.mxu0 0
    %9938 = vmatprep.subr.bf16.mxu0 0
    %9939 = vmatpush1.bf16.msra.mxu0 0
    %9940 = vmatprep.subr.bf16.mxu0 0
    %9941 = vmatpush1.bf16.msra.mxu0 0
    %9942 = vmatprep.mubr.bf16.mxu0 0
    %9943 = vmatmul.mubr.bf16.gmra.mrb[0].mxu0 %v9867
    %v9944 = vpop.f32.mrb[0].mxu0
    %v9945 = vadd.f32 0.0, %v9944
    %v9946 = vpop.f32.mrb[0].mxu0
    %v9947 = vadd.f32 0.0, %v9946
    %v9948 = vpop.f32.mrb[0].mxu0
    %v9949 = vpop.f32.mrb[0].mxu0
    %9950 = vdwg.mxu0
    %v9951 = vadd.f32 %v9861, %v9904
    %v9952 = vadd.f32 %v9862, %v9906
    %v9953 = vadd.f32 %v9863, %v9945
    %v9954 = vadd.f32 %v9864, %v9947
    %v9955 = vxor.u32 %v9951, 2147483648
    %v9956 = vmul.f32 %v9955, 1.442695
    %v9957 = vpow.pop %v9956
    %v9958 = vadd.f32 %v9957, 1.0
    %v9959 = vrcp.pop %v9958
    %v9960 = vmul.f32 1.0, %v9959
    %v9961 = vxor.u32 %v9952, 2147483648
    %v9962 = vmul.f32 %v9961, 1.442695
    %v9963 = vpow.pop %v9962
    %v9964 = vadd.f32 %v9963, 1.0
    %v9965 = vrcp.pop %v9964
    %v9966 = vmul.f32 1.0, %v9965
    %v9967 = vtanh.pop %v9953
    %v9968 = vxor.u32 %v9954, 2147483648
    %v9969 = vmul.f32 %v9968, 1.442695
    %v9970 = vpow.pop %v9969
    %v9971 = vadd.f32 %v9970, 1.0
    %v9972 = vrcp.pop %v9971
    %v9973 = vmul.f32 1.0, %v9972
    %v9975 = vrot.slane %v9858, 6
    %v9977 = vmul.f32 %v9966, %v9975
    %v9978 = vmul.f32 %v9960, %v9967
    %v9979 = vadd.f32 %v9977, %v9978
    %v9980 = vtanh.pop %v9979
    %v9981 = vmul.f32 %v9973, %v9980
    %v9982 = vld [vmem:[#allocation5 + $0x20] sm:$0xc]
    %v9983 = vld [vmem:[#allocation5 + $0x28] sm:$0xc]
    %v9984 = vld [vmem:[#allocation5 + $0x30] sm:$0xc]
    %v9985 = vld [vmem:[#allocation5 + $0x38] sm:$0xc]
    %v9986 = vpack.c.bf16 %v9981, %v9981
    %9987 = vmatprep.subr.bf16.mxu0 %v9324
    %9988 = vmatpush1.bf16.msra.mxu0 %v9323
    %9989 = vmatprep.subr.bf16.mxu0 %v9328
    %9990 = vmatpush1.bf16.msra.mxu0 %v9327
    %9991 = vmatprep.subr.bf16.mxu0 %v9332
    %9992 = vmatpush1.bf16.msra.mxu0 %v9331
    %9993 = vmatprep.subr.bf16.mxu0 %v9336
    %9994 = vmatpush1.bf16.msra.mxu0 %v9335
    %9995 = vmatprep.subr.bf16.mxu0 %v9340
    %9996 = vmatpush1.bf16.msra.mxu0 %v9339
    %9997 = vmatprep.subr.bf16.mxu0 %v9344
    %9998 = vmatpush1.bf16.msra.mxu0 %v9343
    %9999 = vmatprep.subr.bf16.mxu0 %v9348
    %10000 = vmatpush1.bf16.msra.mxu0 %v9347
    %10001 = vmatprep.subr.bf16.mxu0 %v9352
    %10002 = vmatpush1.bf16.msra.mxu0 %v9351
    %10003 = vmatprep.subr.bf16.mxu0 0
    %10004 = vmatpush1.bf16.msra.mxu0 0
    %10005 = vmatprep.subr.bf16.mxu0 0
    %10006 = vmatpush1.bf16.msra.mxu0 0
    %10007 = vmatprep.subr.bf16.mxu0 0
    %10008 = vmatpush1.bf16.msra.mxu0 0
    %10009 = vmatprep.subr.bf16.mxu0 0
    %10010 = vmatpush1.bf16.msra.mxu0 0
    %10011 = vmatprep.subr.bf16.mxu0 0
    %10012 = vmatpush1.bf16.msra.mxu0 0
    %10013 = vmatprep.subr.bf16.mxu0 0
    %10014 = vmatpush1.bf16.msra.mxu0 0
    %10015 = vmatprep.subr.bf16.mxu0 0
    %10016 = vmatpush1.bf16.msra.mxu0 0
    %10017 = vmatprep.subr.bf16.mxu0 0
    %10018 = vmatpush1.bf16.msra.mxu0 0
    %10019 = vmatprep.mubr.bf16.mxu0 0
    %10020 = vmatmul.mubr.bf16.gmra.mrb[0].mxu0 %v9986
    %v10021 = vpop.f32.mrb[0].mxu0
    %v10022 = vadd.f32 0.0, %v10021
    %v10023 = vpop.f32.mrb[0].mxu0
    %v10024 = vadd.f32 0.0, %v10023
    %v10025 = vpop.f32.mrb[0].mxu0
    %v10026 = vpop.f32.mrb[0].mxu0
    %10027 = vdwg.mxu0
    %10028 = vmatprep.subr.bf16.mxu0 %v9326
    %10029 = vmatpush1.bf16.msra.mxu0 %v9325
    %10030 = vmatprep.subr.bf16.mxu0 %v9330
    %10031 = vmatpush1.bf16.msra.mxu0 %v9329
    %10032 = vmatprep.subr.bf16.mxu0 %v9334
    %10033 = vmatpush1.bf16.msra.mxu0 %v9333
    %10034 = vmatprep.subr.bf16.mxu0 %v9338
    %10035 = vmatpush1.bf16.msra.mxu0 %v9337
    %10036 = vmatprep.subr.bf16.mxu0 %v9342
    %10037 = vmatpush1.bf16.msra.mxu0 %v9341
    %10038 = vmatprep.subr.bf16.mxu0 %v9346
    %10039 = vmatpush1.bf16.msra.mxu0 %v9345
    %10040 = vmatprep.subr.bf16.mxu0 %v9350
    %10041 = vmatpush1.bf16.msra.mxu0 %v9349
    %10042 = vmatprep.subr.bf16.mxu0 %v9354
    %10043 = vmatpush1.bf16.msra.mxu0 %v9353
    %10044 = vmatprep.subr.bf16.mxu0 0
    %10045 = vmatpush1.bf16.msra.mxu0 0
    %10046 = vmatprep.subr.bf16.mxu0 0
    %10047 = vmatpush1.bf16.msra.mxu0 0
    %10048 = vmatprep.subr.bf16.mxu0 0
    %10049 = vmatpush1.bf16.msra.mxu0 0
    %10050 = vmatprep.subr.bf16.mxu0 0
    %10051 = vmatpush1.bf16.msra.mxu0 0
    %10052 = vmatprep.subr.bf16.mxu0 0
    %10053 = vmatpush1.bf16.msra.mxu0 0
    %10054 = vmatprep.subr.bf16.mxu0 0
    %10055 = vmatpush1.bf16.msra.mxu0 0
    %10056 = vmatprep.subr.bf16.mxu0 0
    %10057 = vmatpush1.bf16.msra.mxu0 0
    %10058 = vmatprep.subr.bf16.mxu0 0
    %10059 = vmatpush1.bf16.msra.mxu0 0
    %10060 = vmatprep.mubr.bf16.mxu0 0
    %10061 = vmatmul.mubr.bf16.gmra.mrb[0].mxu0 %v9986
    %v10062 = vpop.f32.mrb[0].mxu0
    %v10063 = vadd.f32 0.0, %v10062
    %v10064 = vpop.f32.mrb[0].mxu0
    %v10065 = vadd.f32 0.0, %v10064
    %v10066 = vpop.f32.mrb[0].mxu0
    %v10067 = vpop.f32.mrb[0].mxu0
    %10068 = vdwg.mxu0
    %v10073 = vrot.slane %v10022, 6
    %v10074 = vrot.slane %v10024, 6
    %v10075 = vrot.slane %v10063, 6
    %v10076 = vrot.slane %v10065, 6
    %v10081 = vadd.f32 %v9982, %v10073
    %v10082 = vadd.f32 %v9983, %v10074
    %v10083 = vadd.f32 %v9984, %v10075
    %v10084 = vadd.f32 %v9985, %v10076
    %v10085 = vxor.u32 %v10081, 2147483648
    %v10086 = vmul.f32 %v10085, 1.442695
    %v10087 = vpow.pop %v10086
    %v10088 = vadd.f32 %v10087, 1.0
    %v10089 = vrcp.pop %v10088
    %v10090 = vmul.f32 1.0, %v10089
    %v10091 = vxor.u32 %v10082, 2147483648
    %v10092 = vmul.f32 %v10091, 1.442695
    %v10093 = vpow.pop %v10092
    %v10094 = vadd.f32 %v10093, 1.0
    %v10095 = vrcp.pop %v10094
    %v10096 = vmul.f32 1.0, %v10095
    %v10097 = vtanh.pop %v10083
    %v10098 = vxor.u32 %v10084, 2147483648
    %v10099 = vmul.f32 %v10098, 1.442695
    %v10100 = vpow.pop %v10099
    %v10101 = vadd.f32 %v10100, 1.0
    %v10102 = vrcp.pop %v10101
    %v10103 = vmul.f32 1.0, %v10102
    %v10105 = vrot.slane %v9979, 6
    %v10107 = vmul.f32 %v10096, %v10105
    %v10108 = vmul.f32 %v10090, %v10097
    %v10109 = vadd.f32 %v10107, %v10108
    %v10110 = vtanh.pop %v10109
    %v10111 = vmul.f32 %v10103, %v10110
    %v10112 = vpack.c.bf16 %v10111, %v10111
    %v10113 = vld [vmem:[#allocation11] sm:$0xff]
    %v10114 = vld [vmem:[#allocation11 + $0x8] sm:$0xff]
    %v10115 = vld [vmem:[#allocation11 + $0x10] sm:$0xff]
    %v10116 = vld [vmem:[#allocation11 + $0x18] sm:$0xff]
    %v10117 = vld [vmem:[#allocation11 + $0x20] sm:$0xff]
    %v10118 = vld [vmem:[#allocation11 + $0x28] sm:$0xff]
    %v10119 = vld [vmem:[#allocation11 + $0x30] sm:$0xff]
    %v10120 = vld [vmem:[#allocation11 + $0x38] sm:$0xff]
    %v10121 = vld [vmem:[%s57] sm:$0x1]
    %v10123 = vlaneseq
    %v10124 = vshrl.u32 %v10123, 7
    %v10125 = vsub.s32 0, %v10124
    %v10126 = vrot.slane %v10121, %v10125
    %v10129 = vrot.slane %v10112, 1
    %10131 = vmatprep.subr.bf16.mxu0 0
    %10132 = vmatpush1.bf16.msra.mxu0 %v10113
    %10133 = vmatprep.subr.bf16.mxu0 0
    %10134 = vmatpush1.bf16.msra.mxu0 %v10114
    %10135 = vmatprep.subr.bf16.mxu0 0
    %10136 = vmatpush1.bf16.msra.mxu0 %v10115
    %10137 = vmatprep.subr.bf16.mxu0 0
    %10138 = vmatpush1.bf16.msra.mxu0 %v10116
    %10139 = vmatprep.subr.bf16.mxu0 0
    %10140 = vmatpush1.bf16.msra.mxu0 %v10117
    %10141 = vmatprep.subr.bf16.mxu0 0
    %10142 = vmatpush1.bf16.msra.mxu0 %v10118
    %10143 = vmatprep.subr.bf16.mxu0 0
    %10144 = vmatpush1.bf16.msra.mxu0 %v10119
    %10145 = vmatprep.subr.bf16.mxu0 0
    %10146 = vmatpush1.bf16.msra.mxu0 %v10120
    %10147 = vmatprep.subr.bf16.mxu0 0
    %10148 = vmatpush1.bf16.msra.mxu0 0
    %10149 = vmatprep.subr.bf16.mxu0 0
    %10150 = vmatpush1.bf16.msra.mxu0 0
    %10151 = vmatprep.subr.bf16.mxu0 0
    %10152 = vmatpush1.bf16.msra.mxu0 0
    %10153 = vmatprep.subr.bf16.mxu0 0
    %10154 = vmatpush1.bf16.msra.mxu0 0
    %10155 = vmatprep.subr.bf16.mxu0 0
    %10156 = vmatpush1.bf16.msra.mxu0 0
    %10157 = vmatprep.subr.bf16.mxu0 0
    %10158 = vmatpush1.bf16.msra.mxu0 0
    %10159 = vmatprep.subr.bf16.mxu0 0
    %10160 = vmatpush1.bf16.msra.mxu0 0
    %10161 = vmatprep.subr.bf16.mxu0 0
    %10162 = vmatpush1.bf16.msra.mxu0 0
    %10163 = vmatprep.mubr.bf16.mxu0 0
    %10164 = vmatmul.mubr.bf16.gmra.mrb[0].mxu0 %v10129
    %v10165 = vpop.f32.mrb[0].mxu0
    %v10166 = vadd.f32 %v10126, %v10165
    %v10167 = vpop.f32.mrb[0].mxu0
    %v10168 = vpop.f32.mrb[0].mxu0
    %v10169 = vpop.f32.mrb[0].mxu0
    %10170 = vdwg.mxu0
    %10171 = vst [vmem:[#allocation45] sm:$0x3] %v10166
    // Predicated region
    $region202: #{tpu_custom_call.1} parent=1 // pred_check
      _
    $region203: #{tpu_custom_call.1} parent=1 // pred_check_branch
      %10173 = sbr.rel (0) target = $region205
    $region204: #{tpu_custom_call.1} parent=1 // pred_region
      %s10175 = ssub.s32 32, 32
      %10176 = vsyncadd [#allocation15], %s10175
      %s10178 = sshll.u32 [#allocation45], 4
      %s10179 = int_to_ptr.vmem [resolvable:$true] %s10178
      %10181 = dma.vmem_to_hbm [thread:$0]  %s10179, 32, %s65, [#allocation15]
    $region205: #{tpu_custom_call.1} parent=1 // pred_fallthru
      _
    // Predicated region
    $region206: #{tpu_custom_call.1} parent=1 // pred_check
      _
    $region207: #{tpu_custom_call.1} parent=1 // pred_check_branch
      %10183 = sbr.rel (0) target = $region209
    $region208: #{tpu_custom_call.1} parent=1 // pred_region
      %10184 = dma.done [#allocation15], 32
    $region209: #{tpu_custom_call.1} parent=1 // pred_fallthru
      _
    %10185 = vsyncpa [#allocation14], 1
    %10186 = vsyncpa [#allocation17], 1
    %10187 = vsyncpa [#allocation20], 1
    %10188 = vsyncpa [#allocation23], 1
    %10189 = vsyncpa [#allocation26], 1
    %10190 = vsyncpa [#allocation29], 1
    %10191 = vsyncpa [#allocation32], 1
    %10192 = vsyncpa [#allocation35], 1
    %10193 = vsyncpa [#allocation38], 1
    %10194 = vsyncpa [#allocation41], 1
    %10195 = vsyncpa [#allocation44], 1
    %10196 = vsyncpa [#allocation15], 1
  %10197 = vsyncmov [#allocation12]
  %s10198 = vpop.sfrf %10197
  %p10199 = scmp.eq.s32.totalorder %s10198, 0
  %p10200 = pneg %p10199
  %10202 = shalt.err (%p10200)
  %s10203 = scalar_lea.sflag [#allocation12], 1
  %10204 = vsyncmov %s10203
  %s10205 = vpop.sfrf %10204
  %p10206 = scmp.eq.s32.totalorder %s10205, 0
  %p10207 = pneg %p10206
  %10209 = shalt.err (%p10207)
  %s10210 = scalar_lea.sflag [#allocation12], 2
  %10211 = vsyncmov %s10210
  %s10212 = vpop.sfrf %10211
  %p10213 = scmp.eq.s32.totalorder %s10212, 0
  %p10214 = pneg %p10213
  %10216 = shalt.err (%p10214)

</llo_original>
